<compile_context>
chip_gen: v6e
topology: v6e:2x2x1
jax: 0.10.0
libtpu: 0.0.40
codegen_flags: <defaults>
</compile_context>

<pallas_src>
import jax
import jax.numpy as jnp
from jax.experimental import pallas as pl
from jax.experimental.pallas import tpu as pltpu

# ----------------------------- model config --------------------------------
NUM_FEATURES = 16          # input_size == output_size == num_features
HIDDEN = 128               # hidden_size (matches the PyTorch spec)
NUM_LAYERS = 2
BATCH = 2
SEQ = 8


# ----------------------------- Pallas kernel --------------------------------
def fused_lstm_kernel(x_ref, w0_ref, b0_ref, whh0_ref, w1_ref, b1_ref,
                      wfc_ref, bfc_ref, out_ref, g0_sc):
    """Fused 2-layer LSTM + Linear head (batch-major in and out).

    x_ref    : (B, T, F)   f32   input, batch-major
    w0_ref   : (F, 4H)     bf16  W_ih^T layer 0, gate cols reordered [i,f,o,g]
    b0_ref   : (1, 4H)     f32   b_ih + b_hh layer 0
    whh0_ref : (H, 4H)     bf16  W_hh^T layer 0
    w1_ref   : (2H, 4H)    bf16  stacked [W_ih^T ; W_hh^T] layer 1 (K fused)
    b1_ref   : (1, 4H)     f32   b_ih + b_hh layer 1
    wfc_ref  : (H, O)      bf16  W_fc^T
    bfc_ref  : (1, O)      f32
    out_ref  : (B, T, O)   f32   batch-major output
    g0_sc    : (B, T, 4H)  f32   hoisted layer-0 input-projection gates
    """
    B, T, _ = x_ref.shape
    H = whh0_ref.shape[0]
    f32 = jnp.float32
    bf16 = jnp.bfloat16

    def lstm_cell(gates, c_prev):
        # gate columns are [i | f | o | g]: one sigmoid slab + one tanh slab.
        sig = jax.nn.sigmoid(gates[:, :3 * H])
        i_g = sig[:, 0 * H:1 * H]
        f_g = sig[:, 1 * H:2 * H]
        o_g = sig[:, 2 * H:3 * H]
        g_g = jnp.tanh(gates[:, 3 * H:4 * H])
        c = f_g * c_prev + i_g * g_g
        h = o_g * jnp.tanh(c)
        return h, c

    # Layer-0 non-recurrent projection hoisted out of the recurrence for all T
    # steps (small MXU matmuls, off the critical path).
    for b in range(B):
        g0_sc[b] = jnp.dot(x_ref[b].astype(bf16), w0_ref[...],
                           preferred_element_type=f32) + b0_ref[...]

    h0 = jnp.zeros((B, H), f32)
    c0 = jnp.zeros((B, H), f32)
    h1 = jnp.zeros((B, H), f32)
    c1 = jnp.zeros((B, H), f32)

    # Interleaved recurrence (static unroll; T is small). Layer-0 step t+1 does
    # not depend on layer-1 step t, so the scheduler overlaps the two layers.
    for t in range(T):
        # ---- layer 0, step t: K=H recurrent matmul + precomputed gates.
        gates0 = g0_sc[:, t, :] + jnp.dot(
            h0.astype(bf16), whh0_ref[...], preferred_element_type=f32)
        h0, c0 = lstm_cell(gates0, c0)

        # ---- layer 1, step t: fused K=2H matmul over [h0_t ; h1_{t-1}].
        hcat = jnp.concatenate([h0, h1], axis=1).astype(bf16)
        gates1 = jnp.dot(hcat, w1_ref[...],
                         preferred_element_type=f32) + b1_ref[...]
        h1, c1 = lstm_cell(gates1, c1)

        # ---- FC head, step t (off the recurrence chain), stored batch-major.
        out_ref[:, t, :] = (jnp.dot(h1.astype(bf16), wfc_ref[...],
                                    preferred_element_type=f32)
                            + bfc_ref[...]).astype(out_ref.dtype)


# ------------------------------ wrapper --------------------------------------
def lstm_model_forward(x_btf, kp):
    """LSTMModel.forward: (B, T, F) -> (B, T, output_size).  One pallas_call,
    no wrapper-side transposes/reshapes."""
    B, T, _ = x_btf.shape
    H = kp["whh0"].shape[0]
    O = kp["wfc"].shape[1]
    vmem = pl.BlockSpec(memory_space=pltpu.MemorySpace.VMEM)
    return pl.pallas_call(
        fused_lstm_kernel,
        out_shape=jax.ShapeDtypeStruct((B, T, O), jnp.float32),
        in_specs=[vmem] * 8,
        out_specs=vmem,
        scratch_shapes=[pltpu.VMEM((B, T, 4 * H), jnp.float32)],
    )(x_btf, kp["w0"], kp["b0"], kp["whh0"], kp["w1"], kp["b1"],
      kp["wfc"], kp["bfc"])


# --------------------------- deterministic init ------------------------------
def xavier_uniform(key, shape):
    fan_out, fan_in = shape
    bound = (6.0 / (fan_in + fan_out)) ** 0.5
    return jax.random.uniform(key, shape, jnp.float32, -bound, bound)


def init_params(key):
    """PyTorch-layout params with the module's init (xavier / zero biases)."""
    params = {"lstm": [], "fc": None}
    for layer in range(NUM_LAYERS):
        in_dim = NUM_FEATURES if layer == 0 else HIDDEN
        key, k1, k2 = jax.random.split(key, 3)
        w_ih = xavier_uniform(k1, (4 * HIDDEN, in_dim))   # (4H, in)
        w_hh = xavier_uniform(k2, (4 * HIDDEN, HIDDEN))   # (4H, H)
        b_ih = jnp.zeros((4 * HIDDEN,), jnp.float32)
        b_hh = jnp.zeros((4 * HIDDEN,), jnp.float32)
        params["lstm"].append((w_ih, w_hh, b_ih, b_hh))
    key, kf = jax.random.split(key)
    w_fc = xavier_uniform(kf, (NUM_FEATURES, HIDDEN))     # (O, H)
    b_fc = jnp.zeros((NUM_FEATURES,), jnp.float32)
    params["fc"] = (w_fc, b_fc)
    return params


def prepare_kernel_params(params):
    """PyTorch layout -> kernel layout.

    * transpose so the kernel does activations @ W^T
    * reorder gate columns [i,f,g,o] -> [i,f,o,g] (one sigmoid slab)
    * stack layer-1's [Wih^T ; Whh^T] for the fused K=2H recurrent matmul
    * pack all matmul weights as bf16 (MXU operands); biases stay f32
    """
    def reorder(w):          # (..., 4H) with gate columns [i|f|g|o]
        i, f, g, o = jnp.split(w, 4, axis=-1)
        return jnp.concatenate([i, f, o, g], axis=-1)

    (w_ih0, w_hh0, b_ih0, b_hh0), (w_ih1, w_hh1, b_ih1, b_hh1) = params["lstm"]
    w_fc, b_fc = params["fc"]

    kp = {
        "w0":   reorder(w_ih0.T).astype(jnp.bfloat16),                 # (F, 4H)
        "b0":   reorder((b_ih0 + b_hh0)[None, :]),                     # (1, 4H)
        "whh0": reorder(w_hh0.T).astype(jnp.bfloat16),                 # (H, 4H)
        "w1":   reorder(jnp.concatenate([w_ih1.T, w_hh1.T], axis=0)
                        ).astype(jnp.bfloat16),                        # (2H, 4H)
        "b1":   reorder((b_ih1 + b_hh1)[None, :]),                     # (1, 4H)
        "wfc":  w_fc.T.astype(jnp.bfloat16),                           # (H, O)
        "bfc":  b_fc[None, :],                                         # (1, O)
    }
    return kp


# ------------------------------ reference ------------------------------------
def lstm_model_reference(x_btf, params):
    """Pure-JAX f32 reference in the original PyTorch layout / gate order."""
    H = HIDDEN
    h_seq = jnp.transpose(x_btf, (1, 0, 2))   # (T, B, F)
    for (w_ih, w_hh, b_ih, b_hh) in params["lstm"]:
        B = h_seq.shape[1]
        h = jnp.zeros((B, H), jnp.float32)
        c = jnp.zeros((B, H), jnp.float32)
        outs = []
        for t in range(h_seq.shape[0]):
            gates = h_seq[t] @ w_ih.T + h @ w_hh.T + b_ih + b_hh
            i = jax.nn.sigmoid(gates[:, 0 * H:1 * H])
            f = jax.nn.sigmoid(gates[:, 1 * H:2 * H])
            g = jnp.tanh(gates[:, 2 * H:3 * H])
            o = jax.nn.sigmoid(gates[:, 3 * H:4 * H])
            c = f * c + i * g
            h = o * jnp.tanh(c)
            outs.append(h)
        h_seq = jnp.stack(outs, axis=0)
    w_fc, b_fc = params["fc"]
    out = h_seq @ w_fc.T + b_fc
    return jnp.transpose(out, (1, 0, 2))


# --------------------------------- main ---------------------------------------
if __name__ == "__main__":
    key = jax.random.PRNGKey(0)
    key, kx, kp_key = jax.random.split(key, 3)
    x = jax.random.normal(kx, (BATCH, SEQ, NUM_FEATURES), jnp.float32)
    params = init_params(kp_key)
    kparams = prepare_kernel_params(params)

    out = jax.block_until_ready(lstm_model_forward(x, kparams))
    assert out.shape == (BATCH, SEQ, NUM_FEATURES), out.shape

    ref = jax.block_until_ready(lstm_model_reference(x, params))
    max_err = float(jnp.max(jnp.abs(out - ref)))
    # bf16 MXU operands -> loosened tolerance vs. the f32 reference.
    assert jnp.allclose(out, ref, atol=2e-2, rtol=2e-2), max_err

    print("KERNEL_OK")
</pallas_src>

<mosaic_0001>
module attributes {stable_mosaic.version = 11 : i64} {
  func.func @fused_lstm_kernel(%arg0: memref<2x8x16xf32, #tpu.memory_space<vmem>>, %arg1: memref<16x512xbf16, #tpu.memory_space<vmem>>, %arg2: memref<1x512xf32, #tpu.memory_space<vmem>>, %arg3: memref<128x512xbf16, #tpu.memory_space<vmem>>, %arg4: memref<256x512xbf16, #tpu.memory_space<vmem>>, %arg5: memref<1x512xf32, #tpu.memory_space<vmem>>, %arg6: memref<128x16xbf16, #tpu.memory_space<vmem>>, %arg7: memref<1x16xf32, #tpu.memory_space<vmem>>, %arg8: memref<2x8x16xf32, #tpu.memory_space<vmem>>, %arg9: memref<2x8x512xf32, #tpu.memory_space<vmem>>) attributes {dimension_semantics = [], scalar_prefetch = 0 : i64, scratch_operands = 1 : i64, tpu.core_type = #tpu.core_type<tc>} {
    %c0 = arith.constant 0 : index
    %c0_0 = arith.constant 0 : index
    %c0_1 = arith.constant 0 : index
    %0 = vector.load %arg0[%c0, %c0_0, %c0_1] : memref<2x8x16xf32, #tpu.memory_space<vmem>>, vector<1x8x16xf32>
    %1 = vector.shape_cast %0 : vector<1x8x16xf32> to vector<8x16xf32>
    %2 = arith.truncf %1 : vector<8x16xf32> to vector<8x16xbf16>
    %c0_2 = arith.constant 0 : index
    %c0_3 = arith.constant 0 : index
    %3 = vector.load %arg1[%c0_2, %c0_3] : memref<16x512xbf16, #tpu.memory_space<vmem>>, vector<16x512xbf16>
    %cst = arith.constant dense<0.000000e+00> : vector<8x512xf32>
    %4 = tpu.matmul %2, %3, %cst {dimension_numbers = #tpu.dot_dimension_numbers<[1], [0], [0], [1], [0, 0, 1, 1], [], []>} : vector<8x16xbf16>, vector<16x512xbf16>, vector<8x512xf32> -> vector<8x512xf32>
    %c0_4 = arith.constant 0 : index
    %c0_5 = arith.constant 0 : index
    %5 = vector.load %arg2[%c0_4, %c0_5] : memref<1x512xf32, #tpu.memory_space<vmem>>, vector<1x512xf32>
    %6 = vector.broadcast %5 : vector<1x512xf32> to vector<8x512xf32>
    %7 = arith.addf %4, %6 : vector<8x512xf32>
    %c0_6 = arith.constant 0 : index
    %c0_7 = arith.constant 0 : index
    %c0_8 = arith.constant 0 : index
    %8 = vector.load %arg9[%c0_6, %c0_7, %c0_8] : memref<2x8x512xf32, #tpu.memory_space<vmem>>, vector<1x8x512xf32>
    %9 = vector.shape_cast %8 : vector<1x8x512xf32> to vector<8x512xf32>
    %10 = vector.shape_cast %7 : vector<8x512xf32> to vector<1x8x512xf32>
    tpu.vector_store %arg9[%c0_6, %c0_7, %c0_8], %10 {strides = array<i32>} : memref<2x8x512xf32, #tpu.memory_space<vmem>>, vector<1x8x512xf32>,
    %c1 = arith.constant 1 : index
    %c0_9 = arith.constant 0 : index
    %c0_10 = arith.constant 0 : index
    %11 = vector.load %arg0[%c1, %c0_9, %c0_10] : memref<2x8x16xf32, #tpu.memory_space<vmem>>, vector<1x8x16xf32>
    %12 = vector.shape_cast %11 : vector<1x8x16xf32> to vector<8x16xf32>
    %13 = arith.truncf %12 : vector<8x16xf32> to vector<8x16xbf16>
    %c0_11 = arith.constant 0 : index
    %c0_12 = arith.constant 0 : index
    %14 = vector.load %arg1[%c0_11, %c0_12] : memref<16x512xbf16, #tpu.memory_space<vmem>>, vector<16x512xbf16>
    %cst_13 = arith.constant dense<0.000000e+00> : vector<8x512xf32>
    %15 = tpu.matmul %13, %14, %cst_13 {dimension_numbers = #tpu.dot_dimension_numbers<[1], [0], [0], [1], [0, 0, 1, 1], [], []>} : vector<8x16xbf16>, vector<16x512xbf16>, vector<8x512xf32> -> vector<8x512xf32>
    %c0_14 = arith.constant 0 : index
    %c0_15 = arith.constant 0 : index
    %16 = vector.load %arg2[%c0_14, %c0_15] : memref<1x512xf32, #tpu.memory_space<vmem>>, vector<1x512xf32>
    %17 = vector.broadcast %16 : vector<1x512xf32> to vector<8x512xf32>
    %18 = arith.addf %15, %17 : vector<8x512xf32>
    %c1_16 = arith.constant 1 : index
    %c0_17 = arith.constant 0 : index
    %c0_18 = arith.constant 0 : index
    %19 = vector.load %arg9[%c1_16, %c0_17, %c0_18] : memref<2x8x512xf32, #tpu.memory_space<vmem>>, vector<1x8x512xf32>
    %20 = vector.shape_cast %19 : vector<1x8x512xf32> to vector<8x512xf32>
    %21 = vector.shape_cast %18 : vector<8x512xf32> to vector<1x8x512xf32>
    tpu.vector_store %arg9[%c1_16, %c0_17, %c0_18], %21 {strides = array<i32>} : memref<2x8x512xf32, #tpu.memory_space<vmem>>, vector<1x8x512xf32>,
    %cst_19 = arith.constant 0.000000e+00 : f32
    %22 = vector.broadcast %cst_19 : f32 to vector<2x128xf32>
    %cst_20 = arith.constant 0.000000e+00 : f32
    %23 = vector.broadcast %cst_20 : f32 to vector<2x128xf32>
    %cst_21 = arith.constant 0.000000e+00 : f32
    %24 = vector.broadcast %cst_21 : f32 to vector<2x128xf32>
    %cst_22 = arith.constant 0.000000e+00 : f32
    %25 = vector.broadcast %cst_22 : f32 to vector<2x128xf32>
    %c0_23 = arith.constant 0 : index
    %c0_24 = arith.constant 0 : index
    %c0_25 = arith.constant 0 : index
    %26 = vector.load %arg9[%c0_23, %c0_24, %c0_25] : memref<2x8x512xf32, #tpu.memory_space<vmem>>, vector<2x1x512xf32>
    %27 = vector.shape_cast %26 : vector<2x1x512xf32> to vector<2x512xf32>
    %28 = arith.truncf %22 : vector<2x128xf32> to vector<2x128xbf16>
    %c0_26 = arith.constant 0 : index
    %c0_27 = arith.constant 0 : index
    %29 = vector.load %arg3[%c0_26, %c0_27] : memref<128x512xbf16, #tpu.memory_space<vmem>>, vector<128x512xbf16>
    %cst_28 = arith.constant dense<0.000000e+00> : vector<2x512xf32>
    %30 = tpu.matmul %28, %29, %cst_28 {dimension_numbers = #tpu.dot_dimension_numbers<[1], [0], [0], [1], [0, 0, 1, 1], [], []>} : vector<2x128xbf16>, vector<128x512xbf16>, vector<2x512xf32> -> vector<2x512xf32>
    %31 = arith.addf %27, %30 : vector<2x512xf32>
    %32 = vector.extract_strided_slice %31 {offsets = [0, 0], sizes = [2, 384], strides = [1, 1]} : vector<2x512xf32> to vector<2x384xf32>
    %33 = arith.negf %32 : vector<2x384xf32>
    %34 = math.exp %33 : vector<2x384xf32>
    %cst_29 = arith.constant 1.000000e+00 : f32
    %35 = vector.broadcast %cst_29 : f32 to vector<2x384xf32>
    %36 = arith.addf %35, %34 : vector<2x384xf32>
    %37 = arith.divf %35, %36 : vector<2x384xf32>
    %38 = vector.extract_strided_slice %37 {offsets = [0, 0], sizes = [2, 128], strides = [1, 1]} : vector<2x384xf32> to vector<2x128xf32>
    %39 = vector.extract_strided_slice %37 {offsets = [0, 128], sizes = [2, 128], strides = [1, 1]} : vector<2x384xf32> to vector<2x128xf32>
    %40 = vector.extract_strided_slice %37 {offsets = [0, 256], sizes = [2, 128], strides = [1, 1]} : vector<2x384xf32> to vector<2x128xf32>
    %41 = vector.extract_strided_slice %31 {offsets = [0, 384], sizes = [2, 128], strides = [1, 1]} : vector<2x512xf32> to vector<2x128xf32>
    %42 = math.tanh %41 : vector<2x128xf32>
    %43 = arith.mulf %39, %23 : vector<2x128xf32>
    %44 = arith.mulf %38, %42 : vector<2x128xf32>
    %45 = arith.addf %43, %44 : vector<2x128xf32>
    %46 = math.tanh %45 : vector<2x128xf32>
    %47 = arith.mulf %40, %46 : vector<2x128xf32>
    %48 = tpu.concatenate %47, %24 in 1 : vector<2x128xf32>, vector<2x128xf32> -> vector<2x256xf32>
    %49 = arith.truncf %48 : vector<2x256xf32> to vector<2x256xbf16>
    %c0_30 = arith.constant 0 : index
    %c0_31 = arith.constant 0 : index
    %50 = vector.load %arg4[%c0_30, %c0_31] : memref<256x512xbf16, #tpu.memory_space<vmem>>, vector<256x512xbf16>
    %cst_32 = arith.constant dense<0.000000e+00> : vector<2x512xf32>
    %51 = tpu.matmul %49, %50, %cst_32 {dimension_numbers = #tpu.dot_dimension_numbers<[1], [0], [0], [1], [0, 0, 1, 1], [], []>} : vector<2x256xbf16>, vector<256x512xbf16>, vector<2x512xf32> -> vector<2x512xf32>
    %c0_33 = arith.constant 0 : index
    %c0_34 = arith.constant 0 : index
    %52 = vector.load %arg5[%c0_33, %c0_34] : memref<1x512xf32, #tpu.memory_space<vmem>>, vector<1x512xf32>
    %53 = vector.broadcast %52 : vector<1x512xf32> to vector<2x512xf32>
    %54 = arith.addf %51, %53 : vector<2x512xf32>
    %55 = vector.extract_strided_slice %54 {offsets = [0, 0], sizes = [2, 384], strides = [1, 1]} : vector<2x512xf32> to vector<2x384xf32>
    %56 = arith.negf %55 : vector<2x384xf32>
    %57 = math.exp %56 : vector<2x384xf32>
    %cst_35 = arith.constant 1.000000e+00 : f32
    %58 = vector.broadcast %cst_35 : f32 to vector<2x384xf32>
    %59 = arith.addf %58, %57 : vector<2x384xf32>
    %60 = arith.divf %58, %59 : vector<2x384xf32>
    %61 = vector.extract_strided_slice %60 {offsets = [0, 0], sizes = [2, 128], strides = [1, 1]} : vector<2x384xf32> to vector<2x128xf32>
    %62 = vector.extract_strided_slice %60 {offsets = [0, 128], sizes = [2, 128], strides = [1, 1]} : vector<2x384xf32> to vector<2x128xf32>
    %63 = vector.extract_strided_slice %60 {offsets = [0, 256], sizes = [2, 128], strides = [1, 1]} : vector<2x384xf32> to vector<2x128xf32>
    %64 = vector.extract_strided_slice %54 {offsets = [0, 384], sizes = [2, 128], strides = [1, 1]} : vector<2x512xf32> to vector<2x128xf32>
    %65 = math.tanh %64 : vector<2x128xf32>
    %66 = arith.mulf %62, %25 : vector<2x128xf32>
    %67 = arith.mulf %61, %65 : vector<2x128xf32>
    %68 = arith.addf %66, %67 : vector<2x128xf32>
    %69 = math.tanh %68 : vector<2x128xf32>
    %70 = arith.mulf %63, %69 : vector<2x128xf32>
    %71 = arith.truncf %70 : vector<2x128xf32> to vector<2x128xbf16>
    %c0_36 = arith.constant 0 : index
    %c0_37 = arith.constant 0 : index
    %72 = vector.load %arg6[%c0_36, %c0_37] : memref<128x16xbf16, #tpu.memory_space<vmem>>, vector<128x16xbf16>
    %cst_38 = arith.constant dense<0.000000e+00> : vector<2x16xf32>
    %73 = tpu.matmul %71, %72, %cst_38 {dimension_numbers = #tpu.dot_dimension_numbers<[1], [0], [0], [1], [0, 0, 1, 1], [], []>} : vector<2x128xbf16>, vector<128x16xbf16>, vector<2x16xf32> -> vector<2x16xf32>
    %c0_39 = arith.constant 0 : index
    %c0_40 = arith.constant 0 : index
    %74 = vector.load %arg7[%c0_39, %c0_40] : memref<1x16xf32, #tpu.memory_space<vmem>>, vector<1x16xf32>
    %75 = vector.broadcast %74 : vector<1x16xf32> to vector<2x16xf32>
    %76 = arith.addf %73, %75 : vector<2x16xf32>
    %c0_41 = arith.constant 0 : index
    %c0_42 = arith.constant 0 : index
    %c0_43 = arith.constant 0 : index
    %77 = vector.load %arg8[%c0_41, %c0_42, %c0_43] : memref<2x8x16xf32, #tpu.memory_space<vmem>>, vector<2x1x16xf32>
    %78 = vector.shape_cast %77 : vector<2x1x16xf32> to vector<2x16xf32>
    %79 = vector.shape_cast %76 : vector<2x16xf32> to vector<2x1x16xf32>
    tpu.vector_store %arg8[%c0_41, %c0_42, %c0_43], %79 {strides = array<i32>} : memref<2x8x16xf32, #tpu.memory_space<vmem>>, vector<2x1x16xf32>,
    %c0_44 = arith.constant 0 : index
    %c1_45 = arith.constant 1 : index
    %c0_46 = arith.constant 0 : index
    %80 = vector.load %arg9[%c0_44, %c1_45, %c0_46] : memref<2x8x512xf32, #tpu.memory_space<vmem>>, vector<2x1x512xf32>
    %81 = vector.shape_cast %80 : vector<2x1x512xf32> to vector<2x512xf32>
    %82 = arith.truncf %47 : vector<2x128xf32> to vector<2x128xbf16>
    %c0_47 = arith.constant 0 : index
    %c0_48 = arith.constant 0 : index
    %83 = vector.load %arg3[%c0_47, %c0_48] : memref<128x512xbf16, #tpu.memory_space<vmem>>, vector<128x512xbf16>
    %cst_49 = arith.constant dense<0.000000e+00> : vector<2x512xf32>
    %84 = tpu.matmul %82, %83, %cst_49 {dimension_numbers = #tpu.dot_dimension_numbers<[1], [0], [0], [1], [0, 0, 1, 1], [], []>} : vector<2x128xbf16>, vector<128x512xbf16>, vector<2x512xf32> -> vector<2x512xf32>
    %85 = arith.addf %81, %84 : vector<2x512xf32>
    %86 = vector.extract_strided_slice %85 {offsets = [0, 0], sizes = [2, 384], strides = [1, 1]} : vector<2x512xf32> to vector<2x384xf32>
    %87 = arith.negf %86 : vector<2x384xf32>
    %88 = math.exp %87 : vector<2x384xf32>
    %cst_50 = arith.constant 1.000000e+00 : f32
    %89 = vector.broadcast %cst_50 : f32 to vector<2x384xf32>
    %90 = arith.addf %89, %88 : vector<2x384xf32>
    %91 = arith.divf %89, %90 : vector<2x384xf32>
    %92 = vector.extract_strided_slice %91 {offsets = [0, 0], sizes = [2, 128], strides = [1, 1]} : vector<2x384xf32> to vector<2x128xf32>
    %93 = vector.extract_strided_slice %91 {offsets = [0, 128], sizes = [2, 128], strides = [1, 1]} : vector<2x384xf32> to vector<2x128xf32>
    %94 = vector.extract_strided_slice %91 {offsets = [0, 256], sizes = [2, 128], strides = [1, 1]} : vector<2x384xf32> to vector<2x128xf32>
    %95 = vector.extract_strided_slice %85 {offsets = [0, 384], sizes = [2, 128], strides = [1, 1]} : vector<2x512xf32> to vector<2x128xf32>
    %96 = math.tanh %95 : vector<2x128xf32>
    %97 = arith.mulf %93, %45 : vector<2x128xf32>
    %98 = arith.mulf %92, %96 : vector<2x128xf32>
    %99 = arith.addf %97, %98 : vector<2x128xf32>
    %100 = math.tanh %99 : vector<2x128xf32>
    %101 = arith.mulf %94, %100 : vector<2x128xf32>
    %102 = tpu.concatenate %101, %70 in 1 : vector<2x128xf32>, vector<2x128xf32> -> vector<2x256xf32>
    %103 = arith.truncf %102 : vector<2x256xf32> to vector<2x256xbf16>
    %c0_51 = arith.constant 0 : index
    %c0_52 = arith.constant 0 : index
    %104 = vector.load %arg4[%c0_51, %c0_52] : memref<256x512xbf16, #tpu.memory_space<vmem>>, vector<256x512xbf16>
    %cst_53 = arith.constant dense<0.000000e+00> : vector<2x512xf32>
    %105 = tpu.matmul %103, %104, %cst_53 {dimension_numbers = #tpu.dot_dimension_numbers<[1], [0], [0], [1], [0, 0, 1, 1], [], []>} : vector<2x256xbf16>, vector<256x512xbf16>, vector<2x512xf32> -> vector<2x512xf32>
    %c0_54 = arith.constant 0 : index
    %c0_55 = arith.constant 0 : index
    %106 = vector.load %arg5[%c0_54, %c0_55] : memref<1x512xf32, #tpu.memory_space<vmem>>, vector<1x512xf32>
    %107 = vector.broadcast %106 : vector<1x512xf32> to vector<2x512xf32>
    %108 = arith.addf %105, %107 : vector<2x512xf32>
    %109 = vector.extract_strided_slice %108 {offsets = [0, 0], sizes = [2, 384], strides = [1, 1]} : vector<2x512xf32> to vector<2x384xf32>
    %110 = arith.negf %109 : vector<2x384xf32>
    %111 = math.exp %110 : vector<2x384xf32>
    %cst_56 = arith.constant 1.000000e+00 : f32
    %112 = vector.broadcast %cst_56 : f32 to vector<2x384xf32>
    %113 = arith.addf %112, %111 : vector<2x384xf32>
    %114 = arith.divf %112, %113 : vector<2x384xf32>
    %115 = vector.extract_strided_slice %114 {offsets = [0, 0], sizes = [2, 128], strides = [1, 1]} : vector<2x384xf32> to vector<2x128xf32>
    %116 = vector.extract_strided_slice %114 {offsets = [0, 128], sizes = [2, 128], strides = [1, 1]} : vector<2x384xf32> to vector<2x128xf32>
    %117 = vector.extract_strided_slice %114 {offsets = [0, 256], sizes = [2, 128], strides = [1, 1]} : vector<2x384xf32> to vector<2x128xf32>
    %118 = vector.extract_strided_slice %108 {offsets = [0, 384], sizes = [2, 128], strides = [1, 1]} : vector<2x512xf32> to vector<2x128xf32>
    %119 = math.tanh %118 : vector<2x128xf32>
    %120 = arith.mulf %116, %68 : vector<2x128xf32>
    %121 = arith.mulf %115, %119 : vector<2x128xf32>
    %122 = arith.addf %120, %121 : vector<2x128xf32>
    %123 = math.tanh %122 : vector<2x128xf32>
    %124 = arith.mulf %117, %123 : vector<2x128xf32>
    %125 = arith.truncf %124 : vector<2x128xf32> to vector<2x128xbf16>
    %c0_57 = arith.constant 0 : index
    %c0_58 = arith.constant 0 : index
    %126 = vector.load %arg6[%c0_57, %c0_58] : memref<128x16xbf16, #tpu.memory_space<vmem>>, vector<128x16xbf16>
    %cst_59 = arith.constant dense<0.000000e+00> : vector<2x16xf32>
    %127 = tpu.matmul %125, %126, %cst_59 {dimension_numbers = #tpu.dot_dimension_numbers<[1], [0], [0], [1], [0, 0, 1, 1], [], []>} : vector<2x128xbf16>, vector<128x16xbf16>, vector<2x16xf32> -> vector<2x16xf32>
    %c0_60 = arith.constant 0 : index
    %c0_61 = arith.constant 0 : index
    %128 = vector.load %arg7[%c0_60, %c0_61] : memref<1x16xf32, #tpu.memory_space<vmem>>, vector<1x16xf32>
    %129 = vector.broadcast %128 : vector<1x16xf32> to vector<2x16xf32>
    %130 = arith.addf %127, %129 : vector<2x16xf32>
    %c0_62 = arith.constant 0 : index
    %c1_63 = arith.constant 1 : index
    %c0_64 = arith.constant 0 : index
    %131 = vector.load %arg8[%c0_62, %c1_63, %c0_64] : memref<2x8x16xf32, #tpu.memory_space<vmem>>, vector<2x1x16xf32>
    %132 = vector.shape_cast %131 : vector<2x1x16xf32> to vector<2x16xf32>
    %133 = vector.shape_cast %130 : vector<2x16xf32> to vector<2x1x16xf32>
    tpu.vector_store %arg8[%c0_62, %c1_63, %c0_64], %133 {strides = array<i32>} : memref<2x8x16xf32, #tpu.memory_space<vmem>>, vector<2x1x16xf32>,
    %c0_65 = arith.constant 0 : index
    %c2 = arith.constant 2 : index
    %c0_66 = arith.constant 0 : index
    %134 = vector.load %arg9[%c0_65, %c2, %c0_66] : memref<2x8x512xf32, #tpu.memory_space<vmem>>, vector<2x1x512xf32>
    %135 = vector.shape_cast %134 : vector<2x1x512xf32> to vector<2x512xf32>
    %136 = arith.truncf %101 : vector<2x128xf32> to vector<2x128xbf16>
    %c0_67 = arith.constant 0 : index
    %c0_68 = arith.constant 0 : index
    %137 = vector.load %arg3[%c0_67, %c0_68] : memref<128x512xbf16, #tpu.memory_space<vmem>>, vector<128x512xbf16>
    %cst_69 = arith.constant dense<0.000000e+00> : vector<2x512xf32>
    %138 = tpu.matmul %136, %137, %cst_69 {dimension_numbers = #tpu.dot_dimension_numbers<[1], [0], [0], [1], [0, 0, 1, 1], [], []>} : vector<2x128xbf16>, vector<128x512xbf16>, vector<2x512xf32> -> vector<2x512xf32>
    %139 = arith.addf %135, %138 : vector<2x512xf32>
    %140 = vector.extract_strided_slice %139 {offsets = [0, 0], sizes = [2, 384], strides = [1, 1]} : vector<2x512xf32> to vector<2x384xf32>
    %141 = arith.negf %140 : vector<2x384xf32>
    %142 = math.exp %141 : vector<2x384xf32>
    %cst_70 = arith.constant 1.000000e+00 : f32
    %143 = vector.broadcast %cst_70 : f32 to vector<2x384xf32>
    %144 = arith.addf %143, %142 : vector<2x384xf32>
    %145 = arith.divf %143, %144 : vector<2x384xf32>
    %146 = vector.extract_strided_slice %145 {offsets = [0, 0], sizes = [2, 128], strides = [1, 1]} : vector<2x384xf32> to vector<2x128xf32>
    %147 = vector.extract_strided_slice %145 {offsets = [0, 128], sizes = [2, 128], strides = [1, 1]} : vector<2x384xf32> to vector<2x128xf32>
    %148 = vector.extract_strided_slice %145 {offsets = [0, 256], sizes = [2, 128], strides = [1, 1]} : vector<2x384xf32> to vector<2x128xf32>
    %149 = vector.extract_strided_slice %139 {offsets = [0, 384], sizes = [2, 128], strides = [1, 1]} : vector<2x512xf32> to vector<2x128xf32>
    %150 = math.tanh %149 : vector<2x128xf32>
    %151 = arith.mulf %147, %99 : vector<2x128xf32>
    %152 = arith.mulf %146, %150 : vector<2x128xf32>
    %153 = arith.addf %151, %152 : vector<2x128xf32>
    %154 = math.tanh %153 : vector<2x128xf32>
    %155 = arith.mulf %148, %154 : vector<2x128xf32>
    %156 = tpu.concatenate %155, %124 in 1 : vector<2x128xf32>, vector<2x128xf32> -> vector<2x256xf32>
    %157 = arith.truncf %156 : vector<2x256xf32> to vector<2x256xbf16>
    %c0_71 = arith.constant 0 : index
    %c0_72 = arith.constant 0 : index
    %158 = vector.load %arg4[%c0_71, %c0_72] : memref<256x512xbf16, #tpu.memory_space<vmem>>, vector<256x512xbf16>
    %cst_73 = arith.constant dense<0.000000e+00> : vector<2x512xf32>
    %159 = tpu.matmul %157, %158, %cst_73 {dimension_numbers = #tpu.dot_dimension_numbers<[1], [0], [0], [1], [0, 0, 1, 1], [], []>} : vector<2x256xbf16>, vector<256x512xbf16>, vector<2x512xf32> -> vector<2x512xf32>
    %c0_74 = arith.constant 0 : index
    %c0_75 = arith.constant 0 : index
    %160 = vector.load %arg5[%c0_74, %c0_75] : memref<1x512xf32, #tpu.memory_space<vmem>>, vector<1x512xf32>
    %161 = vector.broadcast %160 : vector<1x512xf32> to vector<2x512xf32>
    %162 = arith.addf %159, %161 : vector<2x512xf32>
    %163 = vector.extract_strided_slice %162 {offsets = [0, 0], sizes = [2, 384], strides = [1, 1]} : vector<2x512xf32> to vector<2x384xf32>
    %164 = arith.negf %163 : vector<2x384xf32>
    %165 = math.exp %164 : vector<2x384xf32>
    %cst_76 = arith.constant 1.000000e+00 : f32
    %166 = vector.broadcast %cst_76 : f32 to vector<2x384xf32>
    %167 = arith.addf %166, %165 : vector<2x384xf32>
    %168 = arith.divf %166, %167 : vector<2x384xf32>
    %169 = vector.extract_strided_slice %168 {offsets = [0, 0], sizes = [2, 128], strides = [1, 1]} : vector<2x384xf32> to vector<2x128xf32>
    %170 = vector.extract_strided_slice %168 {offsets = [0, 128], sizes = [2, 128], strides = [1, 1]} : vector<2x384xf32> to vector<2x128xf32>
    %171 = vector.extract_strided_slice %168 {offsets = [0, 256], sizes = [2, 128], strides = [1, 1]} : vector<2x384xf32> to vector<2x128xf32>
    %172 = vector.extract_strided_slice %162 {offsets = [0, 384], sizes = [2, 128], strides = [1, 1]} : vector<2x512xf32> to vector<2x128xf32>
    %173 = math.tanh %172 : vector<2x128xf32>
    %174 = arith.mulf %170, %122 : vector<2x128xf32>
    %175 = arith.mulf %169, %173 : vector<2x128xf32>
    %176 = arith.addf %174, %175 : vector<2x128xf32>
    %177 = math.tanh %176 : vector<2x128xf32>
    %178 = arith.mulf %171, %177 : vector<2x128xf32>
    %179 = arith.truncf %178 : vector<2x128xf32> to vector<2x128xbf16>
    %c0_77 = arith.constant 0 : index
    %c0_78 = arith.constant 0 : index
    %180 = vector.load %arg6[%c0_77, %c0_78] : memref<128x16xbf16, #tpu.memory_space<vmem>>, vector<128x16xbf16>
    %cst_79 = arith.constant dense<0.000000e+00> : vector<2x16xf32>
    %181 = tpu.matmul %179, %180, %cst_79 {dimension_numbers = #tpu.dot_dimension_numbers<[1], [0], [0], [1], [0, 0, 1, 1], [], []>} : vector<2x128xbf16>, vector<128x16xbf16>, vector<2x16xf32> -> vector<2x16xf32>
    %c0_80 = arith.constant 0 : index
    %c0_81 = arith.constant 0 : index
    %182 = vector.load %arg7[%c0_80, %c0_81] : memref<1x16xf32, #tpu.memory_space<vmem>>, vector<1x16xf32>
    %183 = vector.broadcast %182 : vector<1x16xf32> to vector<2x16xf32>
    %184 = arith.addf %181, %183 : vector<2x16xf32>
    %c0_82 = arith.constant 0 : index
    %c2_83 = arith.constant 2 : index
    %c0_84 = arith.constant 0 : index
    %185 = vector.load %arg8[%c0_82, %c2_83, %c0_84] : memref<2x8x16xf32, #tpu.memory_space<vmem>>, vector<2x1x16xf32>
    %186 = vector.shape_cast %185 : vector<2x1x16xf32> to vector<2x16xf32>
    %187 = vector.shape_cast %184 : vector<2x16xf32> to vector<2x1x16xf32>
    tpu.vector_store %arg8[%c0_82, %c2_83, %c0_84], %187 {strides = array<i32>} : memref<2x8x16xf32, #tpu.memory_space<vmem>>, vector<2x1x16xf32>,
    %c0_85 = arith.constant 0 : index
    %c3 = arith.constant 3 : index
    %c0_86 = arith.constant 0 : index
    %188 = vector.load %arg9[%c0_85, %c3, %c0_86] : memref<2x8x512xf32, #tpu.memory_space<vmem>>, vector<2x1x512xf32>
    %189 = vector.shape_cast %188 : vector<2x1x512xf32> to vector<2x512xf32>
    %190 = arith.truncf %155 : vector<2x128xf32> to vector<2x128xbf16>
    %c0_87 = arith.constant 0 : index
    %c0_88 = arith.constant 0 : index
    %191 = vector.load %arg3[%c0_87, %c0_88] : memref<128x512xbf16, #tpu.memory_space<vmem>>, vector<128x512xbf16>
    %cst_89 = arith.constant dense<0.000000e+00> : vector<2x512xf32>
    %192 = tpu.matmul %190, %191, %cst_89 {dimension_numbers = #tpu.dot_dimension_numbers<[1], [0], [0], [1], [0, 0, 1, 1], [], []>} : vector<2x128xbf16>, vector<128x512xbf16>, vector<2x512xf32> -> vector<2x512xf32>
    %193 = arith.addf %189, %192 : vector<2x512xf32>
    %194 = vector.extract_strided_slice %193 {offsets = [0, 0], sizes = [2, 384], strides = [1, 1]} : vector<2x512xf32> to vector<2x384xf32>
    %195 = arith.negf %194 : vector<2x384xf32>
    %196 = math.exp %195 : vector<2x384xf32>
    %cst_90 = arith.constant 1.000000e+00 : f32
    %197 = vector.broadcast %cst_90 : f32 to vector<2x384xf32>
    %198 = arith.addf %197, %196 : vector<2x384xf32>
    %199 = arith.divf %197, %198 : vector<2x384xf32>
    %200 = vector.extract_strided_slice %199 {offsets = [0, 0], sizes = [2, 128], strides = [1, 1]} : vector<2x384xf32> to vector<2x128xf32>
    %201 = vector.extract_strided_slice %199 {offsets = [0, 128], sizes = [2, 128], strides = [1, 1]} : vector<2x384xf32> to vector<2x128xf32>
    %202 = vector.extract_strided_slice %199 {offsets = [0, 256], sizes = [2, 128], strides = [1, 1]} : vector<2x384xf32> to vector<2x128xf32>
    %203 = vector.extract_strided_slice %193 {offsets = [0, 384], sizes = [2, 128], strides = [1, 1]} : vector<2x512xf32> to vector<2x128xf32>
    %204 = math.tanh %203 : vector<2x128xf32>
    %205 = arith.mulf %201, %153 : vector<2x128xf32>
    %206 = arith.mulf %200, %204 : vector<2x128xf32>
    %207 = arith.addf %205, %206 : vector<2x128xf32>
    %208 = math.tanh %207 : vector<2x128xf32>
    %209 = arith.mulf %202, %208 : vector<2x128xf32>
    %210 = tpu.concatenate %209, %178 in 1 : vector<2x128xf32>, vector<2x128xf32> -> vector<2x256xf32>
    %211 = arith.truncf %210 : vector<2x256xf32> to vector<2x256xbf16>
    %c0_91 = arith.constant 0 : index
    %c0_92 = arith.constant 0 : index
    %212 = vector.load %arg4[%c0_91, %c0_92] : memref<256x512xbf16, #tpu.memory_space<vmem>>, vector<256x512xbf16>
    %cst_93 = arith.constant dense<0.000000e+00> : vector<2x512xf32>
    %213 = tpu.matmul %211, %212, %cst_93 {dimension_numbers = #tpu.dot_dimension_numbers<[1], [0], [0], [1], [0, 0, 1, 1], [], []>} : vector<2x256xbf16>, vector<256x512xbf16>, vector<2x512xf32> -> vector<2x512xf32>
    %c0_94 = arith.constant 0 : index
    %c0_95 = arith.constant 0 : index
    %214 = vector.load %arg5[%c0_94, %c0_95] : memref<1x512xf32, #tpu.memory_space<vmem>>, vector<1x512xf32>
    %215 = vector.broadcast %214 : vector<1x512xf32> to vector<2x512xf32>
    %216 = arith.addf %213, %215 : vector<2x512xf32>
    %217 = vector.extract_strided_slice %216 {offsets = [0, 0], sizes = [2, 384], strides = [1, 1]} : vector<2x512xf32> to vector<2x384xf32>
    %218 = arith.negf %217 : vector<2x384xf32>
    %219 = math.exp %218 : vector<2x384xf32>
    %cst_96 = arith.constant 1.000000e+00 : f32
    %220 = vector.broadcast %cst_96 : f32 to vector<2x384xf32>
    %221 = arith.addf %220, %219 : vector<2x384xf32>
    %222 = arith.divf %220, %221 : vector<2x384xf32>
    %223 = vector.extract_strided_slice %222 {offsets = [0, 0], sizes = [2, 128], strides = [1, 1]} : vector<2x384xf32> to vector<2x128xf32>
    %224 = vector.extract_strided_slice %222 {offsets = [0, 128], sizes = [2, 128], strides = [1, 1]} : vector<2x384xf32> to vector<2x128xf32>
    %225 = vector.extract_strided_slice %222 {offsets = [0, 256], sizes = [2, 128], strides = [1, 1]} : vector<2x384xf32> to vector<2x128xf32>
    %226 = vector.extract_strided_slice %216 {offsets = [0, 384], sizes = [2, 128], strides = [1, 1]} : vector<2x512xf32> to vector<2x128xf32>
    %227 = math.tanh %226 : vector<2x128xf32>
    %228 = arith.mulf %224, %176 : vector<2x128xf32>
    %229 = arith.mulf %223, %227 : vector<2x128xf32>
    %230 = arith.addf %228, %229 : vector<2x128xf32>
    %231 = math.tanh %230 : vector<2x128xf32>
    %232 = arith.mulf %225, %231 : vector<2x128xf32>
    %233 = arith.truncf %232 : vector<2x128xf32> to vector<2x128xbf16>
    %c0_97 = arith.constant 0 : index
    %c0_98 = arith.constant 0 : index
    %234 = vector.load %arg6[%c0_97, %c0_98] : memref<128x16xbf16, #tpu.memory_space<vmem>>, vector<128x16xbf16>
    %cst_99 = arith.constant dense<0.000000e+00> : vector<2x16xf32>
    %235 = tpu.matmul %233, %234, %cst_99 {dimension_numbers = #tpu.dot_dimension_numbers<[1], [0], [0], [1], [0, 0, 1, 1], [], []>} : vector<2x128xbf16>, vector<128x16xbf16>, vector<2x16xf32> -> vector<2x16xf32>
    %c0_100 = arith.constant 0 : index
    %c0_101 = arith.constant 0 : index
    %236 = vector.load %arg7[%c0_100, %c0_101] : memref<1x16xf32, #tpu.memory_space<vmem>>, vector<1x16xf32>
    %237 = vector.broadcast %236 : vector<1x16xf32> to vector<2x16xf32>
    %238 = arith.addf %235, %237 : vector<2x16xf32>
    %c0_102 = arith.constant 0 : index
    %c3_103 = arith.constant 3 : index
    %c0_104 = arith.constant 0 : index
    %239 = vector.load %arg8[%c0_102, %c3_103, %c0_104] : memref<2x8x16xf32, #tpu.memory_space<vmem>>, vector<2x1x16xf32>
    %240 = vector.shape_cast %239 : vector<2x1x16xf32> to vector<2x16xf32>
    %241 = vector.shape_cast %238 : vector<2x16xf32> to vector<2x1x16xf32>
    tpu.vector_store %arg8[%c0_102, %c3_103, %c0_104], %241 {strides = array<i32>} : memref<2x8x16xf32, #tpu.memory_space<vmem>>, vector<2x1x16xf32>,
    %c0_105 = arith.constant 0 : index
    %c4 = arith.constant 4 : index
    %c0_106 = arith.constant 0 : index
    %242 = vector.load %arg9[%c0_105, %c4, %c0_106] : memref<2x8x512xf32, #tpu.memory_space<vmem>>, vector<2x1x512xf32>
    %243 = vector.shape_cast %242 : vector<2x1x512xf32> to vector<2x512xf32>
    %244 = arith.truncf %209 : vector<2x128xf32> to vector<2x128xbf16>
    %c0_107 = arith.constant 0 : index
    %c0_108 = arith.constant 0 : index
    %245 = vector.load %arg3[%c0_107, %c0_108] : memref<128x512xbf16, #tpu.memory_space<vmem>>, vector<128x512xbf16>
    %cst_109 = arith.constant dense<0.000000e+00> : vector<2x512xf32>
    %246 = tpu.matmul %244, %245, %cst_109 {dimension_numbers = #tpu.dot_dimension_numbers<[1], [0], [0], [1], [0, 0, 1, 1], [], []>} : vector<2x128xbf16>, vector<128x512xbf16>, vector<2x512xf32> -> vector<2x512xf32>
    %247 = arith.addf %243, %246 : vector<2x512xf32>
    %248 = vector.extract_strided_slice %247 {offsets = [0, 0], sizes = [2, 384], strides = [1, 1]} : vector<2x512xf32> to vector<2x384xf32>
    %249 = arith.negf %248 : vector<2x384xf32>
    %250 = math.exp %249 : vector<2x384xf32>
    %cst_110 = arith.constant 1.000000e+00 : f32
    %251 = vector.broadcast %cst_110 : f32 to vector<2x384xf32>
    %252 = arith.addf %251, %250 : vector<2x384xf32>
    %253 = arith.divf %251, %252 : vector<2x384xf32>
    %254 = vector.extract_strided_slice %253 {offsets = [0, 0], sizes = [2, 128], strides = [1, 1]} : vector<2x384xf32> to vector<2x128xf32>
    %255 = vector.extract_strided_slice %253 {offsets = [0, 128], sizes = [2, 128], strides = [1, 1]} : vector<2x384xf32> to vector<2x128xf32>
    %256 = vector.extract_strided_slice %253 {offsets = [0, 256], sizes = [2, 128], strides = [1, 1]} : vector<2x384xf32> to vector<2x128xf32>
    %257 = vector.extract_strided_slice %247 {offsets = [0, 384], sizes = [2, 128], strides = [1, 1]} : vector<2x512xf32> to vector<2x128xf32>
    %258 = math.tanh %257 : vector<2x128xf32>
    %259 = arith.mulf %255, %207 : vector<2x128xf32>
    %260 = arith.mulf %254, %258 : vector<2x128xf32>
    %261 = arith.addf %259, %260 : vector<2x128xf32>
    %262 = math.tanh %261 : vector<2x128xf32>
    %263 = arith.mulf %256, %262 : vector<2x128xf32>
    %264 = tpu.concatenate %263, %232 in 1 : vector<2x128xf32>, vector<2x128xf32> -> vector<2x256xf32>
    %265 = arith.truncf %264 : vector<2x256xf32> to vector<2x256xbf16>
    %c0_111 = arith.constant 0 : index
    %c0_112 = arith.constant 0 : index
    %266 = vector.load %arg4[%c0_111, %c0_112] : memref<256x512xbf16, #tpu.memory_space<vmem>>, vector<256x512xbf16>
    %cst_113 = arith.constant dense<0.000000e+00> : vector<2x512xf32>
    %267 = tpu.matmul %265, %266, %cst_113 {dimension_numbers = #tpu.dot_dimension_numbers<[1], [0], [0], [1], [0, 0, 1, 1], [], []>} : vector<2x256xbf16>, vector<256x512xbf16>, vector<2x512xf32> -> vector<2x512xf32>
    %c0_114 = arith.constant 0 : index
    %c0_115 = arith.constant 0 : index
    %268 = vector.load %arg5[%c0_114, %c0_115] : memref<1x512xf32, #tpu.memory_space<vmem>>, vector<1x512xf32>
    %269 = vector.broadcast %268 : vector<1x512xf32> to vector<2x512xf32>
    %270 = arith.addf %267, %269 : vector<2x512xf32>
    %271 = vector.extract_strided_slice %270 {offsets = [0, 0], sizes = [2, 384], strides = [1, 1]} : vector<2x512xf32> to vector<2x384xf32>
    %272 = arith.negf %271 : vector<2x384xf32>
    %273 = math.exp %272 : vector<2x384xf32>
    %cst_116 = arith.constant 1.000000e+00 : f32
    %274 = vector.broadcast %cst_116 : f32 to vector<2x384xf32>
    %275 = arith.addf %274, %273 : vector<2x384xf32>
    %276 = arith.divf %274, %275 : vector<2x384xf32>
    %277 = vector.extract_strided_slice %276 {offsets = [0, 0], sizes = [2, 128], strides = [1, 1]} : vector<2x384xf32> to vector<2x128xf32>
    %278 = vector.extract_strided_slice %276 {offsets = [0, 128], sizes = [2, 128], strides = [1, 1]} : vector<2x384xf32> to vector<2x128xf32>
    %279 = vector.extract_strided_slice %276 {offsets = [0, 256], sizes = [2, 128], strides = [1, 1]} : vector<2x384xf32> to vector<2x128xf32>
    %280 = vector.extract_strided_slice %270 {offsets = [0, 384], sizes = [2, 128], strides = [1, 1]} : vector<2x512xf32> to vector<2x128xf32>
    %281 = math.tanh %280 : vector<2x128xf32>
    %282 = arith.mulf %278, %230 : vector<2x128xf32>
    %283 = arith.mulf %277, %281 : vector<2x128xf32>
    %284 = arith.addf %282, %283 : vector<2x128xf32>
    %285 = math.tanh %284 : vector<2x128xf32>
    %286 = arith.mulf %279, %285 : vector<2x128xf32>
    %287 = arith.truncf %286 : vector<2x128xf32> to vector<2x128xbf16>
    %c0_117 = arith.constant 0 : index
    %c0_118 = arith.constant 0 : index
    %288 = vector.load %arg6[%c0_117, %c0_118] : memref<128x16xbf16, #tpu.memory_space<vmem>>, vector<128x16xbf16>
    %cst_119 = arith.constant dense<0.000000e+00> : vector<2x16xf32>
    %289 = tpu.matmul %287, %288, %cst_119 {dimension_numbers = #tpu.dot_dimension_numbers<[1], [0], [0], [1], [0, 0, 1, 1], [], []>} : vector<2x128xbf16>, vector<128x16xbf16>, vector<2x16xf32> -> vector<2x16xf32>
    %c0_120 = arith.constant 0 : index
    %c0_121 = arith.constant 0 : index
    %290 = vector.load %arg7[%c0_120, %c0_121] : memref<1x16xf32, #tpu.memory_space<vmem>>, vector<1x16xf32>
    %291 = vector.broadcast %290 : vector<1x16xf32> to vector<2x16xf32>
    %292 = arith.addf %289, %291 : vector<2x16xf32>
    %c0_122 = arith.constant 0 : index
    %c4_123 = arith.constant 4 : index
    %c0_124 = arith.constant 0 : index
    %293 = vector.load %arg8[%c0_122, %c4_123, %c0_124] : memref<2x8x16xf32, #tpu.memory_space<vmem>>, vector<2x1x16xf32>
    %294 = vector.shape_cast %293 : vector<2x1x16xf32> to vector<2x16xf32>
    %295 = vector.shape_cast %292 : vector<2x16xf32> to vector<2x1x16xf32>
    tpu.vector_store %arg8[%c0_122, %c4_123, %c0_124], %295 {strides = array<i32>} : memref<2x8x16xf32, #tpu.memory_space<vmem>>, vector<2x1x16xf32>,
    %c0_125 = arith.constant 0 : index
    %c5 = arith.constant 5 : index
    %c0_126 = arith.constant 0 : index
    %296 = vector.load %arg9[%c0_125, %c5, %c0_126] : memref<2x8x512xf32, #tpu.memory_space<vmem>>, vector<2x1x512xf32>
    %297 = vector.shape_cast %296 : vector<2x1x512xf32> to vector<2x512xf32>
    %298 = arith.truncf %263 : vector<2x128xf32> to vector<2x128xbf16>
    %c0_127 = arith.constant 0 : index
    %c0_128 = arith.constant 0 : index
    %299 = vector.load %arg3[%c0_127, %c0_128] : memref<128x512xbf16, #tpu.memory_space<vmem>>, vector<128x512xbf16>
    %cst_129 = arith.constant dense<0.000000e+00> : vector<2x512xf32>
    %300 = tpu.matmul %298, %299, %cst_129 {dimension_numbers = #tpu.dot_dimension_numbers<[1], [0], [0], [1], [0, 0, 1, 1], [], []>} : vector<2x128xbf16>, vector<128x512xbf16>, vector<2x512xf32> -> vector<2x512xf32>
    %301 = arith.addf %297, %300 : vector<2x512xf32>
    %302 = vector.extract_strided_slice %301 {offsets = [0, 0], sizes = [2, 384], strides = [1, 1]} : vector<2x512xf32> to vector<2x384xf32>
    %303 = arith.negf %302 : vector<2x384xf32>
    %304 = math.exp %303 : vector<2x384xf32>
    %cst_130 = arith.constant 1.000000e+00 : f32
    %305 = vector.broadcast %cst_130 : f32 to vector<2x384xf32>
    %306 = arith.addf %305, %304 : vector<2x384xf32>
    %307 = arith.divf %305, %306 : vector<2x384xf32>
    %308 = vector.extract_strided_slice %307 {offsets = [0, 0], sizes = [2, 128], strides = [1, 1]} : vector<2x384xf32> to vector<2x128xf32>
    %309 = vector.extract_strided_slice %307 {offsets = [0, 128], sizes = [2, 128], strides = [1, 1]} : vector<2x384xf32> to vector<2x128xf32>
    %310 = vector.extract_strided_slice %307 {offsets = [0, 256], sizes = [2, 128], strides = [1, 1]} : vector<2x384xf32> to vector<2x128xf32>
    %311 = vector.extract_strided_slice %301 {offsets = [0, 384], sizes = [2, 128], strides = [1, 1]} : vector<2x512xf32> to vector<2x128xf32>
    %312 = math.tanh %311 : vector<2x128xf32>
    %313 = arith.mulf %309, %261 : vector<2x128xf32>
    %314 = arith.mulf %308, %312 : vector<2x128xf32>
    %315 = arith.addf %313, %314 : vector<2x128xf32>
    %316 = math.tanh %315 : vector<2x128xf32>
    %317 = arith.mulf %310, %316 : vector<2x128xf32>
    %318 = tpu.concatenate %317, %286 in 1 : vector<2x128xf32>, vector<2x128xf32> -> vector<2x256xf32>
    %319 = arith.truncf %318 : vector<2x256xf32> to vector<2x256xbf16>
    %c0_131 = arith.constant 0 : index
    %c0_132 = arith.constant 0 : index
    %320 = vector.load %arg4[%c0_131, %c0_132] : memref<256x512xbf16, #tpu.memory_space<vmem>>, vector<256x512xbf16>
    %cst_133 = arith.constant dense<0.000000e+00> : vector<2x512xf32>
    %321 = tpu.matmul %319, %320, %cst_133 {dimension_numbers = #tpu.dot_dimension_numbers<[1], [0], [0], [1], [0, 0, 1, 1], [], []>} : vector<2x256xbf16>, vector<256x512xbf16>, vector<2x512xf32> -> vector<2x512xf32>
    %c0_134 = arith.constant 0 : index
    %c0_135 = arith.constant 0 : index
    %322 = vector.load %arg5[%c0_134, %c0_135] : memref<1x512xf32, #tpu.memory_space<vmem>>, vector<1x512xf32>
    %323 = vector.broadcast %322 : vector<1x512xf32> to vector<2x512xf32>
    %324 = arith.addf %321, %323 : vector<2x512xf32>
    %325 = vector.extract_strided_slice %324 {offsets = [0, 0], sizes = [2, 384], strides = [1, 1]} : vector<2x512xf32> to vector<2x384xf32>
    %326 = arith.negf %325 : vector<2x384xf32>
    %327 = math.exp %326 : vector<2x384xf32>
    %cst_136 = arith.constant 1.000000e+00 : f32
    %328 = vector.broadcast %cst_136 : f32 to vector<2x384xf32>
    %329 = arith.addf %328, %327 : vector<2x384xf32>
    %330 = arith.divf %328, %329 : vector<2x384xf32>
    %331 = vector.extract_strided_slice %330 {offsets = [0, 0], sizes = [2, 128], strides = [1, 1]} : vector<2x384xf32> to vector<2x128xf32>
    %332 = vector.extract_strided_slice %330 {offsets = [0, 128], sizes = [2, 128], strides = [1, 1]} : vector<2x384xf32> to vector<2x128xf32>
    %333 = vector.extract_strided_slice %330 {offsets = [0, 256], sizes = [2, 128], strides = [1, 1]} : vector<2x384xf32> to vector<2x128xf32>
    %334 = vector.extract_strided_slice %324 {offsets = [0, 384], sizes = [2, 128], strides = [1, 1]} : vector<2x512xf32> to vector<2x128xf32>
    %335 = math.tanh %334 : vector<2x128xf32>
    %336 = arith.mulf %332, %284 : vector<2x128xf32>
    %337 = arith.mulf %331, %335 : vector<2x128xf32>
    %338 = arith.addf %336, %337 : vector<2x128xf32>
    %339 = math.tanh %338 : vector<2x128xf32>
    %340 = arith.mulf %333, %339 : vector<2x128xf32>
    %341 = arith.truncf %340 : vector<2x128xf32> to vector<2x128xbf16>
    %c0_137 = arith.constant 0 : index
    %c0_138 = arith.constant 0 : index
    %342 = vector.load %arg6[%c0_137, %c0_138] : memref<128x16xbf16, #tpu.memory_space<vmem>>, vector<128x16xbf16>
    %cst_139 = arith.constant dense<0.000000e+00> : vector<2x16xf32>
    %343 = tpu.matmul %341, %342, %cst_139 {dimension_numbers = #tpu.dot_dimension_numbers<[1], [0], [0], [1], [0, 0, 1, 1], [], []>} : vector<2x128xbf16>, vector<128x16xbf16>, vector<2x16xf32> -> vector<2x16xf32>
    %c0_140 = arith.constant 0 : index
    %c0_141 = arith.constant 0 : index
    %344 = vector.load %arg7[%c0_140, %c0_141] : memref<1x16xf32, #tpu.memory_space<vmem>>, vector<1x16xf32>
    %345 = vector.broadcast %344 : vector<1x16xf32> to vector<2x16xf32>
    %346 = arith.addf %343, %345 : vector<2x16xf32>
    %c0_142 = arith.constant 0 : index
    %c5_143 = arith.constant 5 : index
    %c0_144 = arith.constant 0 : index
    %347 = vector.load %arg8[%c0_142, %c5_143, %c0_144] : memref<2x8x16xf32, #tpu.memory_space<vmem>>, vector<2x1x16xf32>
    %348 = vector.shape_cast %347 : vector<2x1x16xf32> to vector<2x16xf32>
    %349 = vector.shape_cast %346 : vector<2x16xf32> to vector<2x1x16xf32>
    tpu.vector_store %arg8[%c0_142, %c5_143, %c0_144], %349 {strides = array<i32>} : memref<2x8x16xf32, #tpu.memory_space<vmem>>, vector<2x1x16xf32>,
    %c0_145 = arith.constant 0 : index
    %c6 = arith.constant 6 : index
    %c0_146 = arith.constant 0 : index
    %350 = vector.load %arg9[%c0_145, %c6, %c0_146] : memref<2x8x512xf32, #tpu.memory_space<vmem>>, vector<2x1x512xf32>
    %351 = vector.shape_cast %350 : vector<2x1x512xf32> to vector<2x512xf32>
    %352 = arith.truncf %317 : vector<2x128xf32> to vector<2x128xbf16>
    %c0_147 = arith.constant 0 : index
    %c0_148 = arith.constant 0 : index
    %353 = vector.load %arg3[%c0_147, %c0_148] : memref<128x512xbf16, #tpu.memory_space<vmem>>, vector<128x512xbf16>
    %cst_149 = arith.constant dense<0.000000e+00> : vector<2x512xf32>
    %354 = tpu.matmul %352, %353, %cst_149 {dimension_numbers = #tpu.dot_dimension_numbers<[1], [0], [0], [1], [0, 0, 1, 1], [], []>} : vector<2x128xbf16>, vector<128x512xbf16>, vector<2x512xf32> -> vector<2x512xf32>
    %355 = arith.addf %351, %354 : vector<2x512xf32>
    %356 = vector.extract_strided_slice %355 {offsets = [0, 0], sizes = [2, 384], strides = [1, 1]} : vector<2x512xf32> to vector<2x384xf32>
    %357 = arith.negf %356 : vector<2x384xf32>
    %358 = math.exp %357 : vector<2x384xf32>
    %cst_150 = arith.constant 1.000000e+00 : f32
    %359 = vector.broadcast %cst_150 : f32 to vector<2x384xf32>
    %360 = arith.addf %359, %358 : vector<2x384xf32>
    %361 = arith.divf %359, %360 : vector<2x384xf32>
    %362 = vector.extract_strided_slice %361 {offsets = [0, 0], sizes = [2, 128], strides = [1, 1]} : vector<2x384xf32> to vector<2x128xf32>
    %363 = vector.extract_strided_slice %361 {offsets = [0, 128], sizes = [2, 128], strides = [1, 1]} : vector<2x384xf32> to vector<2x128xf32>
    %364 = vector.extract_strided_slice %361 {offsets = [0, 256], sizes = [2, 128], strides = [1, 1]} : vector<2x384xf32> to vector<2x128xf32>
    %365 = vector.extract_strided_slice %355 {offsets = [0, 384], sizes = [2, 128], strides = [1, 1]} : vector<2x512xf32> to vector<2x128xf32>
    %366 = math.tanh %365 : vector<2x128xf32>
    %367 = arith.mulf %363, %315 : vector<2x128xf32>
    %368 = arith.mulf %362, %366 : vector<2x128xf32>
    %369 = arith.addf %367, %368 : vector<2x128xf32>
    %370 = math.tanh %369 : vector<2x128xf32>
    %371 = arith.mulf %364, %370 : vector<2x128xf32>
    %372 = tpu.concatenate %371, %340 in 1 : vector<2x128xf32>, vector<2x128xf32> -> vector<2x256xf32>
    %373 = arith.truncf %372 : vector<2x256xf32> to vector<2x256xbf16>
    %c0_151 = arith.constant 0 : index
    %c0_152 = arith.constant 0 : index
    %374 = vector.load %arg4[%c0_151, %c0_152] : memref<256x512xbf16, #tpu.memory_space<vmem>>, vector<256x512xbf16>
    %cst_153 = arith.constant dense<0.000000e+00> : vector<2x512xf32>
    %375 = tpu.matmul %373, %374, %cst_153 {dimension_numbers = #tpu.dot_dimension_numbers<[1], [0], [0], [1], [0, 0, 1, 1], [], []>} : vector<2x256xbf16>, vector<256x512xbf16>, vector<2x512xf32> -> vector<2x512xf32>
    %c0_154 = arith.constant 0 : index
    %c0_155 = arith.constant 0 : index
    %376 = vector.load %arg5[%c0_154, %c0_155] : memref<1x512xf32, #tpu.memory_space<vmem>>, vector<1x512xf32>
    %377 = vector.broadcast %376 : vector<1x512xf32> to vector<2x512xf32>
    %378 = arith.addf %375, %377 : vector<2x512xf32>
    %379 = vector.extract_strided_slice %378 {offsets = [0, 0], sizes = [2, 384], strides = [1, 1]} : vector<2x512xf32> to vector<2x384xf32>
    %380 = arith.negf %379 : vector<2x384xf32>
    %381 = math.exp %380 : vector<2x384xf32>
    %cst_156 = arith.constant 1.000000e+00 : f32
    %382 = vector.broadcast %cst_156 : f32 to vector<2x384xf32>
    %383 = arith.addf %382, %381 : vector<2x384xf32>
    %384 = arith.divf %382, %383 : vector<2x384xf32>
    %385 = vector.extract_strided_slice %384 {offsets = [0, 0], sizes = [2, 128], strides = [1, 1]} : vector<2x384xf32> to vector<2x128xf32>
    %386 = vector.extract_strided_slice %384 {offsets = [0, 128], sizes = [2, 128], strides = [1, 1]} : vector<2x384xf32> to vector<2x128xf32>
    %387 = vector.extract_strided_slice %384 {offsets = [0, 256], sizes = [2, 128], strides = [1, 1]} : vector<2x384xf32> to vector<2x128xf32>
    %388 = vector.extract_strided_slice %378 {offsets = [0, 384], sizes = [2, 128], strides = [1, 1]} : vector<2x512xf32> to vector<2x128xf32>
    %389 = math.tanh %388 : vector<2x128xf32>
    %390 = arith.mulf %386, %338 : vector<2x128xf32>
    %391 = arith.mulf %385, %389 : vector<2x128xf32>
    %392 = arith.addf %390, %391 : vector<2x128xf32>
    %393 = math.tanh %392 : vector<2x128xf32>
    %394 = arith.mulf %387, %393 : vector<2x128xf32>
    %395 = arith.truncf %394 : vector<2x128xf32> to vector<2x128xbf16>
    %c0_157 = arith.constant 0 : index
    %c0_158 = arith.constant 0 : index
    %396 = vector.load %arg6[%c0_157, %c0_158] : memref<128x16xbf16, #tpu.memory_space<vmem>>, vector<128x16xbf16>
    %cst_159 = arith.constant dense<0.000000e+00> : vector<2x16xf32>
    %397 = tpu.matmul %395, %396, %cst_159 {dimension_numbers = #tpu.dot_dimension_numbers<[1], [0], [0], [1], [0, 0, 1, 1], [], []>} : vector<2x128xbf16>, vector<128x16xbf16>, vector<2x16xf32> -> vector<2x16xf32>
    %c0_160 = arith.constant 0 : index
    %c0_161 = arith.constant 0 : index
    %398 = vector.load %arg7[%c0_160, %c0_161] : memref<1x16xf32, #tpu.memory_space<vmem>>, vector<1x16xf32>
    %399 = vector.broadcast %398 : vector<1x16xf32> to vector<2x16xf32>
    %400 = arith.addf %397, %399 : vector<2x16xf32>
    %c0_162 = arith.constant 0 : index
    %c6_163 = arith.constant 6 : index
    %c0_164 = arith.constant 0 : index
    %401 = vector.load %arg8[%c0_162, %c6_163, %c0_164] : memref<2x8x16xf32, #tpu.memory_space<vmem>>, vector<2x1x16xf32>
    %402 = vector.shape_cast %401 : vector<2x1x16xf32> to vector<2x16xf32>
    %403 = vector.shape_cast %400 : vector<2x16xf32> to vector<2x1x16xf32>
    tpu.vector_store %arg8[%c0_162, %c6_163, %c0_164], %403 {strides = array<i32>} : memref<2x8x16xf32, #tpu.memory_space<vmem>>, vector<2x1x16xf32>,
    %c0_165 = arith.constant 0 : index
    %c7 = arith.constant 7 : index
    %c0_166 = arith.constant 0 : index
    %404 = vector.load %arg9[%c0_165, %c7, %c0_166] : memref<2x8x512xf32, #tpu.memory_space<vmem>>, vector<2x1x512xf32>
    %405 = vector.shape_cast %404 : vector<2x1x512xf32> to vector<2x512xf32>
    %406 = arith.truncf %371 : vector<2x128xf32> to vector<2x128xbf16>
    %c0_167 = arith.constant 0 : index
    %c0_168 = arith.constant 0 : index
    %407 = vector.load %arg3[%c0_167, %c0_168] : memref<128x512xbf16, #tpu.memory_space<vmem>>, vector<128x512xbf16>
    %cst_169 = arith.constant dense<0.000000e+00> : vector<2x512xf32>
    %408 = tpu.matmul %406, %407, %cst_169 {dimension_numbers = #tpu.dot_dimension_numbers<[1], [0], [0], [1], [0, 0, 1, 1], [], []>} : vector<2x128xbf16>, vector<128x512xbf16>, vector<2x512xf32> -> vector<2x512xf32>
    %409 = arith.addf %405, %408 : vector<2x512xf32>
    %410 = vector.extract_strided_slice %409 {offsets = [0, 0], sizes = [2, 384], strides = [1, 1]} : vector<2x512xf32> to vector<2x384xf32>
    %411 = arith.negf %410 : vector<2x384xf32>
    %412 = math.exp %411 : vector<2x384xf32>
    %cst_170 = arith.constant 1.000000e+00 : f32
    %413 = vector.broadcast %cst_170 : f32 to vector<2x384xf32>
    %414 = arith.addf %413, %412 : vector<2x384xf32>
    %415 = arith.divf %413, %414 : vector<2x384xf32>
    %416 = vector.extract_strided_slice %415 {offsets = [0, 0], sizes = [2, 128], strides = [1, 1]} : vector<2x384xf32> to vector<2x128xf32>
    %417 = vector.extract_strided_slice %415 {offsets = [0, 128], sizes = [2, 128], strides = [1, 1]} : vector<2x384xf32> to vector<2x128xf32>
    %418 = vector.extract_strided_slice %415 {offsets = [0, 256], sizes = [2, 128], strides = [1, 1]} : vector<2x384xf32> to vector<2x128xf32>
    %419 = vector.extract_strided_slice %409 {offsets = [0, 384], sizes = [2, 128], strides = [1, 1]} : vector<2x512xf32> to vector<2x128xf32>
    %420 = math.tanh %419 : vector<2x128xf32>
    %421 = arith.mulf %417, %369 : vector<2x128xf32>
    %422 = arith.mulf %416, %420 : vector<2x128xf32>
    %423 = arith.addf %421, %422 : vector<2x128xf32>
    %424 = math.tanh %423 : vector<2x128xf32>
    %425 = arith.mulf %418, %424 : vector<2x128xf32>
    %426 = tpu.concatenate %425, %394 in 1 : vector<2x128xf32>, vector<2x128xf32> -> vector<2x256xf32>
    %427 = arith.truncf %426 : vector<2x256xf32> to vector<2x256xbf16>
    %c0_171 = arith.constant 0 : index
    %c0_172 = arith.constant 0 : index
    %428 = vector.load %arg4[%c0_171, %c0_172] : memref<256x512xbf16, #tpu.memory_space<vmem>>, vector<256x512xbf16>
    %cst_173 = arith.constant dense<0.000000e+00> : vector<2x512xf32>
    %429 = tpu.matmul %427, %428, %cst_173 {dimension_numbers = #tpu.dot_dimension_numbers<[1], [0], [0], [1], [0, 0, 1, 1], [], []>} : vector<2x256xbf16>, vector<256x512xbf16>, vector<2x512xf32> -> vector<2x512xf32>
    %c0_174 = arith.constant 0 : index
    %c0_175 = arith.constant 0 : index
    %430 = vector.load %arg5[%c0_174, %c0_175] : memref<1x512xf32, #tpu.memory_space<vmem>>, vector<1x512xf32>
    %431 = vector.broadcast %430 : vector<1x512xf32> to vector<2x512xf32>
    %432 = arith.addf %429, %431 : vector<2x512xf32>
    %433 = vector.extract_strided_slice %432 {offsets = [0, 0], sizes = [2, 384], strides = [1, 1]} : vector<2x512xf32> to vector<2x384xf32>
    %434 = arith.negf %433 : vector<2x384xf32>
    %435 = math.exp %434 : vector<2x384xf32>
    %cst_176 = arith.constant 1.000000e+00 : f32
    %436 = vector.broadcast %cst_176 : f32 to vector<2x384xf32>
    %437 = arith.addf %436, %435 : vector<2x384xf32>
    %438 = arith.divf %436, %437 : vector<2x384xf32>
    %439 = vector.extract_strided_slice %438 {offsets = [0, 0], sizes = [2, 128], strides = [1, 1]} : vector<2x384xf32> to vector<2x128xf32>
    %440 = vector.extract_strided_slice %438 {offsets = [0, 128], sizes = [2, 128], strides = [1, 1]} : vector<2x384xf32> to vector<2x128xf32>
    %441 = vector.extract_strided_slice %438 {offsets = [0, 256], sizes = [2, 128], strides = [1, 1]} : vector<2x384xf32> to vector<2x128xf32>
    %442 = vector.extract_strided_slice %432 {offsets = [0, 384], sizes = [2, 128], strides = [1, 1]} : vector<2x512xf32> to vector<2x128xf32>
    %443 = math.tanh %442 : vector<2x128xf32>
    %444 = arith.mulf %440, %392 : vector<2x128xf32>
    %445 = arith.mulf %439, %443 : vector<2x128xf32>
    %446 = arith.addf %444, %445 : vector<2x128xf32>
    %447 = math.tanh %446 : vector<2x128xf32>
    %448 = arith.mulf %441, %447 : vector<2x128xf32>
    %449 = arith.truncf %448 : vector<2x128xf32> to vector<2x128xbf16>
    %c0_177 = arith.constant 0 : index
    %c0_178 = arith.constant 0 : index
    %450 = vector.load %arg6[%c0_177, %c0_178] : memref<128x16xbf16, #tpu.memory_space<vmem>>, vector<128x16xbf16>
    %cst_179 = arith.constant dense<0.000000e+00> : vector<2x16xf32>
    %451 = tpu.matmul %449, %450, %cst_179 {dimension_numbers = #tpu.dot_dimension_numbers<[1], [0], [0], [1], [0, 0, 1, 1], [], []>} : vector<2x128xbf16>, vector<128x16xbf16>, vector<2x16xf32> -> vector<2x16xf32>
    %c0_180 = arith.constant 0 : index
    %c0_181 = arith.constant 0 : index
    %452 = vector.load %arg7[%c0_180, %c0_181] : memref<1x16xf32, #tpu.memory_space<vmem>>, vector<1x16xf32>
    %453 = vector.broadcast %452 : vector<1x16xf32> to vector<2x16xf32>
    %454 = arith.addf %451, %453 : vector<2x16xf32>
    %c0_182 = arith.constant 0 : index
    %c7_183 = arith.constant 7 : index
    %c0_184 = arith.constant 0 : index
    %455 = vector.load %arg8[%c0_182, %c7_183, %c0_184] : memref<2x8x16xf32, #tpu.memory_space<vmem>>, vector<2x1x16xf32>
    %456 = vector.shape_cast %455 : vector<2x1x16xf32> to vector<2x16xf32>
    %457 = vector.shape_cast %454 : vector<2x16xf32> to vector<2x1x16xf32>
    tpu.vector_store %arg8[%c0_182, %c7_183, %c0_184], %457 {strides = array<i32>} : memref<2x8x16xf32, #tpu.memory_space<vmem>>, vector<2x1x16xf32>,
    return
  }
}

</mosaic_0001>

<llo_original>
// kernel: tpu_custom_call.1
$region0: #{tpu_custom_call.1}
  #allocation0 [shape = 'u32[]', space=smem, size = 0x4, offset = 0x4, fixed_abs, tag = 'smem constant byte address 0x4 - core index']
  #allocation1 [shape = 'u32[144,128]{1,0:T(1,128)}', space=vmem, size = 0x12000, scoped, tag = 'internal scratch']
  #allocation2 [shape = 'f32[2,8,512]{2,1,0:T(8,128)}', space=vmem, size = 0x8000, scoped, tag = 'scratch operand']
  %s0 = inlined_call_operand.vmem [shape: f32[2,8,16], index: 0, kind: input, shape index: {}]
  %s1 = inlined_call_operand.vmem [shape: bf16[16,512], index: 1, kind: input, shape index: {}]
  %s2 = inlined_call_operand.vmem [shape: f32[1,512], index: 2, kind: input, shape index: {}]
  %s3 = inlined_call_operand.hbm [shape: bf16[128,512], index: 3, kind: input, shape index: {}]
  %s4 = inlined_call_operand.hbm [shape: bf16[256,512], index: 4, kind: input, shape index: {}]
  %s5 = inlined_call_operand.vmem [shape: f32[1,512], index: 5, kind: input, shape index: {}]
  %s6 = inlined_call_operand.vmem [shape: bf16[128,16], index: 6, kind: input, shape index: {}]
  %s7 = inlined_call_operand.vmem [shape: f32[1,16], index: 7, kind: input, shape index: {}]
  %s8 = inlined_call_operand.hbm [shape: f32[2,8,16], index: 8, kind: output, shape index: {}]
  %s9 = sld [smem:[#allocation0]]
  $region50: #{tpu_custom_call.1} parent=0
    _
  %s11 = ssub.s32 1, %s9
  %s12 = scalar_select 0, %s11, %s9
  $region1: #{tpu_custom_call.1} parent=0
    #allocation3 [shape = 'u8[131072]{0}', space=vmem, size = 0x20000, scoped, tag = 'input window, operand 3, single buffered']
    #allocation4 [shape = 's32[1]{0}', space=sflag, size = 0x4, scoped, tag = 'scoped memory for tpu_custom_call.1']
    #allocation5 [shape = 's32[1]{0}', space=sflag, size = 0x4, scoped, tag = 'scoped memory for tpu_custom_call.1']
    #allocation6 [shape = 'u8[262144]{0}', space=vmem, size = 0x40000, scoped, tag = 'input window, operand 4, single buffered']
    #allocation7 [shape = 's32[1]{0}', space=sflag, size = 0x4, scoped, tag = 'scoped memory for tpu_custom_call.1']
    #allocation8 [shape = 'u8[8192]{0}', space=vmem, size = 0x2000, scoped, tag = 'output window, operand 0, single buffered']
    %13 = vsyncpa [#allocation4], 0
    %14 = vsyncpa [#allocation7], 0
    %15 = vsyncpa [#allocation5], 0
    // Predicated region
    $region2: #{tpu_custom_call.1} parent=1 // pred_check
      _
    $region3: #{tpu_custom_call.1} parent=1 // pred_check_branch
      %17 = sbr.rel (0) target = $region5
    $region4: #{tpu_custom_call.1} parent=1 // pred_region
      _
    $region5: #{tpu_custom_call.1} parent=1 // pred_fallthru
      _
    // Predicated region
    $region6: #{tpu_custom_call.1} parent=1 // pred_check
      _
    $region7: #{tpu_custom_call.1} parent=1 // pred_check_branch
      %19 = sbr.rel (0) target = $region9
    $region8: #{tpu_custom_call.1} parent=1 // pred_region
      _
    $region9: #{tpu_custom_call.1} parent=1 // pred_fallthru
      _
    // Predicated region
    $region10: #{tpu_custom_call.1} parent=1 // pred_check
      _
    $region11: #{tpu_custom_call.1} parent=1 // pred_check_branch
      %21 = sbr.rel (0) target = $region13
    $region12: #{tpu_custom_call.1} parent=1 // pred_region
      _
    $region13: #{tpu_custom_call.1} parent=1 // pred_fallthru
      _
    // Predicated region
    $region14: #{tpu_custom_call.1} parent=1 // pred_check
      _
    $region15: #{tpu_custom_call.1} parent=1 // pred_check_branch
      %23 = sbr.rel (0) target = $region17
    $region16: #{tpu_custom_call.1} parent=1 // pred_region
      %s25 = ssub.s32 4096, 4096
      %26 = vsyncadd [#allocation4], %s25
      %s27 = sshll.u32 [#allocation3], 4
      %s28 = int_to_ptr.vmem [resolvable:$true] %s27
      %33 = dma.hbm_to_vmem [thread:$0]  %s3, 4096, %s28, [#allocation4], 256, 256, 16
    $region17: #{tpu_custom_call.1} parent=1 // pred_fallthru
      _
    // Predicated region
    $region18: #{tpu_custom_call.1} parent=1 // pred_check
      _
    $region19: #{tpu_custom_call.1} parent=1 // pred_check_branch
      %35 = sbr.rel (0) target = $region21
    $region20: #{tpu_custom_call.1} parent=1 // pred_region
      %s37 = ssub.s32 8192, 8192
      %38 = vsyncadd [#allocation7], %s37
      %s39 = sshll.u32 [#allocation6], 4
      %s40 = int_to_ptr.vmem [resolvable:$true] %s39
      %45 = dma.hbm_to_vmem [thread:$0]  %s4, 8192, %s40, [#allocation7], 256, 256, 16
    $region21: #{tpu_custom_call.1} parent=1 // pred_fallthru
      _
    // Predicated region
    $region22: #{tpu_custom_call.1} parent=1 // pred_check
      _
    $region23: #{tpu_custom_call.1} parent=1 // pred_check_branch
      %47 = sbr.rel (0) target = $region25
    $region24: #{tpu_custom_call.1} parent=1 // pred_region
      _
    $region25: #{tpu_custom_call.1} parent=1 // pred_fallthru
      _
    // Predicated region
    $region26: #{tpu_custom_call.1} parent=1 // pred_check
      _
    $region27: #{tpu_custom_call.1} parent=1 // pred_check_branch
      %49 = sbr.rel (0) target = $region29
    $region28: #{tpu_custom_call.1} parent=1 // pred_region
      _
    $region29: #{tpu_custom_call.1} parent=1 // pred_fallthru
      _
    // Predicated region
    $region30: #{tpu_custom_call.1} parent=1 // pred_check
      _
    $region31: #{tpu_custom_call.1} parent=1 // pred_check_branch
      %51 = sbr.rel (0) target = $region33
    $region32: #{tpu_custom_call.1} parent=1 // pred_region
      _
    $region33: #{tpu_custom_call.1} parent=1 // pred_fallthru
      _
    // Predicated region
    $region34: #{tpu_custom_call.1} parent=1 // pred_check
      _
    $region35: #{tpu_custom_call.1} parent=1 // pred_check_branch
      %53 = sbr.rel (0) target = $region37
    $region36: #{tpu_custom_call.1} parent=1 // pred_region
      %54 = dma.done [#allocation4], 4096
    $region37: #{tpu_custom_call.1} parent=1 // pred_fallthru
      _
    // Predicated region
    $region38: #{tpu_custom_call.1} parent=1 // pred_check
      _
    $region39: #{tpu_custom_call.1} parent=1 // pred_check_branch
      %56 = sbr.rel (0) target = $region41
    $region40: #{tpu_custom_call.1} parent=1 // pred_region
      %57 = dma.done [#allocation7], 8192
    $region41: #{tpu_custom_call.1} parent=1 // pred_fallthru
      _
    %v59 = vld [vmem:[%s0] sm:$0xff]
    %v60 = vpack.c.bf16 %v59, %v59
    %v61 = vld [vmem:[%s1] sm:$0xff]
    %v62 = vld [vmem:[%s1 + $0x8] sm:$0xff]
    %v63 = vld [vmem:[%s1 + $0x10] sm:$0xff]
    %v64 = vld [vmem:[%s1 + $0x18] sm:$0xff]
    %v65 = vld [vmem:[%s2] sm:$0xf]
    %v67 = vlaneseq
    %v68 = vshrl.u32 %v67, 7
    %v69 = vsub.s32 0, %v68
    %v70 = vrot.slane %v65, %v69
    %v71 = vlaneseq
    %v72 = vshrl.u32 %v71, 7
    %v73 = vsub.s32 1, %v72
    %v74 = vrot.slane %v65, %v73
    %v75 = vlaneseq
    %v76 = vshrl.u32 %v75, 7
    %v77 = vsub.s32 2, %v76
    %v78 = vrot.slane %v65, %v77
    %v79 = vlaneseq
    %v80 = vshrl.u32 %v79, 7
    %v81 = vsub.s32 3, %v80
    %v82 = vrot.slane %v65, %v81
    %v91 = vunpack.c.l.b16 %v61
    %v92 = vunpack.c.h.b16 %v61
    %v93 = vunpack.c.l.b16 %v62
    %v94 = vunpack.c.h.b16 %v62
    %v95 = vunpack.c.l.b16 %v63
    %v96 = vunpack.c.h.b16 %v63
    %v97 = vunpack.c.l.b16 %v64
    %v98 = vunpack.c.h.b16 %v64
    %v99 = vpack.c.b16 %v95, %v91
    %v100 = vpack.c.b16 %v96, %v92
    %v101 = vpack.c.b16 %v97, %v93
    %v102 = vpack.c.b16 %v98, %v94
    %vm107 = vcmask 130048
    %v109 = vsel %vm107, %v60, 0
    %111 = vmatprep.subr.bf16.mxu0 0
    %112 = vmatpush1.bf16.msra.mxu0 0
    %113 = vmatprep.subr.bf16.mxu0 0
    %114 = vmatpush1.bf16.msra.mxu0 0
    %115 = vmatprep.subr.bf16.mxu0 0
    %116 = vmatpush1.bf16.msra.mxu0 0
    %117 = vmatprep.subr.bf16.mxu0 0
    %118 = vmatpush1.bf16.msra.mxu0 0
    %119 = vmatprep.subr.bf16.mxu0 0
    %120 = vmatpush1.bf16.msra.mxu0 0
    %121 = vmatprep.subr.bf16.mxu0 0
    %122 = vmatpush1.bf16.msra.mxu0 0
    %123 = vmatprep.subr.bf16.mxu0 0
    %124 = vmatpush1.bf16.msra.mxu0 0
    %125 = vmatprep.subr.bf16.mxu0 %v100
    %126 = vmatpush1.bf16.msra.mxu0 %v99
    %127 = vmatprep.subr.bf16.mxu0 0
    %128 = vmatpush2.bf16.msra.mxu0 0
    %129 = vmatprep.subr.bf16.mxu0 0
    %130 = vmatpush2.bf16.msra.mxu0 0
    %131 = vmatprep.subr.bf16.mxu0 0
    %132 = vmatpush2.bf16.msra.mxu0 0
    %133 = vmatprep.subr.bf16.mxu0 0
    %134 = vmatpush2.bf16.msra.mxu0 0
    %135 = vmatprep.subr.bf16.mxu0 0
    %136 = vmatpush2.bf16.msra.mxu0 0
    %137 = vmatprep.subr.bf16.mxu0 0
    %138 = vmatpush2.bf16.msra.mxu0 0
    %139 = vmatprep.subr.bf16.mxu0 0
    %140 = vmatpush2.bf16.msra.mxu0 0
    %141 = vmatprep.subr.bf16.mxu0 0
    %142 = vmatpush2.bf16.msra.mxu0 0
    %143 = vmatprep.mubr.bf16.mxu0 0
    %144 = vmatmul.mubr.bf16.gmra.mxu0 %v109
    %v145 = vpop.f32.mrf.mxu0
    %v146 = vadd.f32 %v70, %v145
    %v147 = vpop.f32.mrf.mxu0
    %v148 = vadd.f32 %v74, %v147
    %v149 = vpop.f32.mrf.mxu0
    %v150 = vpop.f32.mrf.mxu0
    %151 = vdwg.mxu0
    %152 = vmatprep.subr.bf16.mxu0 0
    %153 = vmatpush1.bf16.msra.mxu0 0
    %154 = vmatprep.subr.bf16.mxu0 0
    %155 = vmatpush1.bf16.msra.mxu0 0
    %156 = vmatprep.subr.bf16.mxu0 0
    %157 = vmatpush1.bf16.msra.mxu0 0
    %158 = vmatprep.subr.bf16.mxu0 0
    %159 = vmatpush1.bf16.msra.mxu0 0
    %160 = vmatprep.subr.bf16.mxu0 0
    %161 = vmatpush1.bf16.msra.mxu0 0
    %162 = vmatprep.subr.bf16.mxu0 0
    %163 = vmatpush1.bf16.msra.mxu0 0
    %164 = vmatprep.subr.bf16.mxu0 0
    %165 = vmatpush1.bf16.msra.mxu0 0
    %166 = vmatprep.subr.bf16.mxu0 %v102
    %167 = vmatpush1.bf16.msra.mxu0 %v101
    %168 = vmatprep.subr.bf16.mxu0 0
    %169 = vmatpush2.bf16.msra.mxu0 0
    %170 = vmatprep.subr.bf16.mxu0 0
    %171 = vmatpush2.bf16.msra.mxu0 0
    %172 = vmatprep.subr.bf16.mxu0 0
    %173 = vmatpush2.bf16.msra.mxu0 0
    %174 = vmatprep.subr.bf16.mxu0 0
    %175 = vmatpush2.bf16.msra.mxu0 0
    %176 = vmatprep.subr.bf16.mxu0 0
    %177 = vmatpush2.bf16.msra.mxu0 0
    %178 = vmatprep.subr.bf16.mxu0 0
    %179 = vmatpush2.bf16.msra.mxu0 0
    %180 = vmatprep.subr.bf16.mxu0 0
    %181 = vmatpush2.bf16.msra.mxu0 0
    %182 = vmatprep.subr.bf16.mxu0 0
    %183 = vmatpush2.bf16.msra.mxu0 0
    %184 = vmatprep.mubr.bf16.mxu0 0
    %185 = vmatmul.mubr.bf16.gmra.mxu0 %v109
    %v186 = vpop.f32.mrf.mxu0
    %v187 = vadd.f32 %v78, %v186
    %v188 = vpop.f32.mrf.mxu0
    %v189 = vadd.f32 %v82, %v188
    %v190 = vpop.f32.mrf.mxu0
    %v191 = vpop.f32.mrf.mxu0
    %192 = vdwg.mxu0
    %193 = vst [vmem:[#allocation2] sm:$0xff] %v146
    %194 = vst [vmem:[#allocation2 + $0x8] sm:$0xff] %v148
    %195 = vst [vmem:[#allocation2 + $0x10] sm:$0xff] %v187
    %196 = vst [vmem:[#allocation2 + $0x18] sm:$0xff] %v189
    %s197 = scalar_lea.vmem %s0, 8
    %v198 = vld [vmem:[%s197] sm:$0xff]
    %v199 = vpack.c.bf16 %v198, %v198
    %v200 = vld [vmem:[%s1] sm:$0xff]
    %v201 = vld [vmem:[%s1 + $0x8] sm:$0xff]
    %v202 = vld [vmem:[%s1 + $0x10] sm:$0xff]
    %v203 = vld [vmem:[%s1 + $0x18] sm:$0xff]
    %v204 = vld [vmem:[%s2] sm:$0xf]
    %v206 = vlaneseq
    %v207 = vshrl.u32 %v206, 7
    %v208 = vsub.s32 0, %v207
    %v209 = vrot.slane %v204, %v208
    %v210 = vlaneseq
    %v211 = vshrl.u32 %v210, 7
    %v212 = vsub.s32 1, %v211
    %v213 = vrot.slane %v204, %v212
    %v214 = vlaneseq
    %v215 = vshrl.u32 %v214, 7
    %v216 = vsub.s32 2, %v215
    %v217 = vrot.slane %v204, %v216
    %v218 = vlaneseq
    %v219 = vshrl.u32 %v218, 7
    %v220 = vsub.s32 3, %v219
    %v221 = vrot.slane %v204, %v220
    %v230 = vunpack.c.l.b16 %v200
    %v231 = vunpack.c.h.b16 %v200
    %v232 = vunpack.c.l.b16 %v201
    %v233 = vunpack.c.h.b16 %v201
    %v234 = vunpack.c.l.b16 %v202
    %v235 = vunpack.c.h.b16 %v202
    %v236 = vunpack.c.l.b16 %v203
    %v237 = vunpack.c.h.b16 %v203
    %v238 = vpack.c.b16 %v234, %v230
    %v239 = vpack.c.b16 %v235, %v231
    %v240 = vpack.c.b16 %v236, %v232
    %v241 = vpack.c.b16 %v237, %v233
    %v247 = vsel %vm107, %v199, 0
    %249 = vmatprep.subr.bf16.mxu0 0
    %250 = vmatpush1.bf16.msra.mxu0 0
    %251 = vmatprep.subr.bf16.mxu0 0
    %252 = vmatpush1.bf16.msra.mxu0 0
    %253 = vmatprep.subr.bf16.mxu0 0
    %254 = vmatpush1.bf16.msra.mxu0 0
    %255 = vmatprep.subr.bf16.mxu0 0
    %256 = vmatpush1.bf16.msra.mxu0 0
    %257 = vmatprep.subr.bf16.mxu0 0
    %258 = vmatpush1.bf16.msra.mxu0 0
    %259 = vmatprep.subr.bf16.mxu0 0
    %260 = vmatpush1.bf16.msra.mxu0 0
    %261 = vmatprep.subr.bf16.mxu0 0
    %262 = vmatpush1.bf16.msra.mxu0 0
    %263 = vmatprep.subr.bf16.mxu0 %v239
    %264 = vmatpush1.bf16.msra.mxu0 %v238
    %265 = vmatprep.subr.bf16.mxu0 0
    %266 = vmatpush2.bf16.msra.mxu0 0
    %267 = vmatprep.subr.bf16.mxu0 0
    %268 = vmatpush2.bf16.msra.mxu0 0
    %269 = vmatprep.subr.bf16.mxu0 0
    %270 = vmatpush2.bf16.msra.mxu0 0
    %271 = vmatprep.subr.bf16.mxu0 0
    %272 = vmatpush2.bf16.msra.mxu0 0
    %273 = vmatprep.subr.bf16.mxu0 0
    %274 = vmatpush2.bf16.msra.mxu0 0
    %275 = vmatprep.subr.bf16.mxu0 0
    %276 = vmatpush2.bf16.msra.mxu0 0
    %277 = vmatprep.subr.bf16.mxu0 0
    %278 = vmatpush2.bf16.msra.mxu0 0
    %279 = vmatprep.subr.bf16.mxu0 0
    %280 = vmatpush2.bf16.msra.mxu0 0
    %281 = vmatprep.mubr.bf16.mxu0 0
    %282 = vmatmul.mubr.bf16.gmra.mxu0 %v247
    %v283 = vpop.f32.mrf.mxu0
    %v284 = vadd.f32 %v209, %v283
    %v285 = vpop.f32.mrf.mxu0
    %v286 = vadd.f32 %v213, %v285
    %v287 = vpop.f32.mrf.mxu0
    %v288 = vpop.f32.mrf.mxu0
    %289 = vdwg.mxu0
    %290 = vmatprep.subr.bf16.mxu0 0
    %291 = vmatpush1.bf16.msra.mxu0 0
    %292 = vmatprep.subr.bf16.mxu0 0
    %293 = vmatpush1.bf16.msra.mxu0 0
    %294 = vmatprep.subr.bf16.mxu0 0
    %295 = vmatpush1.bf16.msra.mxu0 0
    %296 = vmatprep.subr.bf16.mxu0 0
    %297 = vmatpush1.bf16.msra.mxu0 0
    %298 = vmatprep.subr.bf16.mxu0 0
    %299 = vmatpush1.bf16.msra.mxu0 0
    %300 = vmatprep.subr.bf16.mxu0 0
    %301 = vmatpush1.bf16.msra.mxu0 0
    %302 = vmatprep.subr.bf16.mxu0 0
    %303 = vmatpush1.bf16.msra.mxu0 0
    %304 = vmatprep.subr.bf16.mxu0 %v241
    %305 = vmatpush1.bf16.msra.mxu0 %v240
    %306 = vmatprep.subr.bf16.mxu0 0
    %307 = vmatpush2.bf16.msra.mxu0 0
    %308 = vmatprep.subr.bf16.mxu0 0
    %309 = vmatpush2.bf16.msra.mxu0 0
    %310 = vmatprep.subr.bf16.mxu0 0
    %311 = vmatpush2.bf16.msra.mxu0 0
    %312 = vmatprep.subr.bf16.mxu0 0
    %313 = vmatpush2.bf16.msra.mxu0 0
    %314 = vmatprep.subr.bf16.mxu0 0
    %315 = vmatpush2.bf16.msra.mxu0 0
    %316 = vmatprep.subr.bf16.mxu0 0
    %317 = vmatpush2.bf16.msra.mxu0 0
    %318 = vmatprep.subr.bf16.mxu0 0
    %319 = vmatpush2.bf16.msra.mxu0 0
    %320 = vmatprep.subr.bf16.mxu0 0
    %321 = vmatpush2.bf16.msra.mxu0 0
    %322 = vmatprep.mubr.bf16.mxu0 0
    %323 = vmatmul.mubr.bf16.gmra.mxu0 %v247
    %v324 = vpop.f32.mrf.mxu0
    %v325 = vadd.f32 %v217, %v324
    %v326 = vpop.f32.mrf.mxu0
    %v327 = vadd.f32 %v221, %v326
    %v328 = vpop.f32.mrf.mxu0
    %v329 = vpop.f32.mrf.mxu0
    %330 = vdwg.mxu0
    %s331 = scalar_lea.vmem [#allocation2], 32
    %332 = vst [vmem:[%s331] sm:$0xff] %v284
    %333 = vst [vmem:[%s331 + $0x8] sm:$0xff] %v286
    %334 = vst [vmem:[%s331 + $0x10] sm:$0xff] %v325
    %335 = vst [vmem:[%s331 + $0x18] sm:$0xff] %v327
    %v336 = vld [vmem:[#allocation2] ss:$8 sm:$0xf]
    %s337 = scalar_lea.vmem [#allocation2], 32
    %v338 = vld [vmem:[%s337] ss:$8 sm:$0xf]
    %v339 = vld [vmem:[#allocation3] sm:$0xff]
    %v340 = vld [vmem:[#allocation3 + $0x8] sm:$0xff]
    %v341 = vld [vmem:[#allocation3 + $0x10] sm:$0xff]
    %v342 = vld [vmem:[#allocation3 + $0x18] sm:$0xff]
    %v343 = vld [vmem:[#allocation3 + $0x20] sm:$0xff]
    %v344 = vld [vmem:[#allocation3 + $0x28] sm:$0xff]
    %v345 = vld [vmem:[#allocation3 + $0x30] sm:$0xff]
    %v346 = vld [vmem:[#allocation3 + $0x38] sm:$0xff]
    %v347 = vld [vmem:[#allocation3 + $0x40] sm:$0xff]
    %v348 = vld [vmem:[#allocation3 + $0x48] sm:$0xff]
    %v349 = vld [vmem:[#allocation3 + $0x50] sm:$0xff]
    %v350 = vld [vmem:[#allocation3 + $0x58] sm:$0xff]
    %v351 = vld [vmem:[#allocation3 + $0x60] sm:$0xff]
    %v352 = vld [vmem:[#allocation3 + $0x68] sm:$0xff]
    %v353 = vld [vmem:[#allocation3 + $0x70] sm:$0xff]
    %v354 = vld [vmem:[#allocation3 + $0x78] sm:$0xff]
    %v355 = vld [vmem:[#allocation3 + $0x80] sm:$0xff]
    %v356 = vld [vmem:[#allocation3 + $0x88] sm:$0xff]
    %v357 = vld [vmem:[#allocation3 + $0x90] sm:$0xff]
    %v358 = vld [vmem:[#allocation3 + $0x98] sm:$0xff]
    %v359 = vld [vmem:[#allocation3 + $0xa0] sm:$0xff]
    %v360 = vld [vmem:[#allocation3 + $0xa8] sm:$0xff]
    %v361 = vld [vmem:[#allocation3 + $0xb0] sm:$0xff]
    %v362 = vld [vmem:[#allocation3 + $0xb8] sm:$0xff]
    %v363 = vld [vmem:[#allocation3 + $0xc0] sm:$0xff]
    %v364 = vld [vmem:[#allocation3 + $0xc8] sm:$0xff]
    %v365 = vld [vmem:[#allocation3 + $0xd0] sm:$0xff]
    %v366 = vld [vmem:[#allocation3 + $0xd8] sm:$0xff]
    %v367 = vld [vmem:[#allocation3 + $0xe0] sm:$0xff]
    %v368 = vld [vmem:[#allocation3 + $0xe8] sm:$0xff]
    %v369 = vld [vmem:[#allocation3 + $0xf0] sm:$0xff]
    %v370 = vld [vmem:[#allocation3 + $0xf8] sm:$0xff]
    %v403 = vunpack.c.l.b16 %v339
    %v404 = vunpack.c.h.b16 %v339
    %v405 = vunpack.c.l.b16 %v340
    %v406 = vunpack.c.h.b16 %v340
    %v407 = vunpack.c.l.b16 %v341
    %v408 = vunpack.c.h.b16 %v341
    %v409 = vunpack.c.l.b16 %v342
    %v410 = vunpack.c.h.b16 %v342
    %v411 = vunpack.c.l.b16 %v343
    %v412 = vunpack.c.h.b16 %v343
    %v413 = vunpack.c.l.b16 %v344
    %v414 = vunpack.c.h.b16 %v344
    %v415 = vunpack.c.l.b16 %v345
    %v416 = vunpack.c.h.b16 %v345
    %v417 = vunpack.c.l.b16 %v346
    %v418 = vunpack.c.h.b16 %v346
    %v419 = vunpack.c.l.b16 %v347
    %v420 = vunpack.c.h.b16 %v347
    %v421 = vunpack.c.l.b16 %v348
    %v422 = vunpack.c.h.b16 %v348
    %v423 = vunpack.c.l.b16 %v349
    %v424 = vunpack.c.h.b16 %v349
    %v425 = vunpack.c.l.b16 %v350
    %v426 = vunpack.c.h.b16 %v350
    %v427 = vunpack.c.l.b16 %v351
    %v428 = vunpack.c.h.b16 %v351
    %v429 = vunpack.c.l.b16 %v352
    %v430 = vunpack.c.h.b16 %v352
    %v431 = vunpack.c.l.b16 %v353
    %v432 = vunpack.c.h.b16 %v353
    %v433 = vunpack.c.l.b16 %v354
    %v434 = vunpack.c.h.b16 %v354
    %v435 = vunpack.c.l.b16 %v355
    %v436 = vunpack.c.h.b16 %v355
    %v437 = vunpack.c.l.b16 %v356
    %v438 = vunpack.c.h.b16 %v356
    %v439 = vunpack.c.l.b16 %v357
    %v440 = vunpack.c.h.b16 %v357
    %v441 = vunpack.c.l.b16 %v358
    %v442 = vunpack.c.h.b16 %v358
    %v443 = vunpack.c.l.b16 %v359
    %v444 = vunpack.c.h.b16 %v359
    %v445 = vunpack.c.l.b16 %v360
    %v446 = vunpack.c.h.b16 %v360
    %v447 = vunpack.c.l.b16 %v361
    %v448 = vunpack.c.h.b16 %v361
    %v449 = vunpack.c.l.b16 %v362
    %v450 = vunpack.c.h.b16 %v362
    %v451 = vunpack.c.l.b16 %v363
    %v452 = vunpack.c.h.b16 %v363
    %v453 = vunpack.c.l.b16 %v364
    %v454 = vunpack.c.h.b16 %v364
    %v455 = vunpack.c.l.b16 %v365
    %v456 = vunpack.c.h.b16 %v365
    %v457 = vunpack.c.l.b16 %v366
    %v458 = vunpack.c.h.b16 %v366
    %v459 = vunpack.c.l.b16 %v367
    %v460 = vunpack.c.h.b16 %v367
    %v461 = vunpack.c.l.b16 %v368
    %v462 = vunpack.c.h.b16 %v368
    %v463 = vunpack.c.l.b16 %v369
    %v464 = vunpack.c.h.b16 %v369
    %v465 = vunpack.c.l.b16 %v370
    %v466 = vunpack.c.h.b16 %v370
    %v467 = vpack.c.b16 %v407, %v403
    %v468 = vpack.c.b16 %v408, %v404
    %v469 = vpack.c.b16 %v409, %v405
    %v470 = vpack.c.b16 %v410, %v406
    %v471 = vpack.c.b16 %v415, %v411
    %v472 = vpack.c.b16 %v416, %v412
    %v473 = vpack.c.b16 %v417, %v413
    %v474 = vpack.c.b16 %v418, %v414
    %v475 = vpack.c.b16 %v423, %v419
    %v476 = vpack.c.b16 %v424, %v420
    %v477 = vpack.c.b16 %v425, %v421
    %v478 = vpack.c.b16 %v426, %v422
    %v479 = vpack.c.b16 %v431, %v427
    %v480 = vpack.c.b16 %v432, %v428
    %v481 = vpack.c.b16 %v433, %v429
    %v482 = vpack.c.b16 %v434, %v430
    %v483 = vpack.c.b16 %v439, %v435
    %v484 = vpack.c.b16 %v440, %v436
    %v485 = vpack.c.b16 %v441, %v437
    %v486 = vpack.c.b16 %v442, %v438
    %v487 = vpack.c.b16 %v447, %v443
    %v488 = vpack.c.b16 %v448, %v444
    %v489 = vpack.c.b16 %v449, %v445
    %v490 = vpack.c.b16 %v450, %v446
    %v491 = vpack.c.b16 %v455, %v451
    %v492 = vpack.c.b16 %v456, %v452
    %v493 = vpack.c.b16 %v457, %v453
    %v494 = vpack.c.b16 %v458, %v454
    %v495 = vpack.c.b16 %v463, %v459
    %v496 = vpack.c.b16 %v464, %v460
    %v497 = vpack.c.b16 %v465, %v461
    %v498 = vpack.c.b16 %v466, %v462
    %531 = vmatprep.subr.bf16.mxu0 %v496
    %532 = vmatpush1.bf16.msra.mxu0 %v495
    %533 = vmatprep.subr.bf16.mxu0 %v492
    %534 = vmatpush1.bf16.msra.mxu0 %v491
    %535 = vmatprep.subr.bf16.mxu0 %v488
    %536 = vmatpush1.bf16.msra.mxu0 %v487
    %537 = vmatprep.subr.bf16.mxu0 %v484
    %538 = vmatpush1.bf16.msra.mxu0 %v483
    %539 = vmatprep.subr.bf16.mxu0 %v480
    %540 = vmatpush1.bf16.msra.mxu0 %v479
    %541 = vmatprep.subr.bf16.mxu0 %v476
    %542 = vmatpush1.bf16.msra.mxu0 %v475
    %543 = vmatprep.subr.bf16.mxu0 %v472
    %544 = vmatpush1.bf16.msra.mxu0 %v471
    %545 = vmatprep.subr.bf16.mxu0 %v468
    %546 = vmatpush1.bf16.msra.mxu0 %v467
    %547 = vmatprep.subr.bf16.mxu0 0
    %548 = vmatpush2.bf16.msra.mxu0 0
    %549 = vmatprep.subr.bf16.mxu0 0
    %550 = vmatpush2.bf16.msra.mxu0 0
    %551 = vmatprep.subr.bf16.mxu0 0
    %552 = vmatpush2.bf16.msra.mxu0 0
    %553 = vmatprep.subr.bf16.mxu0 0
    %554 = vmatpush2.bf16.msra.mxu0 0
    %555 = vmatprep.subr.bf16.mxu0 0
    %556 = vmatpush2.bf16.msra.mxu0 0
    %557 = vmatprep.subr.bf16.mxu0 0
    %558 = vmatpush2.bf16.msra.mxu0 0
    %559 = vmatprep.subr.bf16.mxu0 0
    %560 = vmatpush2.bf16.msra.mxu0 0
    %561 = vmatprep.subr.bf16.mxu0 0
    %562 = vmatpush2.bf16.msra.mxu0 0
    %563 = vmatprep.mubr.bf16.mxu0 0
    %564 = vmatmul.mubr.bf16.gmra.mxu0 0
    %v565 = vpop.f32.mrf.mxu0
    %v566 = vadd.f32 0.0, %v565
    %v567 = vpop.f32.mrf.mxu0
    %v568 = vadd.f32 0.0, %v567
    %v569 = vpop.f32.mrf.mxu0
    %v570 = vpop.f32.mrf.mxu0
    %571 = vdwg.mxu0
    %572 = vmatprep.subr.bf16.mxu0 %v498
    %573 = vmatpush1.bf16.msra.mxu0 %v497
    %574 = vmatprep.subr.bf16.mxu0 %v494
    %575 = vmatpush1.bf16.msra.mxu0 %v493
    %576 = vmatprep.subr.bf16.mxu0 %v490
    %577 = vmatpush1.bf16.msra.mxu0 %v489
    %578 = vmatprep.subr.bf16.mxu0 %v486
    %579 = vmatpush1.bf16.msra.mxu0 %v485
    %580 = vmatprep.subr.bf16.mxu0 %v482
    %581 = vmatpush1.bf16.msra.mxu0 %v481
    %582 = vmatprep.subr.bf16.mxu0 %v478
    %583 = vmatpush1.bf16.msra.mxu0 %v477
    %584 = vmatprep.subr.bf16.mxu0 %v474
    %585 = vmatpush1.bf16.msra.mxu0 %v473
    %586 = vmatprep.subr.bf16.mxu0 %v470
    %587 = vmatpush1.bf16.msra.mxu0 %v469
    %588 = vmatprep.subr.bf16.mxu0 0
    %589 = vmatpush2.bf16.msra.mxu0 0
    %590 = vmatprep.subr.bf16.mxu0 0
    %591 = vmatpush2.bf16.msra.mxu0 0
    %592 = vmatprep.subr.bf16.mxu0 0
    %593 = vmatpush2.bf16.msra.mxu0 0
    %594 = vmatprep.subr.bf16.mxu0 0
    %595 = vmatpush2.bf16.msra.mxu0 0
    %596 = vmatprep.subr.bf16.mxu0 0
    %597 = vmatpush2.bf16.msra.mxu0 0
    %598 = vmatprep.subr.bf16.mxu0 0
    %599 = vmatpush2.bf16.msra.mxu0 0
    %600 = vmatprep.subr.bf16.mxu0 0
    %601 = vmatpush2.bf16.msra.mxu0 0
    %602 = vmatprep.subr.bf16.mxu0 0
    %603 = vmatpush2.bf16.msra.mxu0 0
    %604 = vmatprep.mubr.bf16.mxu0 0
    %605 = vmatmul.mubr.bf16.gmra.mxu0 0
    %v606 = vpop.f32.mrf.mxu0
    %v607 = vadd.f32 0.0, %v606
    %v608 = vpop.f32.mrf.mxu0
    %v609 = vadd.f32 0.0, %v608
    %v610 = vpop.f32.mrf.mxu0
    %v611 = vpop.f32.mrf.mxu0
    %612 = vdwg.mxu0
    %v617 = vcombine.low %v566, %v568
    %v618 = vcombine.low %v607, %v609
    %v620 = vunpack.c.l.s4 1966171168
    %v621 = vunpack.c.0.s8 %v620
    %v622 = vlaneseq
    %v623 = vshrl.u32 %v622, 7
    %v624 = vsub.s32 %v621, %v623
    %v625 = vrot.slane %v617, %v624
    %v627 = vunpack.c.l.s4 1966171168
    %v628 = vunpack.c.0.s8 %v627
    %v629 = vlaneseq
    %v630 = vshrl.u32 %v629, 7
    %v631 = vsub.s32 %v628, %v630
    %v632 = vrot.slane %v618, %v631
    %v633 = vcombine.low %v625, %v632
    %v634 = vcombine.high %v625, %v632
    %v636 = vunpack.c.l.s4 1966171168
    %v637 = vunpack.c.0.s8 %v636
    %v638 = vlaneseq
    %v639 = vshrl.u32 %v638, 7
    %v640 = vsub.s32 %v637, %v639
    %v641 = vrot.slane %v633, %v640
    %v643 = vunpack.c.l.s4 1966171168
    %v644 = vunpack.c.0.s8 %v643
    %v645 = vlaneseq
    %v646 = vshrl.u32 %v645, 7
    %v647 = vsub.s32 %v644, %v646
    %v648 = vrot.slane %v634, %v647
    %v651 = vadd.f32 %v336, %v641
    %v652 = vadd.f32 %v338, %v648
    %v653 = vxor.u32 %v651, 2147483648
    %v654 = vxor.u32 %v652, 2147483648
    %v655 = vmul.f32 %v653, 1.442695
    %v656 = vpow.pop %v655
    %v657 = vmul.f32 %v654, 1.442695
    %v658 = vpow.pop %v657
    %v659 = vadd.f32 %v656, 1.0
    %v660 = vadd.f32 %v658, 1.0
    %v661 = vrcp.pop %v659
    %v662 = vmul.f32 1.0, %v661
    %v663 = vrcp.pop %v660
    %v664 = vmul.f32 1.0, %v663
    %v667 = vrot.slane %v651, 3
    %v668 = vrot.slane %v652, 3
    %v671 = vtanh.pop %v667
    %v672 = vtanh.pop %v668
    %v675 = vrot.slane %v662, 1
    %v676 = vrot.slane %v664, 1
    %v679 = vmul.f32 %v675, 0.0
    %v680 = vmul.f32 %v676, 0.0
    %v681 = vmul.f32 %v662, %v671
    %v682 = vmul.f32 %v664, %v672
    %v683 = vadd.f32 %v679, %v681
    %v684 = vadd.f32 %v680, %v682
    %v685 = vtanh.pop %v683
    %v686 = vtanh.pop %v684
    %v687 = vrot.slane %v662, 2
    %v688 = vrot.slane %v664, 2
    %v691 = vmul.f32 %v687, %v685
    %v692 = vmul.f32 %v688, %v686
    %v695 = vcombine.low %v691, %v692
    %v697 = vunpack.c.l.s4 1966171168
    %v698 = vunpack.c.0.s8 %v697
    %v699 = vlaneseq
    %v700 = vshrl.u32 %v699, 7
    %v701 = vsub.s32 %v698, %v700
    %v702 = vrot.slane %v695, %v701
    %v704 = vunpack.c.l.s4 1966171168
    %v705 = vunpack.c.0.s8 %v704
    %v706 = vlaneseq
    %v707 = vshrl.u32 %v706, 7
    %v708 = vsub.s32 %v705, %v707
    %v709 = vrot.slane %v702, %v708
    %v711 = vpack.c.bf16 %v709, %v709
    %v712 = vpack.c.bf16 0.0, 0.0
    %v713 = vld [vmem:[#allocation6] sm:$0xff]
    %v714 = vld [vmem:[#allocation6 + $0x8] sm:$0xff]
    %v715 = vld [vmem:[#allocation6 + $0x10] sm:$0xff]
    %v716 = vld [vmem:[#allocation6 + $0x18] sm:$0xff]
    %v717 = vld [vmem:[#allocation6 + $0x20] sm:$0xff]
    %v718 = vld [vmem:[#allocation6 + $0x28] sm:$0xff]
    %v719 = vld [vmem:[#allocation6 + $0x30] sm:$0xff]
    %v720 = vld [vmem:[#allocation6 + $0x38] sm:$0xff]
    %v721 = vld [vmem:[#allocation6 + $0x40] sm:$0xff]
    %v722 = vld [vmem:[#allocation6 + $0x48] sm:$0xff]
    %v723 = vld [vmem:[#allocation6 + $0x50] sm:$0xff]
    %v724 = vld [vmem:[#allocation6 + $0x58] sm:$0xff]
    %v725 = vld [vmem:[#allocation6 + $0x60] sm:$0xff]
    %v726 = vld [vmem:[#allocation6 + $0x68] sm:$0xff]
    %v727 = vld [vmem:[#allocation6 + $0x70] sm:$0xff]
    %v728 = vld [vmem:[#allocation6 + $0x78] sm:$0xff]
    %v729 = vld [vmem:[#allocation6 + $0x80] sm:$0xff]
    %v730 = vld [vmem:[#allocation6 + $0x88] sm:$0xff]
    %v731 = vld [vmem:[#allocation6 + $0x90] sm:$0xff]
    %v732 = vld [vmem:[#allocation6 + $0x98] sm:$0xff]
    %v733 = vld [vmem:[#allocation6 + $0xa0] sm:$0xff]
    %v734 = vld [vmem:[#allocation6 + $0xa8] sm:$0xff]
    %v735 = vld [vmem:[#allocation6 + $0xb0] sm:$0xff]
    %v736 = vld [vmem:[#allocation6 + $0xb8] sm:$0xff]
    %v737 = vld [vmem:[#allocation6 + $0xc0] sm:$0xff]
    %v738 = vld [vmem:[#allocation6 + $0xc8] sm:$0xff]
    %v739 = vld [vmem:[#allocation6 + $0xd0] sm:$0xff]
    %v740 = vld [vmem:[#allocation6 + $0xd8] sm:$0xff]
    %v741 = vld [vmem:[#allocation6 + $0xe0] sm:$0xff]
    %v742 = vld [vmem:[#allocation6 + $0xe8] sm:$0xff]
    %v743 = vld [vmem:[#allocation6 + $0xf0] sm:$0xff]
    %v744 = vld [vmem:[#allocation6 + $0xf8] sm:$0xff]
    %v745 = vld [vmem:[#allocation6 + $0x100] sm:$0xff]
    %v746 = vld [vmem:[#allocation6 + $0x108] sm:$0xff]
    %v747 = vld [vmem:[#allocation6 + $0x110] sm:$0xff]
    %v748 = vld [vmem:[#allocation6 + $0x118] sm:$0xff]
    %v749 = vld [vmem:[#allocation6 + $0x120] sm:$0xff]
    %v750 = vld [vmem:[#allocation6 + $0x128] sm:$0xff]
    %v751 = vld [vmem:[#allocation6 + $0x130] sm:$0xff]
    %v752 = vld [vmem:[#allocation6 + $0x138] sm:$0xff]
    %v753 = vld [vmem:[#allocation6 + $0x140] sm:$0xff]
    %v754 = vld [vmem:[#allocation6 + $0x148] sm:$0xff]
    %v755 = vld [vmem:[#allocation6 + $0x150] sm:$0xff]
    %v756 = vld [vmem:[#allocation6 + $0x158] sm:$0xff]
    %v757 = vld [vmem:[#allocation6 + $0x160] sm:$0xff]
    %v758 = vld [vmem:[#allocation6 + $0x168] sm:$0xff]
    %v759 = vld [vmem:[#allocation6 + $0x170] sm:$0xff]
    %v760 = vld [vmem:[#allocation6 + $0x178] sm:$0xff]
    %v761 = vld [vmem:[#allocation6 + $0x180] sm:$0xff]
    %v762 = vld [vmem:[#allocation6 + $0x188] sm:$0xff]
    %v763 = vld [vmem:[#allocation6 + $0x190] sm:$0xff]
    %v764 = vld [vmem:[#allocation6 + $0x198] sm:$0xff]
    %v765 = vld [vmem:[#allocation6 + $0x1a0] sm:$0xff]
    %v766 = vld [vmem:[#allocation6 + $0x1a8] sm:$0xff]
    %v767 = vld [vmem:[#allocation6 + $0x1b0] sm:$0xff]
    %v768 = vld [vmem:[#allocation6 + $0x1b8] sm:$0xff]
    %v769 = vld [vmem:[#allocation6 + $0x1c0] sm:$0xff]
    %v770 = vld [vmem:[#allocation6 + $0x1c8] sm:$0xff]
    %v771 = vld [vmem:[#allocation6 + $0x1d0] sm:$0xff]
    %v772 = vld [vmem:[#allocation6 + $0x1d8] sm:$0xff]
    %v773 = vld [vmem:[#allocation6 + $0x1e0] sm:$0xff]
    %v774 = vld [vmem:[#allocation6 + $0x1e8] sm:$0xff]
    %v775 = vld [vmem:[#allocation6 + $0x1f0] sm:$0xff]
    %v776 = vld [vmem:[#allocation6 + $0x1f8] sm:$0xff]
    %v777 = vld [vmem:[%s5] sm:$0xf]
    %v779 = vlaneseq
    %v780 = vshrl.u32 %v779, 7
    %v781 = vsub.s32 0, %v780
    %v782 = vrot.slane %v777, %v781
    %v783 = vlaneseq
    %v784 = vshrl.u32 %v783, 7
    %v785 = vsub.s32 1, %v784
    %v786 = vrot.slane %v777, %v785
    %v787 = vlaneseq
    %v788 = vshrl.u32 %v787, 7
    %v789 = vsub.s32 2, %v788
    %v790 = vrot.slane %v777, %v789
    %v791 = vlaneseq
    %v792 = vshrl.u32 %v791, 7
    %v793 = vsub.s32 3, %v792
    %v794 = vrot.slane %v777, %v793
    %v863 = vunpack.c.l.b16 %v713
    %v864 = vunpack.c.h.b16 %v713
    %v865 = vunpack.c.l.b16 %v714
    %v866 = vunpack.c.h.b16 %v714
    %v867 = vunpack.c.l.b16 %v715
    %v868 = vunpack.c.h.b16 %v715
    %v869 = vunpack.c.l.b16 %v716
    %v870 = vunpack.c.h.b16 %v716
    %v871 = vunpack.c.l.b16 %v717
    %v872 = vunpack.c.h.b16 %v717
    %v873 = vunpack.c.l.b16 %v718
    %v874 = vunpack.c.h.b16 %v718
    %v875 = vunpack.c.l.b16 %v719
    %v876 = vunpack.c.h.b16 %v719
    %v877 = vunpack.c.l.b16 %v720
    %v878 = vunpack.c.h.b16 %v720
    %v879 = vunpack.c.l.b16 %v721
    %v880 = vunpack.c.h.b16 %v721
    %v881 = vunpack.c.l.b16 %v722
    %v882 = vunpack.c.h.b16 %v722
    %v883 = vunpack.c.l.b16 %v723
    %v884 = vunpack.c.h.b16 %v723
    %v885 = vunpack.c.l.b16 %v724
    %v886 = vunpack.c.h.b16 %v724
    %v887 = vunpack.c.l.b16 %v725
    %v888 = vunpack.c.h.b16 %v725
    %v889 = vunpack.c.l.b16 %v726
    %v890 = vunpack.c.h.b16 %v726
    %v891 = vunpack.c.l.b16 %v727
    %v892 = vunpack.c.h.b16 %v727
    %v893 = vunpack.c.l.b16 %v728
    %v894 = vunpack.c.h.b16 %v728
    %v895 = vunpack.c.l.b16 %v729
    %v896 = vunpack.c.h.b16 %v729
    %v897 = vunpack.c.l.b16 %v730
    %v898 = vunpack.c.h.b16 %v730
    %v899 = vunpack.c.l.b16 %v731
    %v900 = vunpack.c.h.b16 %v731
    %v901 = vunpack.c.l.b16 %v732
    %v902 = vunpack.c.h.b16 %v732
    %v903 = vunpack.c.l.b16 %v733
    %v904 = vunpack.c.h.b16 %v733
    %v905 = vunpack.c.l.b16 %v734
    %v906 = vunpack.c.h.b16 %v734
    %v907 = vunpack.c.l.b16 %v735
    %v908 = vunpack.c.h.b16 %v735
    %v909 = vunpack.c.l.b16 %v736
    %v910 = vunpack.c.h.b16 %v736
    %v911 = vunpack.c.l.b16 %v737
    %v912 = vunpack.c.h.b16 %v737
    %v913 = vunpack.c.l.b16 %v738
    %v914 = vunpack.c.h.b16 %v738
    %v915 = vunpack.c.l.b16 %v739
    %v916 = vunpack.c.h.b16 %v739
    %v917 = vunpack.c.l.b16 %v740
    %v918 = vunpack.c.h.b16 %v740
    %v919 = vunpack.c.l.b16 %v741
    %v920 = vunpack.c.h.b16 %v741
    %v921 = vunpack.c.l.b16 %v742
    %v922 = vunpack.c.h.b16 %v742
    %v923 = vunpack.c.l.b16 %v743
    %v924 = vunpack.c.h.b16 %v743
    %v925 = vunpack.c.l.b16 %v744
    %v926 = vunpack.c.h.b16 %v744
    %v927 = vunpack.c.l.b16 %v745
    %v928 = vunpack.c.h.b16 %v745
    %v929 = vunpack.c.l.b16 %v746
    %v930 = vunpack.c.h.b16 %v746
    %v931 = vunpack.c.l.b16 %v747
    %v932 = vunpack.c.h.b16 %v747
    %v933 = vunpack.c.l.b16 %v748
    %v934 = vunpack.c.h.b16 %v748
    %v935 = vunpack.c.l.b16 %v749
    %v936 = vunpack.c.h.b16 %v749
    %v937 = vunpack.c.l.b16 %v750
    %v938 = vunpack.c.h.b16 %v750
    %v939 = vunpack.c.l.b16 %v751
    %v940 = vunpack.c.h.b16 %v751
    %v941 = vunpack.c.l.b16 %v752
    %v942 = vunpack.c.h.b16 %v752
    %v943 = vunpack.c.l.b16 %v753
    %v944 = vunpack.c.h.b16 %v753
    %v945 = vunpack.c.l.b16 %v754
    %v946 = vunpack.c.h.b16 %v754
    %v947 = vunpack.c.l.b16 %v755
    %v948 = vunpack.c.h.b16 %v755
    %v949 = vunpack.c.l.b16 %v756
    %v950 = vunpack.c.h.b16 %v756
    %v951 = vunpack.c.l.b16 %v757
    %v952 = vunpack.c.h.b16 %v757
    %v953 = vunpack.c.l.b16 %v758
    %v954 = vunpack.c.h.b16 %v758
    %v955 = vunpack.c.l.b16 %v759
    %v956 = vunpack.c.h.b16 %v759
    %v957 = vunpack.c.l.b16 %v760
    %v958 = vunpack.c.h.b16 %v760
    %v959 = vunpack.c.l.b16 %v761
    %v960 = vunpack.c.h.b16 %v761
    %v961 = vunpack.c.l.b16 %v762
    %v962 = vunpack.c.h.b16 %v762
    %v963 = vunpack.c.l.b16 %v763
    %v964 = vunpack.c.h.b16 %v763
    %v965 = vunpack.c.l.b16 %v764
    %v966 = vunpack.c.h.b16 %v764
    %v967 = vunpack.c.l.b16 %v765
    %v968 = vunpack.c.h.b16 %v765
    %v969 = vunpack.c.l.b16 %v766
    %v970 = vunpack.c.h.b16 %v766
    %v971 = vunpack.c.l.b16 %v767
    %v972 = vunpack.c.h.b16 %v767
    %v973 = vunpack.c.l.b16 %v768
    %v974 = vunpack.c.h.b16 %v768
    %v975 = vunpack.c.l.b16 %v769
    %v976 = vunpack.c.h.b16 %v769
    %v977 = vunpack.c.l.b16 %v770
    %v978 = vunpack.c.h.b16 %v770
    %v979 = vunpack.c.l.b16 %v771
    %v980 = vunpack.c.h.b16 %v771
    %v981 = vunpack.c.l.b16 %v772
    %v982 = vunpack.c.h.b16 %v772
    %v983 = vunpack.c.l.b16 %v773
    %v984 = vunpack.c.h.b16 %v773
    %v985 = vunpack.c.l.b16 %v774
    %v986 = vunpack.c.h.b16 %v774
    %v987 = vunpack.c.l.b16 %v775
    %v988 = vunpack.c.h.b16 %v775
    %v989 = vunpack.c.l.b16 %v776
    %v990 = vunpack.c.h.b16 %v776
    %v991 = vpack.c.b16 %v867, %v863
    %v992 = vpack.c.b16 %v868, %v864
    %v993 = vpack.c.b16 %v869, %v865
    %v994 = vpack.c.b16 %v870, %v866
    %v995 = vpack.c.b16 %v875, %v871
    %v996 = vpack.c.b16 %v876, %v872
    %v997 = vpack.c.b16 %v877, %v873
    %v998 = vpack.c.b16 %v878, %v874
    %v999 = vpack.c.b16 %v883, %v879
    %v1000 = vpack.c.b16 %v884, %v880
    %v1001 = vpack.c.b16 %v885, %v881
    %v1002 = vpack.c.b16 %v886, %v882
    %v1003 = vpack.c.b16 %v891, %v887
    %v1004 = vpack.c.b16 %v892, %v888
    %v1005 = vpack.c.b16 %v893, %v889
    %v1006 = vpack.c.b16 %v894, %v890
    %v1007 = vpack.c.b16 %v899, %v895
    %v1008 = vpack.c.b16 %v900, %v896
    %v1009 = vpack.c.b16 %v901, %v897
    %v1010 = vpack.c.b16 %v902, %v898
    %v1011 = vpack.c.b16 %v907, %v903
    %v1012 = vpack.c.b16 %v908, %v904
    %v1013 = vpack.c.b16 %v909, %v905
    %v1014 = vpack.c.b16 %v910, %v906
    %v1015 = vpack.c.b16 %v915, %v911
    %v1016 = vpack.c.b16 %v916, %v912
    %v1017 = vpack.c.b16 %v917, %v913
    %v1018 = vpack.c.b16 %v918, %v914
    %v1019 = vpack.c.b16 %v923, %v919
    %v1020 = vpack.c.b16 %v924, %v920
    %v1021 = vpack.c.b16 %v925, %v921
    %v1022 = vpack.c.b16 %v926, %v922
    %v1023 = vpack.c.b16 %v931, %v927
    %v1024 = vpack.c.b16 %v932, %v928
    %v1025 = vpack.c.b16 %v933, %v929
    %v1026 = vpack.c.b16 %v934, %v930
    %v1027 = vpack.c.b16 %v939, %v935
    %v1028 = vpack.c.b16 %v940, %v936
    %v1029 = vpack.c.b16 %v941, %v937
    %v1030 = vpack.c.b16 %v942, %v938
    %v1031 = vpack.c.b16 %v947, %v943
    %v1032 = vpack.c.b16 %v948, %v944
    %v1033 = vpack.c.b16 %v949, %v945
    %v1034 = vpack.c.b16 %v950, %v946
    %v1035 = vpack.c.b16 %v955, %v951
    %v1036 = vpack.c.b16 %v956, %v952
    %v1037 = vpack.c.b16 %v957, %v953
    %v1038 = vpack.c.b16 %v958, %v954
    %v1039 = vpack.c.b16 %v963, %v959
    %v1040 = vpack.c.b16 %v964, %v960
    %v1041 = vpack.c.b16 %v965, %v961
    %v1042 = vpack.c.b16 %v966, %v962
    %v1043 = vpack.c.b16 %v971, %v967
    %v1044 = vpack.c.b16 %v972, %v968
    %v1045 = vpack.c.b16 %v973, %v969
    %v1046 = vpack.c.b16 %v974, %v970
    %v1047 = vpack.c.b16 %v979, %v975
    %v1048 = vpack.c.b16 %v980, %v976
    %v1049 = vpack.c.b16 %v981, %v977
    %v1050 = vpack.c.b16 %v982, %v978
    %v1051 = vpack.c.b16 %v987, %v983
    %v1052 = vpack.c.b16 %v988, %v984
    %v1053 = vpack.c.b16 %v989, %v985
    %v1054 = vpack.c.b16 %v990, %v986
    %1119 = vmatprep.subr.bf16.mxu0 %v1020
    %1120 = vmatpush1.bf16.msra.mxu0 %v1019
    %1121 = vmatprep.subr.bf16.mxu0 %v1016
    %1122 = vmatpush1.bf16.msra.mxu0 %v1015
    %1123 = vmatprep.subr.bf16.mxu0 %v1012
    %1124 = vmatpush1.bf16.msra.mxu0 %v1011
    %1125 = vmatprep.subr.bf16.mxu0 %v1008
    %1126 = vmatpush1.bf16.msra.mxu0 %v1007
    %1127 = vmatprep.subr.bf16.mxu0 %v1004
    %1128 = vmatpush1.bf16.msra.mxu0 %v1003
    %1129 = vmatprep.subr.bf16.mxu0 %v1000
    %1130 = vmatpush1.bf16.msra.mxu0 %v999
    %1131 = vmatprep.subr.bf16.mxu0 %v996
    %1132 = vmatpush1.bf16.msra.mxu0 %v995
    %1133 = vmatprep.subr.bf16.mxu0 %v992
    %1134 = vmatpush1.bf16.msra.mxu0 %v991
    %1135 = vmatprep.subr.bf16.mxu0 %v1052
    %1136 = vmatpush2.bf16.msra.mxu0 %v1051
    %1137 = vmatprep.subr.bf16.mxu0 %v1048
    %1138 = vmatpush2.bf16.msra.mxu0 %v1047
    %1139 = vmatprep.subr.bf16.mxu0 %v1044
    %1140 = vmatpush2.bf16.msra.mxu0 %v1043
    %1141 = vmatprep.subr.bf16.mxu0 %v1040
    %1142 = vmatpush2.bf16.msra.mxu0 %v1039
    %1143 = vmatprep.subr.bf16.mxu0 %v1036
    %1144 = vmatpush2.bf16.msra.mxu0 %v1035
    %1145 = vmatprep.subr.bf16.mxu0 %v1032
    %1146 = vmatpush2.bf16.msra.mxu0 %v1031
    %1147 = vmatprep.subr.bf16.mxu0 %v1028
    %1148 = vmatpush2.bf16.msra.mxu0 %v1027
    %1149 = vmatprep.subr.bf16.mxu0 %v1024
    %1150 = vmatpush2.bf16.msra.mxu0 %v1023
    %1151 = vmatprep.mubr.bf16.mxu0 %v712
    %1152 = vmatmul.mubr.bf16.gmra.mxu0 %v711
    %v1153 = vpop.f32.mrf.mxu0
    %v1154 = vadd.f32 %v782, %v1153
    %v1155 = vpop.f32.mrf.mxu0
    %v1156 = vadd.f32 %v786, %v1155
    %v1157 = vpop.f32.mrf.mxu0
    %v1158 = vpop.f32.mrf.mxu0
    %1159 = vdwg.mxu0
    %1160 = vmatprep.subr.bf16.mxu0 %v1022
    %1161 = vmatpush1.bf16.msra.mxu0 %v1021
    %1162 = vmatprep.subr.bf16.mxu0 %v1018
    %1163 = vmatpush1.bf16.msra.mxu0 %v1017
    %1164 = vmatprep.subr.bf16.mxu0 %v1014
    %1165 = vmatpush1.bf16.msra.mxu0 %v1013
    %1166 = vmatprep.subr.bf16.mxu0 %v1010
    %1167 = vmatpush1.bf16.msra.mxu0 %v1009
    %1168 = vmatprep.subr.bf16.mxu0 %v1006
    %1169 = vmatpush1.bf16.msra.mxu0 %v1005
    %1170 = vmatprep.subr.bf16.mxu0 %v1002
    %1171 = vmatpush1.bf16.msra.mxu0 %v1001
    %1172 = vmatprep.subr.bf16.mxu0 %v998
    %1173 = vmatpush1.bf16.msra.mxu0 %v997
    %1174 = vmatprep.subr.bf16.mxu0 %v994
    %1175 = vmatpush1.bf16.msra.mxu0 %v993
    %1176 = vmatprep.subr.bf16.mxu0 %v1054
    %1177 = vmatpush2.bf16.msra.mxu0 %v1053
    %1178 = vmatprep.subr.bf16.mxu0 %v1050
    %1179 = vmatpush2.bf16.msra.mxu0 %v1049
    %1180 = vmatprep.subr.bf16.mxu0 %v1046
    %1181 = vmatpush2.bf16.msra.mxu0 %v1045
    %1182 = vmatprep.subr.bf16.mxu0 %v1042
    %1183 = vmatpush2.bf16.msra.mxu0 %v1041
    %1184 = vmatprep.subr.bf16.mxu0 %v1038
    %1185 = vmatpush2.bf16.msra.mxu0 %v1037
    %1186 = vmatprep.subr.bf16.mxu0 %v1034
    %1187 = vmatpush2.bf16.msra.mxu0 %v1033
    %1188 = vmatprep.subr.bf16.mxu0 %v1030
    %1189 = vmatpush2.bf16.msra.mxu0 %v1029
    %1190 = vmatprep.subr.bf16.mxu0 %v1026
    %1191 = vmatpush2.bf16.msra.mxu0 %v1025
    %1192 = vmatprep.mubr.bf16.mxu0 %v712
    %1193 = vmatmul.mubr.bf16.gmra.mxu0 %v711
    %v1194 = vpop.f32.mrf.mxu0
    %v1195 = vadd.f32 %v790, %v1194
    %v1196 = vpop.f32.mrf.mxu0
    %v1197 = vadd.f32 %v794, %v1196
    %v1198 = vpop.f32.mrf.mxu0
    %v1199 = vpop.f32.mrf.mxu0
    %1200 = vdwg.mxu0
    %v1201 = vxor.u32 %v1154, 2147483648
    %v1202 = vxor.u32 %v1156, 2147483648
    %v1203 = vxor.u32 %v1195, 2147483648
    %v1204 = vmul.f32 %v1201, 1.442695
    %v1205 = vpow.pop %v1204
    %v1206 = vmul.f32 %v1202, 1.442695
    %v1207 = vpow.pop %v1206
    %v1208 = vmul.f32 %v1203, 1.442695
    %v1209 = vpow.pop %v1208
    %v1210 = vadd.f32 %v1205, 1.0
    %v1211 = vadd.f32 %v1207, 1.0
    %v1212 = vadd.f32 %v1209, 1.0
    %v1213 = vrcp.pop %v1210
    %v1214 = vmul.f32 1.0, %v1213
    %v1215 = vrcp.pop %v1211
    %v1216 = vmul.f32 1.0, %v1215
    %v1217 = vrcp.pop %v1212
    %v1218 = vmul.f32 1.0, %v1217
    %v1219 = vtanh.pop %v1197
    %v1220 = vmul.f32 %v1216, 0.0
    %v1221 = vmul.f32 %v1214, %v1219
    %v1222 = vadd.f32 %v1220, %v1221
    %v1223 = vtanh.pop %v1222
    %v1224 = vmul.f32 %v1218, %v1223
    %v1225 = vpack.c.bf16 %v1224, %v1224
    %v1226 = vld [vmem:[%s6] sm:$0xf]
    %v1227 = vld [vmem:[%s6 + $0x4] sm:$0xf]
    %v1228 = vld [vmem:[%s6 + $0x8] sm:$0xf]
    %v1229 = vld [vmem:[%s6 + $0xc] sm:$0xf]
    %v1230 = vld [vmem:[%s6 + $0x10] sm:$0xf]
    %v1231 = vld [vmem:[%s6 + $0x14] sm:$0xf]
    %v1232 = vld [vmem:[%s6 + $0x18] sm:$0xf]
    %v1233 = vld [vmem:[%s6 + $0x1c] sm:$0xf]
    %v1234 = vld [vmem:[%s6 + $0x20] sm:$0xf]
    %v1235 = vld [vmem:[%s6 + $0x24] sm:$0xf]
    %v1236 = vld [vmem:[%s6 + $0x28] sm:$0xf]
    %v1237 = vld [vmem:[%s6 + $0x2c] sm:$0xf]
    %v1238 = vld [vmem:[%s6 + $0x30] sm:$0xf]
    %v1239 = vld [vmem:[%s6 + $0x34] sm:$0xf]
    %v1240 = vld [vmem:[%s6 + $0x38] sm:$0xf]
    %v1241 = vld [vmem:[%s6 + $0x3c] sm:$0xf]
    %v1242 = vld [vmem:[%s7] sm:$0x1]
    %v1244 = vlaneseq
    %v1245 = vshrl.u32 %v1244, 7
    %v1246 = vsub.s32 0, %v1245
    %v1247 = vrot.slane %v1242, %v1246
    %v1265 = vunpack.c.l.b16 %v1226
    %v1266 = vunpack.c.l.b16 %v1227
    %v1267 = vunpack.c.l.b16 %v1228
    %v1268 = vunpack.c.l.b16 %v1229
    %v1269 = vunpack.c.l.b16 %v1230
    %v1270 = vunpack.c.l.b16 %v1231
    %v1271 = vunpack.c.l.b16 %v1232
    %v1272 = vunpack.c.l.b16 %v1233
    %v1273 = vunpack.c.l.b16 %v1234
    %v1274 = vunpack.c.l.b16 %v1235
    %v1275 = vunpack.c.l.b16 %v1236
    %v1276 = vunpack.c.l.b16 %v1237
    %v1277 = vunpack.c.l.b16 %v1238
    %v1278 = vunpack.c.l.b16 %v1239
    %v1279 = vunpack.c.l.b16 %v1240
    %v1280 = vunpack.c.l.b16 %v1241
    %v1281 = vpack.c.b16 %v1266, %v1265
    %v1282 = vpack.c.b16 %v1268, %v1267
    %v1283 = vpack.c.b16 %v1270, %v1269
    %v1284 = vpack.c.b16 %v1272, %v1271
    %v1285 = vpack.c.b16 %v1274, %v1273
    %v1286 = vpack.c.b16 %v1276, %v1275
    %v1287 = vpack.c.b16 %v1278, %v1277
    %v1288 = vpack.c.b16 %v1280, %v1279
    %1297 = vmatprep.subr.bf16.mxu0 0
    %1298 = vmatpush1.bf16.msra.mxu0 %v1288
    %1299 = vmatprep.subr.bf16.mxu0 0
    %1300 = vmatpush1.bf16.msra.mxu0 %v1287
    %1301 = vmatprep.subr.bf16.mxu0 0
    %1302 = vmatpush1.bf16.msra.mxu0 %v1286
    %1303 = vmatprep.subr.bf16.mxu0 0
    %1304 = vmatpush1.bf16.msra.mxu0 %v1285
    %1305 = vmatprep.subr.bf16.mxu0 0
    %1306 = vmatpush1.bf16.msra.mxu0 %v1284
    %1307 = vmatprep.subr.bf16.mxu0 0
    %1308 = vmatpush1.bf16.msra.mxu0 %v1283
    %1309 = vmatprep.subr.bf16.mxu0 0
    %1310 = vmatpush1.bf16.msra.mxu0 %v1282
    %1311 = vmatprep.subr.bf16.mxu0 0
    %1312 = vmatpush1.bf16.msra.mxu0 %v1281
    %1313 = vmatprep.subr.bf16.mxu0 0
    %1314 = vmatpush2.bf16.msra.mxu0 0
    %1315 = vmatprep.subr.bf16.mxu0 0
    %1316 = vmatpush2.bf16.msra.mxu0 0
    %1317 = vmatprep.subr.bf16.mxu0 0
    %1318 = vmatpush2.bf16.msra.mxu0 0
    %1319 = vmatprep.subr.bf16.mxu0 0
    %1320 = vmatpush2.bf16.msra.mxu0 0
    %1321 = vmatprep.subr.bf16.mxu0 0
    %1322 = vmatpush2.bf16.msra.mxu0 0
    %1323 = vmatprep.subr.bf16.mxu0 0
    %1324 = vmatpush2.bf16.msra.mxu0 0
    %1325 = vmatprep.subr.bf16.mxu0 0
    %1326 = vmatpush2.bf16.msra.mxu0 0
    %1327 = vmatprep.subr.bf16.mxu0 0
    %1328 = vmatpush2.bf16.msra.mxu0 0
    %1329 = vmatprep.mubr.bf16.mxu0 0
    %1330 = vmatmul.mubr.bf16.gmra.mxu0 %v1225
    %v1331 = vpop.f32.mrf.mxu0
    %v1332 = vadd.f32 %v1247, %v1331
    %v1333 = vpop.f32.mrf.mxu0
    %v1334 = vpop.f32.mrf.mxu0
    %v1335 = vpop.f32.mrf.mxu0
    %1336 = vdwg.mxu0
    %v1339 = vunpack.c.l.s4 1966171168
    %v1340 = vunpack.c.0.s8 %v1339
    %v1341 = vlaneseq
    %v1342 = vshrl.u32 %v1341, 7
    %v1343 = vsub.s32 %v1340, %v1342
    %v1344 = vrot.slane %v1332, %v1343
    %v1345 = vcombine.high %v1344, %v1344
    %v1347 = vunpack.c.l.s4 1966171168
    %v1348 = vunpack.c.0.s8 %v1347
    %v1349 = vlaneseq
    %v1350 = vshrl.u32 %v1349, 7
    %v1351 = vsub.s32 %v1348, %v1350
    %v1352 = vrot.slane %v1344, %v1351
    %v1354 = vunpack.c.l.s4 1966171168
    %v1355 = vunpack.c.0.s8 %v1354
    %v1356 = vlaneseq
    %v1357 = vshrl.u32 %v1356, 7
    %v1358 = vsub.s32 %v1355, %v1357
    %v1359 = vrot.slane %v1345, %v1358
    %vm1362 = vcmask 122880
    %1363 = vst.msk [vmem:[#allocation8] sm:$0x1] %vm1362, %v1352
    %1364 = vst.msk [vmem:[#allocation8 + $0x8] sm:$0x1] %vm1362, %v1359
    %s1365 = scalar_lea.vmem [#allocation2], 1
    %v1366 = vld [vmem:[%s1365] ss:$8 sm:$0xf]
    %s1367 = scalar_lea.vmem [#allocation2], 33
    %v1368 = vld [vmem:[%s1367] ss:$8 sm:$0xf]
    %v1369 = vpack.c.bf16 %v691, %v691
    %v1370 = vpack.c.bf16 %v692, %v692
    %v1371 = vld [vmem:[#allocation3] sm:$0xff]
    %v1372 = vld [vmem:[#allocation3 + $0x8] sm:$0xff]
    %v1373 = vld [vmem:[#allocation3 + $0x10] sm:$0xff]
    %v1374 = vld [vmem:[#allocation3 + $0x18] sm:$0xff]
    %v1375 = vld [vmem:[#allocation3 + $0x20] sm:$0xff]
    %v1376 = vld [vmem:[#allocation3 + $0x28] sm:$0xff]
    %v1377 = vld [vmem:[#allocation3 + $0x30] sm:$0xff]
    %v1378 = vld [vmem:[#allocation3 + $0x38] sm:$0xff]
    %v1379 = vld [vmem:[#allocation3 + $0x40] sm:$0xff]
    %v1380 = vld [vmem:[#allocation3 + $0x48] sm:$0xff]
    %v1381 = vld [vmem:[#allocation3 + $0x50] sm:$0xff]
    %v1382 = vld [vmem:[#allocation3 + $0x58] sm:$0xff]
    %v1383 = vld [vmem:[#allocation3 + $0x60] sm:$0xff]
    %v1384 = vld [vmem:[#allocation3 + $0x68] sm:$0xff]
    %v1385 = vld [vmem:[#allocation3 + $0x70] sm:$0xff]
    %v1386 = vld [vmem:[#allocation3 + $0x78] sm:$0xff]
    %v1387 = vld [vmem:[#allocation3 + $0x80] sm:$0xff]
    %v1388 = vld [vmem:[#allocation3 + $0x88] sm:$0xff]
    %v1389 = vld [vmem:[#allocation3 + $0x90] sm:$0xff]
    %v1390 = vld [vmem:[#allocation3 + $0x98] sm:$0xff]
    %v1391 = vld [vmem:[#allocation3 + $0xa0] sm:$0xff]
    %v1392 = vld [vmem:[#allocation3 + $0xa8] sm:$0xff]
    %v1393 = vld [vmem:[#allocation3 + $0xb0] sm:$0xff]
    %v1394 = vld [vmem:[#allocation3 + $0xb8] sm:$0xff]
    %v1395 = vld [vmem:[#allocation3 + $0xc0] sm:$0xff]
    %v1396 = vld [vmem:[#allocation3 + $0xc8] sm:$0xff]
    %v1397 = vld [vmem:[#allocation3 + $0xd0] sm:$0xff]
    %v1398 = vld [vmem:[#allocation3 + $0xd8] sm:$0xff]
    %v1399 = vld [vmem:[#allocation3 + $0xe0] sm:$0xff]
    %v1400 = vld [vmem:[#allocation3 + $0xe8] sm:$0xff]
    %v1401 = vld [vmem:[#allocation3 + $0xf0] sm:$0xff]
    %v1402 = vld [vmem:[#allocation3 + $0xf8] sm:$0xff]
    %v1405 = vunpack.c.l.b16 %v1369
    %v1406 = vunpack.c.l.b16 %v1370
    %v1407 = vrot.slane %v1406, 7
    %vm1408 = vcmask 1041409
    %v1409 = vsel %vm1408, %v1407, %v1405
    %v1410 = vpack.c.b16 %v1409, %v1409
    %v1444 = vunpack.c.l.b16 %v1371
    %v1445 = vunpack.c.h.b16 %v1371
    %v1446 = vunpack.c.l.b16 %v1372
    %v1447 = vunpack.c.h.b16 %v1372
    %v1448 = vunpack.c.l.b16 %v1373
    %v1449 = vunpack.c.h.b16 %v1373
    %v1450 = vunpack.c.l.b16 %v1374
    %v1451 = vunpack.c.h.b16 %v1374
    %v1452 = vunpack.c.l.b16 %v1375
    %v1453 = vunpack.c.h.b16 %v1375
    %v1454 = vunpack.c.l.b16 %v1376
    %v1455 = vunpack.c.h.b16 %v1376
    %v1456 = vunpack.c.l.b16 %v1377
    %v1457 = vunpack.c.h.b16 %v1377
    %v1458 = vunpack.c.l.b16 %v1378
    %v1459 = vunpack.c.h.b16 %v1378
    %v1460 = vunpack.c.l.b16 %v1379
    %v1461 = vunpack.c.h.b16 %v1379
    %v1462 = vunpack.c.l.b16 %v1380
    %v1463 = vunpack.c.h.b16 %v1380
    %v1464 = vunpack.c.l.b16 %v1381
    %v1465 = vunpack.c.h.b16 %v1381
    %v1466 = vunpack.c.l.b16 %v1382
    %v1467 = vunpack.c.h.b16 %v1382
    %v1468 = vunpack.c.l.b16 %v1383
    %v1469 = vunpack.c.h.b16 %v1383
    %v1470 = vunpack.c.l.b16 %v1384
    %v1471 = vunpack.c.h.b16 %v1384
    %v1472 = vunpack.c.l.b16 %v1385
    %v1473 = vunpack.c.h.b16 %v1385
    %v1474 = vunpack.c.l.b16 %v1386
    %v1475 = vunpack.c.h.b16 %v1386
    %v1476 = vunpack.c.l.b16 %v1387
    %v1477 = vunpack.c.h.b16 %v1387
    %v1478 = vunpack.c.l.b16 %v1388
    %v1479 = vunpack.c.h.b16 %v1388
    %v1480 = vunpack.c.l.b16 %v1389
    %v1481 = vunpack.c.h.b16 %v1389
    %v1482 = vunpack.c.l.b16 %v1390
    %v1483 = vunpack.c.h.b16 %v1390
    %v1484 = vunpack.c.l.b16 %v1391
    %v1485 = vunpack.c.h.b16 %v1391
    %v1486 = vunpack.c.l.b16 %v1392
    %v1487 = vunpack.c.h.b16 %v1392
    %v1488 = vunpack.c.l.b16 %v1393
    %v1489 = vunpack.c.h.b16 %v1393
    %v1490 = vunpack.c.l.b16 %v1394
    %v1491 = vunpack.c.h.b16 %v1394
    %v1492 = vunpack.c.l.b16 %v1395
    %v1493 = vunpack.c.h.b16 %v1395
    %v1494 = vunpack.c.l.b16 %v1396
    %v1495 = vunpack.c.h.b16 %v1396
    %v1496 = vunpack.c.l.b16 %v1397
    %v1497 = vunpack.c.h.b16 %v1397
    %v1498 = vunpack.c.l.b16 %v1398
    %v1499 = vunpack.c.h.b16 %v1398
    %v1500 = vunpack.c.l.b16 %v1399
    %v1501 = vunpack.c.h.b16 %v1399
    %v1502 = vunpack.c.l.b16 %v1400
    %v1503 = vunpack.c.h.b16 %v1400
    %v1504 = vunpack.c.l.b16 %v1401
    %v1505 = vunpack.c.h.b16 %v1401
    %v1506 = vunpack.c.l.b16 %v1402
    %v1507 = vunpack.c.h.b16 %v1402
    %v1508 = vpack.c.b16 %v1448, %v1444
    %v1509 = vpack.c.b16 %v1449, %v1445
    %v1510 = vpack.c.b16 %v1450, %v1446
    %v1511 = vpack.c.b16 %v1451, %v1447
    %v1512 = vpack.c.b16 %v1456, %v1452
    %v1513 = vpack.c.b16 %v1457, %v1453
    %v1514 = vpack.c.b16 %v1458, %v1454
    %v1515 = vpack.c.b16 %v1459, %v1455
    %v1516 = vpack.c.b16 %v1464, %v1460
    %v1517 = vpack.c.b16 %v1465, %v1461
    %v1518 = vpack.c.b16 %v1466, %v1462
    %v1519 = vpack.c.b16 %v1467, %v1463
    %v1520 = vpack.c.b16 %v1472, %v1468
    %v1521 = vpack.c.b16 %v1473, %v1469
    %v1522 = vpack.c.b16 %v1474, %v1470
    %v1523 = vpack.c.b16 %v1475, %v1471
    %v1524 = vpack.c.b16 %v1480, %v1476
    %v1525 = vpack.c.b16 %v1481, %v1477
    %v1526 = vpack.c.b16 %v1482, %v1478
    %v1527 = vpack.c.b16 %v1483, %v1479
    %v1528 = vpack.c.b16 %v1488, %v1484
    %v1529 = vpack.c.b16 %v1489, %v1485
    %v1530 = vpack.c.b16 %v1490, %v1486
    %v1531 = vpack.c.b16 %v1491, %v1487
    %v1532 = vpack.c.b16 %v1496, %v1492
    %v1533 = vpack.c.b16 %v1497, %v1493
    %v1534 = vpack.c.b16 %v1498, %v1494
    %v1535 = vpack.c.b16 %v1499, %v1495
    %v1536 = vpack.c.b16 %v1504, %v1500
    %v1537 = vpack.c.b16 %v1505, %v1501
    %v1538 = vpack.c.b16 %v1506, %v1502
    %v1539 = vpack.c.b16 %v1507, %v1503
    %1572 = vmatprep.subr.bf16.mxu0 %v1537
    %1573 = vmatpush1.bf16.msra.mxu0 %v1536
    %1574 = vmatprep.subr.bf16.mxu0 %v1533
    %1575 = vmatpush1.bf16.msra.mxu0 %v1532
    %1576 = vmatprep.subr.bf16.mxu0 %v1529
    %1577 = vmatpush1.bf16.msra.mxu0 %v1528
    %1578 = vmatprep.subr.bf16.mxu0 %v1525
    %1579 = vmatpush1.bf16.msra.mxu0 %v1524
    %1580 = vmatprep.subr.bf16.mxu0 %v1521
    %1581 = vmatpush1.bf16.msra.mxu0 %v1520
    %1582 = vmatprep.subr.bf16.mxu0 %v1517
    %1583 = vmatpush1.bf16.msra.mxu0 %v1516
    %1584 = vmatprep.subr.bf16.mxu0 %v1513
    %1585 = vmatpush1.bf16.msra.mxu0 %v1512
    %1586 = vmatprep.subr.bf16.mxu0 %v1509
    %1587 = vmatpush1.bf16.msra.mxu0 %v1508
    %1588 = vmatprep.subr.bf16.mxu0 0
    %1589 = vmatpush2.bf16.msra.mxu0 0
    %1590 = vmatprep.subr.bf16.mxu0 0
    %1591 = vmatpush2.bf16.msra.mxu0 0
    %1592 = vmatprep.subr.bf16.mxu0 0
    %1593 = vmatpush2.bf16.msra.mxu0 0
    %1594 = vmatprep.subr.bf16.mxu0 0
    %1595 = vmatpush2.bf16.msra.mxu0 0
    %1596 = vmatprep.subr.bf16.mxu0 0
    %1597 = vmatpush2.bf16.msra.mxu0 0
    %1598 = vmatprep.subr.bf16.mxu0 0
    %1599 = vmatpush2.bf16.msra.mxu0 0
    %1600 = vmatprep.subr.bf16.mxu0 0
    %1601 = vmatpush2.bf16.msra.mxu0 0
    %1602 = vmatprep.subr.bf16.mxu0 0
    %1603 = vmatpush2.bf16.msra.mxu0 0
    %1604 = vmatprep.mubr.bf16.mxu0 0
    %1605 = vmatmul.mubr.bf16.gmra.mxu0 %v1410
    %v1606 = vpop.f32.mrf.mxu0
    %v1607 = vadd.f32 0.0, %v1606
    %v1608 = vpop.f32.mrf.mxu0
    %v1609 = vadd.f32 0.0, %v1608
    %v1610 = vpop.f32.mrf.mxu0
    %v1611 = vpop.f32.mrf.mxu0
    %1612 = vdwg.mxu0
    %1613 = vmatprep.subr.bf16.mxu0 %v1539
    %1614 = vmatpush1.bf16.msra.mxu0 %v1538
    %1615 = vmatprep.subr.bf16.mxu0 %v1535
    %1616 = vmatpush1.bf16.msra.mxu0 %v1534
    %1617 = vmatprep.subr.bf16.mxu0 %v1531
    %1618 = vmatpush1.bf16.msra.mxu0 %v1530
    %1619 = vmatprep.subr.bf16.mxu0 %v1527
    %1620 = vmatpush1.bf16.msra.mxu0 %v1526
    %1621 = vmatprep.subr.bf16.mxu0 %v1523
    %1622 = vmatpush1.bf16.msra.mxu0 %v1522
    %1623 = vmatprep.subr.bf16.mxu0 %v1519
    %1624 = vmatpush1.bf16.msra.mxu0 %v1518
    %1625 = vmatprep.subr.bf16.mxu0 %v1515
    %1626 = vmatpush1.bf16.msra.mxu0 %v1514
    %1627 = vmatprep.subr.bf16.mxu0 %v1511
    %1628 = vmatpush1.bf16.msra.mxu0 %v1510
    %1629 = vmatprep.subr.bf16.mxu0 0
    %1630 = vmatpush2.bf16.msra.mxu0 0
    %1631 = vmatprep.subr.bf16.mxu0 0
    %1632 = vmatpush2.bf16.msra.mxu0 0
    %1633 = vmatprep.subr.bf16.mxu0 0
    %1634 = vmatpush2.bf16.msra.mxu0 0
    %1635 = vmatprep.subr.bf16.mxu0 0
    %1636 = vmatpush2.bf16.msra.mxu0 0
    %1637 = vmatprep.subr.bf16.mxu0 0
    %1638 = vmatpush2.bf16.msra.mxu0 0
    %1639 = vmatprep.subr.bf16.mxu0 0
    %1640 = vmatpush2.bf16.msra.mxu0 0
    %1641 = vmatprep.subr.bf16.mxu0 0
    %1642 = vmatpush2.bf16.msra.mxu0 0
    %1643 = vmatprep.subr.bf16.mxu0 0
    %1644 = vmatpush2.bf16.msra.mxu0 0
    %1645 = vmatprep.mubr.bf16.mxu0 0
    %1646 = vmatmul.mubr.bf16.gmra.mxu0 %v1410
    %v1647 = vpop.f32.mrf.mxu0
    %v1648 = vadd.f32 0.0, %v1647
    %v1649 = vpop.f32.mrf.mxu0
    %v1650 = vadd.f32 0.0, %v1649
    %v1651 = vpop.f32.mrf.mxu0
    %v1652 = vpop.f32.mrf.mxu0
    %1653 = vdwg.mxu0
    %v1658 = vcombine.low %v1607, %v1609
    %v1659 = vcombine.low %v1648, %v1650
    %v1661 = vunpack.c.l.s4 1966171168
    %v1662 = vunpack.c.0.s8 %v1661
    %v1663 = vlaneseq
    %v1664 = vshrl.u32 %v1663, 7
    %v1665 = vsub.s32 %v1662, %v1664
    %v1666 = vrot.slane %v1658, %v1665
    %v1668 = vunpack.c.l.s4 1966171168
    %v1669 = vunpack.c.0.s8 %v1668
    %v1670 = vlaneseq
    %v1671 = vshrl.u32 %v1670, 7
    %v1672 = vsub.s32 %v1669, %v1671
    %v1673 = vrot.slane %v1659, %v1672
    %v1674 = vcombine.low %v1666, %v1673
    %v1675 = vcombine.high %v1666, %v1673
    %v1677 = vunpack.c.l.s4 1966171168
    %v1678 = vunpack.c.0.s8 %v1677
    %v1679 = vlaneseq
    %v1680 = vshrl.u32 %v1679, 7
    %v1681 = vsub.s32 %v1678, %v1680
    %v1682 = vrot.slane %v1674, %v1681
    %v1684 = vunpack.c.l.s4 1966171168
    %v1685 = vunpack.c.0.s8 %v1684
    %v1686 = vlaneseq
    %v1687 = vshrl.u32 %v1686, 7
    %v1688 = vsub.s32 %v1685, %v1687
    %v1689 = vrot.slane %v1675, %v1688
    %v1692 = vadd.f32 %v1366, %v1682
    %v1693 = vadd.f32 %v1368, %v1689
    %v1694 = vxor.u32 %v1692, 2147483648
    %v1695 = vxor.u32 %v1693, 2147483648
    %v1696 = vmul.f32 %v1694, 1.442695
    %v1697 = vpow.pop %v1696
    %v1698 = vmul.f32 %v1695, 1.442695
    %v1699 = vpow.pop %v1698
    %v1700 = vadd.f32 %v1697, 1.0
    %v1701 = vadd.f32 %v1699, 1.0
    %v1702 = vrcp.pop %v1700
    %v1703 = vmul.f32 1.0, %v1702
    %v1704 = vrcp.pop %v1701
    %v1705 = vmul.f32 1.0, %v1704
    %v1708 = vrot.slane %v1692, 3
    %v1709 = vrot.slane %v1693, 3
    %v1712 = vtanh.pop %v1708
    %v1713 = vtanh.pop %v1709
    %v1716 = vrot.slane %v1703, 1
    %v1717 = vrot.slane %v1705, 1
    %v1720 = vmul.f32 %v1716, %v683
    %v1721 = vmul.f32 %v1717, %v684
    %v1722 = vmul.f32 %v1703, %v1712
    %v1723 = vmul.f32 %v1705, %v1713
    %v1724 = vadd.f32 %v1720, %v1722
    %v1725 = vadd.f32 %v1721, %v1723
    %v1726 = vtanh.pop %v1724
    %v1727 = vtanh.pop %v1725
    %v1728 = vrot.slane %v1703, 2
    %v1729 = vrot.slane %v1705, 2
    %v1732 = vmul.f32 %v1728, %v1726
    %v1733 = vmul.f32 %v1729, %v1727
    %v1736 = vcombine.low %v1732, %v1733
    %v1738 = vunpack.c.l.s4 1966171168
    %v1739 = vunpack.c.0.s8 %v1738
    %v1740 = vlaneseq
    %v1741 = vshrl.u32 %v1740, 7
    %v1742 = vsub.s32 %v1739, %v1741
    %v1743 = vrot.slane %v1736, %v1742
    %v1745 = vunpack.c.l.s4 1966171168
    %v1746 = vunpack.c.0.s8 %v1745
    %v1747 = vlaneseq
    %v1748 = vshrl.u32 %v1747, 7
    %v1749 = vsub.s32 %v1746, %v1748
    %v1750 = vrot.slane %v1743, %v1749
    %v1752 = vpack.c.bf16 %v1750, %v1750
    %v1753 = vld [vmem:[#allocation6] sm:$0xff]
    %v1754 = vld [vmem:[#allocation6 + $0x8] sm:$0xff]
    %v1755 = vld [vmem:[#allocation6 + $0x10] sm:$0xff]
    %v1756 = vld [vmem:[#allocation6 + $0x18] sm:$0xff]
    %v1757 = vld [vmem:[#allocation6 + $0x20] sm:$0xff]
    %v1758 = vld [vmem:[#allocation6 + $0x28] sm:$0xff]
    %v1759 = vld [vmem:[#allocation6 + $0x30] sm:$0xff]
    %v1760 = vld [vmem:[#allocation6 + $0x38] sm:$0xff]
    %v1761 = vld [vmem:[#allocation6 + $0x40] sm:$0xff]
    %v1762 = vld [vmem:[#allocation6 + $0x48] sm:$0xff]
    %v1763 = vld [vmem:[#allocation6 + $0x50] sm:$0xff]
    %v1764 = vld [vmem:[#allocation6 + $0x58] sm:$0xff]
    %v1765 = vld [vmem:[#allocation6 + $0x60] sm:$0xff]
    %v1766 = vld [vmem:[#allocation6 + $0x68] sm:$0xff]
    %v1767 = vld [vmem:[#allocation6 + $0x70] sm:$0xff]
    %v1768 = vld [vmem:[#allocation6 + $0x78] sm:$0xff]
    %v1769 = vld [vmem:[#allocation6 + $0x80] sm:$0xff]
    %v1770 = vld [vmem:[#allocation6 + $0x88] sm:$0xff]
    %v1771 = vld [vmem:[#allocation6 + $0x90] sm:$0xff]
    %v1772 = vld [vmem:[#allocation6 + $0x98] sm:$0xff]
    %v1773 = vld [vmem:[#allocation6 + $0xa0] sm:$0xff]
    %v1774 = vld [vmem:[#allocation6 + $0xa8] sm:$0xff]
    %v1775 = vld [vmem:[#allocation6 + $0xb0] sm:$0xff]
    %v1776 = vld [vmem:[#allocation6 + $0xb8] sm:$0xff]
    %v1777 = vld [vmem:[#allocation6 + $0xc0] sm:$0xff]
    %v1778 = vld [vmem:[#allocation6 + $0xc8] sm:$0xff]
    %v1779 = vld [vmem:[#allocation6 + $0xd0] sm:$0xff]
    %v1780 = vld [vmem:[#allocation6 + $0xd8] sm:$0xff]
    %v1781 = vld [vmem:[#allocation6 + $0xe0] sm:$0xff]
    %v1782 = vld [vmem:[#allocation6 + $0xe8] sm:$0xff]
    %v1783 = vld [vmem:[#allocation6 + $0xf0] sm:$0xff]
    %v1784 = vld [vmem:[#allocation6 + $0xf8] sm:$0xff]
    %v1785 = vld [vmem:[#allocation6 + $0x100] sm:$0xff]
    %v1786 = vld [vmem:[#allocation6 + $0x108] sm:$0xff]
    %v1787 = vld [vmem:[#allocation6 + $0x110] sm:$0xff]
    %v1788 = vld [vmem:[#allocation6 + $0x118] sm:$0xff]
    %v1789 = vld [vmem:[#allocation6 + $0x120] sm:$0xff]
    %v1790 = vld [vmem:[#allocation6 + $0x128] sm:$0xff]
    %v1791 = vld [vmem:[#allocation6 + $0x130] sm:$0xff]
    %v1792 = vld [vmem:[#allocation6 + $0x138] sm:$0xff]
    %v1793 = vld [vmem:[#allocation6 + $0x140] sm:$0xff]
    %v1794 = vld [vmem:[#allocation6 + $0x148] sm:$0xff]
    %v1795 = vld [vmem:[#allocation6 + $0x150] sm:$0xff]
    %v1796 = vld [vmem:[#allocation6 + $0x158] sm:$0xff]
    %v1797 = vld [vmem:[#allocation6 + $0x160] sm:$0xff]
    %v1798 = vld [vmem:[#allocation6 + $0x168] sm:$0xff]
    %v1799 = vld [vmem:[#allocation6 + $0x170] sm:$0xff]
    %v1800 = vld [vmem:[#allocation6 + $0x178] sm:$0xff]
    %v1801 = vld [vmem:[#allocation6 + $0x180] sm:$0xff]
    %v1802 = vld [vmem:[#allocation6 + $0x188] sm:$0xff]
    %v1803 = vld [vmem:[#allocation6 + $0x190] sm:$0xff]
    %v1804 = vld [vmem:[#allocation6 + $0x198] sm:$0xff]
    %v1805 = vld [vmem:[#allocation6 + $0x1a0] sm:$0xff]
    %v1806 = vld [vmem:[#allocation6 + $0x1a8] sm:$0xff]
    %v1807 = vld [vmem:[#allocation6 + $0x1b0] sm:$0xff]
    %v1808 = vld [vmem:[#allocation6 + $0x1b8] sm:$0xff]
    %v1809 = vld [vmem:[#allocation6 + $0x1c0] sm:$0xff]
    %v1810 = vld [vmem:[#allocation6 + $0x1c8] sm:$0xff]
    %v1811 = vld [vmem:[#allocation6 + $0x1d0] sm:$0xff]
    %v1812 = vld [vmem:[#allocation6 + $0x1d8] sm:$0xff]
    %v1813 = vld [vmem:[#allocation6 + $0x1e0] sm:$0xff]
    %v1814 = vld [vmem:[#allocation6 + $0x1e8] sm:$0xff]
    %v1815 = vld [vmem:[#allocation6 + $0x1f0] sm:$0xff]
    %v1816 = vld [vmem:[#allocation6 + $0x1f8] sm:$0xff]
    %v1817 = vld [vmem:[%s5] sm:$0xf]
    %v1819 = vlaneseq
    %v1820 = vshrl.u32 %v1819, 7
    %v1821 = vsub.s32 0, %v1820
    %v1822 = vrot.slane %v1817, %v1821
    %v1823 = vlaneseq
    %v1824 = vshrl.u32 %v1823, 7
    %v1825 = vsub.s32 1, %v1824
    %v1826 = vrot.slane %v1817, %v1825
    %v1827 = vlaneseq
    %v1828 = vshrl.u32 %v1827, 7
    %v1829 = vsub.s32 2, %v1828
    %v1830 = vrot.slane %v1817, %v1829
    %v1831 = vlaneseq
    %v1832 = vshrl.u32 %v1831, 7
    %v1833 = vsub.s32 3, %v1832
    %v1834 = vrot.slane %v1817, %v1833
    %v1903 = vunpack.c.l.b16 %v1753
    %v1904 = vunpack.c.h.b16 %v1753
    %v1905 = vunpack.c.l.b16 %v1754
    %v1906 = vunpack.c.h.b16 %v1754
    %v1907 = vunpack.c.l.b16 %v1755
    %v1908 = vunpack.c.h.b16 %v1755
    %v1909 = vunpack.c.l.b16 %v1756
    %v1910 = vunpack.c.h.b16 %v1756
    %v1911 = vunpack.c.l.b16 %v1757
    %v1912 = vunpack.c.h.b16 %v1757
    %v1913 = vunpack.c.l.b16 %v1758
    %v1914 = vunpack.c.h.b16 %v1758
    %v1915 = vunpack.c.l.b16 %v1759
    %v1916 = vunpack.c.h.b16 %v1759
    %v1917 = vunpack.c.l.b16 %v1760
    %v1918 = vunpack.c.h.b16 %v1760
    %v1919 = vunpack.c.l.b16 %v1761
    %v1920 = vunpack.c.h.b16 %v1761
    %v1921 = vunpack.c.l.b16 %v1762
    %v1922 = vunpack.c.h.b16 %v1762
    %v1923 = vunpack.c.l.b16 %v1763
    %v1924 = vunpack.c.h.b16 %v1763
    %v1925 = vunpack.c.l.b16 %v1764
    %v1926 = vunpack.c.h.b16 %v1764
    %v1927 = vunpack.c.l.b16 %v1765
    %v1928 = vunpack.c.h.b16 %v1765
    %v1929 = vunpack.c.l.b16 %v1766
    %v1930 = vunpack.c.h.b16 %v1766
    %v1931 = vunpack.c.l.b16 %v1767
    %v1932 = vunpack.c.h.b16 %v1767
    %v1933 = vunpack.c.l.b16 %v1768
    %v1934 = vunpack.c.h.b16 %v1768
    %v1935 = vunpack.c.l.b16 %v1769
    %v1936 = vunpack.c.h.b16 %v1769
    %v1937 = vunpack.c.l.b16 %v1770
    %v1938 = vunpack.c.h.b16 %v1770
    %v1939 = vunpack.c.l.b16 %v1771
    %v1940 = vunpack.c.h.b16 %v1771
    %v1941 = vunpack.c.l.b16 %v1772
    %v1942 = vunpack.c.h.b16 %v1772
    %v1943 = vunpack.c.l.b16 %v1773
    %v1944 = vunpack.c.h.b16 %v1773
    %v1945 = vunpack.c.l.b16 %v1774
    %v1946 = vunpack.c.h.b16 %v1774
    %v1947 = vunpack.c.l.b16 %v1775
    %v1948 = vunpack.c.h.b16 %v1775
    %v1949 = vunpack.c.l.b16 %v1776
    %v1950 = vunpack.c.h.b16 %v1776
    %v1951 = vunpack.c.l.b16 %v1777
    %v1952 = vunpack.c.h.b16 %v1777
    %v1953 = vunpack.c.l.b16 %v1778
    %v1954 = vunpack.c.h.b16 %v1778
    %v1955 = vunpack.c.l.b16 %v1779
    %v1956 = vunpack.c.h.b16 %v1779
    %v1957 = vunpack.c.l.b16 %v1780
    %v1958 = vunpack.c.h.b16 %v1780
    %v1959 = vunpack.c.l.b16 %v1781
    %v1960 = vunpack.c.h.b16 %v1781
    %v1961 = vunpack.c.l.b16 %v1782
    %v1962 = vunpack.c.h.b16 %v1782
    %v1963 = vunpack.c.l.b16 %v1783
    %v1964 = vunpack.c.h.b16 %v1783
    %v1965 = vunpack.c.l.b16 %v1784
    %v1966 = vunpack.c.h.b16 %v1784
    %v1967 = vunpack.c.l.b16 %v1785
    %v1968 = vunpack.c.h.b16 %v1785
    %v1969 = vunpack.c.l.b16 %v1786
    %v1970 = vunpack.c.h.b16 %v1786
    %v1971 = vunpack.c.l.b16 %v1787
    %v1972 = vunpack.c.h.b16 %v1787
    %v1973 = vunpack.c.l.b16 %v1788
    %v1974 = vunpack.c.h.b16 %v1788
    %v1975 = vunpack.c.l.b16 %v1789
    %v1976 = vunpack.c.h.b16 %v1789
    %v1977 = vunpack.c.l.b16 %v1790
    %v1978 = vunpack.c.h.b16 %v1790
    %v1979 = vunpack.c.l.b16 %v1791
    %v1980 = vunpack.c.h.b16 %v1791
    %v1981 = vunpack.c.l.b16 %v1792
    %v1982 = vunpack.c.h.b16 %v1792
    %v1983 = vunpack.c.l.b16 %v1793
    %v1984 = vunpack.c.h.b16 %v1793
    %v1985 = vunpack.c.l.b16 %v1794
    %v1986 = vunpack.c.h.b16 %v1794
    %v1987 = vunpack.c.l.b16 %v1795
    %v1988 = vunpack.c.h.b16 %v1795
    %v1989 = vunpack.c.l.b16 %v1796
    %v1990 = vunpack.c.h.b16 %v1796
    %v1991 = vunpack.c.l.b16 %v1797
    %v1992 = vunpack.c.h.b16 %v1797
    %v1993 = vunpack.c.l.b16 %v1798
    %v1994 = vunpack.c.h.b16 %v1798
    %v1995 = vunpack.c.l.b16 %v1799
    %v1996 = vunpack.c.h.b16 %v1799
    %v1997 = vunpack.c.l.b16 %v1800
    %v1998 = vunpack.c.h.b16 %v1800
    %v1999 = vunpack.c.l.b16 %v1801
    %v2000 = vunpack.c.h.b16 %v1801
    %v2001 = vunpack.c.l.b16 %v1802
    %v2002 = vunpack.c.h.b16 %v1802
    %v2003 = vunpack.c.l.b16 %v1803
    %v2004 = vunpack.c.h.b16 %v1803
    %v2005 = vunpack.c.l.b16 %v1804
    %v2006 = vunpack.c.h.b16 %v1804
    %v2007 = vunpack.c.l.b16 %v1805
    %v2008 = vunpack.c.h.b16 %v1805
    %v2009 = vunpack.c.l.b16 %v1806
    %v2010 = vunpack.c.h.b16 %v1806
    %v2011 = vunpack.c.l.b16 %v1807
    %v2012 = vunpack.c.h.b16 %v1807
    %v2013 = vunpack.c.l.b16 %v1808
    %v2014 = vunpack.c.h.b16 %v1808
    %v2015 = vunpack.c.l.b16 %v1809
    %v2016 = vunpack.c.h.b16 %v1809
    %v2017 = vunpack.c.l.b16 %v1810
    %v2018 = vunpack.c.h.b16 %v1810
    %v2019 = vunpack.c.l.b16 %v1811
    %v2020 = vunpack.c.h.b16 %v1811
    %v2021 = vunpack.c.l.b16 %v1812
    %v2022 = vunpack.c.h.b16 %v1812
    %v2023 = vunpack.c.l.b16 %v1813
    %v2024 = vunpack.c.h.b16 %v1813
    %v2025 = vunpack.c.l.b16 %v1814
    %v2026 = vunpack.c.h.b16 %v1814
    %v2027 = vunpack.c.l.b16 %v1815
    %v2028 = vunpack.c.h.b16 %v1815
    %v2029 = vunpack.c.l.b16 %v1816
    %v2030 = vunpack.c.h.b16 %v1816
    %v2031 = vpack.c.b16 %v1907, %v1903
    %v2032 = vpack.c.b16 %v1908, %v1904
    %v2033 = vpack.c.b16 %v1909, %v1905
    %v2034 = vpack.c.b16 %v1910, %v1906
    %v2035 = vpack.c.b16 %v1915, %v1911
    %v2036 = vpack.c.b16 %v1916, %v1912
    %v2037 = vpack.c.b16 %v1917, %v1913
    %v2038 = vpack.c.b16 %v1918, %v1914
    %v2039 = vpack.c.b16 %v1923, %v1919
    %v2040 = vpack.c.b16 %v1924, %v1920
    %v2041 = vpack.c.b16 %v1925, %v1921
    %v2042 = vpack.c.b16 %v1926, %v1922
    %v2043 = vpack.c.b16 %v1931, %v1927
    %v2044 = vpack.c.b16 %v1932, %v1928
    %v2045 = vpack.c.b16 %v1933, %v1929
    %v2046 = vpack.c.b16 %v1934, %v1930
    %v2047 = vpack.c.b16 %v1939, %v1935
    %v2048 = vpack.c.b16 %v1940, %v1936
    %v2049 = vpack.c.b16 %v1941, %v1937
    %v2050 = vpack.c.b16 %v1942, %v1938
    %v2051 = vpack.c.b16 %v1947, %v1943
    %v2052 = vpack.c.b16 %v1948, %v1944
    %v2053 = vpack.c.b16 %v1949, %v1945
    %v2054 = vpack.c.b16 %v1950, %v1946
    %v2055 = vpack.c.b16 %v1955, %v1951
    %v2056 = vpack.c.b16 %v1956, %v1952
    %v2057 = vpack.c.b16 %v1957, %v1953
    %v2058 = vpack.c.b16 %v1958, %v1954
    %v2059 = vpack.c.b16 %v1963, %v1959
    %v2060 = vpack.c.b16 %v1964, %v1960
    %v2061 = vpack.c.b16 %v1965, %v1961
    %v2062 = vpack.c.b16 %v1966, %v1962
    %v2063 = vpack.c.b16 %v1971, %v1967
    %v2064 = vpack.c.b16 %v1972, %v1968
    %v2065 = vpack.c.b16 %v1973, %v1969
    %v2066 = vpack.c.b16 %v1974, %v1970
    %v2067 = vpack.c.b16 %v1979, %v1975
    %v2068 = vpack.c.b16 %v1980, %v1976
    %v2069 = vpack.c.b16 %v1981, %v1977
    %v2070 = vpack.c.b16 %v1982, %v1978
    %v2071 = vpack.c.b16 %v1987, %v1983
    %v2072 = vpack.c.b16 %v1988, %v1984
    %v2073 = vpack.c.b16 %v1989, %v1985
    %v2074 = vpack.c.b16 %v1990, %v1986
    %v2075 = vpack.c.b16 %v1995, %v1991
    %v2076 = vpack.c.b16 %v1996, %v1992
    %v2077 = vpack.c.b16 %v1997, %v1993
    %v2078 = vpack.c.b16 %v1998, %v1994
    %v2079 = vpack.c.b16 %v2003, %v1999
    %v2080 = vpack.c.b16 %v2004, %v2000
    %v2081 = vpack.c.b16 %v2005, %v2001
    %v2082 = vpack.c.b16 %v2006, %v2002
    %v2083 = vpack.c.b16 %v2011, %v2007
    %v2084 = vpack.c.b16 %v2012, %v2008
    %v2085 = vpack.c.b16 %v2013, %v2009
    %v2086 = vpack.c.b16 %v2014, %v2010
    %v2087 = vpack.c.b16 %v2019, %v2015
    %v2088 = vpack.c.b16 %v2020, %v2016
    %v2089 = vpack.c.b16 %v2021, %v2017
    %v2090 = vpack.c.b16 %v2022, %v2018
    %v2091 = vpack.c.b16 %v2027, %v2023
    %v2092 = vpack.c.b16 %v2028, %v2024
    %v2093 = vpack.c.b16 %v2029, %v2025
    %v2094 = vpack.c.b16 %v2030, %v2026
    %2159 = vmatprep.subr.bf16.mxu0 %v2060
    %2160 = vmatpush1.bf16.msra.mxu0 %v2059
    %2161 = vmatprep.subr.bf16.mxu0 %v2056
    %2162 = vmatpush1.bf16.msra.mxu0 %v2055
    %2163 = vmatprep.subr.bf16.mxu0 %v2052
    %2164 = vmatpush1.bf16.msra.mxu0 %v2051
    %2165 = vmatprep.subr.bf16.mxu0 %v2048
    %2166 = vmatpush1.bf16.msra.mxu0 %v2047
    %2167 = vmatprep.subr.bf16.mxu0 %v2044
    %2168 = vmatpush1.bf16.msra.mxu0 %v2043
    %2169 = vmatprep.subr.bf16.mxu0 %v2040
    %2170 = vmatpush1.bf16.msra.mxu0 %v2039
    %2171 = vmatprep.subr.bf16.mxu0 %v2036
    %2172 = vmatpush1.bf16.msra.mxu0 %v2035
    %2173 = vmatprep.subr.bf16.mxu0 %v2032
    %2174 = vmatpush1.bf16.msra.mxu0 %v2031
    %2175 = vmatprep.subr.bf16.mxu0 %v2092
    %2176 = vmatpush2.bf16.msra.mxu0 %v2091
    %2177 = vmatprep.subr.bf16.mxu0 %v2088
    %2178 = vmatpush2.bf16.msra.mxu0 %v2087
    %2179 = vmatprep.subr.bf16.mxu0 %v2084
    %2180 = vmatpush2.bf16.msra.mxu0 %v2083
    %2181 = vmatprep.subr.bf16.mxu0 %v2080
    %2182 = vmatpush2.bf16.msra.mxu0 %v2079
    %2183 = vmatprep.subr.bf16.mxu0 %v2076
    %2184 = vmatpush2.bf16.msra.mxu0 %v2075
    %2185 = vmatprep.subr.bf16.mxu0 %v2072
    %2186 = vmatpush2.bf16.msra.mxu0 %v2071
    %2187 = vmatprep.subr.bf16.mxu0 %v2068
    %2188 = vmatpush2.bf16.msra.mxu0 %v2067
    %2189 = vmatprep.subr.bf16.mxu0 %v2064
    %2190 = vmatpush2.bf16.msra.mxu0 %v2063
    %2191 = vmatprep.mubr.bf16.mxu0 %v1225
    %2192 = vmatmul.mubr.bf16.gmra.mxu0 %v1752
    %v2193 = vpop.f32.mrf.mxu0
    %v2194 = vadd.f32 %v1822, %v2193
    %v2195 = vpop.f32.mrf.mxu0
    %v2196 = vadd.f32 %v1826, %v2195
    %v2197 = vpop.f32.mrf.mxu0
    %v2198 = vpop.f32.mrf.mxu0
    %2199 = vdwg.mxu0
    %2200 = vmatprep.subr.bf16.mxu0 %v2062
    %2201 = vmatpush1.bf16.msra.mxu0 %v2061
    %2202 = vmatprep.subr.bf16.mxu0 %v2058
    %2203 = vmatpush1.bf16.msra.mxu0 %v2057
    %2204 = vmatprep.subr.bf16.mxu0 %v2054
    %2205 = vmatpush1.bf16.msra.mxu0 %v2053
    %2206 = vmatprep.subr.bf16.mxu0 %v2050
    %2207 = vmatpush1.bf16.msra.mxu0 %v2049
    %2208 = vmatprep.subr.bf16.mxu0 %v2046
    %2209 = vmatpush1.bf16.msra.mxu0 %v2045
    %2210 = vmatprep.subr.bf16.mxu0 %v2042
    %2211 = vmatpush1.bf16.msra.mxu0 %v2041
    %2212 = vmatprep.subr.bf16.mxu0 %v2038
    %2213 = vmatpush1.bf16.msra.mxu0 %v2037
    %2214 = vmatprep.subr.bf16.mxu0 %v2034
    %2215 = vmatpush1.bf16.msra.mxu0 %v2033
    %2216 = vmatprep.subr.bf16.mxu0 %v2094
    %2217 = vmatpush2.bf16.msra.mxu0 %v2093
    %2218 = vmatprep.subr.bf16.mxu0 %v2090
    %2219 = vmatpush2.bf16.msra.mxu0 %v2089
    %2220 = vmatprep.subr.bf16.mxu0 %v2086
    %2221 = vmatpush2.bf16.msra.mxu0 %v2085
    %2222 = vmatprep.subr.bf16.mxu0 %v2082
    %2223 = vmatpush2.bf16.msra.mxu0 %v2081
    %2224 = vmatprep.subr.bf16.mxu0 %v2078
    %2225 = vmatpush2.bf16.msra.mxu0 %v2077
    %2226 = vmatprep.subr.bf16.mxu0 %v2074
    %2227 = vmatpush2.bf16.msra.mxu0 %v2073
    %2228 = vmatprep.subr.bf16.mxu0 %v2070
    %2229 = vmatpush2.bf16.msra.mxu0 %v2069
    %2230 = vmatprep.subr.bf16.mxu0 %v2066
    %2231 = vmatpush2.bf16.msra.mxu0 %v2065
    %2232 = vmatprep.mubr.bf16.mxu0 %v1225
    %2233 = vmatmul.mubr.bf16.gmra.mxu0 %v1752
    %v2234 = vpop.f32.mrf.mxu0
    %v2235 = vadd.f32 %v1830, %v2234
    %v2236 = vpop.f32.mrf.mxu0
    %v2237 = vadd.f32 %v1834, %v2236
    %v2238 = vpop.f32.mrf.mxu0
    %v2239 = vpop.f32.mrf.mxu0
    %2240 = vdwg.mxu0
    %v2241 = vxor.u32 %v2194, 2147483648
    %v2242 = vxor.u32 %v2196, 2147483648
    %v2243 = vxor.u32 %v2235, 2147483648
    %v2244 = vmul.f32 %v2241, 1.442695
    %v2245 = vpow.pop %v2244
    %v2246 = vmul.f32 %v2242, 1.442695
    %v2247 = vpow.pop %v2246
    %v2248 = vmul.f32 %v2243, 1.442695
    %v2249 = vpow.pop %v2248
    %v2250 = vadd.f32 %v2245, 1.0
    %v2251 = vadd.f32 %v2247, 1.0
    %v2252 = vadd.f32 %v2249, 1.0
    %v2253 = vrcp.pop %v2250
    %v2254 = vmul.f32 1.0, %v2253
    %v2255 = vrcp.pop %v2251
    %v2256 = vmul.f32 1.0, %v2255
    %v2257 = vrcp.pop %v2252
    %v2258 = vmul.f32 1.0, %v2257
    %v2259 = vtanh.pop %v2237
    %v2260 = vmul.f32 %v2256, %v1222
    %v2261 = vmul.f32 %v2254, %v2259
    %v2262 = vadd.f32 %v2260, %v2261
    %v2263 = vtanh.pop %v2262
    %v2264 = vmul.f32 %v2258, %v2263
    %v2265 = vpack.c.bf16 %v2264, %v2264
    %v2266 = vld [vmem:[%s6] sm:$0xf]
    %v2267 = vld [vmem:[%s6 + $0x4] sm:$0xf]
    %v2268 = vld [vmem:[%s6 + $0x8] sm:$0xf]
    %v2269 = vld [vmem:[%s6 + $0xc] sm:$0xf]
    %v2270 = vld [vmem:[%s6 + $0x10] sm:$0xf]
    %v2271 = vld [vmem:[%s6 + $0x14] sm:$0xf]
    %v2272 = vld [vmem:[%s6 + $0x18] sm:$0xf]
    %v2273 = vld [vmem:[%s6 + $0x1c] sm:$0xf]
    %v2274 = vld [vmem:[%s6 + $0x20] sm:$0xf]
    %v2275 = vld [vmem:[%s6 + $0x24] sm:$0xf]
    %v2276 = vld [vmem:[%s6 + $0x28] sm:$0xf]
    %v2277 = vld [vmem:[%s6 + $0x2c] sm:$0xf]
    %v2278 = vld [vmem:[%s6 + $0x30] sm:$0xf]
    %v2279 = vld [vmem:[%s6 + $0x34] sm:$0xf]
    %v2280 = vld [vmem:[%s6 + $0x38] sm:$0xf]
    %v2281 = vld [vmem:[%s6 + $0x3c] sm:$0xf]
    %v2282 = vld [vmem:[%s7] sm:$0x1]
    %v2284 = vlaneseq
    %v2285 = vshrl.u32 %v2284, 7
    %v2286 = vsub.s32 0, %v2285
    %v2287 = vrot.slane %v2282, %v2286
    %v2305 = vunpack.c.l.b16 %v2266
    %v2306 = vunpack.c.l.b16 %v2267
    %v2307 = vunpack.c.l.b16 %v2268
    %v2308 = vunpack.c.l.b16 %v2269
    %v2309 = vunpack.c.l.b16 %v2270
    %v2310 = vunpack.c.l.b16 %v2271
    %v2311 = vunpack.c.l.b16 %v2272
    %v2312 = vunpack.c.l.b16 %v2273
    %v2313 = vunpack.c.l.b16 %v2274
    %v2314 = vunpack.c.l.b16 %v2275
    %v2315 = vunpack.c.l.b16 %v2276
    %v2316 = vunpack.c.l.b16 %v2277
    %v2317 = vunpack.c.l.b16 %v2278
    %v2318 = vunpack.c.l.b16 %v2279
    %v2319 = vunpack.c.l.b16 %v2280
    %v2320 = vunpack.c.l.b16 %v2281
    %v2321 = vpack.c.b16 %v2306, %v2305
    %v2322 = vpack.c.b16 %v2308, %v2307
    %v2323 = vpack.c.b16 %v2310, %v2309
    %v2324 = vpack.c.b16 %v2312, %v2311
    %v2325 = vpack.c.b16 %v2314, %v2313
    %v2326 = vpack.c.b16 %v2316, %v2315
    %v2327 = vpack.c.b16 %v2318, %v2317
    %v2328 = vpack.c.b16 %v2320, %v2319
    %2337 = vmatprep.subr.bf16.mxu0 0
    %2338 = vmatpush1.bf16.msra.mxu0 %v2328
    %2339 = vmatprep.subr.bf16.mxu0 0
    %2340 = vmatpush1.bf16.msra.mxu0 %v2327
    %2341 = vmatprep.subr.bf16.mxu0 0
    %2342 = vmatpush1.bf16.msra.mxu0 %v2326
    %2343 = vmatprep.subr.bf16.mxu0 0
    %2344 = vmatpush1.bf16.msra.mxu0 %v2325
    %2345 = vmatprep.subr.bf16.mxu0 0
    %2346 = vmatpush1.bf16.msra.mxu0 %v2324
    %2347 = vmatprep.subr.bf16.mxu0 0
    %2348 = vmatpush1.bf16.msra.mxu0 %v2323
    %2349 = vmatprep.subr.bf16.mxu0 0
    %2350 = vmatpush1.bf16.msra.mxu0 %v2322
    %2351 = vmatprep.subr.bf16.mxu0 0
    %2352 = vmatpush1.bf16.msra.mxu0 %v2321
    %2353 = vmatprep.subr.bf16.mxu0 0
    %2354 = vmatpush2.bf16.msra.mxu0 0
    %2355 = vmatprep.subr.bf16.mxu0 0
    %2356 = vmatpush2.bf16.msra.mxu0 0
    %2357 = vmatprep.subr.bf16.mxu0 0
    %2358 = vmatpush2.bf16.msra.mxu0 0
    %2359 = vmatprep.subr.bf16.mxu0 0
    %2360 = vmatpush2.bf16.msra.mxu0 0
    %2361 = vmatprep.subr.bf16.mxu0 0
    %2362 = vmatpush2.bf16.msra.mxu0 0
    %2363 = vmatprep.subr.bf16.mxu0 0
    %2364 = vmatpush2.bf16.msra.mxu0 0
    %2365 = vmatprep.subr.bf16.mxu0 0
    %2366 = vmatpush2.bf16.msra.mxu0 0
    %2367 = vmatprep.subr.bf16.mxu0 0
    %2368 = vmatpush2.bf16.msra.mxu0 0
    %2369 = vmatprep.mubr.bf16.mxu0 0
    %2370 = vmatmul.mubr.bf16.gmra.mxu0 %v2265
    %v2371 = vpop.f32.mrf.mxu0
    %v2372 = vadd.f32 %v2287, %v2371
    %v2373 = vpop.f32.mrf.mxu0
    %v2374 = vpop.f32.mrf.mxu0
    %v2375 = vpop.f32.mrf.mxu0
    %2376 = vdwg.mxu0
    %v2379 = vunpack.c.l.s4 1966171168
    %v2380 = vunpack.c.0.s8 %v2379
    %v2381 = vlaneseq
    %v2382 = vshrl.u32 %v2381, 7
    %v2383 = vsub.s32 %v2380, %v2382
    %v2384 = vrot.slane %v2372, %v2383
    %v2385 = vcombine.high %v2384, %v2384
    %v2387 = vunpack.c.l.s4 1966171168
    %v2388 = vunpack.c.0.s8 %v2387
    %v2389 = vlaneseq
    %v2390 = vshrl.u32 %v2389, 7
    %v2391 = vsub.s32 %v2388, %v2390
    %v2392 = vrot.slane %v2384, %v2391
    %v2394 = vunpack.c.l.s4 1966171168
    %v2395 = vunpack.c.0.s8 %v2394
    %v2396 = vlaneseq
    %v2397 = vshrl.u32 %v2396, 7
    %v2398 = vsub.s32 %v2395, %v2397
    %v2399 = vrot.slane %v2385, %v2398
    %2402 = vst.msk [vmem:[#allocation8 + $0x1] sm:$0x1] %vm1362, %v2392
    %2403 = vst.msk [vmem:[#allocation8 + $0x9] sm:$0x1] %vm1362, %v2399
    %s2404 = scalar_lea.vmem [#allocation2], 2
    %v2405 = vld [vmem:[%s2404] ss:$8 sm:$0xf]
    %s2406 = scalar_lea.vmem [#allocation2], 34
    %v2407 = vld [vmem:[%s2406] ss:$8 sm:$0xf]
    %v2408 = vpack.c.bf16 %v1732, %v1732
    %v2409 = vpack.c.bf16 %v1733, %v1733
    %v2410 = vld [vmem:[#allocation3] sm:$0xff]
    %v2411 = vld [vmem:[#allocation3 + $0x8] sm:$0xff]
    %v2412 = vld [vmem:[#allocation3 + $0x10] sm:$0xff]
    %v2413 = vld [vmem:[#allocation3 + $0x18] sm:$0xff]
    %v2414 = vld [vmem:[#allocation3 + $0x20] sm:$0xff]
    %v2415 = vld [vmem:[#allocation3 + $0x28] sm:$0xff]
    %v2416 = vld [vmem:[#allocation3 + $0x30] sm:$0xff]
    %v2417 = vld [vmem:[#allocation3 + $0x38] sm:$0xff]
    %v2418 = vld [vmem:[#allocation3 + $0x40] sm:$0xff]
    %v2419 = vld [vmem:[#allocation3 + $0x48] sm:$0xff]
    %v2420 = vld [vmem:[#allocation3 + $0x50] sm:$0xff]
    %v2421 = vld [vmem:[#allocation3 + $0x58] sm:$0xff]
    %v2422 = vld [vmem:[#allocation3 + $0x60] sm:$0xff]
    %v2423 = vld [vmem:[#allocation3 + $0x68] sm:$0xff]
    %v2424 = vld [vmem:[#allocation3 + $0x70] sm:$0xff]
    %v2425 = vld [vmem:[#allocation3 + $0x78] sm:$0xff]
    %v2426 = vld [vmem:[#allocation3 + $0x80] sm:$0xff]
    %v2427 = vld [vmem:[#allocation3 + $0x88] sm:$0xff]
    %v2428 = vld [vmem:[#allocation3 + $0x90] sm:$0xff]
    %v2429 = vld [vmem:[#allocation3 + $0x98] sm:$0xff]
    %v2430 = vld [vmem:[#allocation3 + $0xa0] sm:$0xff]
    %v2431 = vld [vmem:[#allocation3 + $0xa8] sm:$0xff]
    %v2432 = vld [vmem:[#allocation3 + $0xb0] sm:$0xff]
    %v2433 = vld [vmem:[#allocation3 + $0xb8] sm:$0xff]
    %v2434 = vld [vmem:[#allocation3 + $0xc0] sm:$0xff]
    %v2435 = vld [vmem:[#allocation3 + $0xc8] sm:$0xff]
    %v2436 = vld [vmem:[#allocation3 + $0xd0] sm:$0xff]
    %v2437 = vld [vmem:[#allocation3 + $0xd8] sm:$0xff]
    %v2438 = vld [vmem:[#allocation3 + $0xe0] sm:$0xff]
    %v2439 = vld [vmem:[#allocation3 + $0xe8] sm:$0xff]
    %v2440 = vld [vmem:[#allocation3 + $0xf0] sm:$0xff]
    %v2441 = vld [vmem:[#allocation3 + $0xf8] sm:$0xff]
    %v2444 = vunpack.c.l.b16 %v2408
    %v2445 = vunpack.c.l.b16 %v2409
    %v2446 = vrot.slane %v2445, 7
    %v2447 = vsel %vm1408, %v2446, %v2444
    %v2448 = vpack.c.b16 %v2447, %v2447
    %v2482 = vunpack.c.l.b16 %v2410
    %v2483 = vunpack.c.h.b16 %v2410
    %v2484 = vunpack.c.l.b16 %v2411
    %v2485 = vunpack.c.h.b16 %v2411
    %v2486 = vunpack.c.l.b16 %v2412
    %v2487 = vunpack.c.h.b16 %v2412
    %v2488 = vunpack.c.l.b16 %v2413
    %v2489 = vunpack.c.h.b16 %v2413
    %v2490 = vunpack.c.l.b16 %v2414
    %v2491 = vunpack.c.h.b16 %v2414
    %v2492 = vunpack.c.l.b16 %v2415
    %v2493 = vunpack.c.h.b16 %v2415
    %v2494 = vunpack.c.l.b16 %v2416
    %v2495 = vunpack.c.h.b16 %v2416
    %v2496 = vunpack.c.l.b16 %v2417
    %v2497 = vunpack.c.h.b16 %v2417
    %v2498 = vunpack.c.l.b16 %v2418
    %v2499 = vunpack.c.h.b16 %v2418
    %v2500 = vunpack.c.l.b16 %v2419
    %v2501 = vunpack.c.h.b16 %v2419
    %v2502 = vunpack.c.l.b16 %v2420
    %v2503 = vunpack.c.h.b16 %v2420
    %v2504 = vunpack.c.l.b16 %v2421
    %v2505 = vunpack.c.h.b16 %v2421
    %v2506 = vunpack.c.l.b16 %v2422
    %v2507 = vunpack.c.h.b16 %v2422
    %v2508 = vunpack.c.l.b16 %v2423
    %v2509 = vunpack.c.h.b16 %v2423
    %v2510 = vunpack.c.l.b16 %v2424
    %v2511 = vunpack.c.h.b16 %v2424
    %v2512 = vunpack.c.l.b16 %v2425
    %v2513 = vunpack.c.h.b16 %v2425
    %v2514 = vunpack.c.l.b16 %v2426
    %v2515 = vunpack.c.h.b16 %v2426
    %v2516 = vunpack.c.l.b16 %v2427
    %v2517 = vunpack.c.h.b16 %v2427
    %v2518 = vunpack.c.l.b16 %v2428
    %v2519 = vunpack.c.h.b16 %v2428
    %v2520 = vunpack.c.l.b16 %v2429
    %v2521 = vunpack.c.h.b16 %v2429
    %v2522 = vunpack.c.l.b16 %v2430
    %v2523 = vunpack.c.h.b16 %v2430
    %v2524 = vunpack.c.l.b16 %v2431
    %v2525 = vunpack.c.h.b16 %v2431
    %v2526 = vunpack.c.l.b16 %v2432
    %v2527 = vunpack.c.h.b16 %v2432
    %v2528 = vunpack.c.l.b16 %v2433
    %v2529 = vunpack.c.h.b16 %v2433
    %v2530 = vunpack.c.l.b16 %v2434
    %v2531 = vunpack.c.h.b16 %v2434
    %v2532 = vunpack.c.l.b16 %v2435
    %v2533 = vunpack.c.h.b16 %v2435
    %v2534 = vunpack.c.l.b16 %v2436
    %v2535 = vunpack.c.h.b16 %v2436
    %v2536 = vunpack.c.l.b16 %v2437
    %v2537 = vunpack.c.h.b16 %v2437
    %v2538 = vunpack.c.l.b16 %v2438
    %v2539 = vunpack.c.h.b16 %v2438
    %v2540 = vunpack.c.l.b16 %v2439
    %v2541 = vunpack.c.h.b16 %v2439
    %v2542 = vunpack.c.l.b16 %v2440
    %v2543 = vunpack.c.h.b16 %v2440
    %v2544 = vunpack.c.l.b16 %v2441
    %v2545 = vunpack.c.h.b16 %v2441
    %v2546 = vpack.c.b16 %v2486, %v2482
    %v2547 = vpack.c.b16 %v2487, %v2483
    %v2548 = vpack.c.b16 %v2488, %v2484
    %v2549 = vpack.c.b16 %v2489, %v2485
    %v2550 = vpack.c.b16 %v2494, %v2490
    %v2551 = vpack.c.b16 %v2495, %v2491
    %v2552 = vpack.c.b16 %v2496, %v2492
    %v2553 = vpack.c.b16 %v2497, %v2493
    %v2554 = vpack.c.b16 %v2502, %v2498
    %v2555 = vpack.c.b16 %v2503, %v2499
    %v2556 = vpack.c.b16 %v2504, %v2500
    %v2557 = vpack.c.b16 %v2505, %v2501
    %v2558 = vpack.c.b16 %v2510, %v2506
    %v2559 = vpack.c.b16 %v2511, %v2507
    %v2560 = vpack.c.b16 %v2512, %v2508
    %v2561 = vpack.c.b16 %v2513, %v2509
    %v2562 = vpack.c.b16 %v2518, %v2514
    %v2563 = vpack.c.b16 %v2519, %v2515
    %v2564 = vpack.c.b16 %v2520, %v2516
    %v2565 = vpack.c.b16 %v2521, %v2517
    %v2566 = vpack.c.b16 %v2526, %v2522
    %v2567 = vpack.c.b16 %v2527, %v2523
    %v2568 = vpack.c.b16 %v2528, %v2524
    %v2569 = vpack.c.b16 %v2529, %v2525
    %v2570 = vpack.c.b16 %v2534, %v2530
    %v2571 = vpack.c.b16 %v2535, %v2531
    %v2572 = vpack.c.b16 %v2536, %v2532
    %v2573 = vpack.c.b16 %v2537, %v2533
    %v2574 = vpack.c.b16 %v2542, %v2538
    %v2575 = vpack.c.b16 %v2543, %v2539
    %v2576 = vpack.c.b16 %v2544, %v2540
    %v2577 = vpack.c.b16 %v2545, %v2541
    %2610 = vmatprep.subr.bf16.mxu0 %v2575
    %2611 = vmatpush1.bf16.msra.mxu0 %v2574
    %2612 = vmatprep.subr.bf16.mxu0 %v2571
    %2613 = vmatpush1.bf16.msra.mxu0 %v2570
    %2614 = vmatprep.subr.bf16.mxu0 %v2567
    %2615 = vmatpush1.bf16.msra.mxu0 %v2566
    %2616 = vmatprep.subr.bf16.mxu0 %v2563
    %2617 = vmatpush1.bf16.msra.mxu0 %v2562
    %2618 = vmatprep.subr.bf16.mxu0 %v2559
    %2619 = vmatpush1.bf16.msra.mxu0 %v2558
    %2620 = vmatprep.subr.bf16.mxu0 %v2555
    %2621 = vmatpush1.bf16.msra.mxu0 %v2554
    %2622 = vmatprep.subr.bf16.mxu0 %v2551
    %2623 = vmatpush1.bf16.msra.mxu0 %v2550
    %2624 = vmatprep.subr.bf16.mxu0 %v2547
    %2625 = vmatpush1.bf16.msra.mxu0 %v2546
    %2626 = vmatprep.subr.bf16.mxu0 0
    %2627 = vmatpush2.bf16.msra.mxu0 0
    %2628 = vmatprep.subr.bf16.mxu0 0
    %2629 = vmatpush2.bf16.msra.mxu0 0
    %2630 = vmatprep.subr.bf16.mxu0 0
    %2631 = vmatpush2.bf16.msra.mxu0 0
    %2632 = vmatprep.subr.bf16.mxu0 0
    %2633 = vmatpush2.bf16.msra.mxu0 0
    %2634 = vmatprep.subr.bf16.mxu0 0
    %2635 = vmatpush2.bf16.msra.mxu0 0
    %2636 = vmatprep.subr.bf16.mxu0 0
    %2637 = vmatpush2.bf16.msra.mxu0 0
    %2638 = vmatprep.subr.bf16.mxu0 0
    %2639 = vmatpush2.bf16.msra.mxu0 0
    %2640 = vmatprep.subr.bf16.mxu0 0
    %2641 = vmatpush2.bf16.msra.mxu0 0
    %2642 = vmatprep.mubr.bf16.mxu0 0
    %2643 = vmatmul.mubr.bf16.gmra.mxu0 %v2448
    %v2644 = vpop.f32.mrf.mxu0
    %v2645 = vadd.f32 0.0, %v2644
    %v2646 = vpop.f32.mrf.mxu0
    %v2647 = vadd.f32 0.0, %v2646
    %v2648 = vpop.f32.mrf.mxu0
    %v2649 = vpop.f32.mrf.mxu0
    %2650 = vdwg.mxu0
    %2651 = vmatprep.subr.bf16.mxu0 %v2577
    %2652 = vmatpush1.bf16.msra.mxu0 %v2576
    %2653 = vmatprep.subr.bf16.mxu0 %v2573
    %2654 = vmatpush1.bf16.msra.mxu0 %v2572
    %2655 = vmatprep.subr.bf16.mxu0 %v2569
    %2656 = vmatpush1.bf16.msra.mxu0 %v2568
    %2657 = vmatprep.subr.bf16.mxu0 %v2565
    %2658 = vmatpush1.bf16.msra.mxu0 %v2564
    %2659 = vmatprep.subr.bf16.mxu0 %v2561
    %2660 = vmatpush1.bf16.msra.mxu0 %v2560
    %2661 = vmatprep.subr.bf16.mxu0 %v2557
    %2662 = vmatpush1.bf16.msra.mxu0 %v2556
    %2663 = vmatprep.subr.bf16.mxu0 %v2553
    %2664 = vmatpush1.bf16.msra.mxu0 %v2552
    %2665 = vmatprep.subr.bf16.mxu0 %v2549
    %2666 = vmatpush1.bf16.msra.mxu0 %v2548
    %2667 = vmatprep.subr.bf16.mxu0 0
    %2668 = vmatpush2.bf16.msra.mxu0 0
    %2669 = vmatprep.subr.bf16.mxu0 0
    %2670 = vmatpush2.bf16.msra.mxu0 0
    %2671 = vmatprep.subr.bf16.mxu0 0
    %2672 = vmatpush2.bf16.msra.mxu0 0
    %2673 = vmatprep.subr.bf16.mxu0 0
    %2674 = vmatpush2.bf16.msra.mxu0 0
    %2675 = vmatprep.subr.bf16.mxu0 0
    %2676 = vmatpush2.bf16.msra.mxu0 0
    %2677 = vmatprep.subr.bf16.mxu0 0
    %2678 = vmatpush2.bf16.msra.mxu0 0
    %2679 = vmatprep.subr.bf16.mxu0 0
    %2680 = vmatpush2.bf16.msra.mxu0 0
    %2681 = vmatprep.subr.bf16.mxu0 0
    %2682 = vmatpush2.bf16.msra.mxu0 0
    %2683 = vmatprep.mubr.bf16.mxu0 0
    %2684 = vmatmul.mubr.bf16.gmra.mxu0 %v2448
    %v2685 = vpop.f32.mrf.mxu0
    %v2686 = vadd.f32 0.0, %v2685
    %v2687 = vpop.f32.mrf.mxu0
    %v2688 = vadd.f32 0.0, %v2687
    %v2689 = vpop.f32.mrf.mxu0
    %v2690 = vpop.f32.mrf.mxu0
    %2691 = vdwg.mxu0
    %v2696 = vcombine.low %v2645, %v2647
    %v2697 = vcombine.low %v2686, %v2688
    %v2699 = vunpack.c.l.s4 1966171168
    %v2700 = vunpack.c.0.s8 %v2699
    %v2701 = vlaneseq
    %v2702 = vshrl.u32 %v2701, 7
    %v2703 = vsub.s32 %v2700, %v2702
    %v2704 = vrot.slane %v2696, %v2703
    %v2706 = vunpack.c.l.s4 1966171168
    %v2707 = vunpack.c.0.s8 %v2706
    %v2708 = vlaneseq
    %v2709 = vshrl.u32 %v2708, 7
    %v2710 = vsub.s32 %v2707, %v2709
    %v2711 = vrot.slane %v2697, %v2710
    %v2712 = vcombine.low %v2704, %v2711
    %v2713 = vcombine.high %v2704, %v2711
    %v2715 = vunpack.c.l.s4 1966171168
    %v2716 = vunpack.c.0.s8 %v2715
    %v2717 = vlaneseq
    %v2718 = vshrl.u32 %v2717, 7
    %v2719 = vsub.s32 %v2716, %v2718
    %v2720 = vrot.slane %v2712, %v2719
    %v2722 = vunpack.c.l.s4 1966171168
    %v2723 = vunpack.c.0.s8 %v2722
    %v2724 = vlaneseq
    %v2725 = vshrl.u32 %v2724, 7
    %v2726 = vsub.s32 %v2723, %v2725
    %v2727 = vrot.slane %v2713, %v2726
    %v2730 = vadd.f32 %v2405, %v2720
    %v2731 = vadd.f32 %v2407, %v2727
    %v2732 = vxor.u32 %v2730, 2147483648
    %v2733 = vxor.u32 %v2731, 2147483648
    %v2734 = vmul.f32 %v2732, 1.442695
    %v2735 = vpow.pop %v2734
    %v2736 = vmul.f32 %v2733, 1.442695
    %v2737 = vpow.pop %v2736
    %v2738 = vadd.f32 %v2735, 1.0
    %v2739 = vadd.f32 %v2737, 1.0
    %v2740 = vrcp.pop %v2738
    %v2741 = vmul.f32 1.0, %v2740
    %v2742 = vrcp.pop %v2739
    %v2743 = vmul.f32 1.0, %v2742
    %v2746 = vrot.slane %v2730, 3
    %v2747 = vrot.slane %v2731, 3
    %v2750 = vtanh.pop %v2746
    %v2751 = vtanh.pop %v2747
    %v2754 = vrot.slane %v2741, 1
    %v2755 = vrot.slane %v2743, 1
    %v2758 = vmul.f32 %v2754, %v1724
    %v2759 = vmul.f32 %v2755, %v1725
    %v2760 = vmul.f32 %v2741, %v2750
    %v2761 = vmul.f32 %v2743, %v2751
    %v2762 = vadd.f32 %v2758, %v2760
    %v2763 = vadd.f32 %v2759, %v2761
    %v2764 = vtanh.pop %v2762
    %v2765 = vtanh.pop %v2763
    %v2766 = vrot.slane %v2741, 2
    %v2767 = vrot.slane %v2743, 2
    %v2770 = vmul.f32 %v2766, %v2764
    %v2771 = vmul.f32 %v2767, %v2765
    %v2774 = vcombine.low %v2770, %v2771
    %v2776 = vunpack.c.l.s4 1966171168
    %v2777 = vunpack.c.0.s8 %v2776
    %v2778 = vlaneseq
    %v2779 = vshrl.u32 %v2778, 7
    %v2780 = vsub.s32 %v2777, %v2779
    %v2781 = vrot.slane %v2774, %v2780
    %v2783 = vunpack.c.l.s4 1966171168
    %v2784 = vunpack.c.0.s8 %v2783
    %v2785 = vlaneseq
    %v2786 = vshrl.u32 %v2785, 7
    %v2787 = vsub.s32 %v2784, %v2786
    %v2788 = vrot.slane %v2781, %v2787
    %v2790 = vpack.c.bf16 %v2788, %v2788
    %v2791 = vld [vmem:[#allocation6] sm:$0xff]
    %v2792 = vld [vmem:[#allocation6 + $0x8] sm:$0xff]
    %v2793 = vld [vmem:[#allocation6 + $0x10] sm:$0xff]
    %v2794 = vld [vmem:[#allocation6 + $0x18] sm:$0xff]
    %v2795 = vld [vmem:[#allocation6 + $0x20] sm:$0xff]
    %v2796 = vld [vmem:[#allocation6 + $0x28] sm:$0xff]
    %v2797 = vld [vmem:[#allocation6 + $0x30] sm:$0xff]
    %v2798 = vld [vmem:[#allocation6 + $0x38] sm:$0xff]
    %v2799 = vld [vmem:[#allocation6 + $0x40] sm:$0xff]
    %v2800 = vld [vmem:[#allocation6 + $0x48] sm:$0xff]
    %v2801 = vld [vmem:[#allocation6 + $0x50] sm:$0xff]
    %v2802 = vld [vmem:[#allocation6 + $0x58] sm:$0xff]
    %v2803 = vld [vmem:[#allocation6 + $0x60] sm:$0xff]
    %v2804 = vld [vmem:[#allocation6 + $0x68] sm:$0xff]
    %v2805 = vld [vmem:[#allocation6 + $0x70] sm:$0xff]
    %v2806 = vld [vmem:[#allocation6 + $0x78] sm:$0xff]
    %v2807 = vld [vmem:[#allocation6 + $0x80] sm:$0xff]
    %v2808 = vld [vmem:[#allocation6 + $0x88] sm:$0xff]
    %v2809 = vld [vmem:[#allocation6 + $0x90] sm:$0xff]
    %v2810 = vld [vmem:[#allocation6 + $0x98] sm:$0xff]
    %v2811 = vld [vmem:[#allocation6 + $0xa0] sm:$0xff]
    %v2812 = vld [vmem:[#allocation6 + $0xa8] sm:$0xff]
    %v2813 = vld [vmem:[#allocation6 + $0xb0] sm:$0xff]
    %v2814 = vld [vmem:[#allocation6 + $0xb8] sm:$0xff]
    %v2815 = vld [vmem:[#allocation6 + $0xc0] sm:$0xff]
    %v2816 = vld [vmem:[#allocation6 + $0xc8] sm:$0xff]
    %v2817 = vld [vmem:[#allocation6 + $0xd0] sm:$0xff]
    %v2818 = vld [vmem:[#allocation6 + $0xd8] sm:$0xff]
    %v2819 = vld [vmem:[#allocation6 + $0xe0] sm:$0xff]
    %v2820 = vld [vmem:[#allocation6 + $0xe8] sm:$0xff]
    %v2821 = vld [vmem:[#allocation6 + $0xf0] sm:$0xff]
    %v2822 = vld [vmem:[#allocation6 + $0xf8] sm:$0xff]
    %v2823 = vld [vmem:[#allocation6 + $0x100] sm:$0xff]
    %v2824 = vld [vmem:[#allocation6 + $0x108] sm:$0xff]
    %v2825 = vld [vmem:[#allocation6 + $0x110] sm:$0xff]
    %v2826 = vld [vmem:[#allocation6 + $0x118] sm:$0xff]
    %v2827 = vld [vmem:[#allocation6 + $0x120] sm:$0xff]
    %v2828 = vld [vmem:[#allocation6 + $0x128] sm:$0xff]
    %v2829 = vld [vmem:[#allocation6 + $0x130] sm:$0xff]
    %v2830 = vld [vmem:[#allocation6 + $0x138] sm:$0xff]
    %v2831 = vld [vmem:[#allocation6 + $0x140] sm:$0xff]
    %v2832 = vld [vmem:[#allocation6 + $0x148] sm:$0xff]
    %v2833 = vld [vmem:[#allocation6 + $0x150] sm:$0xff]
    %v2834 = vld [vmem:[#allocation6 + $0x158] sm:$0xff]
    %v2835 = vld [vmem:[#allocation6 + $0x160] sm:$0xff]
    %v2836 = vld [vmem:[#allocation6 + $0x168] sm:$0xff]
    %v2837 = vld [vmem:[#allocation6 + $0x170] sm:$0xff]
    %v2838 = vld [vmem:[#allocation6 + $0x178] sm:$0xff]
    %v2839 = vld [vmem:[#allocation6 + $0x180] sm:$0xff]
    %v2840 = vld [vmem:[#allocation6 + $0x188] sm:$0xff]
    %v2841 = vld [vmem:[#allocation6 + $0x190] sm:$0xff]
    %v2842 = vld [vmem:[#allocation6 + $0x198] sm:$0xff]
    %v2843 = vld [vmem:[#allocation6 + $0x1a0] sm:$0xff]
    %v2844 = vld [vmem:[#allocation6 + $0x1a8] sm:$0xff]
    %v2845 = vld [vmem:[#allocation6 + $0x1b0] sm:$0xff]
    %v2846 = vld [vmem:[#allocation6 + $0x1b8] sm:$0xff]
    %v2847 = vld [vmem:[#allocation6 + $0x1c0] sm:$0xff]
    %v2848 = vld [vmem:[#allocation6 + $0x1c8] sm:$0xff]
    %v2849 = vld [vmem:[#allocation6 + $0x1d0] sm:$0xff]
    %v2850 = vld [vmem:[#allocation6 + $0x1d8] sm:$0xff]
    %v2851 = vld [vmem:[#allocation6 + $0x1e0] sm:$0xff]
    %v2852 = vld [vmem:[#allocation6 + $0x1e8] sm:$0xff]
    %v2853 = vld [vmem:[#allocation6 + $0x1f0] sm:$0xff]
    %v2854 = vld [vmem:[#allocation6 + $0x1f8] sm:$0xff]
    %v2855 = vld [vmem:[%s5] sm:$0xf]
    %v2857 = vlaneseq
    %v2858 = vshrl.u32 %v2857, 7
    %v2859 = vsub.s32 0, %v2858
    %v2860 = vrot.slane %v2855, %v2859
    %v2861 = vlaneseq
    %v2862 = vshrl.u32 %v2861, 7
    %v2863 = vsub.s32 1, %v2862
    %v2864 = vrot.slane %v2855, %v2863
    %v2865 = vlaneseq
    %v2866 = vshrl.u32 %v2865, 7
    %v2867 = vsub.s32 2, %v2866
    %v2868 = vrot.slane %v2855, %v2867
    %v2869 = vlaneseq
    %v2870 = vshrl.u32 %v2869, 7
    %v2871 = vsub.s32 3, %v2870
    %v2872 = vrot.slane %v2855, %v2871
    %v2941 = vunpack.c.l.b16 %v2791
    %v2942 = vunpack.c.h.b16 %v2791
    %v2943 = vunpack.c.l.b16 %v2792
    %v2944 = vunpack.c.h.b16 %v2792
    %v2945 = vunpack.c.l.b16 %v2793
    %v2946 = vunpack.c.h.b16 %v2793
    %v2947 = vunpack.c.l.b16 %v2794
    %v2948 = vunpack.c.h.b16 %v2794
    %v2949 = vunpack.c.l.b16 %v2795
    %v2950 = vunpack.c.h.b16 %v2795
    %v2951 = vunpack.c.l.b16 %v2796
    %v2952 = vunpack.c.h.b16 %v2796
    %v2953 = vunpack.c.l.b16 %v2797
    %v2954 = vunpack.c.h.b16 %v2797
    %v2955 = vunpack.c.l.b16 %v2798
    %v2956 = vunpack.c.h.b16 %v2798
    %v2957 = vunpack.c.l.b16 %v2799
    %v2958 = vunpack.c.h.b16 %v2799
    %v2959 = vunpack.c.l.b16 %v2800
    %v2960 = vunpack.c.h.b16 %v2800
    %v2961 = vunpack.c.l.b16 %v2801
    %v2962 = vunpack.c.h.b16 %v2801
    %v2963 = vunpack.c.l.b16 %v2802
    %v2964 = vunpack.c.h.b16 %v2802
    %v2965 = vunpack.c.l.b16 %v2803
    %v2966 = vunpack.c.h.b16 %v2803
    %v2967 = vunpack.c.l.b16 %v2804
    %v2968 = vunpack.c.h.b16 %v2804
    %v2969 = vunpack.c.l.b16 %v2805
    %v2970 = vunpack.c.h.b16 %v2805
    %v2971 = vunpack.c.l.b16 %v2806
    %v2972 = vunpack.c.h.b16 %v2806
    %v2973 = vunpack.c.l.b16 %v2807
    %v2974 = vunpack.c.h.b16 %v2807
    %v2975 = vunpack.c.l.b16 %v2808
    %v2976 = vunpack.c.h.b16 %v2808
    %v2977 = vunpack.c.l.b16 %v2809
    %v2978 = vunpack.c.h.b16 %v2809
    %v2979 = vunpack.c.l.b16 %v2810
    %v2980 = vunpack.c.h.b16 %v2810
    %v2981 = vunpack.c.l.b16 %v2811
    %v2982 = vunpack.c.h.b16 %v2811
    %v2983 = vunpack.c.l.b16 %v2812
    %v2984 = vunpack.c.h.b16 %v2812
    %v2985 = vunpack.c.l.b16 %v2813
    %v2986 = vunpack.c.h.b16 %v2813
    %v2987 = vunpack.c.l.b16 %v2814
    %v2988 = vunpack.c.h.b16 %v2814
    %v2989 = vunpack.c.l.b16 %v2815
    %v2990 = vunpack.c.h.b16 %v2815
    %v2991 = vunpack.c.l.b16 %v2816
    %v2992 = vunpack.c.h.b16 %v2816
    %v2993 = vunpack.c.l.b16 %v2817
    %v2994 = vunpack.c.h.b16 %v2817
    %v2995 = vunpack.c.l.b16 %v2818
    %v2996 = vunpack.c.h.b16 %v2818
    %v2997 = vunpack.c.l.b16 %v2819
    %v2998 = vunpack.c.h.b16 %v2819
    %v2999 = vunpack.c.l.b16 %v2820
    %v3000 = vunpack.c.h.b16 %v2820
    %v3001 = vunpack.c.l.b16 %v2821
    %v3002 = vunpack.c.h.b16 %v2821
    %v3003 = vunpack.c.l.b16 %v2822
    %v3004 = vunpack.c.h.b16 %v2822
    %v3005 = vunpack.c.l.b16 %v2823
    %v3006 = vunpack.c.h.b16 %v2823
    %v3007 = vunpack.c.l.b16 %v2824
    %v3008 = vunpack.c.h.b16 %v2824
    %v3009 = vunpack.c.l.b16 %v2825
    %v3010 = vunpack.c.h.b16 %v2825
    %v3011 = vunpack.c.l.b16 %v2826
    %v3012 = vunpack.c.h.b16 %v2826
    %v3013 = vunpack.c.l.b16 %v2827
    %v3014 = vunpack.c.h.b16 %v2827
    %v3015 = vunpack.c.l.b16 %v2828
    %v3016 = vunpack.c.h.b16 %v2828
    %v3017 = vunpack.c.l.b16 %v2829
    %v3018 = vunpack.c.h.b16 %v2829
    %v3019 = vunpack.c.l.b16 %v2830
    %v3020 = vunpack.c.h.b16 %v2830
    %v3021 = vunpack.c.l.b16 %v2831
    %v3022 = vunpack.c.h.b16 %v2831
    %v3023 = vunpack.c.l.b16 %v2832
    %v3024 = vunpack.c.h.b16 %v2832
    %v3025 = vunpack.c.l.b16 %v2833
    %v3026 = vunpack.c.h.b16 %v2833
    %v3027 = vunpack.c.l.b16 %v2834
    %v3028 = vunpack.c.h.b16 %v2834
    %v3029 = vunpack.c.l.b16 %v2835
    %v3030 = vunpack.c.h.b16 %v2835
    %v3031 = vunpack.c.l.b16 %v2836
    %v3032 = vunpack.c.h.b16 %v2836
    %v3033 = vunpack.c.l.b16 %v2837
    %v3034 = vunpack.c.h.b16 %v2837
    %v3035 = vunpack.c.l.b16 %v2838
    %v3036 = vunpack.c.h.b16 %v2838
    %v3037 = vunpack.c.l.b16 %v2839
    %v3038 = vunpack.c.h.b16 %v2839
    %v3039 = vunpack.c.l.b16 %v2840
    %v3040 = vunpack.c.h.b16 %v2840
    %v3041 = vunpack.c.l.b16 %v2841
    %v3042 = vunpack.c.h.b16 %v2841
    %v3043 = vunpack.c.l.b16 %v2842
    %v3044 = vunpack.c.h.b16 %v2842
    %v3045 = vunpack.c.l.b16 %v2843
    %v3046 = vunpack.c.h.b16 %v2843
    %v3047 = vunpack.c.l.b16 %v2844
    %v3048 = vunpack.c.h.b16 %v2844
    %v3049 = vunpack.c.l.b16 %v2845
    %v3050 = vunpack.c.h.b16 %v2845
    %v3051 = vunpack.c.l.b16 %v2846
    %v3052 = vunpack.c.h.b16 %v2846
    %v3053 = vunpack.c.l.b16 %v2847
    %v3054 = vunpack.c.h.b16 %v2847
    %v3055 = vunpack.c.l.b16 %v2848
    %v3056 = vunpack.c.h.b16 %v2848
    %v3057 = vunpack.c.l.b16 %v2849
    %v3058 = vunpack.c.h.b16 %v2849
    %v3059 = vunpack.c.l.b16 %v2850
    %v3060 = vunpack.c.h.b16 %v2850
    %v3061 = vunpack.c.l.b16 %v2851
    %v3062 = vunpack.c.h.b16 %v2851
    %v3063 = vunpack.c.l.b16 %v2852
    %v3064 = vunpack.c.h.b16 %v2852
    %v3065 = vunpack.c.l.b16 %v2853
    %v3066 = vunpack.c.h.b16 %v2853
    %v3067 = vunpack.c.l.b16 %v2854
    %v3068 = vunpack.c.h.b16 %v2854
    %v3069 = vpack.c.b16 %v2945, %v2941
    %v3070 = vpack.c.b16 %v2946, %v2942
    %v3071 = vpack.c.b16 %v2947, %v2943
    %v3072 = vpack.c.b16 %v2948, %v2944
    %v3073 = vpack.c.b16 %v2953, %v2949
    %v3074 = vpack.c.b16 %v2954, %v2950
    %v3075 = vpack.c.b16 %v2955, %v2951
    %v3076 = vpack.c.b16 %v2956, %v2952
    %v3077 = vpack.c.b16 %v2961, %v2957
    %v3078 = vpack.c.b16 %v2962, %v2958
    %v3079 = vpack.c.b16 %v2963, %v2959
    %v3080 = vpack.c.b16 %v2964, %v2960
    %v3081 = vpack.c.b16 %v2969, %v2965
    %v3082 = vpack.c.b16 %v2970, %v2966
    %v3083 = vpack.c.b16 %v2971, %v2967
    %v3084 = vpack.c.b16 %v2972, %v2968
    %v3085 = vpack.c.b16 %v2977, %v2973
    %v3086 = vpack.c.b16 %v2978, %v2974
    %v3087 = vpack.c.b16 %v2979, %v2975
    %v3088 = vpack.c.b16 %v2980, %v2976
    %v3089 = vpack.c.b16 %v2985, %v2981
    %v3090 = vpack.c.b16 %v2986, %v2982
    %v3091 = vpack.c.b16 %v2987, %v2983
    %v3092 = vpack.c.b16 %v2988, %v2984
    %v3093 = vpack.c.b16 %v2993, %v2989
    %v3094 = vpack.c.b16 %v2994, %v2990
    %v3095 = vpack.c.b16 %v2995, %v2991
    %v3096 = vpack.c.b16 %v2996, %v2992
    %v3097 = vpack.c.b16 %v3001, %v2997
    %v3098 = vpack.c.b16 %v3002, %v2998
    %v3099 = vpack.c.b16 %v3003, %v2999
    %v3100 = vpack.c.b16 %v3004, %v3000
    %v3101 = vpack.c.b16 %v3009, %v3005
    %v3102 = vpack.c.b16 %v3010, %v3006
    %v3103 = vpack.c.b16 %v3011, %v3007
    %v3104 = vpack.c.b16 %v3012, %v3008
    %v3105 = vpack.c.b16 %v3017, %v3013
    %v3106 = vpack.c.b16 %v3018, %v3014
    %v3107 = vpack.c.b16 %v3019, %v3015
    %v3108 = vpack.c.b16 %v3020, %v3016
    %v3109 = vpack.c.b16 %v3025, %v3021
    %v3110 = vpack.c.b16 %v3026, %v3022
    %v3111 = vpack.c.b16 %v3027, %v3023
    %v3112 = vpack.c.b16 %v3028, %v3024
    %v3113 = vpack.c.b16 %v3033, %v3029
    %v3114 = vpack.c.b16 %v3034, %v3030
    %v3115 = vpack.c.b16 %v3035, %v3031
    %v3116 = vpack.c.b16 %v3036, %v3032
    %v3117 = vpack.c.b16 %v3041, %v3037
    %v3118 = vpack.c.b16 %v3042, %v3038
    %v3119 = vpack.c.b16 %v3043, %v3039
    %v3120 = vpack.c.b16 %v3044, %v3040
    %v3121 = vpack.c.b16 %v3049, %v3045
    %v3122 = vpack.c.b16 %v3050, %v3046
    %v3123 = vpack.c.b16 %v3051, %v3047
    %v3124 = vpack.c.b16 %v3052, %v3048
    %v3125 = vpack.c.b16 %v3057, %v3053
    %v3126 = vpack.c.b16 %v3058, %v3054
    %v3127 = vpack.c.b16 %v3059, %v3055
    %v3128 = vpack.c.b16 %v3060, %v3056
    %v3129 = vpack.c.b16 %v3065, %v3061
    %v3130 = vpack.c.b16 %v3066, %v3062
    %v3131 = vpack.c.b16 %v3067, %v3063
    %v3132 = vpack.c.b16 %v3068, %v3064
    %3197 = vmatprep.subr.bf16.mxu0 %v3098
    %3198 = vmatpush1.bf16.msra.mxu0 %v3097
    %3199 = vmatprep.subr.bf16.mxu0 %v3094
    %3200 = vmatpush1.bf16.msra.mxu0 %v3093
    %3201 = vmatprep.subr.bf16.mxu0 %v3090
    %3202 = vmatpush1.bf16.msra.mxu0 %v3089
    %3203 = vmatprep.subr.bf16.mxu0 %v3086
    %3204 = vmatpush1.bf16.msra.mxu0 %v3085
    %3205 = vmatprep.subr.bf16.mxu0 %v3082
    %3206 = vmatpush1.bf16.msra.mxu0 %v3081
    %3207 = vmatprep.subr.bf16.mxu0 %v3078
    %3208 = vmatpush1.bf16.msra.mxu0 %v3077
    %3209 = vmatprep.subr.bf16.mxu0 %v3074
    %3210 = vmatpush1.bf16.msra.mxu0 %v3073
    %3211 = vmatprep.subr.bf16.mxu0 %v3070
    %3212 = vmatpush1.bf16.msra.mxu0 %v3069
    %3213 = vmatprep.subr.bf16.mxu0 %v3130
    %3214 = vmatpush2.bf16.msra.mxu0 %v3129
    %3215 = vmatprep.subr.bf16.mxu0 %v3126
    %3216 = vmatpush2.bf16.msra.mxu0 %v3125
    %3217 = vmatprep.subr.bf16.mxu0 %v3122
    %3218 = vmatpush2.bf16.msra.mxu0 %v3121
    %3219 = vmatprep.subr.bf16.mxu0 %v3118
    %3220 = vmatpush2.bf16.msra.mxu0 %v3117
    %3221 = vmatprep.subr.bf16.mxu0 %v3114
    %3222 = vmatpush2.bf16.msra.mxu0 %v3113
    %3223 = vmatprep.subr.bf16.mxu0 %v3110
    %3224 = vmatpush2.bf16.msra.mxu0 %v3109
    %3225 = vmatprep.subr.bf16.mxu0 %v3106
    %3226 = vmatpush2.bf16.msra.mxu0 %v3105
    %3227 = vmatprep.subr.bf16.mxu0 %v3102
    %3228 = vmatpush2.bf16.msra.mxu0 %v3101
    %3229 = vmatprep.mubr.bf16.mxu0 %v2265
    %3230 = vmatmul.mubr.bf16.gmra.mxu0 %v2790
    %v3231 = vpop.f32.mrf.mxu0
    %v3232 = vadd.f32 %v2860, %v3231
    %v3233 = vpop.f32.mrf.mxu0
    %v3234 = vadd.f32 %v2864, %v3233
    %v3235 = vpop.f32.mrf.mxu0
    %v3236 = vpop.f32.mrf.mxu0
    %3237 = vdwg.mxu0
    %3238 = vmatprep.subr.bf16.mxu0 %v3100
    %3239 = vmatpush1.bf16.msra.mxu0 %v3099
    %3240 = vmatprep.subr.bf16.mxu0 %v3096
    %3241 = vmatpush1.bf16.msra.mxu0 %v3095
    %3242 = vmatprep.subr.bf16.mxu0 %v3092
    %3243 = vmatpush1.bf16.msra.mxu0 %v3091
    %3244 = vmatprep.subr.bf16.mxu0 %v3088
    %3245 = vmatpush1.bf16.msra.mxu0 %v3087
    %3246 = vmatprep.subr.bf16.mxu0 %v3084
    %3247 = vmatpush1.bf16.msra.mxu0 %v3083
    %3248 = vmatprep.subr.bf16.mxu0 %v3080
    %3249 = vmatpush1.bf16.msra.mxu0 %v3079
    %3250 = vmatprep.subr.bf16.mxu0 %v3076
    %3251 = vmatpush1.bf16.msra.mxu0 %v3075
    %3252 = vmatprep.subr.bf16.mxu0 %v3072
    %3253 = vmatpush1.bf16.msra.mxu0 %v3071
    %3254 = vmatprep.subr.bf16.mxu0 %v3132
    %3255 = vmatpush2.bf16.msra.mxu0 %v3131
    %3256 = vmatprep.subr.bf16.mxu0 %v3128
    %3257 = vmatpush2.bf16.msra.mxu0 %v3127
    %3258 = vmatprep.subr.bf16.mxu0 %v3124
    %3259 = vmatpush2.bf16.msra.mxu0 %v3123
    %3260 = vmatprep.subr.bf16.mxu0 %v3120
    %3261 = vmatpush2.bf16.msra.mxu0 %v3119
    %3262 = vmatprep.subr.bf16.mxu0 %v3116
    %3263 = vmatpush2.bf16.msra.mxu0 %v3115
    %3264 = vmatprep.subr.bf16.mxu0 %v3112
    %3265 = vmatpush2.bf16.msra.mxu0 %v3111
    %3266 = vmatprep.subr.bf16.mxu0 %v3108
    %3267 = vmatpush2.bf16.msra.mxu0 %v3107
    %3268 = vmatprep.subr.bf16.mxu0 %v3104
    %3269 = vmatpush2.bf16.msra.mxu0 %v3103
    %3270 = vmatprep.mubr.bf16.mxu0 %v2265
    %3271 = vmatmul.mubr.bf16.gmra.mxu0 %v2790
    %v3272 = vpop.f32.mrf.mxu0
    %v3273 = vadd.f32 %v2868, %v3272
    %v3274 = vpop.f32.mrf.mxu0
    %v3275 = vadd.f32 %v2872, %v3274
    %v3276 = vpop.f32.mrf.mxu0
    %v3277 = vpop.f32.mrf.mxu0
    %3278 = vdwg.mxu0
    %v3279 = vxor.u32 %v3232, 2147483648
    %v3280 = vxor.u32 %v3234, 2147483648
    %v3281 = vxor.u32 %v3273, 2147483648
    %v3282 = vmul.f32 %v3279, 1.442695
    %v3283 = vpow.pop %v3282
    %v3284 = vmul.f32 %v3280, 1.442695
    %v3285 = vpow.pop %v3284
    %v3286 = vmul.f32 %v3281, 1.442695
    %v3287 = vpow.pop %v3286
    %v3288 = vadd.f32 %v3283, 1.0
    %v3289 = vadd.f32 %v3285, 1.0
    %v3290 = vadd.f32 %v3287, 1.0
    %v3291 = vrcp.pop %v3288
    %v3292 = vmul.f32 1.0, %v3291
    %v3293 = vrcp.pop %v3289
    %v3294 = vmul.f32 1.0, %v3293
    %v3295 = vrcp.pop %v3290
    %v3296 = vmul.f32 1.0, %v3295
    %v3297 = vtanh.pop %v3275
    %v3298 = vmul.f32 %v3294, %v2262
    %v3299 = vmul.f32 %v3292, %v3297
    %v3300 = vadd.f32 %v3298, %v3299
    %v3301 = vtanh.pop %v3300
    %v3302 = vmul.f32 %v3296, %v3301
    %v3303 = vpack.c.bf16 %v3302, %v3302
    %v3304 = vld [vmem:[%s6] sm:$0xf]
    %v3305 = vld [vmem:[%s6 + $0x4] sm:$0xf]
    %v3306 = vld [vmem:[%s6 + $0x8] sm:$0xf]
    %v3307 = vld [vmem:[%s6 + $0xc] sm:$0xf]
    %v3308 = vld [vmem:[%s6 + $0x10] sm:$0xf]
    %v3309 = vld [vmem:[%s6 + $0x14] sm:$0xf]
    %v3310 = vld [vmem:[%s6 + $0x18] sm:$0xf]
    %v3311 = vld [vmem:[%s6 + $0x1c] sm:$0xf]
    %v3312 = vld [vmem:[%s6 + $0x20] sm:$0xf]
    %v3313 = vld [vmem:[%s6 + $0x24] sm:$0xf]
    %v3314 = vld [vmem:[%s6 + $0x28] sm:$0xf]
    %v3315 = vld [vmem:[%s6 + $0x2c] sm:$0xf]
    %v3316 = vld [vmem:[%s6 + $0x30] sm:$0xf]
    %v3317 = vld [vmem:[%s6 + $0x34] sm:$0xf]
    %v3318 = vld [vmem:[%s6 + $0x38] sm:$0xf]
    %v3319 = vld [vmem:[%s6 + $0x3c] sm:$0xf]
    %v3320 = vld [vmem:[%s7] sm:$0x1]
    %v3322 = vlaneseq
    %v3323 = vshrl.u32 %v3322, 7
    %v3324 = vsub.s32 0, %v3323
    %v3325 = vrot.slane %v3320, %v3324
    %v3343 = vunpack.c.l.b16 %v3304
    %v3344 = vunpack.c.l.b16 %v3305
    %v3345 = vunpack.c.l.b16 %v3306
    %v3346 = vunpack.c.l.b16 %v3307
    %v3347 = vunpack.c.l.b16 %v3308
    %v3348 = vunpack.c.l.b16 %v3309
    %v3349 = vunpack.c.l.b16 %v3310
    %v3350 = vunpack.c.l.b16 %v3311
    %v3351 = vunpack.c.l.b16 %v3312
    %v3352 = vunpack.c.l.b16 %v3313
    %v3353 = vunpack.c.l.b16 %v3314
    %v3354 = vunpack.c.l.b16 %v3315
    %v3355 = vunpack.c.l.b16 %v3316
    %v3356 = vunpack.c.l.b16 %v3317
    %v3357 = vunpack.c.l.b16 %v3318
    %v3358 = vunpack.c.l.b16 %v3319
    %v3359 = vpack.c.b16 %v3344, %v3343
    %v3360 = vpack.c.b16 %v3346, %v3345
    %v3361 = vpack.c.b16 %v3348, %v3347
    %v3362 = vpack.c.b16 %v3350, %v3349
    %v3363 = vpack.c.b16 %v3352, %v3351
    %v3364 = vpack.c.b16 %v3354, %v3353
    %v3365 = vpack.c.b16 %v3356, %v3355
    %v3366 = vpack.c.b16 %v3358, %v3357
    %3375 = vmatprep.subr.bf16.mxu0 0
    %3376 = vmatpush1.bf16.msra.mxu0 %v3366
    %3377 = vmatprep.subr.bf16.mxu0 0
    %3378 = vmatpush1.bf16.msra.mxu0 %v3365
    %3379 = vmatprep.subr.bf16.mxu0 0
    %3380 = vmatpush1.bf16.msra.mxu0 %v3364
    %3381 = vmatprep.subr.bf16.mxu0 0
    %3382 = vmatpush1.bf16.msra.mxu0 %v3363
    %3383 = vmatprep.subr.bf16.mxu0 0
    %3384 = vmatpush1.bf16.msra.mxu0 %v3362
    %3385 = vmatprep.subr.bf16.mxu0 0
    %3386 = vmatpush1.bf16.msra.mxu0 %v3361
    %3387 = vmatprep.subr.bf16.mxu0 0
    %3388 = vmatpush1.bf16.msra.mxu0 %v3360
    %3389 = vmatprep.subr.bf16.mxu0 0
    %3390 = vmatpush1.bf16.msra.mxu0 %v3359
    %3391 = vmatprep.subr.bf16.mxu0 0
    %3392 = vmatpush2.bf16.msra.mxu0 0
    %3393 = vmatprep.subr.bf16.mxu0 0
    %3394 = vmatpush2.bf16.msra.mxu0 0
    %3395 = vmatprep.subr.bf16.mxu0 0
    %3396 = vmatpush2.bf16.msra.mxu0 0
    %3397 = vmatprep.subr.bf16.mxu0 0
    %3398 = vmatpush2.bf16.msra.mxu0 0
    %3399 = vmatprep.subr.bf16.mxu0 0
    %3400 = vmatpush2.bf16.msra.mxu0 0
    %3401 = vmatprep.subr.bf16.mxu0 0
    %3402 = vmatpush2.bf16.msra.mxu0 0
    %3403 = vmatprep.subr.bf16.mxu0 0
    %3404 = vmatpush2.bf16.msra.mxu0 0
    %3405 = vmatprep.subr.bf16.mxu0 0
    %3406 = vmatpush2.bf16.msra.mxu0 0
    %3407 = vmatprep.mubr.bf16.mxu0 0
    %3408 = vmatmul.mubr.bf16.gmra.mxu0 %v3303
    %v3409 = vpop.f32.mrf.mxu0
    %v3410 = vadd.f32 %v3325, %v3409
    %v3411 = vpop.f32.mrf.mxu0
    %v3412 = vpop.f32.mrf.mxu0
    %v3413 = vpop.f32.mrf.mxu0
    %3414 = vdwg.mxu0
    %v3417 = vunpack.c.l.s4 1966171168
    %v3418 = vunpack.c.0.s8 %v3417
    %v3419 = vlaneseq
    %v3420 = vshrl.u32 %v3419, 7
    %v3421 = vsub.s32 %v3418, %v3420
    %v3422 = vrot.slane %v3410, %v3421
    %v3423 = vcombine.high %v3422, %v3422
    %v3425 = vunpack.c.l.s4 1966171168
    %v3426 = vunpack.c.0.s8 %v3425
    %v3427 = vlaneseq
    %v3428 = vshrl.u32 %v3427, 7
    %v3429 = vsub.s32 %v3426, %v3428
    %v3430 = vrot.slane %v3422, %v3429
    %v3432 = vunpack.c.l.s4 1966171168
    %v3433 = vunpack.c.0.s8 %v3432
    %v3434 = vlaneseq
    %v3435 = vshrl.u32 %v3434, 7
    %v3436 = vsub.s32 %v3433, %v3435
    %v3437 = vrot.slane %v3423, %v3436
    %3440 = vst.msk [vmem:[#allocation8 + $0x2] sm:$0x1] %vm1362, %v3430
    %3441 = vst.msk [vmem:[#allocation8 + $0xa] sm:$0x1] %vm1362, %v3437
    %s3442 = scalar_lea.vmem [#allocation2], 3
    %v3443 = vld [vmem:[%s3442] ss:$8 sm:$0xf]
    %s3444 = scalar_lea.vmem [#allocation2], 35
    %v3445 = vld [vmem:[%s3444] ss:$8 sm:$0xf]
    %v3446 = vpack.c.bf16 %v2770, %v2770
    %v3447 = vpack.c.bf16 %v2771, %v2771
    %v3448 = vld [vmem:[#allocation3] sm:$0xff]
    %v3449 = vld [vmem:[#allocation3 + $0x8] sm:$0xff]
    %v3450 = vld [vmem:[#allocation3 + $0x10] sm:$0xff]
    %v3451 = vld [vmem:[#allocation3 + $0x18] sm:$0xff]
    %v3452 = vld [vmem:[#allocation3 + $0x20] sm:$0xff]
    %v3453 = vld [vmem:[#allocation3 + $0x28] sm:$0xff]
    %v3454 = vld [vmem:[#allocation3 + $0x30] sm:$0xff]
    %v3455 = vld [vmem:[#allocation3 + $0x38] sm:$0xff]
    %v3456 = vld [vmem:[#allocation3 + $0x40] sm:$0xff]
    %v3457 = vld [vmem:[#allocation3 + $0x48] sm:$0xff]
    %v3458 = vld [vmem:[#allocation3 + $0x50] sm:$0xff]
    %v3459 = vld [vmem:[#allocation3 + $0x58] sm:$0xff]
    %v3460 = vld [vmem:[#allocation3 + $0x60] sm:$0xff]
    %v3461 = vld [vmem:[#allocation3 + $0x68] sm:$0xff]
    %v3462 = vld [vmem:[#allocation3 + $0x70] sm:$0xff]
    %v3463 = vld [vmem:[#allocation3 + $0x78] sm:$0xff]
    %v3464 = vld [vmem:[#allocation3 + $0x80] sm:$0xff]
    %v3465 = vld [vmem:[#allocation3 + $0x88] sm:$0xff]
    %v3466 = vld [vmem:[#allocation3 + $0x90] sm:$0xff]
    %v3467 = vld [vmem:[#allocation3 + $0x98] sm:$0xff]
    %v3468 = vld [vmem:[#allocation3 + $0xa0] sm:$0xff]
    %v3469 = vld [vmem:[#allocation3 + $0xa8] sm:$0xff]
    %v3470 = vld [vmem:[#allocation3 + $0xb0] sm:$0xff]
    %v3471 = vld [vmem:[#allocation3 + $0xb8] sm:$0xff]
    %v3472 = vld [vmem:[#allocation3 + $0xc0] sm:$0xff]
    %v3473 = vld [vmem:[#allocation3 + $0xc8] sm:$0xff]
    %v3474 = vld [vmem:[#allocation3 + $0xd0] sm:$0xff]
    %v3475 = vld [vmem:[#allocation3 + $0xd8] sm:$0xff]
    %v3476 = vld [vmem:[#allocation3 + $0xe0] sm:$0xff]
    %v3477 = vld [vmem:[#allocation3 + $0xe8] sm:$0xff]
    %v3478 = vld [vmem:[#allocation3 + $0xf0] sm:$0xff]
    %v3479 = vld [vmem:[#allocation3 + $0xf8] sm:$0xff]
    %v3482 = vunpack.c.l.b16 %v3446
    %v3483 = vunpack.c.l.b16 %v3447
    %v3484 = vrot.slane %v3483, 7
    %v3485 = vsel %vm1408, %v3484, %v3482
    %v3486 = vpack.c.b16 %v3485, %v3485
    %v3520 = vunpack.c.l.b16 %v3448
    %v3521 = vunpack.c.h.b16 %v3448
    %v3522 = vunpack.c.l.b16 %v3449
    %v3523 = vunpack.c.h.b16 %v3449
    %v3524 = vunpack.c.l.b16 %v3450
    %v3525 = vunpack.c.h.b16 %v3450
    %v3526 = vunpack.c.l.b16 %v3451
    %v3527 = vunpack.c.h.b16 %v3451
    %v3528 = vunpack.c.l.b16 %v3452
    %v3529 = vunpack.c.h.b16 %v3452
    %v3530 = vunpack.c.l.b16 %v3453
    %v3531 = vunpack.c.h.b16 %v3453
    %v3532 = vunpack.c.l.b16 %v3454
    %v3533 = vunpack.c.h.b16 %v3454
    %v3534 = vunpack.c.l.b16 %v3455
    %v3535 = vunpack.c.h.b16 %v3455
    %v3536 = vunpack.c.l.b16 %v3456
    %v3537 = vunpack.c.h.b16 %v3456
    %v3538 = vunpack.c.l.b16 %v3457
    %v3539 = vunpack.c.h.b16 %v3457
    %v3540 = vunpack.c.l.b16 %v3458
    %v3541 = vunpack.c.h.b16 %v3458
    %v3542 = vunpack.c.l.b16 %v3459
    %v3543 = vunpack.c.h.b16 %v3459
    %v3544 = vunpack.c.l.b16 %v3460
    %v3545 = vunpack.c.h.b16 %v3460
    %v3546 = vunpack.c.l.b16 %v3461
    %v3547 = vunpack.c.h.b16 %v3461
    %v3548 = vunpack.c.l.b16 %v3462
    %v3549 = vunpack.c.h.b16 %v3462
    %v3550 = vunpack.c.l.b16 %v3463
    %v3551 = vunpack.c.h.b16 %v3463
    %v3552 = vunpack.c.l.b16 %v3464
    %v3553 = vunpack.c.h.b16 %v3464
    %v3554 = vunpack.c.l.b16 %v3465
    %v3555 = vunpack.c.h.b16 %v3465
    %v3556 = vunpack.c.l.b16 %v3466
    %v3557 = vunpack.c.h.b16 %v3466
    %v3558 = vunpack.c.l.b16 %v3467
    %v3559 = vunpack.c.h.b16 %v3467
    %v3560 = vunpack.c.l.b16 %v3468
    %v3561 = vunpack.c.h.b16 %v3468
    %v3562 = vunpack.c.l.b16 %v3469
    %v3563 = vunpack.c.h.b16 %v3469
    %v3564 = vunpack.c.l.b16 %v3470
    %v3565 = vunpack.c.h.b16 %v3470
    %v3566 = vunpack.c.l.b16 %v3471
    %v3567 = vunpack.c.h.b16 %v3471
    %v3568 = vunpack.c.l.b16 %v3472
    %v3569 = vunpack.c.h.b16 %v3472
    %v3570 = vunpack.c.l.b16 %v3473
    %v3571 = vunpack.c.h.b16 %v3473
    %v3572 = vunpack.c.l.b16 %v3474
    %v3573 = vunpack.c.h.b16 %v3474
    %v3574 = vunpack.c.l.b16 %v3475
    %v3575 = vunpack.c.h.b16 %v3475
    %v3576 = vunpack.c.l.b16 %v3476
    %v3577 = vunpack.c.h.b16 %v3476
    %v3578 = vunpack.c.l.b16 %v3477
    %v3579 = vunpack.c.h.b16 %v3477
    %v3580 = vunpack.c.l.b16 %v3478
    %v3581 = vunpack.c.h.b16 %v3478
    %v3582 = vunpack.c.l.b16 %v3479
    %v3583 = vunpack.c.h.b16 %v3479
    %v3584 = vpack.c.b16 %v3524, %v3520
    %v3585 = vpack.c.b16 %v3525, %v3521
    %v3586 = vpack.c.b16 %v3526, %v3522
    %v3587 = vpack.c.b16 %v3527, %v3523
    %v3588 = vpack.c.b16 %v3532, %v3528
    %v3589 = vpack.c.b16 %v3533, %v3529
    %v3590 = vpack.c.b16 %v3534, %v3530
    %v3591 = vpack.c.b16 %v3535, %v3531
    %v3592 = vpack.c.b16 %v3540, %v3536
    %v3593 = vpack.c.b16 %v3541, %v3537
    %v3594 = vpack.c.b16 %v3542, %v3538
    %v3595 = vpack.c.b16 %v3543, %v3539
    %v3596 = vpack.c.b16 %v3548, %v3544
    %v3597 = vpack.c.b16 %v3549, %v3545
    %v3598 = vpack.c.b16 %v3550, %v3546
    %v3599 = vpack.c.b16 %v3551, %v3547
    %v3600 = vpack.c.b16 %v3556, %v3552
    %v3601 = vpack.c.b16 %v3557, %v3553
    %v3602 = vpack.c.b16 %v3558, %v3554
    %v3603 = vpack.c.b16 %v3559, %v3555
    %v3604 = vpack.c.b16 %v3564, %v3560
    %v3605 = vpack.c.b16 %v3565, %v3561
    %v3606 = vpack.c.b16 %v3566, %v3562
    %v3607 = vpack.c.b16 %v3567, %v3563
    %v3608 = vpack.c.b16 %v3572, %v3568
    %v3609 = vpack.c.b16 %v3573, %v3569
    %v3610 = vpack.c.b16 %v3574, %v3570
    %v3611 = vpack.c.b16 %v3575, %v3571
    %v3612 = vpack.c.b16 %v3580, %v3576
    %v3613 = vpack.c.b16 %v3581, %v3577
    %v3614 = vpack.c.b16 %v3582, %v3578
    %v3615 = vpack.c.b16 %v3583, %v3579
    %3648 = vmatprep.subr.bf16.mxu0 %v3613
    %3649 = vmatpush1.bf16.msra.mxu0 %v3612
    %3650 = vmatprep.subr.bf16.mxu0 %v3609
    %3651 = vmatpush1.bf16.msra.mxu0 %v3608
    %3652 = vmatprep.subr.bf16.mxu0 %v3605
    %3653 = vmatpush1.bf16.msra.mxu0 %v3604
    %3654 = vmatprep.subr.bf16.mxu0 %v3601
    %3655 = vmatpush1.bf16.msra.mxu0 %v3600
    %3656 = vmatprep.subr.bf16.mxu0 %v3597
    %3657 = vmatpush1.bf16.msra.mxu0 %v3596
    %3658 = vmatprep.subr.bf16.mxu0 %v3593
    %3659 = vmatpush1.bf16.msra.mxu0 %v3592
    %3660 = vmatprep.subr.bf16.mxu0 %v3589
    %3661 = vmatpush1.bf16.msra.mxu0 %v3588
    %3662 = vmatprep.subr.bf16.mxu0 %v3585
    %3663 = vmatpush1.bf16.msra.mxu0 %v3584
    %3664 = vmatprep.subr.bf16.mxu0 0
    %3665 = vmatpush2.bf16.msra.mxu0 0
    %3666 = vmatprep.subr.bf16.mxu0 0
    %3667 = vmatpush2.bf16.msra.mxu0 0
    %3668 = vmatprep.subr.bf16.mxu0 0
    %3669 = vmatpush2.bf16.msra.mxu0 0
    %3670 = vmatprep.subr.bf16.mxu0 0
    %3671 = vmatpush2.bf16.msra.mxu0 0
    %3672 = vmatprep.subr.bf16.mxu0 0
    %3673 = vmatpush2.bf16.msra.mxu0 0
    %3674 = vmatprep.subr.bf16.mxu0 0
    %3675 = vmatpush2.bf16.msra.mxu0 0
    %3676 = vmatprep.subr.bf16.mxu0 0
    %3677 = vmatpush2.bf16.msra.mxu0 0
    %3678 = vmatprep.subr.bf16.mxu0 0
    %3679 = vmatpush2.bf16.msra.mxu0 0
    %3680 = vmatprep.mubr.bf16.mxu0 0
    %3681 = vmatmul.mubr.bf16.gmra.mxu0 %v3486
    %v3682 = vpop.f32.mrf.mxu0
    %v3683 = vadd.f32 0.0, %v3682
    %v3684 = vpop.f32.mrf.mxu0
    %v3685 = vadd.f32 0.0, %v3684
    %v3686 = vpop.f32.mrf.mxu0
    %v3687 = vpop.f32.mrf.mxu0
    %3688 = vdwg.mxu0
    %3689 = vmatprep.subr.bf16.mxu0 %v3615
    %3690 = vmatpush1.bf16.msra.mxu0 %v3614
    %3691 = vmatprep.subr.bf16.mxu0 %v3611
    %3692 = vmatpush1.bf16.msra.mxu0 %v3610
    %3693 = vmatprep.subr.bf16.mxu0 %v3607
    %3694 = vmatpush1.bf16.msra.mxu0 %v3606
    %3695 = vmatprep.subr.bf16.mxu0 %v3603
    %3696 = vmatpush1.bf16.msra.mxu0 %v3602
    %3697 = vmatprep.subr.bf16.mxu0 %v3599
    %3698 = vmatpush1.bf16.msra.mxu0 %v3598
    %3699 = vmatprep.subr.bf16.mxu0 %v3595
    %3700 = vmatpush1.bf16.msra.mxu0 %v3594
    %3701 = vmatprep.subr.bf16.mxu0 %v3591
    %3702 = vmatpush1.bf16.msra.mxu0 %v3590
    %3703 = vmatprep.subr.bf16.mxu0 %v3587
    %3704 = vmatpush1.bf16.msra.mxu0 %v3586
    %3705 = vmatprep.subr.bf16.mxu0 0
    %3706 = vmatpush2.bf16.msra.mxu0 0
    %3707 = vmatprep.subr.bf16.mxu0 0
    %3708 = vmatpush2.bf16.msra.mxu0 0
    %3709 = vmatprep.subr.bf16.mxu0 0
    %3710 = vmatpush2.bf16.msra.mxu0 0
    %3711 = vmatprep.subr.bf16.mxu0 0
    %3712 = vmatpush2.bf16.msra.mxu0 0
    %3713 = vmatprep.subr.bf16.mxu0 0
    %3714 = vmatpush2.bf16.msra.mxu0 0
    %3715 = vmatprep.subr.bf16.mxu0 0
    %3716 = vmatpush2.bf16.msra.mxu0 0
    %3717 = vmatprep.subr.bf16.mxu0 0
    %3718 = vmatpush2.bf16.msra.mxu0 0
    %3719 = vmatprep.subr.bf16.mxu0 0
    %3720 = vmatpush2.bf16.msra.mxu0 0
    %3721 = vmatprep.mubr.bf16.mxu0 0
    %3722 = vmatmul.mubr.bf16.gmra.mxu0 %v3486
    %v3723 = vpop.f32.mrf.mxu0
    %v3724 = vadd.f32 0.0, %v3723
    %v3725 = vpop.f32.mrf.mxu0
    %v3726 = vadd.f32 0.0, %v3725
    %v3727 = vpop.f32.mrf.mxu0
    %v3728 = vpop.f32.mrf.mxu0
    %3729 = vdwg.mxu0
    %v3734 = vcombine.low %v3683, %v3685
    %v3735 = vcombine.low %v3724, %v3726
    %v3737 = vunpack.c.l.s4 1966171168
    %v3738 = vunpack.c.0.s8 %v3737
    %v3739 = vlaneseq
    %v3740 = vshrl.u32 %v3739, 7
    %v3741 = vsub.s32 %v3738, %v3740
    %v3742 = vrot.slane %v3734, %v3741
    %v3744 = vunpack.c.l.s4 1966171168
    %v3745 = vunpack.c.0.s8 %v3744
    %v3746 = vlaneseq
    %v3747 = vshrl.u32 %v3746, 7
    %v3748 = vsub.s32 %v3745, %v3747
    %v3749 = vrot.slane %v3735, %v3748
    %v3750 = vcombine.low %v3742, %v3749
    %v3751 = vcombine.high %v3742, %v3749
    %v3753 = vunpack.c.l.s4 1966171168
    %v3754 = vunpack.c.0.s8 %v3753
    %v3755 = vlaneseq
    %v3756 = vshrl.u32 %v3755, 7
    %v3757 = vsub.s32 %v3754, %v3756
    %v3758 = vrot.slane %v3750, %v3757
    %v3760 = vunpack.c.l.s4 1966171168
    %v3761 = vunpack.c.0.s8 %v3760
    %v3762 = vlaneseq
    %v3763 = vshrl.u32 %v3762, 7
    %v3764 = vsub.s32 %v3761, %v3763
    %v3765 = vrot.slane %v3751, %v3764
    %v3768 = vadd.f32 %v3443, %v3758
    %v3769 = vadd.f32 %v3445, %v3765
    %v3770 = vxor.u32 %v3768, 2147483648
    %v3771 = vxor.u32 %v3769, 2147483648
    %v3772 = vmul.f32 %v3770, 1.442695
    %v3773 = vpow.pop %v3772
    %v3774 = vmul.f32 %v3771, 1.442695
    %v3775 = vpow.pop %v3774
    %v3776 = vadd.f32 %v3773, 1.0
    %v3777 = vadd.f32 %v3775, 1.0
    %v3778 = vrcp.pop %v3776
    %v3779 = vmul.f32 1.0, %v3778
    %v3780 = vrcp.pop %v3777
    %v3781 = vmul.f32 1.0, %v3780
    %v3784 = vrot.slane %v3768, 3
    %v3785 = vrot.slane %v3769, 3
    %v3788 = vtanh.pop %v3784
    %v3789 = vtanh.pop %v3785
    %v3792 = vrot.slane %v3779, 1
    %v3793 = vrot.slane %v3781, 1
    %v3796 = vmul.f32 %v3792, %v2762
    %v3797 = vmul.f32 %v3793, %v2763
    %v3798 = vmul.f32 %v3779, %v3788
    %v3799 = vmul.f32 %v3781, %v3789
    %v3800 = vadd.f32 %v3796, %v3798
    %v3801 = vadd.f32 %v3797, %v3799
    %v3802 = vtanh.pop %v3800
    %v3803 = vtanh.pop %v3801
    %v3804 = vrot.slane %v3779, 2
    %v3805 = vrot.slane %v3781, 2
    %v3808 = vmul.f32 %v3804, %v3802
    %v3809 = vmul.f32 %v3805, %v3803
    %v3812 = vcombine.low %v3808, %v3809
    %v3814 = vunpack.c.l.s4 1966171168
    %v3815 = vunpack.c.0.s8 %v3814
    %v3816 = vlaneseq
    %v3817 = vshrl.u32 %v3816, 7
    %v3818 = vsub.s32 %v3815, %v3817
    %v3819 = vrot.slane %v3812, %v3818
    %v3821 = vunpack.c.l.s4 1966171168
    %v3822 = vunpack.c.0.s8 %v3821
    %v3823 = vlaneseq
    %v3824 = vshrl.u32 %v3823, 7
    %v3825 = vsub.s32 %v3822, %v3824
    %v3826 = vrot.slane %v3819, %v3825
    %v3828 = vpack.c.bf16 %v3826, %v3826
    %v3829 = vld [vmem:[#allocation6] sm:$0xff]
    %v3830 = vld [vmem:[#allocation6 + $0x8] sm:$0xff]
    %v3831 = vld [vmem:[#allocation6 + $0x10] sm:$0xff]
    %v3832 = vld [vmem:[#allocation6 + $0x18] sm:$0xff]
    %v3833 = vld [vmem:[#allocation6 + $0x20] sm:$0xff]
    %v3834 = vld [vmem:[#allocation6 + $0x28] sm:$0xff]
    %v3835 = vld [vmem:[#allocation6 + $0x30] sm:$0xff]
    %v3836 = vld [vmem:[#allocation6 + $0x38] sm:$0xff]
    %v3837 = vld [vmem:[#allocation6 + $0x40] sm:$0xff]
    %v3838 = vld [vmem:[#allocation6 + $0x48] sm:$0xff]
    %v3839 = vld [vmem:[#allocation6 + $0x50] sm:$0xff]
    %v3840 = vld [vmem:[#allocation6 + $0x58] sm:$0xff]
    %v3841 = vld [vmem:[#allocation6 + $0x60] sm:$0xff]
    %v3842 = vld [vmem:[#allocation6 + $0x68] sm:$0xff]
    %v3843 = vld [vmem:[#allocation6 + $0x70] sm:$0xff]
    %v3844 = vld [vmem:[#allocation6 + $0x78] sm:$0xff]
    %v3845 = vld [vmem:[#allocation6 + $0x80] sm:$0xff]
    %v3846 = vld [vmem:[#allocation6 + $0x88] sm:$0xff]
    %v3847 = vld [vmem:[#allocation6 + $0x90] sm:$0xff]
    %v3848 = vld [vmem:[#allocation6 + $0x98] sm:$0xff]
    %v3849 = vld [vmem:[#allocation6 + $0xa0] sm:$0xff]
    %v3850 = vld [vmem:[#allocation6 + $0xa8] sm:$0xff]
    %v3851 = vld [vmem:[#allocation6 + $0xb0] sm:$0xff]
    %v3852 = vld [vmem:[#allocation6 + $0xb8] sm:$0xff]
    %v3853 = vld [vmem:[#allocation6 + $0xc0] sm:$0xff]
    %v3854 = vld [vmem:[#allocation6 + $0xc8] sm:$0xff]
    %v3855 = vld [vmem:[#allocation6 + $0xd0] sm:$0xff]
    %v3856 = vld [vmem:[#allocation6 + $0xd8] sm:$0xff]
    %v3857 = vld [vmem:[#allocation6 + $0xe0] sm:$0xff]
    %v3858 = vld [vmem:[#allocation6 + $0xe8] sm:$0xff]
    %v3859 = vld [vmem:[#allocation6 + $0xf0] sm:$0xff]
    %v3860 = vld [vmem:[#allocation6 + $0xf8] sm:$0xff]
    %v3861 = vld [vmem:[#allocation6 + $0x100] sm:$0xff]
    %v3862 = vld [vmem:[#allocation6 + $0x108] sm:$0xff]
    %v3863 = vld [vmem:[#allocation6 + $0x110] sm:$0xff]
    %v3864 = vld [vmem:[#allocation6 + $0x118] sm:$0xff]
    %v3865 = vld [vmem:[#allocation6 + $0x120] sm:$0xff]
    %v3866 = vld [vmem:[#allocation6 + $0x128] sm:$0xff]
    %v3867 = vld [vmem:[#allocation6 + $0x130] sm:$0xff]
    %v3868 = vld [vmem:[#allocation6 + $0x138] sm:$0xff]
    %v3869 = vld [vmem:[#allocation6 + $0x140] sm:$0xff]
    %v3870 = vld [vmem:[#allocation6 + $0x148] sm:$0xff]
    %v3871 = vld [vmem:[#allocation6 + $0x150] sm:$0xff]
    %v3872 = vld [vmem:[#allocation6 + $0x158] sm:$0xff]
    %v3873 = vld [vmem:[#allocation6 + $0x160] sm:$0xff]
    %v3874 = vld [vmem:[#allocation6 + $0x168] sm:$0xff]
    %v3875 = vld [vmem:[#allocation6 + $0x170] sm:$0xff]
    %v3876 = vld [vmem:[#allocation6 + $0x178] sm:$0xff]
    %v3877 = vld [vmem:[#allocation6 + $0x180] sm:$0xff]
    %v3878 = vld [vmem:[#allocation6 + $0x188] sm:$0xff]
    %v3879 = vld [vmem:[#allocation6 + $0x190] sm:$0xff]
    %v3880 = vld [vmem:[#allocation6 + $0x198] sm:$0xff]
    %v3881 = vld [vmem:[#allocation6 + $0x1a0] sm:$0xff]
    %v3882 = vld [vmem:[#allocation6 + $0x1a8] sm:$0xff]
    %v3883 = vld [vmem:[#allocation6 + $0x1b0] sm:$0xff]
    %v3884 = vld [vmem:[#allocation6 + $0x1b8] sm:$0xff]
    %v3885 = vld [vmem:[#allocation6 + $0x1c0] sm:$0xff]
    %v3886 = vld [vmem:[#allocation6 + $0x1c8] sm:$0xff]
    %v3887 = vld [vmem:[#allocation6 + $0x1d0] sm:$0xff]
    %v3888 = vld [vmem:[#allocation6 + $0x1d8] sm:$0xff]
    %v3889 = vld [vmem:[#allocation6 + $0x1e0] sm:$0xff]
    %v3890 = vld [vmem:[#allocation6 + $0x1e8] sm:$0xff]
    %v3891 = vld [vmem:[#allocation6 + $0x1f0] sm:$0xff]
    %v3892 = vld [vmem:[#allocation6 + $0x1f8] sm:$0xff]
    %v3893 = vld [vmem:[%s5] sm:$0xf]
    %v3895 = vlaneseq
    %v3896 = vshrl.u32 %v3895, 7
    %v3897 = vsub.s32 0, %v3896
    %v3898 = vrot.slane %v3893, %v3897
    %v3899 = vlaneseq
    %v3900 = vshrl.u32 %v3899, 7
    %v3901 = vsub.s32 1, %v3900
    %v3902 = vrot.slane %v3893, %v3901
    %v3903 = vlaneseq
    %v3904 = vshrl.u32 %v3903, 7
    %v3905 = vsub.s32 2, %v3904
    %v3906 = vrot.slane %v3893, %v3905
    %v3907 = vlaneseq
    %v3908 = vshrl.u32 %v3907, 7
    %v3909 = vsub.s32 3, %v3908
    %v3910 = vrot.slane %v3893, %v3909
    %v3979 = vunpack.c.l.b16 %v3829
    %v3980 = vunpack.c.h.b16 %v3829
    %v3981 = vunpack.c.l.b16 %v3830
    %v3982 = vunpack.c.h.b16 %v3830
    %v3983 = vunpack.c.l.b16 %v3831
    %v3984 = vunpack.c.h.b16 %v3831
    %v3985 = vunpack.c.l.b16 %v3832
    %v3986 = vunpack.c.h.b16 %v3832
    %v3987 = vunpack.c.l.b16 %v3833
    %v3988 = vunpack.c.h.b16 %v3833
    %v3989 = vunpack.c.l.b16 %v3834
    %v3990 = vunpack.c.h.b16 %v3834
    %v3991 = vunpack.c.l.b16 %v3835
    %v3992 = vunpack.c.h.b16 %v3835
    %v3993 = vunpack.c.l.b16 %v3836
    %v3994 = vunpack.c.h.b16 %v3836
    %v3995 = vunpack.c.l.b16 %v3837
    %v3996 = vunpack.c.h.b16 %v3837
    %v3997 = vunpack.c.l.b16 %v3838
    %v3998 = vunpack.c.h.b16 %v3838
    %v3999 = vunpack.c.l.b16 %v3839
    %v4000 = vunpack.c.h.b16 %v3839
    %v4001 = vunpack.c.l.b16 %v3840
    %v4002 = vunpack.c.h.b16 %v3840
    %v4003 = vunpack.c.l.b16 %v3841
    %v4004 = vunpack.c.h.b16 %v3841
    %v4005 = vunpack.c.l.b16 %v3842
    %v4006 = vunpack.c.h.b16 %v3842
    %v4007 = vunpack.c.l.b16 %v3843
    %v4008 = vunpack.c.h.b16 %v3843
    %v4009 = vunpack.c.l.b16 %v3844
    %v4010 = vunpack.c.h.b16 %v3844
    %v4011 = vunpack.c.l.b16 %v3845
    %v4012 = vunpack.c.h.b16 %v3845
    %v4013 = vunpack.c.l.b16 %v3846
    %v4014 = vunpack.c.h.b16 %v3846
    %v4015 = vunpack.c.l.b16 %v3847
    %v4016 = vunpack.c.h.b16 %v3847
    %v4017 = vunpack.c.l.b16 %v3848
    %v4018 = vunpack.c.h.b16 %v3848
    %v4019 = vunpack.c.l.b16 %v3849
    %v4020 = vunpack.c.h.b16 %v3849
    %v4021 = vunpack.c.l.b16 %v3850
    %v4022 = vunpack.c.h.b16 %v3850
    %v4023 = vunpack.c.l.b16 %v3851
    %v4024 = vunpack.c.h.b16 %v3851
    %v4025 = vunpack.c.l.b16 %v3852
    %v4026 = vunpack.c.h.b16 %v3852
    %v4027 = vunpack.c.l.b16 %v3853
    %v4028 = vunpack.c.h.b16 %v3853
    %v4029 = vunpack.c.l.b16 %v3854
    %v4030 = vunpack.c.h.b16 %v3854
    %v4031 = vunpack.c.l.b16 %v3855
    %v4032 = vunpack.c.h.b16 %v3855
    %v4033 = vunpack.c.l.b16 %v3856
    %v4034 = vunpack.c.h.b16 %v3856
    %v4035 = vunpack.c.l.b16 %v3857
    %v4036 = vunpack.c.h.b16 %v3857
    %v4037 = vunpack.c.l.b16 %v3858
    %v4038 = vunpack.c.h.b16 %v3858
    %v4039 = vunpack.c.l.b16 %v3859
    %v4040 = vunpack.c.h.b16 %v3859
    %v4041 = vunpack.c.l.b16 %v3860
    %v4042 = vunpack.c.h.b16 %v3860
    %v4043 = vunpack.c.l.b16 %v3861
    %v4044 = vunpack.c.h.b16 %v3861
    %v4045 = vunpack.c.l.b16 %v3862
    %v4046 = vunpack.c.h.b16 %v3862
    %v4047 = vunpack.c.l.b16 %v3863
    %v4048 = vunpack.c.h.b16 %v3863
    %v4049 = vunpack.c.l.b16 %v3864
    %v4050 = vunpack.c.h.b16 %v3864
    %v4051 = vunpack.c.l.b16 %v3865
    %v4052 = vunpack.c.h.b16 %v3865
    %v4053 = vunpack.c.l.b16 %v3866
    %v4054 = vunpack.c.h.b16 %v3866
    %v4055 = vunpack.c.l.b16 %v3867
    %v4056 = vunpack.c.h.b16 %v3867
    %v4057 = vunpack.c.l.b16 %v3868
    %v4058 = vunpack.c.h.b16 %v3868
    %v4059 = vunpack.c.l.b16 %v3869
    %v4060 = vunpack.c.h.b16 %v3869
    %v4061 = vunpack.c.l.b16 %v3870
    %v4062 = vunpack.c.h.b16 %v3870
    %v4063 = vunpack.c.l.b16 %v3871
    %v4064 = vunpack.c.h.b16 %v3871
    %v4065 = vunpack.c.l.b16 %v3872
    %v4066 = vunpack.c.h.b16 %v3872
    %v4067 = vunpack.c.l.b16 %v3873
    %v4068 = vunpack.c.h.b16 %v3873
    %v4069 = vunpack.c.l.b16 %v3874
    %v4070 = vunpack.c.h.b16 %v3874
    %v4071 = vunpack.c.l.b16 %v3875
    %v4072 = vunpack.c.h.b16 %v3875
    %v4073 = vunpack.c.l.b16 %v3876
    %v4074 = vunpack.c.h.b16 %v3876
    %v4075 = vunpack.c.l.b16 %v3877
    %v4076 = vunpack.c.h.b16 %v3877
    %v4077 = vunpack.c.l.b16 %v3878
    %v4078 = vunpack.c.h.b16 %v3878
    %v4079 = vunpack.c.l.b16 %v3879
    %v4080 = vunpack.c.h.b16 %v3879
    %v4081 = vunpack.c.l.b16 %v3880
    %v4082 = vunpack.c.h.b16 %v3880
    %v4083 = vunpack.c.l.b16 %v3881
    %v4084 = vunpack.c.h.b16 %v3881
    %v4085 = vunpack.c.l.b16 %v3882
    %v4086 = vunpack.c.h.b16 %v3882
    %v4087 = vunpack.c.l.b16 %v3883
    %v4088 = vunpack.c.h.b16 %v3883
    %v4089 = vunpack.c.l.b16 %v3884
    %v4090 = vunpack.c.h.b16 %v3884
    %v4091 = vunpack.c.l.b16 %v3885
    %v4092 = vunpack.c.h.b16 %v3885
    %v4093 = vunpack.c.l.b16 %v3886
    %v4094 = vunpack.c.h.b16 %v3886
    %v4095 = vunpack.c.l.b16 %v3887
    %v4096 = vunpack.c.h.b16 %v3887
    %v4097 = vunpack.c.l.b16 %v3888
    %v4098 = vunpack.c.h.b16 %v3888
    %v4099 = vunpack.c.l.b16 %v3889
    %v4100 = vunpack.c.h.b16 %v3889
    %v4101 = vunpack.c.l.b16 %v3890
    %v4102 = vunpack.c.h.b16 %v3890
    %v4103 = vunpack.c.l.b16 %v3891
    %v4104 = vunpack.c.h.b16 %v3891
    %v4105 = vunpack.c.l.b16 %v3892
    %v4106 = vunpack.c.h.b16 %v3892
    %v4107 = vpack.c.b16 %v3983, %v3979
    %v4108 = vpack.c.b16 %v3984, %v3980
    %v4109 = vpack.c.b16 %v3985, %v3981
    %v4110 = vpack.c.b16 %v3986, %v3982
    %v4111 = vpack.c.b16 %v3991, %v3987
    %v4112 = vpack.c.b16 %v3992, %v3988
    %v4113 = vpack.c.b16 %v3993, %v3989
    %v4114 = vpack.c.b16 %v3994, %v3990
    %v4115 = vpack.c.b16 %v3999, %v3995
    %v4116 = vpack.c.b16 %v4000, %v3996
    %v4117 = vpack.c.b16 %v4001, %v3997
    %v4118 = vpack.c.b16 %v4002, %v3998
    %v4119 = vpack.c.b16 %v4007, %v4003
    %v4120 = vpack.c.b16 %v4008, %v4004
    %v4121 = vpack.c.b16 %v4009, %v4005
    %v4122 = vpack.c.b16 %v4010, %v4006
    %v4123 = vpack.c.b16 %v4015, %v4011
    %v4124 = vpack.c.b16 %v4016, %v4012
    %v4125 = vpack.c.b16 %v4017, %v4013
    %v4126 = vpack.c.b16 %v4018, %v4014
    %v4127 = vpack.c.b16 %v4023, %v4019
    %v4128 = vpack.c.b16 %v4024, %v4020
    %v4129 = vpack.c.b16 %v4025, %v4021
    %v4130 = vpack.c.b16 %v4026, %v4022
    %v4131 = vpack.c.b16 %v4031, %v4027
    %v4132 = vpack.c.b16 %v4032, %v4028
    %v4133 = vpack.c.b16 %v4033, %v4029
    %v4134 = vpack.c.b16 %v4034, %v4030
    %v4135 = vpack.c.b16 %v4039, %v4035
    %v4136 = vpack.c.b16 %v4040, %v4036
    %v4137 = vpack.c.b16 %v4041, %v4037
    %v4138 = vpack.c.b16 %v4042, %v4038
    %v4139 = vpack.c.b16 %v4047, %v4043
    %v4140 = vpack.c.b16 %v4048, %v4044
    %v4141 = vpack.c.b16 %v4049, %v4045
    %v4142 = vpack.c.b16 %v4050, %v4046
    %v4143 = vpack.c.b16 %v4055, %v4051
    %v4144 = vpack.c.b16 %v4056, %v4052
    %v4145 = vpack.c.b16 %v4057, %v4053
    %v4146 = vpack.c.b16 %v4058, %v4054
    %v4147 = vpack.c.b16 %v4063, %v4059
    %v4148 = vpack.c.b16 %v4064, %v4060
    %v4149 = vpack.c.b16 %v4065, %v4061
    %v4150 = vpack.c.b16 %v4066, %v4062
    %v4151 = vpack.c.b16 %v4071, %v4067
    %v4152 = vpack.c.b16 %v4072, %v4068
    %v4153 = vpack.c.b16 %v4073, %v4069
    %v4154 = vpack.c.b16 %v4074, %v4070
    %v4155 = vpack.c.b16 %v4079, %v4075
    %v4156 = vpack.c.b16 %v4080, %v4076
    %v4157 = vpack.c.b16 %v4081, %v4077
    %v4158 = vpack.c.b16 %v4082, %v4078
    %v4159 = vpack.c.b16 %v4087, %v4083
    %v4160 = vpack.c.b16 %v4088, %v4084
    %v4161 = vpack.c.b16 %v4089, %v4085
    %v4162 = vpack.c.b16 %v4090, %v4086
    %v4163 = vpack.c.b16 %v4095, %v4091
    %v4164 = vpack.c.b16 %v4096, %v4092
    %v4165 = vpack.c.b16 %v4097, %v4093
    %v4166 = vpack.c.b16 %v4098, %v4094
    %v4167 = vpack.c.b16 %v4103, %v4099
    %v4168 = vpack.c.b16 %v4104, %v4100
    %v4169 = vpack.c.b16 %v4105, %v4101
    %v4170 = vpack.c.b16 %v4106, %v4102
    %4235 = vmatprep.subr.bf16.mxu0 %v4136
    %4236 = vmatpush1.bf16.msra.mxu0 %v4135
    %4237 = vmatprep.subr.bf16.mxu0 %v4132
    %4238 = vmatpush1.bf16.msra.mxu0 %v4131
    %4239 = vmatprep.subr.bf16.mxu0 %v4128
    %4240 = vmatpush1.bf16.msra.mxu0 %v4127
    %4241 = vmatprep.subr.bf16.mxu0 %v4124
    %4242 = vmatpush1.bf16.msra.mxu0 %v4123
    %4243 = vmatprep.subr.bf16.mxu0 %v4120
    %4244 = vmatpush1.bf16.msra.mxu0 %v4119
    %4245 = vmatprep.subr.bf16.mxu0 %v4116
    %4246 = vmatpush1.bf16.msra.mxu0 %v4115
    %4247 = vmatprep.subr.bf16.mxu0 %v4112
    %4248 = vmatpush1.bf16.msra.mxu0 %v4111
    %4249 = vmatprep.subr.bf16.mxu0 %v4108
    %4250 = vmatpush1.bf16.msra.mxu0 %v4107
    %4251 = vmatprep.subr.bf16.mxu0 %v4168
    %4252 = vmatpush2.bf16.msra.mxu0 %v4167
    %4253 = vmatprep.subr.bf16.mxu0 %v4164
    %4254 = vmatpush2.bf16.msra.mxu0 %v4163
    %4255 = vmatprep.subr.bf16.mxu0 %v4160
    %4256 = vmatpush2.bf16.msra.mxu0 %v4159
    %4257 = vmatprep.subr.bf16.mxu0 %v4156
    %4258 = vmatpush2.bf16.msra.mxu0 %v4155
    %4259 = vmatprep.subr.bf16.mxu0 %v4152
    %4260 = vmatpush2.bf16.msra.mxu0 %v4151
    %4261 = vmatprep.subr.bf16.mxu0 %v4148
    %4262 = vmatpush2.bf16.msra.mxu0 %v4147
    %4263 = vmatprep.subr.bf16.mxu0 %v4144
    %4264 = vmatpush2.bf16.msra.mxu0 %v4143
    %4265 = vmatprep.subr.bf16.mxu0 %v4140
    %4266 = vmatpush2.bf16.msra.mxu0 %v4139
    %4267 = vmatprep.mubr.bf16.mxu0 %v3303
    %4268 = vmatmul.mubr.bf16.gmra.mxu0 %v3828
    %v4269 = vpop.f32.mrf.mxu0
    %v4270 = vadd.f32 %v3898, %v4269
    %v4271 = vpop.f32.mrf.mxu0
    %v4272 = vadd.f32 %v3902, %v4271
    %v4273 = vpop.f32.mrf.mxu0
    %v4274 = vpop.f32.mrf.mxu0
    %4275 = vdwg.mxu0
    %4276 = vmatprep.subr.bf16.mxu0 %v4138
    %4277 = vmatpush1.bf16.msra.mxu0 %v4137
    %4278 = vmatprep.subr.bf16.mxu0 %v4134
    %4279 = vmatpush1.bf16.msra.mxu0 %v4133
    %4280 = vmatprep.subr.bf16.mxu0 %v4130
    %4281 = vmatpush1.bf16.msra.mxu0 %v4129
    %4282 = vmatprep.subr.bf16.mxu0 %v4126
    %4283 = vmatpush1.bf16.msra.mxu0 %v4125
    %4284 = vmatprep.subr.bf16.mxu0 %v4122
    %4285 = vmatpush1.bf16.msra.mxu0 %v4121
    %4286 = vmatprep.subr.bf16.mxu0 %v4118
    %4287 = vmatpush1.bf16.msra.mxu0 %v4117
    %4288 = vmatprep.subr.bf16.mxu0 %v4114
    %4289 = vmatpush1.bf16.msra.mxu0 %v4113
    %4290 = vmatprep.subr.bf16.mxu0 %v4110
    %4291 = vmatpush1.bf16.msra.mxu0 %v4109
    %4292 = vmatprep.subr.bf16.mxu0 %v4170
    %4293 = vmatpush2.bf16.msra.mxu0 %v4169
    %4294 = vmatprep.subr.bf16.mxu0 %v4166
    %4295 = vmatpush2.bf16.msra.mxu0 %v4165
    %4296 = vmatprep.subr.bf16.mxu0 %v4162
    %4297 = vmatpush2.bf16.msra.mxu0 %v4161
    %4298 = vmatprep.subr.bf16.mxu0 %v4158
    %4299 = vmatpush2.bf16.msra.mxu0 %v4157
    %4300 = vmatprep.subr.bf16.mxu0 %v4154
    %4301 = vmatpush2.bf16.msra.mxu0 %v4153
    %4302 = vmatprep.subr.bf16.mxu0 %v4150
    %4303 = vmatpush2.bf16.msra.mxu0 %v4149
    %4304 = vmatprep.subr.bf16.mxu0 %v4146
    %4305 = vmatpush2.bf16.msra.mxu0 %v4145
    %4306 = vmatprep.subr.bf16.mxu0 %v4142
    %4307 = vmatpush2.bf16.msra.mxu0 %v4141
    %4308 = vmatprep.mubr.bf16.mxu0 %v3303
    %4309 = vmatmul.mubr.bf16.gmra.mxu0 %v3828
    %v4310 = vpop.f32.mrf.mxu0
    %v4311 = vadd.f32 %v3906, %v4310
    %v4312 = vpop.f32.mrf.mxu0
    %v4313 = vadd.f32 %v3910, %v4312
    %v4314 = vpop.f32.mrf.mxu0
    %v4315 = vpop.f32.mrf.mxu0
    %4316 = vdwg.mxu0
    %v4317 = vxor.u32 %v4270, 2147483648
    %v4318 = vxor.u32 %v4272, 2147483648
    %v4319 = vxor.u32 %v4311, 2147483648
    %v4320 = vmul.f32 %v4317, 1.442695
    %v4321 = vpow.pop %v4320
    %v4322 = vmul.f32 %v4318, 1.442695
    %v4323 = vpow.pop %v4322
    %v4324 = vmul.f32 %v4319, 1.442695
    %v4325 = vpow.pop %v4324
    %v4326 = vadd.f32 %v4321, 1.0
    %v4327 = vadd.f32 %v4323, 1.0
    %v4328 = vadd.f32 %v4325, 1.0
    %v4329 = vrcp.pop %v4326
    %v4330 = vmul.f32 1.0, %v4329
    %v4331 = vrcp.pop %v4327
    %v4332 = vmul.f32 1.0, %v4331
    %v4333 = vrcp.pop %v4328
    %v4334 = vmul.f32 1.0, %v4333
    %v4335 = vtanh.pop %v4313
    %v4336 = vmul.f32 %v4332, %v3300
    %v4337 = vmul.f32 %v4330, %v4335
    %v4338 = vadd.f32 %v4336, %v4337
    %v4339 = vtanh.pop %v4338
    %v4340 = vmul.f32 %v4334, %v4339
    %v4341 = vpack.c.bf16 %v4340, %v4340
    %v4342 = vld [vmem:[%s6] sm:$0xf]
    %v4343 = vld [vmem:[%s6 + $0x4] sm:$0xf]
    %v4344 = vld [vmem:[%s6 + $0x8] sm:$0xf]
    %v4345 = vld [vmem:[%s6 + $0xc] sm:$0xf]
    %v4346 = vld [vmem:[%s6 + $0x10] sm:$0xf]
    %v4347 = vld [vmem:[%s6 + $0x14] sm:$0xf]
    %v4348 = vld [vmem:[%s6 + $0x18] sm:$0xf]
    %v4349 = vld [vmem:[%s6 + $0x1c] sm:$0xf]
    %v4350 = vld [vmem:[%s6 + $0x20] sm:$0xf]
    %v4351 = vld [vmem:[%s6 + $0x24] sm:$0xf]
    %v4352 = vld [vmem:[%s6 + $0x28] sm:$0xf]
    %v4353 = vld [vmem:[%s6 + $0x2c] sm:$0xf]
    %v4354 = vld [vmem:[%s6 + $0x30] sm:$0xf]
    %v4355 = vld [vmem:[%s6 + $0x34] sm:$0xf]
    %v4356 = vld [vmem:[%s6 + $0x38] sm:$0xf]
    %v4357 = vld [vmem:[%s6 + $0x3c] sm:$0xf]
    %v4358 = vld [vmem:[%s7] sm:$0x1]
    %v4360 = vlaneseq
    %v4361 = vshrl.u32 %v4360, 7
    %v4362 = vsub.s32 0, %v4361
    %v4363 = vrot.slane %v4358, %v4362
    %v4381 = vunpack.c.l.b16 %v4342
    %v4382 = vunpack.c.l.b16 %v4343
    %v4383 = vunpack.c.l.b16 %v4344
    %v4384 = vunpack.c.l.b16 %v4345
    %v4385 = vunpack.c.l.b16 %v4346
    %v4386 = vunpack.c.l.b16 %v4347
    %v4387 = vunpack.c.l.b16 %v4348
    %v4388 = vunpack.c.l.b16 %v4349
    %v4389 = vunpack.c.l.b16 %v4350
    %v4390 = vunpack.c.l.b16 %v4351
    %v4391 = vunpack.c.l.b16 %v4352
    %v4392 = vunpack.c.l.b16 %v4353
    %v4393 = vunpack.c.l.b16 %v4354
    %v4394 = vunpack.c.l.b16 %v4355
    %v4395 = vunpack.c.l.b16 %v4356
    %v4396 = vunpack.c.l.b16 %v4357
    %v4397 = vpack.c.b16 %v4382, %v4381
    %v4398 = vpack.c.b16 %v4384, %v4383
    %v4399 = vpack.c.b16 %v4386, %v4385
    %v4400 = vpack.c.b16 %v4388, %v4387
    %v4401 = vpack.c.b16 %v4390, %v4389
    %v4402 = vpack.c.b16 %v4392, %v4391
    %v4403 = vpack.c.b16 %v4394, %v4393
    %v4404 = vpack.c.b16 %v4396, %v4395
    %4413 = vmatprep.subr.bf16.mxu0 0
    %4414 = vmatpush1.bf16.msra.mxu0 %v4404
    %4415 = vmatprep.subr.bf16.mxu0 0
    %4416 = vmatpush1.bf16.msra.mxu0 %v4403
    %4417 = vmatprep.subr.bf16.mxu0 0
    %4418 = vmatpush1.bf16.msra.mxu0 %v4402
    %4419 = vmatprep.subr.bf16.mxu0 0
    %4420 = vmatpush1.bf16.msra.mxu0 %v4401
    %4421 = vmatprep.subr.bf16.mxu0 0
    %4422 = vmatpush1.bf16.msra.mxu0 %v4400
    %4423 = vmatprep.subr.bf16.mxu0 0
    %4424 = vmatpush1.bf16.msra.mxu0 %v4399
    %4425 = vmatprep.subr.bf16.mxu0 0
    %4426 = vmatpush1.bf16.msra.mxu0 %v4398
    %4427 = vmatprep.subr.bf16.mxu0 0
    %4428 = vmatpush1.bf16.msra.mxu0 %v4397
    %4429 = vmatprep.subr.bf16.mxu0 0
    %4430 = vmatpush2.bf16.msra.mxu0 0
    %4431 = vmatprep.subr.bf16.mxu0 0
    %4432 = vmatpush2.bf16.msra.mxu0 0
    %4433 = vmatprep.subr.bf16.mxu0 0
    %4434 = vmatpush2.bf16.msra.mxu0 0
    %4435 = vmatprep.subr.bf16.mxu0 0
    %4436 = vmatpush2.bf16.msra.mxu0 0
    %4437 = vmatprep.subr.bf16.mxu0 0
    %4438 = vmatpush2.bf16.msra.mxu0 0
    %4439 = vmatprep.subr.bf16.mxu0 0
    %4440 = vmatpush2.bf16.msra.mxu0 0
    %4441 = vmatprep.subr.bf16.mxu0 0
    %4442 = vmatpush2.bf16.msra.mxu0 0
    %4443 = vmatprep.subr.bf16.mxu0 0
    %4444 = vmatpush2.bf16.msra.mxu0 0
    %4445 = vmatprep.mubr.bf16.mxu0 0
    %4446 = vmatmul.mubr.bf16.gmra.mxu0 %v4341
    %v4447 = vpop.f32.mrf.mxu0
    %v4448 = vadd.f32 %v4363, %v4447
    %v4449 = vpop.f32.mrf.mxu0
    %v4450 = vpop.f32.mrf.mxu0
    %v4451 = vpop.f32.mrf.mxu0
    %4452 = vdwg.mxu0
    %v4455 = vunpack.c.l.s4 1966171168
    %v4456 = vunpack.c.0.s8 %v4455
    %v4457 = vlaneseq
    %v4458 = vshrl.u32 %v4457, 7
    %v4459 = vsub.s32 %v4456, %v4458
    %v4460 = vrot.slane %v4448, %v4459
    %v4461 = vcombine.high %v4460, %v4460
    %v4463 = vunpack.c.l.s4 1966171168
    %v4464 = vunpack.c.0.s8 %v4463
    %v4465 = vlaneseq
    %v4466 = vshrl.u32 %v4465, 7
    %v4467 = vsub.s32 %v4464, %v4466
    %v4468 = vrot.slane %v4460, %v4467
    %v4470 = vunpack.c.l.s4 1966171168
    %v4471 = vunpack.c.0.s8 %v4470
    %v4472 = vlaneseq
    %v4473 = vshrl.u32 %v4472, 7
    %v4474 = vsub.s32 %v4471, %v4473
    %v4475 = vrot.slane %v4461, %v4474
    %4478 = vst.msk [vmem:[#allocation8 + $0x3] sm:$0x1] %vm1362, %v4468
    %4479 = vst.msk [vmem:[#allocation8 + $0xb] sm:$0x1] %vm1362, %v4475
    %s4480 = scalar_lea.vmem [#allocation2], 4
    %v4481 = vld [vmem:[%s4480] ss:$8 sm:$0xf]
    %s4482 = scalar_lea.vmem [#allocation2], 36
    %v4483 = vld [vmem:[%s4482] ss:$8 sm:$0xf]
    %v4484 = vpack.c.bf16 %v3808, %v3808
    %v4485 = vpack.c.bf16 %v3809, %v3809
    %v4486 = vld [vmem:[#allocation3] sm:$0xff]
    %v4487 = vld [vmem:[#allocation3 + $0x8] sm:$0xff]
    %v4488 = vld [vmem:[#allocation3 + $0x10] sm:$0xff]
    %v4489 = vld [vmem:[#allocation3 + $0x18] sm:$0xff]
    %v4490 = vld [vmem:[#allocation3 + $0x20] sm:$0xff]
    %v4491 = vld [vmem:[#allocation3 + $0x28] sm:$0xff]
    %v4492 = vld [vmem:[#allocation3 + $0x30] sm:$0xff]
    %v4493 = vld [vmem:[#allocation3 + $0x38] sm:$0xff]
    %v4494 = vld [vmem:[#allocation3 + $0x40] sm:$0xff]
    %v4495 = vld [vmem:[#allocation3 + $0x48] sm:$0xff]
    %v4496 = vld [vmem:[#allocation3 + $0x50] sm:$0xff]
    %v4497 = vld [vmem:[#allocation3 + $0x58] sm:$0xff]
    %v4498 = vld [vmem:[#allocation3 + $0x60] sm:$0xff]
    %v4499 = vld [vmem:[#allocation3 + $0x68] sm:$0xff]
    %v4500 = vld [vmem:[#allocation3 + $0x70] sm:$0xff]
    %v4501 = vld [vmem:[#allocation3 + $0x78] sm:$0xff]
    %v4502 = vld [vmem:[#allocation3 + $0x80] sm:$0xff]
    %v4503 = vld [vmem:[#allocation3 + $0x88] sm:$0xff]
    %v4504 = vld [vmem:[#allocation3 + $0x90] sm:$0xff]
    %v4505 = vld [vmem:[#allocation3 + $0x98] sm:$0xff]
    %v4506 = vld [vmem:[#allocation3 + $0xa0] sm:$0xff]
    %v4507 = vld [vmem:[#allocation3 + $0xa8] sm:$0xff]
    %v4508 = vld [vmem:[#allocation3 + $0xb0] sm:$0xff]
    %v4509 = vld [vmem:[#allocation3 + $0xb8] sm:$0xff]
    %v4510 = vld [vmem:[#allocation3 + $0xc0] sm:$0xff]
    %v4511 = vld [vmem:[#allocation3 + $0xc8] sm:$0xff]
    %v4512 = vld [vmem:[#allocation3 + $0xd0] sm:$0xff]
    %v4513 = vld [vmem:[#allocation3 + $0xd8] sm:$0xff]
    %v4514 = vld [vmem:[#allocation3 + $0xe0] sm:$0xff]
    %v4515 = vld [vmem:[#allocation3 + $0xe8] sm:$0xff]
    %v4516 = vld [vmem:[#allocation3 + $0xf0] sm:$0xff]
    %v4517 = vld [vmem:[#allocation3 + $0xf8] sm:$0xff]
    %v4520 = vunpack.c.l.b16 %v4484
    %v4521 = vunpack.c.l.b16 %v4485
    %v4522 = vrot.slane %v4521, 7
    %v4523 = vsel %vm1408, %v4522, %v4520
    %v4524 = vpack.c.b16 %v4523, %v4523
    %v4558 = vunpack.c.l.b16 %v4486
    %v4559 = vunpack.c.h.b16 %v4486
    %v4560 = vunpack.c.l.b16 %v4487
    %v4561 = vunpack.c.h.b16 %v4487
    %v4562 = vunpack.c.l.b16 %v4488
    %v4563 = vunpack.c.h.b16 %v4488
    %v4564 = vunpack.c.l.b16 %v4489
    %v4565 = vunpack.c.h.b16 %v4489
    %v4566 = vunpack.c.l.b16 %v4490
    %v4567 = vunpack.c.h.b16 %v4490
    %v4568 = vunpack.c.l.b16 %v4491
    %v4569 = vunpack.c.h.b16 %v4491
    %v4570 = vunpack.c.l.b16 %v4492
    %v4571 = vunpack.c.h.b16 %v4492
    %v4572 = vunpack.c.l.b16 %v4493
    %v4573 = vunpack.c.h.b16 %v4493
    %v4574 = vunpack.c.l.b16 %v4494
    %v4575 = vunpack.c.h.b16 %v4494
    %v4576 = vunpack.c.l.b16 %v4495
    %v4577 = vunpack.c.h.b16 %v4495
    %v4578 = vunpack.c.l.b16 %v4496
    %v4579 = vunpack.c.h.b16 %v4496
    %v4580 = vunpack.c.l.b16 %v4497
    %v4581 = vunpack.c.h.b16 %v4497
    %v4582 = vunpack.c.l.b16 %v4498
    %v4583 = vunpack.c.h.b16 %v4498
    %v4584 = vunpack.c.l.b16 %v4499
    %v4585 = vunpack.c.h.b16 %v4499
    %v4586 = vunpack.c.l.b16 %v4500
    %v4587 = vunpack.c.h.b16 %v4500
    %v4588 = vunpack.c.l.b16 %v4501
    %v4589 = vunpack.c.h.b16 %v4501
    %v4590 = vunpack.c.l.b16 %v4502
    %v4591 = vunpack.c.h.b16 %v4502
    %v4592 = vunpack.c.l.b16 %v4503
    %v4593 = vunpack.c.h.b16 %v4503
    %v4594 = vunpack.c.l.b16 %v4504
    %v4595 = vunpack.c.h.b16 %v4504
    %v4596 = vunpack.c.l.b16 %v4505
    %v4597 = vunpack.c.h.b16 %v4505
    %v4598 = vunpack.c.l.b16 %v4506
    %v4599 = vunpack.c.h.b16 %v4506
    %v4600 = vunpack.c.l.b16 %v4507
    %v4601 = vunpack.c.h.b16 %v4507
    %v4602 = vunpack.c.l.b16 %v4508
    %v4603 = vunpack.c.h.b16 %v4508
    %v4604 = vunpack.c.l.b16 %v4509
    %v4605 = vunpack.c.h.b16 %v4509
    %v4606 = vunpack.c.l.b16 %v4510
    %v4607 = vunpack.c.h.b16 %v4510
    %v4608 = vunpack.c.l.b16 %v4511
    %v4609 = vunpack.c.h.b16 %v4511
    %v4610 = vunpack.c.l.b16 %v4512
    %v4611 = vunpack.c.h.b16 %v4512
    %v4612 = vunpack.c.l.b16 %v4513
    %v4613 = vunpack.c.h.b16 %v4513
    %v4614 = vunpack.c.l.b16 %v4514
    %v4615 = vunpack.c.h.b16 %v4514
    %v4616 = vunpack.c.l.b16 %v4515
    %v4617 = vunpack.c.h.b16 %v4515
    %v4618 = vunpack.c.l.b16 %v4516
    %v4619 = vunpack.c.h.b16 %v4516
    %v4620 = vunpack.c.l.b16 %v4517
    %v4621 = vunpack.c.h.b16 %v4517
    %v4622 = vpack.c.b16 %v4562, %v4558
    %v4623 = vpack.c.b16 %v4563, %v4559
    %v4624 = vpack.c.b16 %v4564, %v4560
    %v4625 = vpack.c.b16 %v4565, %v4561
    %v4626 = vpack.c.b16 %v4570, %v4566
    %v4627 = vpack.c.b16 %v4571, %v4567
    %v4628 = vpack.c.b16 %v4572, %v4568
    %v4629 = vpack.c.b16 %v4573, %v4569
    %v4630 = vpack.c.b16 %v4578, %v4574
    %v4631 = vpack.c.b16 %v4579, %v4575
    %v4632 = vpack.c.b16 %v4580, %v4576
    %v4633 = vpack.c.b16 %v4581, %v4577
    %v4634 = vpack.c.b16 %v4586, %v4582
    %v4635 = vpack.c.b16 %v4587, %v4583
    %v4636 = vpack.c.b16 %v4588, %v4584
    %v4637 = vpack.c.b16 %v4589, %v4585
    %v4638 = vpack.c.b16 %v4594, %v4590
    %v4639 = vpack.c.b16 %v4595, %v4591
    %v4640 = vpack.c.b16 %v4596, %v4592
    %v4641 = vpack.c.b16 %v4597, %v4593
    %v4642 = vpack.c.b16 %v4602, %v4598
    %v4643 = vpack.c.b16 %v4603, %v4599
    %v4644 = vpack.c.b16 %v4604, %v4600
    %v4645 = vpack.c.b16 %v4605, %v4601
    %v4646 = vpack.c.b16 %v4610, %v4606
    %v4647 = vpack.c.b16 %v4611, %v4607
    %v4648 = vpack.c.b16 %v4612, %v4608
    %v4649 = vpack.c.b16 %v4613, %v4609
    %v4650 = vpack.c.b16 %v4618, %v4614
    %v4651 = vpack.c.b16 %v4619, %v4615
    %v4652 = vpack.c.b16 %v4620, %v4616
    %v4653 = vpack.c.b16 %v4621, %v4617
    %4686 = vmatprep.subr.bf16.mxu0 %v4651
    %4687 = vmatpush1.bf16.msra.mxu0 %v4650
    %4688 = vmatprep.subr.bf16.mxu0 %v4647
    %4689 = vmatpush1.bf16.msra.mxu0 %v4646
    %4690 = vmatprep.subr.bf16.mxu0 %v4643
    %4691 = vmatpush1.bf16.msra.mxu0 %v4642
    %4692 = vmatprep.subr.bf16.mxu0 %v4639
    %4693 = vmatpush1.bf16.msra.mxu0 %v4638
    %4694 = vmatprep.subr.bf16.mxu0 %v4635
    %4695 = vmatpush1.bf16.msra.mxu0 %v4634
    %4696 = vmatprep.subr.bf16.mxu0 %v4631
    %4697 = vmatpush1.bf16.msra.mxu0 %v4630
    %4698 = vmatprep.subr.bf16.mxu0 %v4627
    %4699 = vmatpush1.bf16.msra.mxu0 %v4626
    %4700 = vmatprep.subr.bf16.mxu0 %v4623
    %4701 = vmatpush1.bf16.msra.mxu0 %v4622
    %4702 = vmatprep.subr.bf16.mxu0 0
    %4703 = vmatpush2.bf16.msra.mxu0 0
    %4704 = vmatprep.subr.bf16.mxu0 0
    %4705 = vmatpush2.bf16.msra.mxu0 0
    %4706 = vmatprep.subr.bf16.mxu0 0
    %4707 = vmatpush2.bf16.msra.mxu0 0
    %4708 = vmatprep.subr.bf16.mxu0 0
    %4709 = vmatpush2.bf16.msra.mxu0 0
    %4710 = vmatprep.subr.bf16.mxu0 0
    %4711 = vmatpush2.bf16.msra.mxu0 0
    %4712 = vmatprep.subr.bf16.mxu0 0
    %4713 = vmatpush2.bf16.msra.mxu0 0
    %4714 = vmatprep.subr.bf16.mxu0 0
    %4715 = vmatpush2.bf16.msra.mxu0 0
    %4716 = vmatprep.subr.bf16.mxu0 0
    %4717 = vmatpush2.bf16.msra.mxu0 0
    %4718 = vmatprep.mubr.bf16.mxu0 0
    %4719 = vmatmul.mubr.bf16.gmra.mxu0 %v4524
    %v4720 = vpop.f32.mrf.mxu0
    %v4721 = vadd.f32 0.0, %v4720
    %v4722 = vpop.f32.mrf.mxu0
    %v4723 = vadd.f32 0.0, %v4722
    %v4724 = vpop.f32.mrf.mxu0
    %v4725 = vpop.f32.mrf.mxu0
    %4726 = vdwg.mxu0
    %4727 = vmatprep.subr.bf16.mxu0 %v4653
    %4728 = vmatpush1.bf16.msra.mxu0 %v4652
    %4729 = vmatprep.subr.bf16.mxu0 %v4649
    %4730 = vmatpush1.bf16.msra.mxu0 %v4648
    %4731 = vmatprep.subr.bf16.mxu0 %v4645
    %4732 = vmatpush1.bf16.msra.mxu0 %v4644
    %4733 = vmatprep.subr.bf16.mxu0 %v4641
    %4734 = vmatpush1.bf16.msra.mxu0 %v4640
    %4735 = vmatprep.subr.bf16.mxu0 %v4637
    %4736 = vmatpush1.bf16.msra.mxu0 %v4636
    %4737 = vmatprep.subr.bf16.mxu0 %v4633
    %4738 = vmatpush1.bf16.msra.mxu0 %v4632
    %4739 = vmatprep.subr.bf16.mxu0 %v4629
    %4740 = vmatpush1.bf16.msra.mxu0 %v4628
    %4741 = vmatprep.subr.bf16.mxu0 %v4625
    %4742 = vmatpush1.bf16.msra.mxu0 %v4624
    %4743 = vmatprep.subr.bf16.mxu0 0
    %4744 = vmatpush2.bf16.msra.mxu0 0
    %4745 = vmatprep.subr.bf16.mxu0 0
    %4746 = vmatpush2.bf16.msra.mxu0 0
    %4747 = vmatprep.subr.bf16.mxu0 0
    %4748 = vmatpush2.bf16.msra.mxu0 0
    %4749 = vmatprep.subr.bf16.mxu0 0
    %4750 = vmatpush2.bf16.msra.mxu0 0
    %4751 = vmatprep.subr.bf16.mxu0 0
    %4752 = vmatpush2.bf16.msra.mxu0 0
    %4753 = vmatprep.subr.bf16.mxu0 0
    %4754 = vmatpush2.bf16.msra.mxu0 0
    %4755 = vmatprep.subr.bf16.mxu0 0
    %4756 = vmatpush2.bf16.msra.mxu0 0
    %4757 = vmatprep.subr.bf16.mxu0 0
    %4758 = vmatpush2.bf16.msra.mxu0 0
    %4759 = vmatprep.mubr.bf16.mxu0 0
    %4760 = vmatmul.mubr.bf16.gmra.mxu0 %v4524
    %v4761 = vpop.f32.mrf.mxu0
    %v4762 = vadd.f32 0.0, %v4761
    %v4763 = vpop.f32.mrf.mxu0
    %v4764 = vadd.f32 0.0, %v4763
    %v4765 = vpop.f32.mrf.mxu0
    %v4766 = vpop.f32.mrf.mxu0
    %4767 = vdwg.mxu0
    %v4772 = vcombine.low %v4721, %v4723
    %v4773 = vcombine.low %v4762, %v4764
    %v4775 = vunpack.c.l.s4 1966171168
    %v4776 = vunpack.c.0.s8 %v4775
    %v4777 = vlaneseq
    %v4778 = vshrl.u32 %v4777, 7
    %v4779 = vsub.s32 %v4776, %v4778
    %v4780 = vrot.slane %v4772, %v4779
    %v4782 = vunpack.c.l.s4 1966171168
    %v4783 = vunpack.c.0.s8 %v4782
    %v4784 = vlaneseq
    %v4785 = vshrl.u32 %v4784, 7
    %v4786 = vsub.s32 %v4783, %v4785
    %v4787 = vrot.slane %v4773, %v4786
    %v4788 = vcombine.low %v4780, %v4787
    %v4789 = vcombine.high %v4780, %v4787
    %v4791 = vunpack.c.l.s4 1966171168
    %v4792 = vunpack.c.0.s8 %v4791
    %v4793 = vlaneseq
    %v4794 = vshrl.u32 %v4793, 7
    %v4795 = vsub.s32 %v4792, %v4794
    %v4796 = vrot.slane %v4788, %v4795
    %v4798 = vunpack.c.l.s4 1966171168
    %v4799 = vunpack.c.0.s8 %v4798
    %v4800 = vlaneseq
    %v4801 = vshrl.u32 %v4800, 7
    %v4802 = vsub.s32 %v4799, %v4801
    %v4803 = vrot.slane %v4789, %v4802
    %v4806 = vadd.f32 %v4481, %v4796
    %v4807 = vadd.f32 %v4483, %v4803
    %v4808 = vxor.u32 %v4806, 2147483648
    %v4809 = vxor.u32 %v4807, 2147483648
    %v4810 = vmul.f32 %v4808, 1.442695
    %v4811 = vpow.pop %v4810
    %v4812 = vmul.f32 %v4809, 1.442695
    %v4813 = vpow.pop %v4812
    %v4814 = vadd.f32 %v4811, 1.0
    %v4815 = vadd.f32 %v4813, 1.0
    %v4816 = vrcp.pop %v4814
    %v4817 = vmul.f32 1.0, %v4816
    %v4818 = vrcp.pop %v4815
    %v4819 = vmul.f32 1.0, %v4818
    %v4822 = vrot.slane %v4806, 3
    %v4823 = vrot.slane %v4807, 3
    %v4826 = vtanh.pop %v4822
    %v4827 = vtanh.pop %v4823
    %v4830 = vrot.slane %v4817, 1
    %v4831 = vrot.slane %v4819, 1
    %v4834 = vmul.f32 %v4830, %v3800
    %v4835 = vmul.f32 %v4831, %v3801
    %v4836 = vmul.f32 %v4817, %v4826
    %v4837 = vmul.f32 %v4819, %v4827
    %v4838 = vadd.f32 %v4834, %v4836
    %v4839 = vadd.f32 %v4835, %v4837
    %v4840 = vtanh.pop %v4838
    %v4841 = vtanh.pop %v4839
    %v4842 = vrot.slane %v4817, 2
    %v4843 = vrot.slane %v4819, 2
    %v4846 = vmul.f32 %v4842, %v4840
    %v4847 = vmul.f32 %v4843, %v4841
    %v4850 = vcombine.low %v4846, %v4847
    %v4852 = vunpack.c.l.s4 1966171168
    %v4853 = vunpack.c.0.s8 %v4852
    %v4854 = vlaneseq
    %v4855 = vshrl.u32 %v4854, 7
    %v4856 = vsub.s32 %v4853, %v4855
    %v4857 = vrot.slane %v4850, %v4856
    %v4859 = vunpack.c.l.s4 1966171168
    %v4860 = vunpack.c.0.s8 %v4859
    %v4861 = vlaneseq
    %v4862 = vshrl.u32 %v4861, 7
    %v4863 = vsub.s32 %v4860, %v4862
    %v4864 = vrot.slane %v4857, %v4863
    %v4866 = vpack.c.bf16 %v4864, %v4864
    %v4867 = vld [vmem:[#allocation6] sm:$0xff]
    %v4868 = vld [vmem:[#allocation6 + $0x8] sm:$0xff]
    %v4869 = vld [vmem:[#allocation6 + $0x10] sm:$0xff]
    %v4870 = vld [vmem:[#allocation6 + $0x18] sm:$0xff]
    %v4871 = vld [vmem:[#allocation6 + $0x20] sm:$0xff]
    %v4872 = vld [vmem:[#allocation6 + $0x28] sm:$0xff]
    %v4873 = vld [vmem:[#allocation6 + $0x30] sm:$0xff]
    %v4874 = vld [vmem:[#allocation6 + $0x38] sm:$0xff]
    %v4875 = vld [vmem:[#allocation6 + $0x40] sm:$0xff]
    %v4876 = vld [vmem:[#allocation6 + $0x48] sm:$0xff]
    %v4877 = vld [vmem:[#allocation6 + $0x50] sm:$0xff]
    %v4878 = vld [vmem:[#allocation6 + $0x58] sm:$0xff]
    %v4879 = vld [vmem:[#allocation6 + $0x60] sm:$0xff]
    %v4880 = vld [vmem:[#allocation6 + $0x68] sm:$0xff]
    %v4881 = vld [vmem:[#allocation6 + $0x70] sm:$0xff]
    %v4882 = vld [vmem:[#allocation6 + $0x78] sm:$0xff]
    %v4883 = vld [vmem:[#allocation6 + $0x80] sm:$0xff]
    %v4884 = vld [vmem:[#allocation6 + $0x88] sm:$0xff]
    %v4885 = vld [vmem:[#allocation6 + $0x90] sm:$0xff]
    %v4886 = vld [vmem:[#allocation6 + $0x98] sm:$0xff]
    %v4887 = vld [vmem:[#allocation6 + $0xa0] sm:$0xff]
    %v4888 = vld [vmem:[#allocation6 + $0xa8] sm:$0xff]
    %v4889 = vld [vmem:[#allocation6 + $0xb0] sm:$0xff]
    %v4890 = vld [vmem:[#allocation6 + $0xb8] sm:$0xff]
    %v4891 = vld [vmem:[#allocation6 + $0xc0] sm:$0xff]
    %v4892 = vld [vmem:[#allocation6 + $0xc8] sm:$0xff]
    %v4893 = vld [vmem:[#allocation6 + $0xd0] sm:$0xff]
    %v4894 = vld [vmem:[#allocation6 + $0xd8] sm:$0xff]
    %v4895 = vld [vmem:[#allocation6 + $0xe0] sm:$0xff]
    %v4896 = vld [vmem:[#allocation6 + $0xe8] sm:$0xff]
    %v4897 = vld [vmem:[#allocation6 + $0xf0] sm:$0xff]
    %v4898 = vld [vmem:[#allocation6 + $0xf8] sm:$0xff]
    %v4899 = vld [vmem:[#allocation6 + $0x100] sm:$0xff]
    %v4900 = vld [vmem:[#allocation6 + $0x108] sm:$0xff]
    %v4901 = vld [vmem:[#allocation6 + $0x110] sm:$0xff]
    %v4902 = vld [vmem:[#allocation6 + $0x118] sm:$0xff]
    %v4903 = vld [vmem:[#allocation6 + $0x120] sm:$0xff]
    %v4904 = vld [vmem:[#allocation6 + $0x128] sm:$0xff]
    %v4905 = vld [vmem:[#allocation6 + $0x130] sm:$0xff]
    %v4906 = vld [vmem:[#allocation6 + $0x138] sm:$0xff]
    %v4907 = vld [vmem:[#allocation6 + $0x140] sm:$0xff]
    %v4908 = vld [vmem:[#allocation6 + $0x148] sm:$0xff]
    %v4909 = vld [vmem:[#allocation6 + $0x150] sm:$0xff]
    %v4910 = vld [vmem:[#allocation6 + $0x158] sm:$0xff]
    %v4911 = vld [vmem:[#allocation6 + $0x160] sm:$0xff]
    %v4912 = vld [vmem:[#allocation6 + $0x168] sm:$0xff]
    %v4913 = vld [vmem:[#allocation6 + $0x170] sm:$0xff]
    %v4914 = vld [vmem:[#allocation6 + $0x178] sm:$0xff]
    %v4915 = vld [vmem:[#allocation6 + $0x180] sm:$0xff]
    %v4916 = vld [vmem:[#allocation6 + $0x188] sm:$0xff]
    %v4917 = vld [vmem:[#allocation6 + $0x190] sm:$0xff]
    %v4918 = vld [vmem:[#allocation6 + $0x198] sm:$0xff]
    %v4919 = vld [vmem:[#allocation6 + $0x1a0] sm:$0xff]
    %v4920 = vld [vmem:[#allocation6 + $0x1a8] sm:$0xff]
    %v4921 = vld [vmem:[#allocation6 + $0x1b0] sm:$0xff]
    %v4922 = vld [vmem:[#allocation6 + $0x1b8] sm:$0xff]
    %v4923 = vld [vmem:[#allocation6 + $0x1c0] sm:$0xff]
    %v4924 = vld [vmem:[#allocation6 + $0x1c8] sm:$0xff]
    %v4925 = vld [vmem:[#allocation6 + $0x1d0] sm:$0xff]
    %v4926 = vld [vmem:[#allocation6 + $0x1d8] sm:$0xff]
    %v4927 = vld [vmem:[#allocation6 + $0x1e0] sm:$0xff]
    %v4928 = vld [vmem:[#allocation6 + $0x1e8] sm:$0xff]
    %v4929 = vld [vmem:[#allocation6 + $0x1f0] sm:$0xff]
    %v4930 = vld [vmem:[#allocation6 + $0x1f8] sm:$0xff]
    %v4931 = vld [vmem:[%s5] sm:$0xf]
    %v4933 = vlaneseq
    %v4934 = vshrl.u32 %v4933, 7
    %v4935 = vsub.s32 0, %v4934
    %v4936 = vrot.slane %v4931, %v4935
    %v4937 = vlaneseq
    %v4938 = vshrl.u32 %v4937, 7
    %v4939 = vsub.s32 1, %v4938
    %v4940 = vrot.slane %v4931, %v4939
    %v4941 = vlaneseq
    %v4942 = vshrl.u32 %v4941, 7
    %v4943 = vsub.s32 2, %v4942
    %v4944 = vrot.slane %v4931, %v4943
    %v4945 = vlaneseq
    %v4946 = vshrl.u32 %v4945, 7
    %v4947 = vsub.s32 3, %v4946
    %v4948 = vrot.slane %v4931, %v4947
    %v5017 = vunpack.c.l.b16 %v4867
    %v5018 = vunpack.c.h.b16 %v4867
    %v5019 = vunpack.c.l.b16 %v4868
    %v5020 = vunpack.c.h.b16 %v4868
    %v5021 = vunpack.c.l.b16 %v4869
    %v5022 = vunpack.c.h.b16 %v4869
    %v5023 = vunpack.c.l.b16 %v4870
    %v5024 = vunpack.c.h.b16 %v4870
    %v5025 = vunpack.c.l.b16 %v4871
    %v5026 = vunpack.c.h.b16 %v4871
    %v5027 = vunpack.c.l.b16 %v4872
    %v5028 = vunpack.c.h.b16 %v4872
    %v5029 = vunpack.c.l.b16 %v4873
    %v5030 = vunpack.c.h.b16 %v4873
    %v5031 = vunpack.c.l.b16 %v4874
    %v5032 = vunpack.c.h.b16 %v4874
    %v5033 = vunpack.c.l.b16 %v4875
    %v5034 = vunpack.c.h.b16 %v4875
    %v5035 = vunpack.c.l.b16 %v4876
    %v5036 = vunpack.c.h.b16 %v4876
    %v5037 = vunpack.c.l.b16 %v4877
    %v5038 = vunpack.c.h.b16 %v4877
    %v5039 = vunpack.c.l.b16 %v4878
    %v5040 = vunpack.c.h.b16 %v4878
    %v5041 = vunpack.c.l.b16 %v4879
    %v5042 = vunpack.c.h.b16 %v4879
    %v5043 = vunpack.c.l.b16 %v4880
    %v5044 = vunpack.c.h.b16 %v4880
    %v5045 = vunpack.c.l.b16 %v4881
    %v5046 = vunpack.c.h.b16 %v4881
    %v5047 = vunpack.c.l.b16 %v4882
    %v5048 = vunpack.c.h.b16 %v4882
    %v5049 = vunpack.c.l.b16 %v4883
    %v5050 = vunpack.c.h.b16 %v4883
    %v5051 = vunpack.c.l.b16 %v4884
    %v5052 = vunpack.c.h.b16 %v4884
    %v5053 = vunpack.c.l.b16 %v4885
    %v5054 = vunpack.c.h.b16 %v4885
    %v5055 = vunpack.c.l.b16 %v4886
    %v5056 = vunpack.c.h.b16 %v4886
    %v5057 = vunpack.c.l.b16 %v4887
    %v5058 = vunpack.c.h.b16 %v4887
    %v5059 = vunpack.c.l.b16 %v4888
    %v5060 = vunpack.c.h.b16 %v4888
    %v5061 = vunpack.c.l.b16 %v4889
    %v5062 = vunpack.c.h.b16 %v4889
    %v5063 = vunpack.c.l.b16 %v4890
    %v5064 = vunpack.c.h.b16 %v4890
    %v5065 = vunpack.c.l.b16 %v4891
    %v5066 = vunpack.c.h.b16 %v4891
    %v5067 = vunpack.c.l.b16 %v4892
    %v5068 = vunpack.c.h.b16 %v4892
    %v5069 = vunpack.c.l.b16 %v4893
    %v5070 = vunpack.c.h.b16 %v4893
    %v5071 = vunpack.c.l.b16 %v4894
    %v5072 = vunpack.c.h.b16 %v4894
    %v5073 = vunpack.c.l.b16 %v4895
    %v5074 = vunpack.c.h.b16 %v4895
    %v5075 = vunpack.c.l.b16 %v4896
    %v5076 = vunpack.c.h.b16 %v4896
    %v5077 = vunpack.c.l.b16 %v4897
    %v5078 = vunpack.c.h.b16 %v4897
    %v5079 = vunpack.c.l.b16 %v4898
    %v5080 = vunpack.c.h.b16 %v4898
    %v5081 = vunpack.c.l.b16 %v4899
    %v5082 = vunpack.c.h.b16 %v4899
    %v5083 = vunpack.c.l.b16 %v4900
    %v5084 = vunpack.c.h.b16 %v4900
    %v5085 = vunpack.c.l.b16 %v4901
    %v5086 = vunpack.c.h.b16 %v4901
    %v5087 = vunpack.c.l.b16 %v4902
    %v5088 = vunpack.c.h.b16 %v4902
    %v5089 = vunpack.c.l.b16 %v4903
    %v5090 = vunpack.c.h.b16 %v4903
    %v5091 = vunpack.c.l.b16 %v4904
    %v5092 = vunpack.c.h.b16 %v4904
    %v5093 = vunpack.c.l.b16 %v4905
    %v5094 = vunpack.c.h.b16 %v4905
    %v5095 = vunpack.c.l.b16 %v4906
    %v5096 = vunpack.c.h.b16 %v4906
    %v5097 = vunpack.c.l.b16 %v4907
    %v5098 = vunpack.c.h.b16 %v4907
    %v5099 = vunpack.c.l.b16 %v4908
    %v5100 = vunpack.c.h.b16 %v4908
    %v5101 = vunpack.c.l.b16 %v4909
    %v5102 = vunpack.c.h.b16 %v4909
    %v5103 = vunpack.c.l.b16 %v4910
    %v5104 = vunpack.c.h.b16 %v4910
    %v5105 = vunpack.c.l.b16 %v4911
    %v5106 = vunpack.c.h.b16 %v4911
    %v5107 = vunpack.c.l.b16 %v4912
    %v5108 = vunpack.c.h.b16 %v4912
    %v5109 = vunpack.c.l.b16 %v4913
    %v5110 = vunpack.c.h.b16 %v4913
    %v5111 = vunpack.c.l.b16 %v4914
    %v5112 = vunpack.c.h.b16 %v4914
    %v5113 = vunpack.c.l.b16 %v4915
    %v5114 = vunpack.c.h.b16 %v4915
    %v5115 = vunpack.c.l.b16 %v4916
    %v5116 = vunpack.c.h.b16 %v4916
    %v5117 = vunpack.c.l.b16 %v4917
    %v5118 = vunpack.c.h.b16 %v4917
    %v5119 = vunpack.c.l.b16 %v4918
    %v5120 = vunpack.c.h.b16 %v4918
    %v5121 = vunpack.c.l.b16 %v4919
    %v5122 = vunpack.c.h.b16 %v4919
    %v5123 = vunpack.c.l.b16 %v4920
    %v5124 = vunpack.c.h.b16 %v4920
    %v5125 = vunpack.c.l.b16 %v4921
    %v5126 = vunpack.c.h.b16 %v4921
    %v5127 = vunpack.c.l.b16 %v4922
    %v5128 = vunpack.c.h.b16 %v4922
    %v5129 = vunpack.c.l.b16 %v4923
    %v5130 = vunpack.c.h.b16 %v4923
    %v5131 = vunpack.c.l.b16 %v4924
    %v5132 = vunpack.c.h.b16 %v4924
    %v5133 = vunpack.c.l.b16 %v4925
    %v5134 = vunpack.c.h.b16 %v4925
    %v5135 = vunpack.c.l.b16 %v4926
    %v5136 = vunpack.c.h.b16 %v4926
    %v5137 = vunpack.c.l.b16 %v4927
    %v5138 = vunpack.c.h.b16 %v4927
    %v5139 = vunpack.c.l.b16 %v4928
    %v5140 = vunpack.c.h.b16 %v4928
    %v5141 = vunpack.c.l.b16 %v4929
    %v5142 = vunpack.c.h.b16 %v4929
    %v5143 = vunpack.c.l.b16 %v4930
    %v5144 = vunpack.c.h.b16 %v4930
    %v5145 = vpack.c.b16 %v5021, %v5017
    %v5146 = vpack.c.b16 %v5022, %v5018
    %v5147 = vpack.c.b16 %v5023, %v5019
    %v5148 = vpack.c.b16 %v5024, %v5020
    %v5149 = vpack.c.b16 %v5029, %v5025
    %v5150 = vpack.c.b16 %v5030, %v5026
    %v5151 = vpack.c.b16 %v5031, %v5027
    %v5152 = vpack.c.b16 %v5032, %v5028
    %v5153 = vpack.c.b16 %v5037, %v5033
    %v5154 = vpack.c.b16 %v5038, %v5034
    %v5155 = vpack.c.b16 %v5039, %v5035
    %v5156 = vpack.c.b16 %v5040, %v5036
    %v5157 = vpack.c.b16 %v5045, %v5041
    %v5158 = vpack.c.b16 %v5046, %v5042
    %v5159 = vpack.c.b16 %v5047, %v5043
    %v5160 = vpack.c.b16 %v5048, %v5044
    %v5161 = vpack.c.b16 %v5053, %v5049
    %v5162 = vpack.c.b16 %v5054, %v5050
    %v5163 = vpack.c.b16 %v5055, %v5051
    %v5164 = vpack.c.b16 %v5056, %v5052
    %v5165 = vpack.c.b16 %v5061, %v5057
    %v5166 = vpack.c.b16 %v5062, %v5058
    %v5167 = vpack.c.b16 %v5063, %v5059
    %v5168 = vpack.c.b16 %v5064, %v5060
    %v5169 = vpack.c.b16 %v5069, %v5065
    %v5170 = vpack.c.b16 %v5070, %v5066
    %v5171 = vpack.c.b16 %v5071, %v5067
    %v5172 = vpack.c.b16 %v5072, %v5068
    %v5173 = vpack.c.b16 %v5077, %v5073
    %v5174 = vpack.c.b16 %v5078, %v5074
    %v5175 = vpack.c.b16 %v5079, %v5075
    %v5176 = vpack.c.b16 %v5080, %v5076
    %v5177 = vpack.c.b16 %v5085, %v5081
    %v5178 = vpack.c.b16 %v5086, %v5082
    %v5179 = vpack.c.b16 %v5087, %v5083
    %v5180 = vpack.c.b16 %v5088, %v5084
    %v5181 = vpack.c.b16 %v5093, %v5089
    %v5182 = vpack.c.b16 %v5094, %v5090
    %v5183 = vpack.c.b16 %v5095, %v5091
    %v5184 = vpack.c.b16 %v5096, %v5092
    %v5185 = vpack.c.b16 %v5101, %v5097
    %v5186 = vpack.c.b16 %v5102, %v5098
    %v5187 = vpack.c.b16 %v5103, %v5099
    %v5188 = vpack.c.b16 %v5104, %v5100
    %v5189 = vpack.c.b16 %v5109, %v5105
    %v5190 = vpack.c.b16 %v5110, %v5106
    %v5191 = vpack.c.b16 %v5111, %v5107
    %v5192 = vpack.c.b16 %v5112, %v5108
    %v5193 = vpack.c.b16 %v5117, %v5113
    %v5194 = vpack.c.b16 %v5118, %v5114
    %v5195 = vpack.c.b16 %v5119, %v5115
    %v5196 = vpack.c.b16 %v5120, %v5116
    %v5197 = vpack.c.b16 %v5125, %v5121
    %v5198 = vpack.c.b16 %v5126, %v5122
    %v5199 = vpack.c.b16 %v5127, %v5123
    %v5200 = vpack.c.b16 %v5128, %v5124
    %v5201 = vpack.c.b16 %v5133, %v5129
    %v5202 = vpack.c.b16 %v5134, %v5130
    %v5203 = vpack.c.b16 %v5135, %v5131
    %v5204 = vpack.c.b16 %v5136, %v5132
    %v5205 = vpack.c.b16 %v5141, %v5137
    %v5206 = vpack.c.b16 %v5142, %v5138
    %v5207 = vpack.c.b16 %v5143, %v5139
    %v5208 = vpack.c.b16 %v5144, %v5140
    %5273 = vmatprep.subr.bf16.mxu0 %v5174
    %5274 = vmatpush1.bf16.msra.mxu0 %v5173
    %5275 = vmatprep.subr.bf16.mxu0 %v5170
    %5276 = vmatpush1.bf16.msra.mxu0 %v5169
    %5277 = vmatprep.subr.bf16.mxu0 %v5166
    %5278 = vmatpush1.bf16.msra.mxu0 %v5165
    %5279 = vmatprep.subr.bf16.mxu0 %v5162
    %5280 = vmatpush1.bf16.msra.mxu0 %v5161
    %5281 = vmatprep.subr.bf16.mxu0 %v5158
    %5282 = vmatpush1.bf16.msra.mxu0 %v5157
    %5283 = vmatprep.subr.bf16.mxu0 %v5154
    %5284 = vmatpush1.bf16.msra.mxu0 %v5153
    %5285 = vmatprep.subr.bf16.mxu0 %v5150
    %5286 = vmatpush1.bf16.msra.mxu0 %v5149
    %5287 = vmatprep.subr.bf16.mxu0 %v5146
    %5288 = vmatpush1.bf16.msra.mxu0 %v5145
    %5289 = vmatprep.subr.bf16.mxu0 %v5206
    %5290 = vmatpush2.bf16.msra.mxu0 %v5205
    %5291 = vmatprep.subr.bf16.mxu0 %v5202
    %5292 = vmatpush2.bf16.msra.mxu0 %v5201
    %5293 = vmatprep.subr.bf16.mxu0 %v5198
    %5294 = vmatpush2.bf16.msra.mxu0 %v5197
    %5295 = vmatprep.subr.bf16.mxu0 %v5194
    %5296 = vmatpush2.bf16.msra.mxu0 %v5193
    %5297 = vmatprep.subr.bf16.mxu0 %v5190
    %5298 = vmatpush2.bf16.msra.mxu0 %v5189
    %5299 = vmatprep.subr.bf16.mxu0 %v5186
    %5300 = vmatpush2.bf16.msra.mxu0 %v5185
    %5301 = vmatprep.subr.bf16.mxu0 %v5182
    %5302 = vmatpush2.bf16.msra.mxu0 %v5181
    %5303 = vmatprep.subr.bf16.mxu0 %v5178
    %5304 = vmatpush2.bf16.msra.mxu0 %v5177
    %5305 = vmatprep.mubr.bf16.mxu0 %v4341
    %5306 = vmatmul.mubr.bf16.gmra.mxu0 %v4866
    %v5307 = vpop.f32.mrf.mxu0
    %v5308 = vadd.f32 %v4936, %v5307
    %v5309 = vpop.f32.mrf.mxu0
    %v5310 = vadd.f32 %v4940, %v5309
    %v5311 = vpop.f32.mrf.mxu0
    %v5312 = vpop.f32.mrf.mxu0
    %5313 = vdwg.mxu0
    %5314 = vmatprep.subr.bf16.mxu0 %v5176
    %5315 = vmatpush1.bf16.msra.mxu0 %v5175
    %5316 = vmatprep.subr.bf16.mxu0 %v5172
    %5317 = vmatpush1.bf16.msra.mxu0 %v5171
    %5318 = vmatprep.subr.bf16.mxu0 %v5168
    %5319 = vmatpush1.bf16.msra.mxu0 %v5167
    %5320 = vmatprep.subr.bf16.mxu0 %v5164
    %5321 = vmatpush1.bf16.msra.mxu0 %v5163
    %5322 = vmatprep.subr.bf16.mxu0 %v5160
    %5323 = vmatpush1.bf16.msra.mxu0 %v5159
    %5324 = vmatprep.subr.bf16.mxu0 %v5156
    %5325 = vmatpush1.bf16.msra.mxu0 %v5155
    %5326 = vmatprep.subr.bf16.mxu0 %v5152
    %5327 = vmatpush1.bf16.msra.mxu0 %v5151
    %5328 = vmatprep.subr.bf16.mxu0 %v5148
    %5329 = vmatpush1.bf16.msra.mxu0 %v5147
    %5330 = vmatprep.subr.bf16.mxu0 %v5208
    %5331 = vmatpush2.bf16.msra.mxu0 %v5207
    %5332 = vmatprep.subr.bf16.mxu0 %v5204
    %5333 = vmatpush2.bf16.msra.mxu0 %v5203
    %5334 = vmatprep.subr.bf16.mxu0 %v5200
    %5335 = vmatpush2.bf16.msra.mxu0 %v5199
    %5336 = vmatprep.subr.bf16.mxu0 %v5196
    %5337 = vmatpush2.bf16.msra.mxu0 %v5195
    %5338 = vmatprep.subr.bf16.mxu0 %v5192
    %5339 = vmatpush2.bf16.msra.mxu0 %v5191
    %5340 = vmatprep.subr.bf16.mxu0 %v5188
    %5341 = vmatpush2.bf16.msra.mxu0 %v5187
    %5342 = vmatprep.subr.bf16.mxu0 %v5184
    %5343 = vmatpush2.bf16.msra.mxu0 %v5183
    %5344 = vmatprep.subr.bf16.mxu0 %v5180
    %5345 = vmatpush2.bf16.msra.mxu0 %v5179
    %5346 = vmatprep.mubr.bf16.mxu0 %v4341
    %5347 = vmatmul.mubr.bf16.gmra.mxu0 %v4866
    %v5348 = vpop.f32.mrf.mxu0
    %v5349 = vadd.f32 %v4944, %v5348
    %v5350 = vpop.f32.mrf.mxu0
    %v5351 = vadd.f32 %v4948, %v5350
    %v5352 = vpop.f32.mrf.mxu0
    %v5353 = vpop.f32.mrf.mxu0
    %5354 = vdwg.mxu0
    %v5355 = vxor.u32 %v5308, 2147483648
    %v5356 = vxor.u32 %v5310, 2147483648
    %v5357 = vxor.u32 %v5349, 2147483648
    %v5358 = vmul.f32 %v5355, 1.442695
    %v5359 = vpow.pop %v5358
    %v5360 = vmul.f32 %v5356, 1.442695
    %v5361 = vpow.pop %v5360
    %v5362 = vmul.f32 %v5357, 1.442695
    %v5363 = vpow.pop %v5362
    %v5364 = vadd.f32 %v5359, 1.0
    %v5365 = vadd.f32 %v5361, 1.0
    %v5366 = vadd.f32 %v5363, 1.0
    %v5367 = vrcp.pop %v5364
    %v5368 = vmul.f32 1.0, %v5367
    %v5369 = vrcp.pop %v5365
    %v5370 = vmul.f32 1.0, %v5369
    %v5371 = vrcp.pop %v5366
    %v5372 = vmul.f32 1.0, %v5371
    %v5373 = vtanh.pop %v5351
    %v5374 = vmul.f32 %v5370, %v4338
    %v5375 = vmul.f32 %v5368, %v5373
    %v5376 = vadd.f32 %v5374, %v5375
    %v5377 = vtanh.pop %v5376
    %v5378 = vmul.f32 %v5372, %v5377
    %v5379 = vpack.c.bf16 %v5378, %v5378
    %v5380 = vld [vmem:[%s6] sm:$0xf]
    %v5381 = vld [vmem:[%s6 + $0x4] sm:$0xf]
    %v5382 = vld [vmem:[%s6 + $0x8] sm:$0xf]
    %v5383 = vld [vmem:[%s6 + $0xc] sm:$0xf]
    %v5384 = vld [vmem:[%s6 + $0x10] sm:$0xf]
    %v5385 = vld [vmem:[%s6 + $0x14] sm:$0xf]
    %v5386 = vld [vmem:[%s6 + $0x18] sm:$0xf]
    %v5387 = vld [vmem:[%s6 + $0x1c] sm:$0xf]
    %v5388 = vld [vmem:[%s6 + $0x20] sm:$0xf]
    %v5389 = vld [vmem:[%s6 + $0x24] sm:$0xf]
    %v5390 = vld [vmem:[%s6 + $0x28] sm:$0xf]
    %v5391 = vld [vmem:[%s6 + $0x2c] sm:$0xf]
    %v5392 = vld [vmem:[%s6 + $0x30] sm:$0xf]
    %v5393 = vld [vmem:[%s6 + $0x34] sm:$0xf]
    %v5394 = vld [vmem:[%s6 + $0x38] sm:$0xf]
    %v5395 = vld [vmem:[%s6 + $0x3c] sm:$0xf]
    %v5396 = vld [vmem:[%s7] sm:$0x1]
    %v5398 = vlaneseq
    %v5399 = vshrl.u32 %v5398, 7
    %v5400 = vsub.s32 0, %v5399
    %v5401 = vrot.slane %v5396, %v5400
    %v5419 = vunpack.c.l.b16 %v5380
    %v5420 = vunpack.c.l.b16 %v5381
    %v5421 = vunpack.c.l.b16 %v5382
    %v5422 = vunpack.c.l.b16 %v5383
    %v5423 = vunpack.c.l.b16 %v5384
    %v5424 = vunpack.c.l.b16 %v5385
    %v5425 = vunpack.c.l.b16 %v5386
    %v5426 = vunpack.c.l.b16 %v5387
    %v5427 = vunpack.c.l.b16 %v5388
    %v5428 = vunpack.c.l.b16 %v5389
    %v5429 = vunpack.c.l.b16 %v5390
    %v5430 = vunpack.c.l.b16 %v5391
    %v5431 = vunpack.c.l.b16 %v5392
    %v5432 = vunpack.c.l.b16 %v5393
    %v5433 = vunpack.c.l.b16 %v5394
    %v5434 = vunpack.c.l.b16 %v5395
    %v5435 = vpack.c.b16 %v5420, %v5419
    %v5436 = vpack.c.b16 %v5422, %v5421
    %v5437 = vpack.c.b16 %v5424, %v5423
    %v5438 = vpack.c.b16 %v5426, %v5425
    %v5439 = vpack.c.b16 %v5428, %v5427
    %v5440 = vpack.c.b16 %v5430, %v5429
    %v5441 = vpack.c.b16 %v5432, %v5431
    %v5442 = vpack.c.b16 %v5434, %v5433
    %5451 = vmatprep.subr.bf16.mxu0 0
    %5452 = vmatpush1.bf16.msra.mxu0 %v5442
    %5453 = vmatprep.subr.bf16.mxu0 0
    %5454 = vmatpush1.bf16.msra.mxu0 %v5441
    %5455 = vmatprep.subr.bf16.mxu0 0
    %5456 = vmatpush1.bf16.msra.mxu0 %v5440
    %5457 = vmatprep.subr.bf16.mxu0 0
    %5458 = vmatpush1.bf16.msra.mxu0 %v5439
    %5459 = vmatprep.subr.bf16.mxu0 0
    %5460 = vmatpush1.bf16.msra.mxu0 %v5438
    %5461 = vmatprep.subr.bf16.mxu0 0
    %5462 = vmatpush1.bf16.msra.mxu0 %v5437
    %5463 = vmatprep.subr.bf16.mxu0 0
    %5464 = vmatpush1.bf16.msra.mxu0 %v5436
    %5465 = vmatprep.subr.bf16.mxu0 0
    %5466 = vmatpush1.bf16.msra.mxu0 %v5435
    %5467 = vmatprep.subr.bf16.mxu0 0
    %5468 = vmatpush2.bf16.msra.mxu0 0
    %5469 = vmatprep.subr.bf16.mxu0 0
    %5470 = vmatpush2.bf16.msra.mxu0 0
    %5471 = vmatprep.subr.bf16.mxu0 0
    %5472 = vmatpush2.bf16.msra.mxu0 0
    %5473 = vmatprep.subr.bf16.mxu0 0
    %5474 = vmatpush2.bf16.msra.mxu0 0
    %5475 = vmatprep.subr.bf16.mxu0 0
    %5476 = vmatpush2.bf16.msra.mxu0 0
    %5477 = vmatprep.subr.bf16.mxu0 0
    %5478 = vmatpush2.bf16.msra.mxu0 0
    %5479 = vmatprep.subr.bf16.mxu0 0
    %5480 = vmatpush2.bf16.msra.mxu0 0
    %5481 = vmatprep.subr.bf16.mxu0 0
    %5482 = vmatpush2.bf16.msra.mxu0 0
    %5483 = vmatprep.mubr.bf16.mxu0 0
    %5484 = vmatmul.mubr.bf16.gmra.mxu0 %v5379
    %v5485 = vpop.f32.mrf.mxu0
    %v5486 = vadd.f32 %v5401, %v5485
    %v5487 = vpop.f32.mrf.mxu0
    %v5488 = vpop.f32.mrf.mxu0
    %v5489 = vpop.f32.mrf.mxu0
    %5490 = vdwg.mxu0
    %v5493 = vunpack.c.l.s4 1966171168
    %v5494 = vunpack.c.0.s8 %v5493
    %v5495 = vlaneseq
    %v5496 = vshrl.u32 %v5495, 7
    %v5497 = vsub.s32 %v5494, %v5496
    %v5498 = vrot.slane %v5486, %v5497
    %v5499 = vcombine.high %v5498, %v5498
    %v5501 = vunpack.c.l.s4 1966171168
    %v5502 = vunpack.c.0.s8 %v5501
    %v5503 = vlaneseq
    %v5504 = vshrl.u32 %v5503, 7
    %v5505 = vsub.s32 %v5502, %v5504
    %v5506 = vrot.slane %v5498, %v5505
    %v5508 = vunpack.c.l.s4 1966171168
    %v5509 = vunpack.c.0.s8 %v5508
    %v5510 = vlaneseq
    %v5511 = vshrl.u32 %v5510, 7
    %v5512 = vsub.s32 %v5509, %v5511
    %v5513 = vrot.slane %v5499, %v5512
    %5516 = vst.msk [vmem:[#allocation8 + $0x4] sm:$0x1] %vm1362, %v5506
    %5517 = vst.msk [vmem:[#allocation8 + $0xc] sm:$0x1] %vm1362, %v5513
    %s5518 = scalar_lea.vmem [#allocation2], 5
    %v5519 = vld [vmem:[%s5518] ss:$8 sm:$0xf]
    %s5520 = scalar_lea.vmem [#allocation2], 37
    %v5521 = vld [vmem:[%s5520] ss:$8 sm:$0xf]
    %v5522 = vpack.c.bf16 %v4846, %v4846
    %v5523 = vpack.c.bf16 %v4847, %v4847
    %v5524 = vld [vmem:[#allocation3] sm:$0xff]
    %v5525 = vld [vmem:[#allocation3 + $0x8] sm:$0xff]
    %v5526 = vld [vmem:[#allocation3 + $0x10] sm:$0xff]
    %v5527 = vld [vmem:[#allocation3 + $0x18] sm:$0xff]
    %v5528 = vld [vmem:[#allocation3 + $0x20] sm:$0xff]
    %v5529 = vld [vmem:[#allocation3 + $0x28] sm:$0xff]
    %v5530 = vld [vmem:[#allocation3 + $0x30] sm:$0xff]
    %v5531 = vld [vmem:[#allocation3 + $0x38] sm:$0xff]
    %v5532 = vld [vmem:[#allocation3 + $0x40] sm:$0xff]
    %v5533 = vld [vmem:[#allocation3 + $0x48] sm:$0xff]
    %v5534 = vld [vmem:[#allocation3 + $0x50] sm:$0xff]
    %v5535 = vld [vmem:[#allocation3 + $0x58] sm:$0xff]
    %v5536 = vld [vmem:[#allocation3 + $0x60] sm:$0xff]
    %v5537 = vld [vmem:[#allocation3 + $0x68] sm:$0xff]
    %v5538 = vld [vmem:[#allocation3 + $0x70] sm:$0xff]
    %v5539 = vld [vmem:[#allocation3 + $0x78] sm:$0xff]
    %v5540 = vld [vmem:[#allocation3 + $0x80] sm:$0xff]
    %v5541 = vld [vmem:[#allocation3 + $0x88] sm:$0xff]
    %v5542 = vld [vmem:[#allocation3 + $0x90] sm:$0xff]
    %v5543 = vld [vmem:[#allocation3 + $0x98] sm:$0xff]
    %v5544 = vld [vmem:[#allocation3 + $0xa0] sm:$0xff]
    %v5545 = vld [vmem:[#allocation3 + $0xa8] sm:$0xff]
    %v5546 = vld [vmem:[#allocation3 + $0xb0] sm:$0xff]
    %v5547 = vld [vmem:[#allocation3 + $0xb8] sm:$0xff]
    %v5548 = vld [vmem:[#allocation3 + $0xc0] sm:$0xff]
    %v5549 = vld [vmem:[#allocation3 + $0xc8] sm:$0xff]
    %v5550 = vld [vmem:[#allocation3 + $0xd0] sm:$0xff]
    %v5551 = vld [vmem:[#allocation3 + $0xd8] sm:$0xff]
    %v5552 = vld [vmem:[#allocation3 + $0xe0] sm:$0xff]
    %v5553 = vld [vmem:[#allocation3 + $0xe8] sm:$0xff]
    %v5554 = vld [vmem:[#allocation3 + $0xf0] sm:$0xff]
    %v5555 = vld [vmem:[#allocation3 + $0xf8] sm:$0xff]
    %v5558 = vunpack.c.l.b16 %v5522
    %v5559 = vunpack.c.l.b16 %v5523
    %v5560 = vrot.slane %v5559, 7
    %v5561 = vsel %vm1408, %v5560, %v5558
    %v5562 = vpack.c.b16 %v5561, %v5561
    %v5596 = vunpack.c.l.b16 %v5524
    %v5597 = vunpack.c.h.b16 %v5524
    %v5598 = vunpack.c.l.b16 %v5525
    %v5599 = vunpack.c.h.b16 %v5525
    %v5600 = vunpack.c.l.b16 %v5526
    %v5601 = vunpack.c.h.b16 %v5526
    %v5602 = vunpack.c.l.b16 %v5527
    %v5603 = vunpack.c.h.b16 %v5527
    %v5604 = vunpack.c.l.b16 %v5528
    %v5605 = vunpack.c.h.b16 %v5528
    %v5606 = vunpack.c.l.b16 %v5529
    %v5607 = vunpack.c.h.b16 %v5529
    %v5608 = vunpack.c.l.b16 %v5530
    %v5609 = vunpack.c.h.b16 %v5530
    %v5610 = vunpack.c.l.b16 %v5531
    %v5611 = vunpack.c.h.b16 %v5531
    %v5612 = vunpack.c.l.b16 %v5532
    %v5613 = vunpack.c.h.b16 %v5532
    %v5614 = vunpack.c.l.b16 %v5533
    %v5615 = vunpack.c.h.b16 %v5533
    %v5616 = vunpack.c.l.b16 %v5534
    %v5617 = vunpack.c.h.b16 %v5534
    %v5618 = vunpack.c.l.b16 %v5535
    %v5619 = vunpack.c.h.b16 %v5535
    %v5620 = vunpack.c.l.b16 %v5536
    %v5621 = vunpack.c.h.b16 %v5536
    %v5622 = vunpack.c.l.b16 %v5537
    %v5623 = vunpack.c.h.b16 %v5537
    %v5624 = vunpack.c.l.b16 %v5538
    %v5625 = vunpack.c.h.b16 %v5538
    %v5626 = vunpack.c.l.b16 %v5539
    %v5627 = vunpack.c.h.b16 %v5539
    %v5628 = vunpack.c.l.b16 %v5540
    %v5629 = vunpack.c.h.b16 %v5540
    %v5630 = vunpack.c.l.b16 %v5541
    %v5631 = vunpack.c.h.b16 %v5541
    %v5632 = vunpack.c.l.b16 %v5542
    %v5633 = vunpack.c.h.b16 %v5542
    %v5634 = vunpack.c.l.b16 %v5543
    %v5635 = vunpack.c.h.b16 %v5543
    %v5636 = vunpack.c.l.b16 %v5544
    %v5637 = vunpack.c.h.b16 %v5544
    %v5638 = vunpack.c.l.b16 %v5545
    %v5639 = vunpack.c.h.b16 %v5545
    %v5640 = vunpack.c.l.b16 %v5546
    %v5641 = vunpack.c.h.b16 %v5546
    %v5642 = vunpack.c.l.b16 %v5547
    %v5643 = vunpack.c.h.b16 %v5547
    %v5644 = vunpack.c.l.b16 %v5548
    %v5645 = vunpack.c.h.b16 %v5548
    %v5646 = vunpack.c.l.b16 %v5549
    %v5647 = vunpack.c.h.b16 %v5549
    %v5648 = vunpack.c.l.b16 %v5550
    %v5649 = vunpack.c.h.b16 %v5550
    %v5650 = vunpack.c.l.b16 %v5551
    %v5651 = vunpack.c.h.b16 %v5551
    %v5652 = vunpack.c.l.b16 %v5552
    %v5653 = vunpack.c.h.b16 %v5552
    %v5654 = vunpack.c.l.b16 %v5553
    %v5655 = vunpack.c.h.b16 %v5553
    %v5656 = vunpack.c.l.b16 %v5554
    %v5657 = vunpack.c.h.b16 %v5554
    %v5658 = vunpack.c.l.b16 %v5555
    %v5659 = vunpack.c.h.b16 %v5555
    %v5660 = vpack.c.b16 %v5600, %v5596
    %v5661 = vpack.c.b16 %v5601, %v5597
    %v5662 = vpack.c.b16 %v5602, %v5598
    %v5663 = vpack.c.b16 %v5603, %v5599
    %v5664 = vpack.c.b16 %v5608, %v5604
    %v5665 = vpack.c.b16 %v5609, %v5605
    %v5666 = vpack.c.b16 %v5610, %v5606
    %v5667 = vpack.c.b16 %v5611, %v5607
    %v5668 = vpack.c.b16 %v5616, %v5612
    %v5669 = vpack.c.b16 %v5617, %v5613
    %v5670 = vpack.c.b16 %v5618, %v5614
    %v5671 = vpack.c.b16 %v5619, %v5615
    %v5672 = vpack.c.b16 %v5624, %v5620
    %v5673 = vpack.c.b16 %v5625, %v5621
    %v5674 = vpack.c.b16 %v5626, %v5622
    %v5675 = vpack.c.b16 %v5627, %v5623
    %v5676 = vpack.c.b16 %v5632, %v5628
    %v5677 = vpack.c.b16 %v5633, %v5629
    %v5678 = vpack.c.b16 %v5634, %v5630
    %v5679 = vpack.c.b16 %v5635, %v5631
    %v5680 = vpack.c.b16 %v5640, %v5636
    %v5681 = vpack.c.b16 %v5641, %v5637
    %v5682 = vpack.c.b16 %v5642, %v5638
    %v5683 = vpack.c.b16 %v5643, %v5639
    %v5684 = vpack.c.b16 %v5648, %v5644
    %v5685 = vpack.c.b16 %v5649, %v5645
    %v5686 = vpack.c.b16 %v5650, %v5646
    %v5687 = vpack.c.b16 %v5651, %v5647
    %v5688 = vpack.c.b16 %v5656, %v5652
    %v5689 = vpack.c.b16 %v5657, %v5653
    %v5690 = vpack.c.b16 %v5658, %v5654
    %v5691 = vpack.c.b16 %v5659, %v5655
    %5724 = vmatprep.subr.bf16.mxu0 %v5689
    %5725 = vmatpush1.bf16.msra.mxu0 %v5688
    %5726 = vmatprep.subr.bf16.mxu0 %v5685
    %5727 = vmatpush1.bf16.msra.mxu0 %v5684
    %5728 = vmatprep.subr.bf16.mxu0 %v5681
    %5729 = vmatpush1.bf16.msra.mxu0 %v5680
    %5730 = vmatprep.subr.bf16.mxu0 %v5677
    %5731 = vmatpush1.bf16.msra.mxu0 %v5676
    %5732 = vmatprep.subr.bf16.mxu0 %v5673
    %5733 = vmatpush1.bf16.msra.mxu0 %v5672
    %5734 = vmatprep.subr.bf16.mxu0 %v5669
    %5735 = vmatpush1.bf16.msra.mxu0 %v5668
    %5736 = vmatprep.subr.bf16.mxu0 %v5665
    %5737 = vmatpush1.bf16.msra.mxu0 %v5664
    %5738 = vmatprep.subr.bf16.mxu0 %v5661
    %5739 = vmatpush1.bf16.msra.mxu0 %v5660
    %5740 = vmatprep.subr.bf16.mxu0 0
    %5741 = vmatpush2.bf16.msra.mxu0 0
    %5742 = vmatprep.subr.bf16.mxu0 0
    %5743 = vmatpush2.bf16.msra.mxu0 0
    %5744 = vmatprep.subr.bf16.mxu0 0
    %5745 = vmatpush2.bf16.msra.mxu0 0
    %5746 = vmatprep.subr.bf16.mxu0 0
    %5747 = vmatpush2.bf16.msra.mxu0 0
    %5748 = vmatprep.subr.bf16.mxu0 0
    %5749 = vmatpush2.bf16.msra.mxu0 0
    %5750 = vmatprep.subr.bf16.mxu0 0
    %5751 = vmatpush2.bf16.msra.mxu0 0
    %5752 = vmatprep.subr.bf16.mxu0 0
    %5753 = vmatpush2.bf16.msra.mxu0 0
    %5754 = vmatprep.subr.bf16.mxu0 0
    %5755 = vmatpush2.bf16.msra.mxu0 0
    %5756 = vmatprep.mubr.bf16.mxu0 0
    %5757 = vmatmul.mubr.bf16.gmra.mxu0 %v5562
    %v5758 = vpop.f32.mrf.mxu0
    %v5759 = vadd.f32 0.0, %v5758
    %v5760 = vpop.f32.mrf.mxu0
    %v5761 = vadd.f32 0.0, %v5760
    %v5762 = vpop.f32.mrf.mxu0
    %v5763 = vpop.f32.mrf.mxu0
    %5764 = vdwg.mxu0
    %5765 = vmatprep.subr.bf16.mxu0 %v5691
    %5766 = vmatpush1.bf16.msra.mxu0 %v5690
    %5767 = vmatprep.subr.bf16.mxu0 %v5687
    %5768 = vmatpush1.bf16.msra.mxu0 %v5686
    %5769 = vmatprep.subr.bf16.mxu0 %v5683
    %5770 = vmatpush1.bf16.msra.mxu0 %v5682
    %5771 = vmatprep.subr.bf16.mxu0 %v5679
    %5772 = vmatpush1.bf16.msra.mxu0 %v5678
    %5773 = vmatprep.subr.bf16.mxu0 %v5675
    %5774 = vmatpush1.bf16.msra.mxu0 %v5674
    %5775 = vmatprep.subr.bf16.mxu0 %v5671
    %5776 = vmatpush1.bf16.msra.mxu0 %v5670
    %5777 = vmatprep.subr.bf16.mxu0 %v5667
    %5778 = vmatpush1.bf16.msra.mxu0 %v5666
    %5779 = vmatprep.subr.bf16.mxu0 %v5663
    %5780 = vmatpush1.bf16.msra.mxu0 %v5662
    %5781 = vmatprep.subr.bf16.mxu0 0
    %5782 = vmatpush2.bf16.msra.mxu0 0
    %5783 = vmatprep.subr.bf16.mxu0 0
    %5784 = vmatpush2.bf16.msra.mxu0 0
    %5785 = vmatprep.subr.bf16.mxu0 0
    %5786 = vmatpush2.bf16.msra.mxu0 0
    %5787 = vmatprep.subr.bf16.mxu0 0
    %5788 = vmatpush2.bf16.msra.mxu0 0
    %5789 = vmatprep.subr.bf16.mxu0 0
    %5790 = vmatpush2.bf16.msra.mxu0 0
    %5791 = vmatprep.subr.bf16.mxu0 0
    %5792 = vmatpush2.bf16.msra.mxu0 0
    %5793 = vmatprep.subr.bf16.mxu0 0
    %5794 = vmatpush2.bf16.msra.mxu0 0
    %5795 = vmatprep.subr.bf16.mxu0 0
    %5796 = vmatpush2.bf16.msra.mxu0 0
    %5797 = vmatprep.mubr.bf16.mxu0 0
    %5798 = vmatmul.mubr.bf16.gmra.mxu0 %v5562
    %v5799 = vpop.f32.mrf.mxu0
    %v5800 = vadd.f32 0.0, %v5799
    %v5801 = vpop.f32.mrf.mxu0
    %v5802 = vadd.f32 0.0, %v5801
    %v5803 = vpop.f32.mrf.mxu0
    %v5804 = vpop.f32.mrf.mxu0
    %5805 = vdwg.mxu0
    %v5810 = vcombine.low %v5759, %v5761
    %v5811 = vcombine.low %v5800, %v5802
    %v5813 = vunpack.c.l.s4 1966171168
    %v5814 = vunpack.c.0.s8 %v5813
    %v5815 = vlaneseq
    %v5816 = vshrl.u32 %v5815, 7
    %v5817 = vsub.s32 %v5814, %v5816
    %v5818 = vrot.slane %v5810, %v5817
    %v5820 = vunpack.c.l.s4 1966171168
    %v5821 = vunpack.c.0.s8 %v5820
    %v5822 = vlaneseq
    %v5823 = vshrl.u32 %v5822, 7
    %v5824 = vsub.s32 %v5821, %v5823
    %v5825 = vrot.slane %v5811, %v5824
    %v5826 = vcombine.low %v5818, %v5825
    %v5827 = vcombine.high %v5818, %v5825
    %v5829 = vunpack.c.l.s4 1966171168
    %v5830 = vunpack.c.0.s8 %v5829
    %v5831 = vlaneseq
    %v5832 = vshrl.u32 %v5831, 7
    %v5833 = vsub.s32 %v5830, %v5832
    %v5834 = vrot.slane %v5826, %v5833
    %v5836 = vunpack.c.l.s4 1966171168
    %v5837 = vunpack.c.0.s8 %v5836
    %v5838 = vlaneseq
    %v5839 = vshrl.u32 %v5838, 7
    %v5840 = vsub.s32 %v5837, %v5839
    %v5841 = vrot.slane %v5827, %v5840
    %v5844 = vadd.f32 %v5519, %v5834
    %v5845 = vadd.f32 %v5521, %v5841
    %v5846 = vxor.u32 %v5844, 2147483648
    %v5847 = vxor.u32 %v5845, 2147483648
    %v5848 = vmul.f32 %v5846, 1.442695
    %v5849 = vpow.pop %v5848
    %v5850 = vmul.f32 %v5847, 1.442695
    %v5851 = vpow.pop %v5850
    %v5852 = vadd.f32 %v5849, 1.0
    %v5853 = vadd.f32 %v5851, 1.0
    %v5854 = vrcp.pop %v5852
    %v5855 = vmul.f32 1.0, %v5854
    %v5856 = vrcp.pop %v5853
    %v5857 = vmul.f32 1.0, %v5856
    %v5860 = vrot.slane %v5844, 3
    %v5861 = vrot.slane %v5845, 3
    %v5864 = vtanh.pop %v5860
    %v5865 = vtanh.pop %v5861
    %v5868 = vrot.slane %v5855, 1
    %v5869 = vrot.slane %v5857, 1
    %v5872 = vmul.f32 %v5868, %v4838
    %v5873 = vmul.f32 %v5869, %v4839
    %v5874 = vmul.f32 %v5855, %v5864
    %v5875 = vmul.f32 %v5857, %v5865
    %v5876 = vadd.f32 %v5872, %v5874
    %v5877 = vadd.f32 %v5873, %v5875
    %v5878 = vtanh.pop %v5876
    %v5879 = vtanh.pop %v5877
    %v5880 = vrot.slane %v5855, 2
    %v5881 = vrot.slane %v5857, 2
    %v5884 = vmul.f32 %v5880, %v5878
    %v5885 = vmul.f32 %v5881, %v5879
    %v5888 = vcombine.low %v5884, %v5885
    %v5890 = vunpack.c.l.s4 1966171168
    %v5891 = vunpack.c.0.s8 %v5890
    %v5892 = vlaneseq
    %v5893 = vshrl.u32 %v5892, 7
    %v5894 = vsub.s32 %v5891, %v5893
    %v5895 = vrot.slane %v5888, %v5894
    %v5897 = vunpack.c.l.s4 1966171168
    %v5898 = vunpack.c.0.s8 %v5897
    %v5899 = vlaneseq
    %v5900 = vshrl.u32 %v5899, 7
    %v5901 = vsub.s32 %v5898, %v5900
    %v5902 = vrot.slane %v5895, %v5901
    %v5904 = vpack.c.bf16 %v5902, %v5902
    %v5905 = vld [vmem:[#allocation6] sm:$0xff]
    %v5906 = vld [vmem:[#allocation6 + $0x8] sm:$0xff]
    %v5907 = vld [vmem:[#allocation6 + $0x10] sm:$0xff]
    %v5908 = vld [vmem:[#allocation6 + $0x18] sm:$0xff]
    %v5909 = vld [vmem:[#allocation6 + $0x20] sm:$0xff]
    %v5910 = vld [vmem:[#allocation6 + $0x28] sm:$0xff]
    %v5911 = vld [vmem:[#allocation6 + $0x30] sm:$0xff]
    %v5912 = vld [vmem:[#allocation6 + $0x38] sm:$0xff]
    %v5913 = vld [vmem:[#allocation6 + $0x40] sm:$0xff]
    %v5914 = vld [vmem:[#allocation6 + $0x48] sm:$0xff]
    %v5915 = vld [vmem:[#allocation6 + $0x50] sm:$0xff]
    %v5916 = vld [vmem:[#allocation6 + $0x58] sm:$0xff]
    %v5917 = vld [vmem:[#allocation6 + $0x60] sm:$0xff]
    %v5918 = vld [vmem:[#allocation6 + $0x68] sm:$0xff]
    %v5919 = vld [vmem:[#allocation6 + $0x70] sm:$0xff]
    %v5920 = vld [vmem:[#allocation6 + $0x78] sm:$0xff]
    %v5921 = vld [vmem:[#allocation6 + $0x80] sm:$0xff]
    %v5922 = vld [vmem:[#allocation6 + $0x88] sm:$0xff]
    %v5923 = vld [vmem:[#allocation6 + $0x90] sm:$0xff]
    %v5924 = vld [vmem:[#allocation6 + $0x98] sm:$0xff]
    %v5925 = vld [vmem:[#allocation6 + $0xa0] sm:$0xff]
    %v5926 = vld [vmem:[#allocation6 + $0xa8] sm:$0xff]
    %v5927 = vld [vmem:[#allocation6 + $0xb0] sm:$0xff]
    %v5928 = vld [vmem:[#allocation6 + $0xb8] sm:$0xff]
    %v5929 = vld [vmem:[#allocation6 + $0xc0] sm:$0xff]
    %v5930 = vld [vmem:[#allocation6 + $0xc8] sm:$0xff]
    %v5931 = vld [vmem:[#allocation6 + $0xd0] sm:$0xff]
    %v5932 = vld [vmem:[#allocation6 + $0xd8] sm:$0xff]
    %v5933 = vld [vmem:[#allocation6 + $0xe0] sm:$0xff]
    %v5934 = vld [vmem:[#allocation6 + $0xe8] sm:$0xff]
    %v5935 = vld [vmem:[#allocation6 + $0xf0] sm:$0xff]
    %v5936 = vld [vmem:[#allocation6 + $0xf8] sm:$0xff]
    %v5937 = vld [vmem:[#allocation6 + $0x100] sm:$0xff]
    %v5938 = vld [vmem:[#allocation6 + $0x108] sm:$0xff]
    %v5939 = vld [vmem:[#allocation6 + $0x110] sm:$0xff]
    %v5940 = vld [vmem:[#allocation6 + $0x118] sm:$0xff]
    %v5941 = vld [vmem:[#allocation6 + $0x120] sm:$0xff]
    %v5942 = vld [vmem:[#allocation6 + $0x128] sm:$0xff]
    %v5943 = vld [vmem:[#allocation6 + $0x130] sm:$0xff]
    %v5944 = vld [vmem:[#allocation6 + $0x138] sm:$0xff]
    %v5945 = vld [vmem:[#allocation6 + $0x140] sm:$0xff]
    %v5946 = vld [vmem:[#allocation6 + $0x148] sm:$0xff]
    %v5947 = vld [vmem:[#allocation6 + $0x150] sm:$0xff]
    %v5948 = vld [vmem:[#allocation6 + $0x158] sm:$0xff]
    %v5949 = vld [vmem:[#allocation6 + $0x160] sm:$0xff]
    %v5950 = vld [vmem:[#allocation6 + $0x168] sm:$0xff]
    %v5951 = vld [vmem:[#allocation6 + $0x170] sm:$0xff]
    %v5952 = vld [vmem:[#allocation6 + $0x178] sm:$0xff]
    %v5953 = vld [vmem:[#allocation6 + $0x180] sm:$0xff]
    %v5954 = vld [vmem:[#allocation6 + $0x188] sm:$0xff]
    %v5955 = vld [vmem:[#allocation6 + $0x190] sm:$0xff]
    %v5956 = vld [vmem:[#allocation6 + $0x198] sm:$0xff]
    %v5957 = vld [vmem:[#allocation6 + $0x1a0] sm:$0xff]
    %v5958 = vld [vmem:[#allocation6 + $0x1a8] sm:$0xff]
    %v5959 = vld [vmem:[#allocation6 + $0x1b0] sm:$0xff]
    %v5960 = vld [vmem:[#allocation6 + $0x1b8] sm:$0xff]
    %v5961 = vld [vmem:[#allocation6 + $0x1c0] sm:$0xff]
    %v5962 = vld [vmem:[#allocation6 + $0x1c8] sm:$0xff]
    %v5963 = vld [vmem:[#allocation6 + $0x1d0] sm:$0xff]
    %v5964 = vld [vmem:[#allocation6 + $0x1d8] sm:$0xff]
    %v5965 = vld [vmem:[#allocation6 + $0x1e0] sm:$0xff]
    %v5966 = vld [vmem:[#allocation6 + $0x1e8] sm:$0xff]
    %v5967 = vld [vmem:[#allocation6 + $0x1f0] sm:$0xff]
    %v5968 = vld [vmem:[#allocation6 + $0x1f8] sm:$0xff]
    %v5969 = vld [vmem:[%s5] sm:$0xf]
    %v5971 = vlaneseq
    %v5972 = vshrl.u32 %v5971, 7
    %v5973 = vsub.s32 0, %v5972
    %v5974 = vrot.slane %v5969, %v5973
    %v5975 = vlaneseq
    %v5976 = vshrl.u32 %v5975, 7
    %v5977 = vsub.s32 1, %v5976
    %v5978 = vrot.slane %v5969, %v5977
    %v5979 = vlaneseq
    %v5980 = vshrl.u32 %v5979, 7
    %v5981 = vsub.s32 2, %v5980
    %v5982 = vrot.slane %v5969, %v5981
    %v5983 = vlaneseq
    %v5984 = vshrl.u32 %v5983, 7
    %v5985 = vsub.s32 3, %v5984
    %v5986 = vrot.slane %v5969, %v5985
    %v6055 = vunpack.c.l.b16 %v5905
    %v6056 = vunpack.c.h.b16 %v5905
    %v6057 = vunpack.c.l.b16 %v5906
    %v6058 = vunpack.c.h.b16 %v5906
    %v6059 = vunpack.c.l.b16 %v5907
    %v6060 = vunpack.c.h.b16 %v5907
    %v6061 = vunpack.c.l.b16 %v5908
    %v6062 = vunpack.c.h.b16 %v5908
    %v6063 = vunpack.c.l.b16 %v5909
    %v6064 = vunpack.c.h.b16 %v5909
    %v6065 = vunpack.c.l.b16 %v5910
    %v6066 = vunpack.c.h.b16 %v5910
    %v6067 = vunpack.c.l.b16 %v5911
    %v6068 = vunpack.c.h.b16 %v5911
    %v6069 = vunpack.c.l.b16 %v5912
    %v6070 = vunpack.c.h.b16 %v5912
    %v6071 = vunpack.c.l.b16 %v5913
    %v6072 = vunpack.c.h.b16 %v5913
    %v6073 = vunpack.c.l.b16 %v5914
    %v6074 = vunpack.c.h.b16 %v5914
    %v6075 = vunpack.c.l.b16 %v5915
    %v6076 = vunpack.c.h.b16 %v5915
    %v6077 = vunpack.c.l.b16 %v5916
    %v6078 = vunpack.c.h.b16 %v5916
    %v6079 = vunpack.c.l.b16 %v5917
    %v6080 = vunpack.c.h.b16 %v5917
    %v6081 = vunpack.c.l.b16 %v5918
    %v6082 = vunpack.c.h.b16 %v5918
    %v6083 = vunpack.c.l.b16 %v5919
    %v6084 = vunpack.c.h.b16 %v5919
    %v6085 = vunpack.c.l.b16 %v5920
    %v6086 = vunpack.c.h.b16 %v5920
    %v6087 = vunpack.c.l.b16 %v5921
    %v6088 = vunpack.c.h.b16 %v5921
    %v6089 = vunpack.c.l.b16 %v5922
    %v6090 = vunpack.c.h.b16 %v5922
    %v6091 = vunpack.c.l.b16 %v5923
    %v6092 = vunpack.c.h.b16 %v5923
    %v6093 = vunpack.c.l.b16 %v5924
    %v6094 = vunpack.c.h.b16 %v5924
    %v6095 = vunpack.c.l.b16 %v5925
    %v6096 = vunpack.c.h.b16 %v5925
    %v6097 = vunpack.c.l.b16 %v5926
    %v6098 = vunpack.c.h.b16 %v5926
    %v6099 = vunpack.c.l.b16 %v5927
    %v6100 = vunpack.c.h.b16 %v5927
    %v6101 = vunpack.c.l.b16 %v5928
    %v6102 = vunpack.c.h.b16 %v5928
    %v6103 = vunpack.c.l.b16 %v5929
    %v6104 = vunpack.c.h.b16 %v5929
    %v6105 = vunpack.c.l.b16 %v5930
    %v6106 = vunpack.c.h.b16 %v5930
    %v6107 = vunpack.c.l.b16 %v5931
    %v6108 = vunpack.c.h.b16 %v5931
    %v6109 = vunpack.c.l.b16 %v5932
    %v6110 = vunpack.c.h.b16 %v5932
    %v6111 = vunpack.c.l.b16 %v5933
    %v6112 = vunpack.c.h.b16 %v5933
    %v6113 = vunpack.c.l.b16 %v5934
    %v6114 = vunpack.c.h.b16 %v5934
    %v6115 = vunpack.c.l.b16 %v5935
    %v6116 = vunpack.c.h.b16 %v5935
    %v6117 = vunpack.c.l.b16 %v5936
    %v6118 = vunpack.c.h.b16 %v5936
    %v6119 = vunpack.c.l.b16 %v5937
    %v6120 = vunpack.c.h.b16 %v5937
    %v6121 = vunpack.c.l.b16 %v5938
    %v6122 = vunpack.c.h.b16 %v5938
    %v6123 = vunpack.c.l.b16 %v5939
    %v6124 = vunpack.c.h.b16 %v5939
    %v6125 = vunpack.c.l.b16 %v5940
    %v6126 = vunpack.c.h.b16 %v5940
    %v6127 = vunpack.c.l.b16 %v5941
    %v6128 = vunpack.c.h.b16 %v5941
    %v6129 = vunpack.c.l.b16 %v5942
    %v6130 = vunpack.c.h.b16 %v5942
    %v6131 = vunpack.c.l.b16 %v5943
    %v6132 = vunpack.c.h.b16 %v5943
    %v6133 = vunpack.c.l.b16 %v5944
    %v6134 = vunpack.c.h.b16 %v5944
    %v6135 = vunpack.c.l.b16 %v5945
    %v6136 = vunpack.c.h.b16 %v5945
    %v6137 = vunpack.c.l.b16 %v5946
    %v6138 = vunpack.c.h.b16 %v5946
    %v6139 = vunpack.c.l.b16 %v5947
    %v6140 = vunpack.c.h.b16 %v5947
    %v6141 = vunpack.c.l.b16 %v5948
    %v6142 = vunpack.c.h.b16 %v5948
    %v6143 = vunpack.c.l.b16 %v5949
    %v6144 = vunpack.c.h.b16 %v5949
    %v6145 = vunpack.c.l.b16 %v5950
    %v6146 = vunpack.c.h.b16 %v5950
    %v6147 = vunpack.c.l.b16 %v5951
    %v6148 = vunpack.c.h.b16 %v5951
    %v6149 = vunpack.c.l.b16 %v5952
    %v6150 = vunpack.c.h.b16 %v5952
    %v6151 = vunpack.c.l.b16 %v5953
    %v6152 = vunpack.c.h.b16 %v5953
    %v6153 = vunpack.c.l.b16 %v5954
    %v6154 = vunpack.c.h.b16 %v5954
    %v6155 = vunpack.c.l.b16 %v5955
    %v6156 = vunpack.c.h.b16 %v5955
    %v6157 = vunpack.c.l.b16 %v5956
    %v6158 = vunpack.c.h.b16 %v5956
    %v6159 = vunpack.c.l.b16 %v5957
    %v6160 = vunpack.c.h.b16 %v5957
    %v6161 = vunpack.c.l.b16 %v5958
    %v6162 = vunpack.c.h.b16 %v5958
    %v6163 = vunpack.c.l.b16 %v5959
    %v6164 = vunpack.c.h.b16 %v5959
    %v6165 = vunpack.c.l.b16 %v5960
    %v6166 = vunpack.c.h.b16 %v5960
    %v6167 = vunpack.c.l.b16 %v5961
    %v6168 = vunpack.c.h.b16 %v5961
    %v6169 = vunpack.c.l.b16 %v5962
    %v6170 = vunpack.c.h.b16 %v5962
    %v6171 = vunpack.c.l.b16 %v5963
    %v6172 = vunpack.c.h.b16 %v5963
    %v6173 = vunpack.c.l.b16 %v5964
    %v6174 = vunpack.c.h.b16 %v5964
    %v6175 = vunpack.c.l.b16 %v5965
    %v6176 = vunpack.c.h.b16 %v5965
    %v6177 = vunpack.c.l.b16 %v5966
    %v6178 = vunpack.c.h.b16 %v5966
    %v6179 = vunpack.c.l.b16 %v5967
    %v6180 = vunpack.c.h.b16 %v5967
    %v6181 = vunpack.c.l.b16 %v5968
    %v6182 = vunpack.c.h.b16 %v5968
    %v6183 = vpack.c.b16 %v6059, %v6055
    %v6184 = vpack.c.b16 %v6060, %v6056
    %v6185 = vpack.c.b16 %v6061, %v6057
    %v6186 = vpack.c.b16 %v6062, %v6058
    %v6187 = vpack.c.b16 %v6067, %v6063
    %v6188 = vpack.c.b16 %v6068, %v6064
    %v6189 = vpack.c.b16 %v6069, %v6065
    %v6190 = vpack.c.b16 %v6070, %v6066
    %v6191 = vpack.c.b16 %v6075, %v6071
    %v6192 = vpack.c.b16 %v6076, %v6072
    %v6193 = vpack.c.b16 %v6077, %v6073
    %v6194 = vpack.c.b16 %v6078, %v6074
    %v6195 = vpack.c.b16 %v6083, %v6079
    %v6196 = vpack.c.b16 %v6084, %v6080
    %v6197 = vpack.c.b16 %v6085, %v6081
    %v6198 = vpack.c.b16 %v6086, %v6082
    %v6199 = vpack.c.b16 %v6091, %v6087
    %v6200 = vpack.c.b16 %v6092, %v6088
    %v6201 = vpack.c.b16 %v6093, %v6089
    %v6202 = vpack.c.b16 %v6094, %v6090
    %v6203 = vpack.c.b16 %v6099, %v6095
    %v6204 = vpack.c.b16 %v6100, %v6096
    %v6205 = vpack.c.b16 %v6101, %v6097
    %v6206 = vpack.c.b16 %v6102, %v6098
    %v6207 = vpack.c.b16 %v6107, %v6103
    %v6208 = vpack.c.b16 %v6108, %v6104
    %v6209 = vpack.c.b16 %v6109, %v6105
    %v6210 = vpack.c.b16 %v6110, %v6106
    %v6211 = vpack.c.b16 %v6115, %v6111
    %v6212 = vpack.c.b16 %v6116, %v6112
    %v6213 = vpack.c.b16 %v6117, %v6113
    %v6214 = vpack.c.b16 %v6118, %v6114
    %v6215 = vpack.c.b16 %v6123, %v6119
    %v6216 = vpack.c.b16 %v6124, %v6120
    %v6217 = vpack.c.b16 %v6125, %v6121
    %v6218 = vpack.c.b16 %v6126, %v6122
    %v6219 = vpack.c.b16 %v6131, %v6127
    %v6220 = vpack.c.b16 %v6132, %v6128
    %v6221 = vpack.c.b16 %v6133, %v6129
    %v6222 = vpack.c.b16 %v6134, %v6130
    %v6223 = vpack.c.b16 %v6139, %v6135
    %v6224 = vpack.c.b16 %v6140, %v6136
    %v6225 = vpack.c.b16 %v6141, %v6137
    %v6226 = vpack.c.b16 %v6142, %v6138
    %v6227 = vpack.c.b16 %v6147, %v6143
    %v6228 = vpack.c.b16 %v6148, %v6144
    %v6229 = vpack.c.b16 %v6149, %v6145
    %v6230 = vpack.c.b16 %v6150, %v6146
    %v6231 = vpack.c.b16 %v6155, %v6151
    %v6232 = vpack.c.b16 %v6156, %v6152
    %v6233 = vpack.c.b16 %v6157, %v6153
    %v6234 = vpack.c.b16 %v6158, %v6154
    %v6235 = vpack.c.b16 %v6163, %v6159
    %v6236 = vpack.c.b16 %v6164, %v6160
    %v6237 = vpack.c.b16 %v6165, %v6161
    %v6238 = vpack.c.b16 %v6166, %v6162
    %v6239 = vpack.c.b16 %v6171, %v6167
    %v6240 = vpack.c.b16 %v6172, %v6168
    %v6241 = vpack.c.b16 %v6173, %v6169
    %v6242 = vpack.c.b16 %v6174, %v6170
    %v6243 = vpack.c.b16 %v6179, %v6175
    %v6244 = vpack.c.b16 %v6180, %v6176
    %v6245 = vpack.c.b16 %v6181, %v6177
    %v6246 = vpack.c.b16 %v6182, %v6178
    %6311 = vmatprep.subr.bf16.mxu0 %v6212
    %6312 = vmatpush1.bf16.msra.mxu0 %v6211
    %6313 = vmatprep.subr.bf16.mxu0 %v6208
    %6314 = vmatpush1.bf16.msra.mxu0 %v6207
    %6315 = vmatprep.subr.bf16.mxu0 %v6204
    %6316 = vmatpush1.bf16.msra.mxu0 %v6203
    %6317 = vmatprep.subr.bf16.mxu0 %v6200
    %6318 = vmatpush1.bf16.msra.mxu0 %v6199
    %6319 = vmatprep.subr.bf16.mxu0 %v6196
    %6320 = vmatpush1.bf16.msra.mxu0 %v6195
    %6321 = vmatprep.subr.bf16.mxu0 %v6192
    %6322 = vmatpush1.bf16.msra.mxu0 %v6191
    %6323 = vmatprep.subr.bf16.mxu0 %v6188
    %6324 = vmatpush1.bf16.msra.mxu0 %v6187
    %6325 = vmatprep.subr.bf16.mxu0 %v6184
    %6326 = vmatpush1.bf16.msra.mxu0 %v6183
    %6327 = vmatprep.subr.bf16.mxu0 %v6244
    %6328 = vmatpush2.bf16.msra.mxu0 %v6243
    %6329 = vmatprep.subr.bf16.mxu0 %v6240
    %6330 = vmatpush2.bf16.msra.mxu0 %v6239
    %6331 = vmatprep.subr.bf16.mxu0 %v6236
    %6332 = vmatpush2.bf16.msra.mxu0 %v6235
    %6333 = vmatprep.subr.bf16.mxu0 %v6232
    %6334 = vmatpush2.bf16.msra.mxu0 %v6231
    %6335 = vmatprep.subr.bf16.mxu0 %v6228
    %6336 = vmatpush2.bf16.msra.mxu0 %v6227
    %6337 = vmatprep.subr.bf16.mxu0 %v6224
    %6338 = vmatpush2.bf16.msra.mxu0 %v6223
    %6339 = vmatprep.subr.bf16.mxu0 %v6220
    %6340 = vmatpush2.bf16.msra.mxu0 %v6219
    %6341 = vmatprep.subr.bf16.mxu0 %v6216
    %6342 = vmatpush2.bf16.msra.mxu0 %v6215
    %6343 = vmatprep.mubr.bf16.mxu0 %v5379
    %6344 = vmatmul.mubr.bf16.gmra.mxu0 %v5904
    %v6345 = vpop.f32.mrf.mxu0
    %v6346 = vadd.f32 %v5974, %v6345
    %v6347 = vpop.f32.mrf.mxu0
    %v6348 = vadd.f32 %v5978, %v6347
    %v6349 = vpop.f32.mrf.mxu0
    %v6350 = vpop.f32.mrf.mxu0
    %6351 = vdwg.mxu0
    %6352 = vmatprep.subr.bf16.mxu0 %v6214
    %6353 = vmatpush1.bf16.msra.mxu0 %v6213
    %6354 = vmatprep.subr.bf16.mxu0 %v6210
    %6355 = vmatpush1.bf16.msra.mxu0 %v6209
    %6356 = vmatprep.subr.bf16.mxu0 %v6206
    %6357 = vmatpush1.bf16.msra.mxu0 %v6205
    %6358 = vmatprep.subr.bf16.mxu0 %v6202
    %6359 = vmatpush1.bf16.msra.mxu0 %v6201
    %6360 = vmatprep.subr.bf16.mxu0 %v6198
    %6361 = vmatpush1.bf16.msra.mxu0 %v6197
    %6362 = vmatprep.subr.bf16.mxu0 %v6194
    %6363 = vmatpush1.bf16.msra.mxu0 %v6193
    %6364 = vmatprep.subr.bf16.mxu0 %v6190
    %6365 = vmatpush1.bf16.msra.mxu0 %v6189
    %6366 = vmatprep.subr.bf16.mxu0 %v6186
    %6367 = vmatpush1.bf16.msra.mxu0 %v6185
    %6368 = vmatprep.subr.bf16.mxu0 %v6246
    %6369 = vmatpush2.bf16.msra.mxu0 %v6245
    %6370 = vmatprep.subr.bf16.mxu0 %v6242
    %6371 = vmatpush2.bf16.msra.mxu0 %v6241
    %6372 = vmatprep.subr.bf16.mxu0 %v6238
    %6373 = vmatpush2.bf16.msra.mxu0 %v6237
    %6374 = vmatprep.subr.bf16.mxu0 %v6234
    %6375 = vmatpush2.bf16.msra.mxu0 %v6233
    %6376 = vmatprep.subr.bf16.mxu0 %v6230
    %6377 = vmatpush2.bf16.msra.mxu0 %v6229
    %6378 = vmatprep.subr.bf16.mxu0 %v6226
    %6379 = vmatpush2.bf16.msra.mxu0 %v6225
    %6380 = vmatprep.subr.bf16.mxu0 %v6222
    %6381 = vmatpush2.bf16.msra.mxu0 %v6221
    %6382 = vmatprep.subr.bf16.mxu0 %v6218
    %6383 = vmatpush2.bf16.msra.mxu0 %v6217
    %6384 = vmatprep.mubr.bf16.mxu0 %v5379
    %6385 = vmatmul.mubr.bf16.gmra.mxu0 %v5904
    %v6386 = vpop.f32.mrf.mxu0
    %v6387 = vadd.f32 %v5982, %v6386
    %v6388 = vpop.f32.mrf.mxu0
    %v6389 = vadd.f32 %v5986, %v6388
    %v6390 = vpop.f32.mrf.mxu0
    %v6391 = vpop.f32.mrf.mxu0
    %6392 = vdwg.mxu0
    %v6393 = vxor.u32 %v6346, 2147483648
    %v6394 = vxor.u32 %v6348, 2147483648
    %v6395 = vxor.u32 %v6387, 2147483648
    %v6396 = vmul.f32 %v6393, 1.442695
    %v6397 = vpow.pop %v6396
    %v6398 = vmul.f32 %v6394, 1.442695
    %v6399 = vpow.pop %v6398
    %v6400 = vmul.f32 %v6395, 1.442695
    %v6401 = vpow.pop %v6400
    %v6402 = vadd.f32 %v6397, 1.0
    %v6403 = vadd.f32 %v6399, 1.0
    %v6404 = vadd.f32 %v6401, 1.0
    %v6405 = vrcp.pop %v6402
    %v6406 = vmul.f32 1.0, %v6405
    %v6407 = vrcp.pop %v6403
    %v6408 = vmul.f32 1.0, %v6407
    %v6409 = vrcp.pop %v6404
    %v6410 = vmul.f32 1.0, %v6409
    %v6411 = vtanh.pop %v6389
    %v6412 = vmul.f32 %v6408, %v5376
    %v6413 = vmul.f32 %v6406, %v6411
    %v6414 = vadd.f32 %v6412, %v6413
    %v6415 = vtanh.pop %v6414
    %v6416 = vmul.f32 %v6410, %v6415
    %v6417 = vpack.c.bf16 %v6416, %v6416
    %v6418 = vld [vmem:[%s6] sm:$0xf]
    %v6419 = vld [vmem:[%s6 + $0x4] sm:$0xf]
    %v6420 = vld [vmem:[%s6 + $0x8] sm:$0xf]
    %v6421 = vld [vmem:[%s6 + $0xc] sm:$0xf]
    %v6422 = vld [vmem:[%s6 + $0x10] sm:$0xf]
    %v6423 = vld [vmem:[%s6 + $0x14] sm:$0xf]
    %v6424 = vld [vmem:[%s6 + $0x18] sm:$0xf]
    %v6425 = vld [vmem:[%s6 + $0x1c] sm:$0xf]
    %v6426 = vld [vmem:[%s6 + $0x20] sm:$0xf]
    %v6427 = vld [vmem:[%s6 + $0x24] sm:$0xf]
    %v6428 = vld [vmem:[%s6 + $0x28] sm:$0xf]
    %v6429 = vld [vmem:[%s6 + $0x2c] sm:$0xf]
    %v6430 = vld [vmem:[%s6 + $0x30] sm:$0xf]
    %v6431 = vld [vmem:[%s6 + $0x34] sm:$0xf]
    %v6432 = vld [vmem:[%s6 + $0x38] sm:$0xf]
    %v6433 = vld [vmem:[%s6 + $0x3c] sm:$0xf]
    %v6434 = vld [vmem:[%s7] sm:$0x1]
    %v6436 = vlaneseq
    %v6437 = vshrl.u32 %v6436, 7
    %v6438 = vsub.s32 0, %v6437
    %v6439 = vrot.slane %v6434, %v6438
    %v6457 = vunpack.c.l.b16 %v6418
    %v6458 = vunpack.c.l.b16 %v6419
    %v6459 = vunpack.c.l.b16 %v6420
    %v6460 = vunpack.c.l.b16 %v6421
    %v6461 = vunpack.c.l.b16 %v6422
    %v6462 = vunpack.c.l.b16 %v6423
    %v6463 = vunpack.c.l.b16 %v6424
    %v6464 = vunpack.c.l.b16 %v6425
    %v6465 = vunpack.c.l.b16 %v6426
    %v6466 = vunpack.c.l.b16 %v6427
    %v6467 = vunpack.c.l.b16 %v6428
    %v6468 = vunpack.c.l.b16 %v6429
    %v6469 = vunpack.c.l.b16 %v6430
    %v6470 = vunpack.c.l.b16 %v6431
    %v6471 = vunpack.c.l.b16 %v6432
    %v6472 = vunpack.c.l.b16 %v6433
    %v6473 = vpack.c.b16 %v6458, %v6457
    %v6474 = vpack.c.b16 %v6460, %v6459
    %v6475 = vpack.c.b16 %v6462, %v6461
    %v6476 = vpack.c.b16 %v6464, %v6463
    %v6477 = vpack.c.b16 %v6466, %v6465
    %v6478 = vpack.c.b16 %v6468, %v6467
    %v6479 = vpack.c.b16 %v6470, %v6469
    %v6480 = vpack.c.b16 %v6472, %v6471
    %6489 = vmatprep.subr.bf16.mxu0 0
    %6490 = vmatpush1.bf16.msra.mxu0 %v6480
    %6491 = vmatprep.subr.bf16.mxu0 0
    %6492 = vmatpush1.bf16.msra.mxu0 %v6479
    %6493 = vmatprep.subr.bf16.mxu0 0
    %6494 = vmatpush1.bf16.msra.mxu0 %v6478
    %6495 = vmatprep.subr.bf16.mxu0 0
    %6496 = vmatpush1.bf16.msra.mxu0 %v6477
    %6497 = vmatprep.subr.bf16.mxu0 0
    %6498 = vmatpush1.bf16.msra.mxu0 %v6476
    %6499 = vmatprep.subr.bf16.mxu0 0
    %6500 = vmatpush1.bf16.msra.mxu0 %v6475
    %6501 = vmatprep.subr.bf16.mxu0 0
    %6502 = vmatpush1.bf16.msra.mxu0 %v6474
    %6503 = vmatprep.subr.bf16.mxu0 0
    %6504 = vmatpush1.bf16.msra.mxu0 %v6473
    %6505 = vmatprep.subr.bf16.mxu0 0
    %6506 = vmatpush2.bf16.msra.mxu0 0
    %6507 = vmatprep.subr.bf16.mxu0 0
    %6508 = vmatpush2.bf16.msra.mxu0 0
    %6509 = vmatprep.subr.bf16.mxu0 0
    %6510 = vmatpush2.bf16.msra.mxu0 0
    %6511 = vmatprep.subr.bf16.mxu0 0
    %6512 = vmatpush2.bf16.msra.mxu0 0
    %6513 = vmatprep.subr.bf16.mxu0 0
    %6514 = vmatpush2.bf16.msra.mxu0 0
    %6515 = vmatprep.subr.bf16.mxu0 0
    %6516 = vmatpush2.bf16.msra.mxu0 0
    %6517 = vmatprep.subr.bf16.mxu0 0
    %6518 = vmatpush2.bf16.msra.mxu0 0
    %6519 = vmatprep.subr.bf16.mxu0 0
    %6520 = vmatpush2.bf16.msra.mxu0 0
    %6521 = vmatprep.mubr.bf16.mxu0 0
    %6522 = vmatmul.mubr.bf16.gmra.mxu0 %v6417
    %v6523 = vpop.f32.mrf.mxu0
    %v6524 = vadd.f32 %v6439, %v6523
    %v6525 = vpop.f32.mrf.mxu0
    %v6526 = vpop.f32.mrf.mxu0
    %v6527 = vpop.f32.mrf.mxu0
    %6528 = vdwg.mxu0
    %v6531 = vunpack.c.l.s4 1966171168
    %v6532 = vunpack.c.0.s8 %v6531
    %v6533 = vlaneseq
    %v6534 = vshrl.u32 %v6533, 7
    %v6535 = vsub.s32 %v6532, %v6534
    %v6536 = vrot.slane %v6524, %v6535
    %v6537 = vcombine.high %v6536, %v6536
    %v6539 = vunpack.c.l.s4 1966171168
    %v6540 = vunpack.c.0.s8 %v6539
    %v6541 = vlaneseq
    %v6542 = vshrl.u32 %v6541, 7
    %v6543 = vsub.s32 %v6540, %v6542
    %v6544 = vrot.slane %v6536, %v6543
    %v6546 = vunpack.c.l.s4 1966171168
    %v6547 = vunpack.c.0.s8 %v6546
    %v6548 = vlaneseq
    %v6549 = vshrl.u32 %v6548, 7
    %v6550 = vsub.s32 %v6547, %v6549
    %v6551 = vrot.slane %v6537, %v6550
    %6554 = vst.msk [vmem:[#allocation8 + $0x5] sm:$0x1] %vm1362, %v6544
    %6555 = vst.msk [vmem:[#allocation8 + $0xd] sm:$0x1] %vm1362, %v6551
    %s6556 = scalar_lea.vmem [#allocation2], 6
    %v6557 = vld [vmem:[%s6556] ss:$8 sm:$0xf]
    %s6558 = scalar_lea.vmem [#allocation2], 38
    %v6559 = vld [vmem:[%s6558] ss:$8 sm:$0xf]
    %v6560 = vpack.c.bf16 %v5884, %v5884
    %v6561 = vpack.c.bf16 %v5885, %v5885
    %v6562 = vld [vmem:[#allocation3] sm:$0xff]
    %v6563 = vld [vmem:[#allocation3 + $0x8] sm:$0xff]
    %v6564 = vld [vmem:[#allocation3 + $0x10] sm:$0xff]
    %v6565 = vld [vmem:[#allocation3 + $0x18] sm:$0xff]
    %v6566 = vld [vmem:[#allocation3 + $0x20] sm:$0xff]
    %v6567 = vld [vmem:[#allocation3 + $0x28] sm:$0xff]
    %v6568 = vld [vmem:[#allocation3 + $0x30] sm:$0xff]
    %v6569 = vld [vmem:[#allocation3 + $0x38] sm:$0xff]
    %v6570 = vld [vmem:[#allocation3 + $0x40] sm:$0xff]
    %v6571 = vld [vmem:[#allocation3 + $0x48] sm:$0xff]
    %v6572 = vld [vmem:[#allocation3 + $0x50] sm:$0xff]
    %v6573 = vld [vmem:[#allocation3 + $0x58] sm:$0xff]
    %v6574 = vld [vmem:[#allocation3 + $0x60] sm:$0xff]
    %v6575 = vld [vmem:[#allocation3 + $0x68] sm:$0xff]
    %v6576 = vld [vmem:[#allocation3 + $0x70] sm:$0xff]
    %v6577 = vld [vmem:[#allocation3 + $0x78] sm:$0xff]
    %v6578 = vld [vmem:[#allocation3 + $0x80] sm:$0xff]
    %v6579 = vld [vmem:[#allocation3 + $0x88] sm:$0xff]
    %v6580 = vld [vmem:[#allocation3 + $0x90] sm:$0xff]
    %v6581 = vld [vmem:[#allocation3 + $0x98] sm:$0xff]
    %v6582 = vld [vmem:[#allocation3 + $0xa0] sm:$0xff]
    %v6583 = vld [vmem:[#allocation3 + $0xa8] sm:$0xff]
    %v6584 = vld [vmem:[#allocation3 + $0xb0] sm:$0xff]
    %v6585 = vld [vmem:[#allocation3 + $0xb8] sm:$0xff]
    %v6586 = vld [vmem:[#allocation3 + $0xc0] sm:$0xff]
    %v6587 = vld [vmem:[#allocation3 + $0xc8] sm:$0xff]
    %v6588 = vld [vmem:[#allocation3 + $0xd0] sm:$0xff]
    %v6589 = vld [vmem:[#allocation3 + $0xd8] sm:$0xff]
    %v6590 = vld [vmem:[#allocation3 + $0xe0] sm:$0xff]
    %v6591 = vld [vmem:[#allocation3 + $0xe8] sm:$0xff]
    %v6592 = vld [vmem:[#allocation3 + $0xf0] sm:$0xff]
    %v6593 = vld [vmem:[#allocation3 + $0xf8] sm:$0xff]
    %v6596 = vunpack.c.l.b16 %v6560
    %v6597 = vunpack.c.l.b16 %v6561
    %v6598 = vrot.slane %v6597, 7
    %v6599 = vsel %vm1408, %v6598, %v6596
    %v6600 = vpack.c.b16 %v6599, %v6599
    %v6634 = vunpack.c.l.b16 %v6562
    %v6635 = vunpack.c.h.b16 %v6562
    %v6636 = vunpack.c.l.b16 %v6563
    %v6637 = vunpack.c.h.b16 %v6563
    %v6638 = vunpack.c.l.b16 %v6564
    %v6639 = vunpack.c.h.b16 %v6564
    %v6640 = vunpack.c.l.b16 %v6565
    %v6641 = vunpack.c.h.b16 %v6565
    %v6642 = vunpack.c.l.b16 %v6566
    %v6643 = vunpack.c.h.b16 %v6566
    %v6644 = vunpack.c.l.b16 %v6567
    %v6645 = vunpack.c.h.b16 %v6567
    %v6646 = vunpack.c.l.b16 %v6568
    %v6647 = vunpack.c.h.b16 %v6568
    %v6648 = vunpack.c.l.b16 %v6569
    %v6649 = vunpack.c.h.b16 %v6569
    %v6650 = vunpack.c.l.b16 %v6570
    %v6651 = vunpack.c.h.b16 %v6570
    %v6652 = vunpack.c.l.b16 %v6571
    %v6653 = vunpack.c.h.b16 %v6571
    %v6654 = vunpack.c.l.b16 %v6572
    %v6655 = vunpack.c.h.b16 %v6572
    %v6656 = vunpack.c.l.b16 %v6573
    %v6657 = vunpack.c.h.b16 %v6573
    %v6658 = vunpack.c.l.b16 %v6574
    %v6659 = vunpack.c.h.b16 %v6574
    %v6660 = vunpack.c.l.b16 %v6575
    %v6661 = vunpack.c.h.b16 %v6575
    %v6662 = vunpack.c.l.b16 %v6576
    %v6663 = vunpack.c.h.b16 %v6576
    %v6664 = vunpack.c.l.b16 %v6577
    %v6665 = vunpack.c.h.b16 %v6577
    %v6666 = vunpack.c.l.b16 %v6578
    %v6667 = vunpack.c.h.b16 %v6578
    %v6668 = vunpack.c.l.b16 %v6579
    %v6669 = vunpack.c.h.b16 %v6579
    %v6670 = vunpack.c.l.b16 %v6580
    %v6671 = vunpack.c.h.b16 %v6580
    %v6672 = vunpack.c.l.b16 %v6581
    %v6673 = vunpack.c.h.b16 %v6581
    %v6674 = vunpack.c.l.b16 %v6582
    %v6675 = vunpack.c.h.b16 %v6582
    %v6676 = vunpack.c.l.b16 %v6583
    %v6677 = vunpack.c.h.b16 %v6583
    %v6678 = vunpack.c.l.b16 %v6584
    %v6679 = vunpack.c.h.b16 %v6584
    %v6680 = vunpack.c.l.b16 %v6585
    %v6681 = vunpack.c.h.b16 %v6585
    %v6682 = vunpack.c.l.b16 %v6586
    %v6683 = vunpack.c.h.b16 %v6586
    %v6684 = vunpack.c.l.b16 %v6587
    %v6685 = vunpack.c.h.b16 %v6587
    %v6686 = vunpack.c.l.b16 %v6588
    %v6687 = vunpack.c.h.b16 %v6588
    %v6688 = vunpack.c.l.b16 %v6589
    %v6689 = vunpack.c.h.b16 %v6589
    %v6690 = vunpack.c.l.b16 %v6590
    %v6691 = vunpack.c.h.b16 %v6590
    %v6692 = vunpack.c.l.b16 %v6591
    %v6693 = vunpack.c.h.b16 %v6591
    %v6694 = vunpack.c.l.b16 %v6592
    %v6695 = vunpack.c.h.b16 %v6592
    %v6696 = vunpack.c.l.b16 %v6593
    %v6697 = vunpack.c.h.b16 %v6593
    %v6698 = vpack.c.b16 %v6638, %v6634
    %v6699 = vpack.c.b16 %v6639, %v6635
    %v6700 = vpack.c.b16 %v6640, %v6636
    %v6701 = vpack.c.b16 %v6641, %v6637
    %v6702 = vpack.c.b16 %v6646, %v6642
    %v6703 = vpack.c.b16 %v6647, %v6643
    %v6704 = vpack.c.b16 %v6648, %v6644
    %v6705 = vpack.c.b16 %v6649, %v6645
    %v6706 = vpack.c.b16 %v6654, %v6650
    %v6707 = vpack.c.b16 %v6655, %v6651
    %v6708 = vpack.c.b16 %v6656, %v6652
    %v6709 = vpack.c.b16 %v6657, %v6653
    %v6710 = vpack.c.b16 %v6662, %v6658
    %v6711 = vpack.c.b16 %v6663, %v6659
    %v6712 = vpack.c.b16 %v6664, %v6660
    %v6713 = vpack.c.b16 %v6665, %v6661
    %v6714 = vpack.c.b16 %v6670, %v6666
    %v6715 = vpack.c.b16 %v6671, %v6667
    %v6716 = vpack.c.b16 %v6672, %v6668
    %v6717 = vpack.c.b16 %v6673, %v6669
    %v6718 = vpack.c.b16 %v6678, %v6674
    %v6719 = vpack.c.b16 %v6679, %v6675
    %v6720 = vpack.c.b16 %v6680, %v6676
    %v6721 = vpack.c.b16 %v6681, %v6677
    %v6722 = vpack.c.b16 %v6686, %v6682
    %v6723 = vpack.c.b16 %v6687, %v6683
    %v6724 = vpack.c.b16 %v6688, %v6684
    %v6725 = vpack.c.b16 %v6689, %v6685
    %v6726 = vpack.c.b16 %v6694, %v6690
    %v6727 = vpack.c.b16 %v6695, %v6691
    %v6728 = vpack.c.b16 %v6696, %v6692
    %v6729 = vpack.c.b16 %v6697, %v6693
    %6762 = vmatprep.subr.bf16.mxu0 %v6727
    %6763 = vmatpush1.bf16.msra.mxu0 %v6726
    %6764 = vmatprep.subr.bf16.mxu0 %v6723
    %6765 = vmatpush1.bf16.msra.mxu0 %v6722
    %6766 = vmatprep.subr.bf16.mxu0 %v6719
    %6767 = vmatpush1.bf16.msra.mxu0 %v6718
    %6768 = vmatprep.subr.bf16.mxu0 %v6715
    %6769 = vmatpush1.bf16.msra.mxu0 %v6714
    %6770 = vmatprep.subr.bf16.mxu0 %v6711
    %6771 = vmatpush1.bf16.msra.mxu0 %v6710
    %6772 = vmatprep.subr.bf16.mxu0 %v6707
    %6773 = vmatpush1.bf16.msra.mxu0 %v6706
    %6774 = vmatprep.subr.bf16.mxu0 %v6703
    %6775 = vmatpush1.bf16.msra.mxu0 %v6702
    %6776 = vmatprep.subr.bf16.mxu0 %v6699
    %6777 = vmatpush1.bf16.msra.mxu0 %v6698
    %6778 = vmatprep.subr.bf16.mxu0 0
    %6779 = vmatpush2.bf16.msra.mxu0 0
    %6780 = vmatprep.subr.bf16.mxu0 0
    %6781 = vmatpush2.bf16.msra.mxu0 0
    %6782 = vmatprep.subr.bf16.mxu0 0
    %6783 = vmatpush2.bf16.msra.mxu0 0
    %6784 = vmatprep.subr.bf16.mxu0 0
    %6785 = vmatpush2.bf16.msra.mxu0 0
    %6786 = vmatprep.subr.bf16.mxu0 0
    %6787 = vmatpush2.bf16.msra.mxu0 0
    %6788 = vmatprep.subr.bf16.mxu0 0
    %6789 = vmatpush2.bf16.msra.mxu0 0
    %6790 = vmatprep.subr.bf16.mxu0 0
    %6791 = vmatpush2.bf16.msra.mxu0 0
    %6792 = vmatprep.subr.bf16.mxu0 0
    %6793 = vmatpush2.bf16.msra.mxu0 0
    %6794 = vmatprep.mubr.bf16.mxu0 0
    %6795 = vmatmul.mubr.bf16.gmra.mxu0 %v6600
    %v6796 = vpop.f32.mrf.mxu0
    %v6797 = vadd.f32 0.0, %v6796
    %v6798 = vpop.f32.mrf.mxu0
    %v6799 = vadd.f32 0.0, %v6798
    %v6800 = vpop.f32.mrf.mxu0
    %v6801 = vpop.f32.mrf.mxu0
    %6802 = vdwg.mxu0
    %6803 = vmatprep.subr.bf16.mxu0 %v6729
    %6804 = vmatpush1.bf16.msra.mxu0 %v6728
    %6805 = vmatprep.subr.bf16.mxu0 %v6725
    %6806 = vmatpush1.bf16.msra.mxu0 %v6724
    %6807 = vmatprep.subr.bf16.mxu0 %v6721
    %6808 = vmatpush1.bf16.msra.mxu0 %v6720
    %6809 = vmatprep.subr.bf16.mxu0 %v6717
    %6810 = vmatpush1.bf16.msra.mxu0 %v6716
    %6811 = vmatprep.subr.bf16.mxu0 %v6713
    %6812 = vmatpush1.bf16.msra.mxu0 %v6712
    %6813 = vmatprep.subr.bf16.mxu0 %v6709
    %6814 = vmatpush1.bf16.msra.mxu0 %v6708
    %6815 = vmatprep.subr.bf16.mxu0 %v6705
    %6816 = vmatpush1.bf16.msra.mxu0 %v6704
    %6817 = vmatprep.subr.bf16.mxu0 %v6701
    %6818 = vmatpush1.bf16.msra.mxu0 %v6700
    %6819 = vmatprep.subr.bf16.mxu0 0
    %6820 = vmatpush2.bf16.msra.mxu0 0
    %6821 = vmatprep.subr.bf16.mxu0 0
    %6822 = vmatpush2.bf16.msra.mxu0 0
    %6823 = vmatprep.subr.bf16.mxu0 0
    %6824 = vmatpush2.bf16.msra.mxu0 0
    %6825 = vmatprep.subr.bf16.mxu0 0
    %6826 = vmatpush2.bf16.msra.mxu0 0
    %6827 = vmatprep.subr.bf16.mxu0 0
    %6828 = vmatpush2.bf16.msra.mxu0 0
    %6829 = vmatprep.subr.bf16.mxu0 0
    %6830 = vmatpush2.bf16.msra.mxu0 0
    %6831 = vmatprep.subr.bf16.mxu0 0
    %6832 = vmatpush2.bf16.msra.mxu0 0
    %6833 = vmatprep.subr.bf16.mxu0 0
    %6834 = vmatpush2.bf16.msra.mxu0 0
    %6835 = vmatprep.mubr.bf16.mxu0 0
    %6836 = vmatmul.mubr.bf16.gmra.mxu0 %v6600
    %v6837 = vpop.f32.mrf.mxu0
    %v6838 = vadd.f32 0.0, %v6837
    %v6839 = vpop.f32.mrf.mxu0
    %v6840 = vadd.f32 0.0, %v6839
    %v6841 = vpop.f32.mrf.mxu0
    %v6842 = vpop.f32.mrf.mxu0
    %6843 = vdwg.mxu0
    %v6848 = vcombine.low %v6797, %v6799
    %v6849 = vcombine.low %v6838, %v6840
    %v6851 = vunpack.c.l.s4 1966171168
    %v6852 = vunpack.c.0.s8 %v6851
    %v6853 = vlaneseq
    %v6854 = vshrl.u32 %v6853, 7
    %v6855 = vsub.s32 %v6852, %v6854
    %v6856 = vrot.slane %v6848, %v6855
    %v6858 = vunpack.c.l.s4 1966171168
    %v6859 = vunpack.c.0.s8 %v6858
    %v6860 = vlaneseq
    %v6861 = vshrl.u32 %v6860, 7
    %v6862 = vsub.s32 %v6859, %v6861
    %v6863 = vrot.slane %v6849, %v6862
    %v6864 = vcombine.low %v6856, %v6863
    %v6865 = vcombine.high %v6856, %v6863
    %v6867 = vunpack.c.l.s4 1966171168
    %v6868 = vunpack.c.0.s8 %v6867
    %v6869 = vlaneseq
    %v6870 = vshrl.u32 %v6869, 7
    %v6871 = vsub.s32 %v6868, %v6870
    %v6872 = vrot.slane %v6864, %v6871
    %v6874 = vunpack.c.l.s4 1966171168
    %v6875 = vunpack.c.0.s8 %v6874
    %v6876 = vlaneseq
    %v6877 = vshrl.u32 %v6876, 7
    %v6878 = vsub.s32 %v6875, %v6877
    %v6879 = vrot.slane %v6865, %v6878
    %v6882 = vadd.f32 %v6557, %v6872
    %v6883 = vadd.f32 %v6559, %v6879
    %v6884 = vxor.u32 %v6882, 2147483648
    %v6885 = vxor.u32 %v6883, 2147483648
    %v6886 = vmul.f32 %v6884, 1.442695
    %v6887 = vpow.pop %v6886
    %v6888 = vmul.f32 %v6885, 1.442695
    %v6889 = vpow.pop %v6888
    %v6890 = vadd.f32 %v6887, 1.0
    %v6891 = vadd.f32 %v6889, 1.0
    %v6892 = vrcp.pop %v6890
    %v6893 = vmul.f32 1.0, %v6892
    %v6894 = vrcp.pop %v6891
    %v6895 = vmul.f32 1.0, %v6894
    %v6898 = vrot.slane %v6882, 3
    %v6899 = vrot.slane %v6883, 3
    %v6902 = vtanh.pop %v6898
    %v6903 = vtanh.pop %v6899
    %v6906 = vrot.slane %v6893, 1
    %v6907 = vrot.slane %v6895, 1
    %v6910 = vmul.f32 %v6906, %v5876
    %v6911 = vmul.f32 %v6907, %v5877
    %v6912 = vmul.f32 %v6893, %v6902
    %v6913 = vmul.f32 %v6895, %v6903
    %v6914 = vadd.f32 %v6910, %v6912
    %v6915 = vadd.f32 %v6911, %v6913
    %v6916 = vtanh.pop %v6914
    %v6917 = vtanh.pop %v6915
    %v6918 = vrot.slane %v6893, 2
    %v6919 = vrot.slane %v6895, 2
    %v6922 = vmul.f32 %v6918, %v6916
    %v6923 = vmul.f32 %v6919, %v6917
    %v6926 = vcombine.low %v6922, %v6923
    %v6928 = vunpack.c.l.s4 1966171168
    %v6929 = vunpack.c.0.s8 %v6928
    %v6930 = vlaneseq
    %v6931 = vshrl.u32 %v6930, 7
    %v6932 = vsub.s32 %v6929, %v6931
    %v6933 = vrot.slane %v6926, %v6932
    %v6935 = vunpack.c.l.s4 1966171168
    %v6936 = vunpack.c.0.s8 %v6935
    %v6937 = vlaneseq
    %v6938 = vshrl.u32 %v6937, 7
    %v6939 = vsub.s32 %v6936, %v6938
    %v6940 = vrot.slane %v6933, %v6939
    %v6942 = vpack.c.bf16 %v6940, %v6940
    %v6943 = vld [vmem:[#allocation6] sm:$0xff]
    %v6944 = vld [vmem:[#allocation6 + $0x8] sm:$0xff]
    %v6945 = vld [vmem:[#allocation6 + $0x10] sm:$0xff]
    %v6946 = vld [vmem:[#allocation6 + $0x18] sm:$0xff]
    %v6947 = vld [vmem:[#allocation6 + $0x20] sm:$0xff]
    %v6948 = vld [vmem:[#allocation6 + $0x28] sm:$0xff]
    %v6949 = vld [vmem:[#allocation6 + $0x30] sm:$0xff]
    %v6950 = vld [vmem:[#allocation6 + $0x38] sm:$0xff]
    %v6951 = vld [vmem:[#allocation6 + $0x40] sm:$0xff]
    %v6952 = vld [vmem:[#allocation6 + $0x48] sm:$0xff]
    %v6953 = vld [vmem:[#allocation6 + $0x50] sm:$0xff]
    %v6954 = vld [vmem:[#allocation6 + $0x58] sm:$0xff]
    %v6955 = vld [vmem:[#allocation6 + $0x60] sm:$0xff]
    %v6956 = vld [vmem:[#allocation6 + $0x68] sm:$0xff]
    %v6957 = vld [vmem:[#allocation6 + $0x70] sm:$0xff]
    %v6958 = vld [vmem:[#allocation6 + $0x78] sm:$0xff]
    %v6959 = vld [vmem:[#allocation6 + $0x80] sm:$0xff]
    %v6960 = vld [vmem:[#allocation6 + $0x88] sm:$0xff]
    %v6961 = vld [vmem:[#allocation6 + $0x90] sm:$0xff]
    %v6962 = vld [vmem:[#allocation6 + $0x98] sm:$0xff]
    %v6963 = vld [vmem:[#allocation6 + $0xa0] sm:$0xff]
    %v6964 = vld [vmem:[#allocation6 + $0xa8] sm:$0xff]
    %v6965 = vld [vmem:[#allocation6 + $0xb0] sm:$0xff]
    %v6966 = vld [vmem:[#allocation6 + $0xb8] sm:$0xff]
    %v6967 = vld [vmem:[#allocation6 + $0xc0] sm:$0xff]
    %v6968 = vld [vmem:[#allocation6 + $0xc8] sm:$0xff]
    %v6969 = vld [vmem:[#allocation6 + $0xd0] sm:$0xff]
    %v6970 = vld [vmem:[#allocation6 + $0xd8] sm:$0xff]
    %v6971 = vld [vmem:[#allocation6 + $0xe0] sm:$0xff]
    %v6972 = vld [vmem:[#allocation6 + $0xe8] sm:$0xff]
    %v6973 = vld [vmem:[#allocation6 + $0xf0] sm:$0xff]
    %v6974 = vld [vmem:[#allocation6 + $0xf8] sm:$0xff]
    %v6975 = vld [vmem:[#allocation6 + $0x100] sm:$0xff]
    %v6976 = vld [vmem:[#allocation6 + $0x108] sm:$0xff]
    %v6977 = vld [vmem:[#allocation6 + $0x110] sm:$0xff]
    %v6978 = vld [vmem:[#allocation6 + $0x118] sm:$0xff]
    %v6979 = vld [vmem:[#allocation6 + $0x120] sm:$0xff]
    %v6980 = vld [vmem:[#allocation6 + $0x128] sm:$0xff]
    %v6981 = vld [vmem:[#allocation6 + $0x130] sm:$0xff]
    %v6982 = vld [vmem:[#allocation6 + $0x138] sm:$0xff]
    %v6983 = vld [vmem:[#allocation6 + $0x140] sm:$0xff]
    %v6984 = vld [vmem:[#allocation6 + $0x148] sm:$0xff]
    %v6985 = vld [vmem:[#allocation6 + $0x150] sm:$0xff]
    %v6986 = vld [vmem:[#allocation6 + $0x158] sm:$0xff]
    %v6987 = vld [vmem:[#allocation6 + $0x160] sm:$0xff]
    %v6988 = vld [vmem:[#allocation6 + $0x168] sm:$0xff]
    %v6989 = vld [vmem:[#allocation6 + $0x170] sm:$0xff]
    %v6990 = vld [vmem:[#allocation6 + $0x178] sm:$0xff]
    %v6991 = vld [vmem:[#allocation6 + $0x180] sm:$0xff]
    %v6992 = vld [vmem:[#allocation6 + $0x188] sm:$0xff]
    %v6993 = vld [vmem:[#allocation6 + $0x190] sm:$0xff]
    %v6994 = vld [vmem:[#allocation6 + $0x198] sm:$0xff]
    %v6995 = vld [vmem:[#allocation6 + $0x1a0] sm:$0xff]
    %v6996 = vld [vmem:[#allocation6 + $0x1a8] sm:$0xff]
    %v6997 = vld [vmem:[#allocation6 + $0x1b0] sm:$0xff]
    %v6998 = vld [vmem:[#allocation6 + $0x1b8] sm:$0xff]
    %v6999 = vld [vmem:[#allocation6 + $0x1c0] sm:$0xff]
    %v7000 = vld [vmem:[#allocation6 + $0x1c8] sm:$0xff]
    %v7001 = vld [vmem:[#allocation6 + $0x1d0] sm:$0xff]
    %v7002 = vld [vmem:[#allocation6 + $0x1d8] sm:$0xff]
    %v7003 = vld [vmem:[#allocation6 + $0x1e0] sm:$0xff]
    %v7004 = vld [vmem:[#allocation6 + $0x1e8] sm:$0xff]
    %v7005 = vld [vmem:[#allocation6 + $0x1f0] sm:$0xff]
    %v7006 = vld [vmem:[#allocation6 + $0x1f8] sm:$0xff]
    %v7007 = vld [vmem:[%s5] sm:$0xf]
    %v7009 = vlaneseq
    %v7010 = vshrl.u32 %v7009, 7
    %v7011 = vsub.s32 0, %v7010
    %v7012 = vrot.slane %v7007, %v7011
    %v7013 = vlaneseq
    %v7014 = vshrl.u32 %v7013, 7
    %v7015 = vsub.s32 1, %v7014
    %v7016 = vrot.slane %v7007, %v7015
    %v7017 = vlaneseq
    %v7018 = vshrl.u32 %v7017, 7
    %v7019 = vsub.s32 2, %v7018
    %v7020 = vrot.slane %v7007, %v7019
    %v7021 = vlaneseq
    %v7022 = vshrl.u32 %v7021, 7
    %v7023 = vsub.s32 3, %v7022
    %v7024 = vrot.slane %v7007, %v7023
    %v7093 = vunpack.c.l.b16 %v6943
    %v7094 = vunpack.c.h.b16 %v6943
    %v7095 = vunpack.c.l.b16 %v6944
    %v7096 = vunpack.c.h.b16 %v6944
    %v7097 = vunpack.c.l.b16 %v6945
    %v7098 = vunpack.c.h.b16 %v6945
    %v7099 = vunpack.c.l.b16 %v6946
    %v7100 = vunpack.c.h.b16 %v6946
    %v7101 = vunpack.c.l.b16 %v6947
    %v7102 = vunpack.c.h.b16 %v6947
    %v7103 = vunpack.c.l.b16 %v6948
    %v7104 = vunpack.c.h.b16 %v6948
    %v7105 = vunpack.c.l.b16 %v6949
    %v7106 = vunpack.c.h.b16 %v6949
    %v7107 = vunpack.c.l.b16 %v6950
    %v7108 = vunpack.c.h.b16 %v6950
    %v7109 = vunpack.c.l.b16 %v6951
    %v7110 = vunpack.c.h.b16 %v6951
    %v7111 = vunpack.c.l.b16 %v6952
    %v7112 = vunpack.c.h.b16 %v6952
    %v7113 = vunpack.c.l.b16 %v6953
    %v7114 = vunpack.c.h.b16 %v6953
    %v7115 = vunpack.c.l.b16 %v6954
    %v7116 = vunpack.c.h.b16 %v6954
    %v7117 = vunpack.c.l.b16 %v6955
    %v7118 = vunpack.c.h.b16 %v6955
    %v7119 = vunpack.c.l.b16 %v6956
    %v7120 = vunpack.c.h.b16 %v6956
    %v7121 = vunpack.c.l.b16 %v6957
    %v7122 = vunpack.c.h.b16 %v6957
    %v7123 = vunpack.c.l.b16 %v6958
    %v7124 = vunpack.c.h.b16 %v6958
    %v7125 = vunpack.c.l.b16 %v6959
    %v7126 = vunpack.c.h.b16 %v6959
    %v7127 = vunpack.c.l.b16 %v6960
    %v7128 = vunpack.c.h.b16 %v6960
    %v7129 = vunpack.c.l.b16 %v6961
    %v7130 = vunpack.c.h.b16 %v6961
    %v7131 = vunpack.c.l.b16 %v6962
    %v7132 = vunpack.c.h.b16 %v6962
    %v7133 = vunpack.c.l.b16 %v6963
    %v7134 = vunpack.c.h.b16 %v6963
    %v7135 = vunpack.c.l.b16 %v6964
    %v7136 = vunpack.c.h.b16 %v6964
    %v7137 = vunpack.c.l.b16 %v6965
    %v7138 = vunpack.c.h.b16 %v6965
    %v7139 = vunpack.c.l.b16 %v6966
    %v7140 = vunpack.c.h.b16 %v6966
    %v7141 = vunpack.c.l.b16 %v6967
    %v7142 = vunpack.c.h.b16 %v6967
    %v7143 = vunpack.c.l.b16 %v6968
    %v7144 = vunpack.c.h.b16 %v6968
    %v7145 = vunpack.c.l.b16 %v6969
    %v7146 = vunpack.c.h.b16 %v6969
    %v7147 = vunpack.c.l.b16 %v6970
    %v7148 = vunpack.c.h.b16 %v6970
    %v7149 = vunpack.c.l.b16 %v6971
    %v7150 = vunpack.c.h.b16 %v6971
    %v7151 = vunpack.c.l.b16 %v6972
    %v7152 = vunpack.c.h.b16 %v6972
    %v7153 = vunpack.c.l.b16 %v6973
    %v7154 = vunpack.c.h.b16 %v6973
    %v7155 = vunpack.c.l.b16 %v6974
    %v7156 = vunpack.c.h.b16 %v6974
    %v7157 = vunpack.c.l.b16 %v6975
    %v7158 = vunpack.c.h.b16 %v6975
    %v7159 = vunpack.c.l.b16 %v6976
    %v7160 = vunpack.c.h.b16 %v6976
    %v7161 = vunpack.c.l.b16 %v6977
    %v7162 = vunpack.c.h.b16 %v6977
    %v7163 = vunpack.c.l.b16 %v6978
    %v7164 = vunpack.c.h.b16 %v6978
    %v7165 = vunpack.c.l.b16 %v6979
    %v7166 = vunpack.c.h.b16 %v6979
    %v7167 = vunpack.c.l.b16 %v6980
    %v7168 = vunpack.c.h.b16 %v6980
    %v7169 = vunpack.c.l.b16 %v6981
    %v7170 = vunpack.c.h.b16 %v6981
    %v7171 = vunpack.c.l.b16 %v6982
    %v7172 = vunpack.c.h.b16 %v6982
    %v7173 = vunpack.c.l.b16 %v6983
    %v7174 = vunpack.c.h.b16 %v6983
    %v7175 = vunpack.c.l.b16 %v6984
    %v7176 = vunpack.c.h.b16 %v6984
    %v7177 = vunpack.c.l.b16 %v6985
    %v7178 = vunpack.c.h.b16 %v6985
    %v7179 = vunpack.c.l.b16 %v6986
    %v7180 = vunpack.c.h.b16 %v6986
    %v7181 = vunpack.c.l.b16 %v6987
    %v7182 = vunpack.c.h.b16 %v6987
    %v7183 = vunpack.c.l.b16 %v6988
    %v7184 = vunpack.c.h.b16 %v6988
    %v7185 = vunpack.c.l.b16 %v6989
    %v7186 = vunpack.c.h.b16 %v6989
    %v7187 = vunpack.c.l.b16 %v6990
    %v7188 = vunpack.c.h.b16 %v6990
    %v7189 = vunpack.c.l.b16 %v6991
    %v7190 = vunpack.c.h.b16 %v6991
    %v7191 = vunpack.c.l.b16 %v6992
    %v7192 = vunpack.c.h.b16 %v6992
    %v7193 = vunpack.c.l.b16 %v6993
    %v7194 = vunpack.c.h.b16 %v6993
    %v7195 = vunpack.c.l.b16 %v6994
    %v7196 = vunpack.c.h.b16 %v6994
    %v7197 = vunpack.c.l.b16 %v6995
    %v7198 = vunpack.c.h.b16 %v6995
    %v7199 = vunpack.c.l.b16 %v6996
    %v7200 = vunpack.c.h.b16 %v6996
    %v7201 = vunpack.c.l.b16 %v6997
    %v7202 = vunpack.c.h.b16 %v6997
    %v7203 = vunpack.c.l.b16 %v6998
    %v7204 = vunpack.c.h.b16 %v6998
    %v7205 = vunpack.c.l.b16 %v6999
    %v7206 = vunpack.c.h.b16 %v6999
    %v7207 = vunpack.c.l.b16 %v7000
    %v7208 = vunpack.c.h.b16 %v7000
    %v7209 = vunpack.c.l.b16 %v7001
    %v7210 = vunpack.c.h.b16 %v7001
    %v7211 = vunpack.c.l.b16 %v7002
    %v7212 = vunpack.c.h.b16 %v7002
    %v7213 = vunpack.c.l.b16 %v7003
    %v7214 = vunpack.c.h.b16 %v7003
    %v7215 = vunpack.c.l.b16 %v7004
    %v7216 = vunpack.c.h.b16 %v7004
    %v7217 = vunpack.c.l.b16 %v7005
    %v7218 = vunpack.c.h.b16 %v7005
    %v7219 = vunpack.c.l.b16 %v7006
    %v7220 = vunpack.c.h.b16 %v7006
    %v7221 = vpack.c.b16 %v7097, %v7093
    %v7222 = vpack.c.b16 %v7098, %v7094
    %v7223 = vpack.c.b16 %v7099, %v7095
    %v7224 = vpack.c.b16 %v7100, %v7096
    %v7225 = vpack.c.b16 %v7105, %v7101
    %v7226 = vpack.c.b16 %v7106, %v7102
    %v7227 = vpack.c.b16 %v7107, %v7103
    %v7228 = vpack.c.b16 %v7108, %v7104
    %v7229 = vpack.c.b16 %v7113, %v7109
    %v7230 = vpack.c.b16 %v7114, %v7110
    %v7231 = vpack.c.b16 %v7115, %v7111
    %v7232 = vpack.c.b16 %v7116, %v7112
    %v7233 = vpack.c.b16 %v7121, %v7117
    %v7234 = vpack.c.b16 %v7122, %v7118
    %v7235 = vpack.c.b16 %v7123, %v7119
    %v7236 = vpack.c.b16 %v7124, %v7120
    %v7237 = vpack.c.b16 %v7129, %v7125
    %v7238 = vpack.c.b16 %v7130, %v7126
    %v7239 = vpack.c.b16 %v7131, %v7127
    %v7240 = vpack.c.b16 %v7132, %v7128
    %v7241 = vpack.c.b16 %v7137, %v7133
    %v7242 = vpack.c.b16 %v7138, %v7134
    %v7243 = vpack.c.b16 %v7139, %v7135
    %v7244 = vpack.c.b16 %v7140, %v7136
    %v7245 = vpack.c.b16 %v7145, %v7141
    %v7246 = vpack.c.b16 %v7146, %v7142
    %v7247 = vpack.c.b16 %v7147, %v7143
    %v7248 = vpack.c.b16 %v7148, %v7144
    %v7249 = vpack.c.b16 %v7153, %v7149
    %v7250 = vpack.c.b16 %v7154, %v7150
    %v7251 = vpack.c.b16 %v7155, %v7151
    %v7252 = vpack.c.b16 %v7156, %v7152
    %v7253 = vpack.c.b16 %v7161, %v7157
    %v7254 = vpack.c.b16 %v7162, %v7158
    %v7255 = vpack.c.b16 %v7163, %v7159
    %v7256 = vpack.c.b16 %v7164, %v7160
    %v7257 = vpack.c.b16 %v7169, %v7165
    %v7258 = vpack.c.b16 %v7170, %v7166
    %v7259 = vpack.c.b16 %v7171, %v7167
    %v7260 = vpack.c.b16 %v7172, %v7168
    %v7261 = vpack.c.b16 %v7177, %v7173
    %v7262 = vpack.c.b16 %v7178, %v7174
    %v7263 = vpack.c.b16 %v7179, %v7175
    %v7264 = vpack.c.b16 %v7180, %v7176
    %v7265 = vpack.c.b16 %v7185, %v7181
    %v7266 = vpack.c.b16 %v7186, %v7182
    %v7267 = vpack.c.b16 %v7187, %v7183
    %v7268 = vpack.c.b16 %v7188, %v7184
    %v7269 = vpack.c.b16 %v7193, %v7189
    %v7270 = vpack.c.b16 %v7194, %v7190
    %v7271 = vpack.c.b16 %v7195, %v7191
    %v7272 = vpack.c.b16 %v7196, %v7192
    %v7273 = vpack.c.b16 %v7201, %v7197
    %v7274 = vpack.c.b16 %v7202, %v7198
    %v7275 = vpack.c.b16 %v7203, %v7199
    %v7276 = vpack.c.b16 %v7204, %v7200
    %v7277 = vpack.c.b16 %v7209, %v7205
    %v7278 = vpack.c.b16 %v7210, %v7206
    %v7279 = vpack.c.b16 %v7211, %v7207
    %v7280 = vpack.c.b16 %v7212, %v7208
    %v7281 = vpack.c.b16 %v7217, %v7213
    %v7282 = vpack.c.b16 %v7218, %v7214
    %v7283 = vpack.c.b16 %v7219, %v7215
    %v7284 = vpack.c.b16 %v7220, %v7216
    %7349 = vmatprep.subr.bf16.mxu0 %v7250
    %7350 = vmatpush1.bf16.msra.mxu0 %v7249
    %7351 = vmatprep.subr.bf16.mxu0 %v7246
    %7352 = vmatpush1.bf16.msra.mxu0 %v7245
    %7353 = vmatprep.subr.bf16.mxu0 %v7242
    %7354 = vmatpush1.bf16.msra.mxu0 %v7241
    %7355 = vmatprep.subr.bf16.mxu0 %v7238
    %7356 = vmatpush1.bf16.msra.mxu0 %v7237
    %7357 = vmatprep.subr.bf16.mxu0 %v7234
    %7358 = vmatpush1.bf16.msra.mxu0 %v7233
    %7359 = vmatprep.subr.bf16.mxu0 %v7230
    %7360 = vmatpush1.bf16.msra.mxu0 %v7229
    %7361 = vmatprep.subr.bf16.mxu0 %v7226
    %7362 = vmatpush1.bf16.msra.mxu0 %v7225
    %7363 = vmatprep.subr.bf16.mxu0 %v7222
    %7364 = vmatpush1.bf16.msra.mxu0 %v7221
    %7365 = vmatprep.subr.bf16.mxu0 %v7282
    %7366 = vmatpush2.bf16.msra.mxu0 %v7281
    %7367 = vmatprep.subr.bf16.mxu0 %v7278
    %7368 = vmatpush2.bf16.msra.mxu0 %v7277
    %7369 = vmatprep.subr.bf16.mxu0 %v7274
    %7370 = vmatpush2.bf16.msra.mxu0 %v7273
    %7371 = vmatprep.subr.bf16.mxu0 %v7270
    %7372 = vmatpush2.bf16.msra.mxu0 %v7269
    %7373 = vmatprep.subr.bf16.mxu0 %v7266
    %7374 = vmatpush2.bf16.msra.mxu0 %v7265
    %7375 = vmatprep.subr.bf16.mxu0 %v7262
    %7376 = vmatpush2.bf16.msra.mxu0 %v7261
    %7377 = vmatprep.subr.bf16.mxu0 %v7258
    %7378 = vmatpush2.bf16.msra.mxu0 %v7257
    %7379 = vmatprep.subr.bf16.mxu0 %v7254
    %7380 = vmatpush2.bf16.msra.mxu0 %v7253
    %7381 = vmatprep.mubr.bf16.mxu0 %v6417
    %7382 = vmatmul.mubr.bf16.gmra.mxu0 %v6942
    %v7383 = vpop.f32.mrf.mxu0
    %v7384 = vadd.f32 %v7012, %v7383
    %v7385 = vpop.f32.mrf.mxu0
    %v7386 = vadd.f32 %v7016, %v7385
    %v7387 = vpop.f32.mrf.mxu0
    %v7388 = vpop.f32.mrf.mxu0
    %7389 = vdwg.mxu0
    %7390 = vmatprep.subr.bf16.mxu0 %v7252
    %7391 = vmatpush1.bf16.msra.mxu0 %v7251
    %7392 = vmatprep.subr.bf16.mxu0 %v7248
    %7393 = vmatpush1.bf16.msra.mxu0 %v7247
    %7394 = vmatprep.subr.bf16.mxu0 %v7244
    %7395 = vmatpush1.bf16.msra.mxu0 %v7243
    %7396 = vmatprep.subr.bf16.mxu0 %v7240
    %7397 = vmatpush1.bf16.msra.mxu0 %v7239
    %7398 = vmatprep.subr.bf16.mxu0 %v7236
    %7399 = vmatpush1.bf16.msra.mxu0 %v7235
    %7400 = vmatprep.subr.bf16.mxu0 %v7232
    %7401 = vmatpush1.bf16.msra.mxu0 %v7231
    %7402 = vmatprep.subr.bf16.mxu0 %v7228
    %7403 = vmatpush1.bf16.msra.mxu0 %v7227
    %7404 = vmatprep.subr.bf16.mxu0 %v7224
    %7405 = vmatpush1.bf16.msra.mxu0 %v7223
    %7406 = vmatprep.subr.bf16.mxu0 %v7284
    %7407 = vmatpush2.bf16.msra.mxu0 %v7283
    %7408 = vmatprep.subr.bf16.mxu0 %v7280
    %7409 = vmatpush2.bf16.msra.mxu0 %v7279
    %7410 = vmatprep.subr.bf16.mxu0 %v7276
    %7411 = vmatpush2.bf16.msra.mxu0 %v7275
    %7412 = vmatprep.subr.bf16.mxu0 %v7272
    %7413 = vmatpush2.bf16.msra.mxu0 %v7271
    %7414 = vmatprep.subr.bf16.mxu0 %v7268
    %7415 = vmatpush2.bf16.msra.mxu0 %v7267
    %7416 = vmatprep.subr.bf16.mxu0 %v7264
    %7417 = vmatpush2.bf16.msra.mxu0 %v7263
    %7418 = vmatprep.subr.bf16.mxu0 %v7260
    %7419 = vmatpush2.bf16.msra.mxu0 %v7259
    %7420 = vmatprep.subr.bf16.mxu0 %v7256
    %7421 = vmatpush2.bf16.msra.mxu0 %v7255
    %7422 = vmatprep.mubr.bf16.mxu0 %v6417
    %7423 = vmatmul.mubr.bf16.gmra.mxu0 %v6942
    %v7424 = vpop.f32.mrf.mxu0
    %v7425 = vadd.f32 %v7020, %v7424
    %v7426 = vpop.f32.mrf.mxu0
    %v7427 = vadd.f32 %v7024, %v7426
    %v7428 = vpop.f32.mrf.mxu0
    %v7429 = vpop.f32.mrf.mxu0
    %7430 = vdwg.mxu0
    %v7431 = vxor.u32 %v7384, 2147483648
    %v7432 = vxor.u32 %v7386, 2147483648
    %v7433 = vxor.u32 %v7425, 2147483648
    %v7434 = vmul.f32 %v7431, 1.442695
    %v7435 = vpow.pop %v7434
    %v7436 = vmul.f32 %v7432, 1.442695
    %v7437 = vpow.pop %v7436
    %v7438 = vmul.f32 %v7433, 1.442695
    %v7439 = vpow.pop %v7438
    %v7440 = vadd.f32 %v7435, 1.0
    %v7441 = vadd.f32 %v7437, 1.0
    %v7442 = vadd.f32 %v7439, 1.0
    %v7443 = vrcp.pop %v7440
    %v7444 = vmul.f32 1.0, %v7443
    %v7445 = vrcp.pop %v7441
    %v7446 = vmul.f32 1.0, %v7445
    %v7447 = vrcp.pop %v7442
    %v7448 = vmul.f32 1.0, %v7447
    %v7449 = vtanh.pop %v7427
    %v7450 = vmul.f32 %v7446, %v6414
    %v7451 = vmul.f32 %v7444, %v7449
    %v7452 = vadd.f32 %v7450, %v7451
    %v7453 = vtanh.pop %v7452
    %v7454 = vmul.f32 %v7448, %v7453
    %v7455 = vpack.c.bf16 %v7454, %v7454
    %v7456 = vld [vmem:[%s6] sm:$0xf]
    %v7457 = vld [vmem:[%s6 + $0x4] sm:$0xf]
    %v7458 = vld [vmem:[%s6 + $0x8] sm:$0xf]
    %v7459 = vld [vmem:[%s6 + $0xc] sm:$0xf]
    %v7460 = vld [vmem:[%s6 + $0x10] sm:$0xf]
    %v7461 = vld [vmem:[%s6 + $0x14] sm:$0xf]
    %v7462 = vld [vmem:[%s6 + $0x18] sm:$0xf]
    %v7463 = vld [vmem:[%s6 + $0x1c] sm:$0xf]
    %v7464 = vld [vmem:[%s6 + $0x20] sm:$0xf]
    %v7465 = vld [vmem:[%s6 + $0x24] sm:$0xf]
    %v7466 = vld [vmem:[%s6 + $0x28] sm:$0xf]
    %v7467 = vld [vmem:[%s6 + $0x2c] sm:$0xf]
    %v7468 = vld [vmem:[%s6 + $0x30] sm:$0xf]
    %v7469 = vld [vmem:[%s6 + $0x34] sm:$0xf]
    %v7470 = vld [vmem:[%s6 + $0x38] sm:$0xf]
    %v7471 = vld [vmem:[%s6 + $0x3c] sm:$0xf]
    %v7472 = vld [vmem:[%s7] sm:$0x1]
    %v7474 = vlaneseq
    %v7475 = vshrl.u32 %v7474, 7
    %v7476 = vsub.s32 0, %v7475
    %v7477 = vrot.slane %v7472, %v7476
    %v7495 = vunpack.c.l.b16 %v7456
    %v7496 = vunpack.c.l.b16 %v7457
    %v7497 = vunpack.c.l.b16 %v7458
    %v7498 = vunpack.c.l.b16 %v7459
    %v7499 = vunpack.c.l.b16 %v7460
    %v7500 = vunpack.c.l.b16 %v7461
    %v7501 = vunpack.c.l.b16 %v7462
    %v7502 = vunpack.c.l.b16 %v7463
    %v7503 = vunpack.c.l.b16 %v7464
    %v7504 = vunpack.c.l.b16 %v7465
    %v7505 = vunpack.c.l.b16 %v7466
    %v7506 = vunpack.c.l.b16 %v7467
    %v7507 = vunpack.c.l.b16 %v7468
    %v7508 = vunpack.c.l.b16 %v7469
    %v7509 = vunpack.c.l.b16 %v7470
    %v7510 = vunpack.c.l.b16 %v7471
    %v7511 = vpack.c.b16 %v7496, %v7495
    %v7512 = vpack.c.b16 %v7498, %v7497
    %v7513 = vpack.c.b16 %v7500, %v7499
    %v7514 = vpack.c.b16 %v7502, %v7501
    %v7515 = vpack.c.b16 %v7504, %v7503
    %v7516 = vpack.c.b16 %v7506, %v7505
    %v7517 = vpack.c.b16 %v7508, %v7507
    %v7518 = vpack.c.b16 %v7510, %v7509
    %7527 = vmatprep.subr.bf16.mxu0 0
    %7528 = vmatpush1.bf16.msra.mxu0 %v7518
    %7529 = vmatprep.subr.bf16.mxu0 0
    %7530 = vmatpush1.bf16.msra.mxu0 %v7517
    %7531 = vmatprep.subr.bf16.mxu0 0
    %7532 = vmatpush1.bf16.msra.mxu0 %v7516
    %7533 = vmatprep.subr.bf16.mxu0 0
    %7534 = vmatpush1.bf16.msra.mxu0 %v7515
    %7535 = vmatprep.subr.bf16.mxu0 0
    %7536 = vmatpush1.bf16.msra.mxu0 %v7514
    %7537 = vmatprep.subr.bf16.mxu0 0
    %7538 = vmatpush1.bf16.msra.mxu0 %v7513
    %7539 = vmatprep.subr.bf16.mxu0 0
    %7540 = vmatpush1.bf16.msra.mxu0 %v7512
    %7541 = vmatprep.subr.bf16.mxu0 0
    %7542 = vmatpush1.bf16.msra.mxu0 %v7511
    %7543 = vmatprep.subr.bf16.mxu0 0
    %7544 = vmatpush2.bf16.msra.mxu0 0
    %7545 = vmatprep.subr.bf16.mxu0 0
    %7546 = vmatpush2.bf16.msra.mxu0 0
    %7547 = vmatprep.subr.bf16.mxu0 0
    %7548 = vmatpush2.bf16.msra.mxu0 0
    %7549 = vmatprep.subr.bf16.mxu0 0
    %7550 = vmatpush2.bf16.msra.mxu0 0
    %7551 = vmatprep.subr.bf16.mxu0 0
    %7552 = vmatpush2.bf16.msra.mxu0 0
    %7553 = vmatprep.subr.bf16.mxu0 0
    %7554 = vmatpush2.bf16.msra.mxu0 0
    %7555 = vmatprep.subr.bf16.mxu0 0
    %7556 = vmatpush2.bf16.msra.mxu0 0
    %7557 = vmatprep.subr.bf16.mxu0 0
    %7558 = vmatpush2.bf16.msra.mxu0 0
    %7559 = vmatprep.mubr.bf16.mxu0 0
    %7560 = vmatmul.mubr.bf16.gmra.mxu0 %v7455
    %v7561 = vpop.f32.mrf.mxu0
    %v7562 = vadd.f32 %v7477, %v7561
    %v7563 = vpop.f32.mrf.mxu0
    %v7564 = vpop.f32.mrf.mxu0
    %v7565 = vpop.f32.mrf.mxu0
    %7566 = vdwg.mxu0
    %v7569 = vunpack.c.l.s4 1966171168
    %v7570 = vunpack.c.0.s8 %v7569
    %v7571 = vlaneseq
    %v7572 = vshrl.u32 %v7571, 7
    %v7573 = vsub.s32 %v7570, %v7572
    %v7574 = vrot.slane %v7562, %v7573
    %v7575 = vcombine.high %v7574, %v7574
    %v7577 = vunpack.c.l.s4 1966171168
    %v7578 = vunpack.c.0.s8 %v7577
    %v7579 = vlaneseq
    %v7580 = vshrl.u32 %v7579, 7
    %v7581 = vsub.s32 %v7578, %v7580
    %v7582 = vrot.slane %v7574, %v7581
    %v7584 = vunpack.c.l.s4 1966171168
    %v7585 = vunpack.c.0.s8 %v7584
    %v7586 = vlaneseq
    %v7587 = vshrl.u32 %v7586, 7
    %v7588 = vsub.s32 %v7585, %v7587
    %v7589 = vrot.slane %v7575, %v7588
    %7592 = vst.msk [vmem:[#allocation8 + $0x6] sm:$0x1] %vm1362, %v7582
    %7593 = vst.msk [vmem:[#allocation8 + $0xe] sm:$0x1] %vm1362, %v7589
    %s7594 = scalar_lea.vmem [#allocation2], 7
    %v7595 = vld [vmem:[%s7594] ss:$8 sm:$0xf]
    %s7596 = scalar_lea.vmem [#allocation2], 39
    %v7597 = vld [vmem:[%s7596] ss:$8 sm:$0xf]
    %v7598 = vpack.c.bf16 %v6922, %v6922
    %v7599 = vpack.c.bf16 %v6923, %v6923
    %v7600 = vld [vmem:[#allocation3] sm:$0xff]
    %v7601 = vld [vmem:[#allocation3 + $0x8] sm:$0xff]
    %v7602 = vld [vmem:[#allocation3 + $0x10] sm:$0xff]
    %v7603 = vld [vmem:[#allocation3 + $0x18] sm:$0xff]
    %v7604 = vld [vmem:[#allocation3 + $0x20] sm:$0xff]
    %v7605 = vld [vmem:[#allocation3 + $0x28] sm:$0xff]
    %v7606 = vld [vmem:[#allocation3 + $0x30] sm:$0xff]
    %v7607 = vld [vmem:[#allocation3 + $0x38] sm:$0xff]
    %v7608 = vld [vmem:[#allocation3 + $0x40] sm:$0xff]
    %v7609 = vld [vmem:[#allocation3 + $0x48] sm:$0xff]
    %v7610 = vld [vmem:[#allocation3 + $0x50] sm:$0xff]
    %v7611 = vld [vmem:[#allocation3 + $0x58] sm:$0xff]
    %v7612 = vld [vmem:[#allocation3 + $0x60] sm:$0xff]
    %v7613 = vld [vmem:[#allocation3 + $0x68] sm:$0xff]
    %v7614 = vld [vmem:[#allocation3 + $0x70] sm:$0xff]
    %v7615 = vld [vmem:[#allocation3 + $0x78] sm:$0xff]
    %v7616 = vld [vmem:[#allocation3 + $0x80] sm:$0xff]
    %v7617 = vld [vmem:[#allocation3 + $0x88] sm:$0xff]
    %v7618 = vld [vmem:[#allocation3 + $0x90] sm:$0xff]
    %v7619 = vld [vmem:[#allocation3 + $0x98] sm:$0xff]
    %v7620 = vld [vmem:[#allocation3 + $0xa0] sm:$0xff]
    %v7621 = vld [vmem:[#allocation3 + $0xa8] sm:$0xff]
    %v7622 = vld [vmem:[#allocation3 + $0xb0] sm:$0xff]
    %v7623 = vld [vmem:[#allocation3 + $0xb8] sm:$0xff]
    %v7624 = vld [vmem:[#allocation3 + $0xc0] sm:$0xff]
    %v7625 = vld [vmem:[#allocation3 + $0xc8] sm:$0xff]
    %v7626 = vld [vmem:[#allocation3 + $0xd0] sm:$0xff]
    %v7627 = vld [vmem:[#allocation3 + $0xd8] sm:$0xff]
    %v7628 = vld [vmem:[#allocation3 + $0xe0] sm:$0xff]
    %v7629 = vld [vmem:[#allocation3 + $0xe8] sm:$0xff]
    %v7630 = vld [vmem:[#allocation3 + $0xf0] sm:$0xff]
    %v7631 = vld [vmem:[#allocation3 + $0xf8] sm:$0xff]
    %v7634 = vunpack.c.l.b16 %v7598
    %v7635 = vunpack.c.l.b16 %v7599
    %v7636 = vrot.slane %v7635, 7
    %v7637 = vsel %vm1408, %v7636, %v7634
    %v7638 = vpack.c.b16 %v7637, %v7637
    %v7672 = vunpack.c.l.b16 %v7600
    %v7673 = vunpack.c.h.b16 %v7600
    %v7674 = vunpack.c.l.b16 %v7601
    %v7675 = vunpack.c.h.b16 %v7601
    %v7676 = vunpack.c.l.b16 %v7602
    %v7677 = vunpack.c.h.b16 %v7602
    %v7678 = vunpack.c.l.b16 %v7603
    %v7679 = vunpack.c.h.b16 %v7603
    %v7680 = vunpack.c.l.b16 %v7604
    %v7681 = vunpack.c.h.b16 %v7604
    %v7682 = vunpack.c.l.b16 %v7605
    %v7683 = vunpack.c.h.b16 %v7605
    %v7684 = vunpack.c.l.b16 %v7606
    %v7685 = vunpack.c.h.b16 %v7606
    %v7686 = vunpack.c.l.b16 %v7607
    %v7687 = vunpack.c.h.b16 %v7607
    %v7688 = vunpack.c.l.b16 %v7608
    %v7689 = vunpack.c.h.b16 %v7608
    %v7690 = vunpack.c.l.b16 %v7609
    %v7691 = vunpack.c.h.b16 %v7609
    %v7692 = vunpack.c.l.b16 %v7610
    %v7693 = vunpack.c.h.b16 %v7610
    %v7694 = vunpack.c.l.b16 %v7611
    %v7695 = vunpack.c.h.b16 %v7611
    %v7696 = vunpack.c.l.b16 %v7612
    %v7697 = vunpack.c.h.b16 %v7612
    %v7698 = vunpack.c.l.b16 %v7613
    %v7699 = vunpack.c.h.b16 %v7613
    %v7700 = vunpack.c.l.b16 %v7614
    %v7701 = vunpack.c.h.b16 %v7614
    %v7702 = vunpack.c.l.b16 %v7615
    %v7703 = vunpack.c.h.b16 %v7615
    %v7704 = vunpack.c.l.b16 %v7616
    %v7705 = vunpack.c.h.b16 %v7616
    %v7706 = vunpack.c.l.b16 %v7617
    %v7707 = vunpack.c.h.b16 %v7617
    %v7708 = vunpack.c.l.b16 %v7618
    %v7709 = vunpack.c.h.b16 %v7618
    %v7710 = vunpack.c.l.b16 %v7619
    %v7711 = vunpack.c.h.b16 %v7619
    %v7712 = vunpack.c.l.b16 %v7620
    %v7713 = vunpack.c.h.b16 %v7620
    %v7714 = vunpack.c.l.b16 %v7621
    %v7715 = vunpack.c.h.b16 %v7621
    %v7716 = vunpack.c.l.b16 %v7622
    %v7717 = vunpack.c.h.b16 %v7622
    %v7718 = vunpack.c.l.b16 %v7623
    %v7719 = vunpack.c.h.b16 %v7623
    %v7720 = vunpack.c.l.b16 %v7624
    %v7721 = vunpack.c.h.b16 %v7624
    %v7722 = vunpack.c.l.b16 %v7625
    %v7723 = vunpack.c.h.b16 %v7625
    %v7724 = vunpack.c.l.b16 %v7626
    %v7725 = vunpack.c.h.b16 %v7626
    %v7726 = vunpack.c.l.b16 %v7627
    %v7727 = vunpack.c.h.b16 %v7627
    %v7728 = vunpack.c.l.b16 %v7628
    %v7729 = vunpack.c.h.b16 %v7628
    %v7730 = vunpack.c.l.b16 %v7629
    %v7731 = vunpack.c.h.b16 %v7629
    %v7732 = vunpack.c.l.b16 %v7630
    %v7733 = vunpack.c.h.b16 %v7630
    %v7734 = vunpack.c.l.b16 %v7631
    %v7735 = vunpack.c.h.b16 %v7631
    %v7736 = vpack.c.b16 %v7676, %v7672
    %v7737 = vpack.c.b16 %v7677, %v7673
    %v7738 = vpack.c.b16 %v7678, %v7674
    %v7739 = vpack.c.b16 %v7679, %v7675
    %v7740 = vpack.c.b16 %v7684, %v7680
    %v7741 = vpack.c.b16 %v7685, %v7681
    %v7742 = vpack.c.b16 %v7686, %v7682
    %v7743 = vpack.c.b16 %v7687, %v7683
    %v7744 = vpack.c.b16 %v7692, %v7688
    %v7745 = vpack.c.b16 %v7693, %v7689
    %v7746 = vpack.c.b16 %v7694, %v7690
    %v7747 = vpack.c.b16 %v7695, %v7691
    %v7748 = vpack.c.b16 %v7700, %v7696
    %v7749 = vpack.c.b16 %v7701, %v7697
    %v7750 = vpack.c.b16 %v7702, %v7698
    %v7751 = vpack.c.b16 %v7703, %v7699
    %v7752 = vpack.c.b16 %v7708, %v7704
    %v7753 = vpack.c.b16 %v7709, %v7705
    %v7754 = vpack.c.b16 %v7710, %v7706
    %v7755 = vpack.c.b16 %v7711, %v7707
    %v7756 = vpack.c.b16 %v7716, %v7712
    %v7757 = vpack.c.b16 %v7717, %v7713
    %v7758 = vpack.c.b16 %v7718, %v7714
    %v7759 = vpack.c.b16 %v7719, %v7715
    %v7760 = vpack.c.b16 %v7724, %v7720
    %v7761 = vpack.c.b16 %v7725, %v7721
    %v7762 = vpack.c.b16 %v7726, %v7722
    %v7763 = vpack.c.b16 %v7727, %v7723
    %v7764 = vpack.c.b16 %v7732, %v7728
    %v7765 = vpack.c.b16 %v7733, %v7729
    %v7766 = vpack.c.b16 %v7734, %v7730
    %v7767 = vpack.c.b16 %v7735, %v7731
    %7800 = vmatprep.subr.bf16.mxu0 %v7765
    %7801 = vmatpush1.bf16.msra.mxu0 %v7764
    %7802 = vmatprep.subr.bf16.mxu0 %v7761
    %7803 = vmatpush1.bf16.msra.mxu0 %v7760
    %7804 = vmatprep.subr.bf16.mxu0 %v7757
    %7805 = vmatpush1.bf16.msra.mxu0 %v7756
    %7806 = vmatprep.subr.bf16.mxu0 %v7753
    %7807 = vmatpush1.bf16.msra.mxu0 %v7752
    %7808 = vmatprep.subr.bf16.mxu0 %v7749
    %7809 = vmatpush1.bf16.msra.mxu0 %v7748
    %7810 = vmatprep.subr.bf16.mxu0 %v7745
    %7811 = vmatpush1.bf16.msra.mxu0 %v7744
    %7812 = vmatprep.subr.bf16.mxu0 %v7741
    %7813 = vmatpush1.bf16.msra.mxu0 %v7740
    %7814 = vmatprep.subr.bf16.mxu0 %v7737
    %7815 = vmatpush1.bf16.msra.mxu0 %v7736
    %7816 = vmatprep.subr.bf16.mxu0 0
    %7817 = vmatpush2.bf16.msra.mxu0 0
    %7818 = vmatprep.subr.bf16.mxu0 0
    %7819 = vmatpush2.bf16.msra.mxu0 0
    %7820 = vmatprep.subr.bf16.mxu0 0
    %7821 = vmatpush2.bf16.msra.mxu0 0
    %7822 = vmatprep.subr.bf16.mxu0 0
    %7823 = vmatpush2.bf16.msra.mxu0 0
    %7824 = vmatprep.subr.bf16.mxu0 0
    %7825 = vmatpush2.bf16.msra.mxu0 0
    %7826 = vmatprep.subr.bf16.mxu0 0
    %7827 = vmatpush2.bf16.msra.mxu0 0
    %7828 = vmatprep.subr.bf16.mxu0 0
    %7829 = vmatpush2.bf16.msra.mxu0 0
    %7830 = vmatprep.subr.bf16.mxu0 0
    %7831 = vmatpush2.bf16.msra.mxu0 0
    %7832 = vmatprep.mubr.bf16.mxu0 0
    %7833 = vmatmul.mubr.bf16.gmra.mxu0 %v7638
    %v7834 = vpop.f32.mrf.mxu0
    %v7835 = vadd.f32 0.0, %v7834
    %v7836 = vpop.f32.mrf.mxu0
    %v7837 = vadd.f32 0.0, %v7836
    %v7838 = vpop.f32.mrf.mxu0
    %v7839 = vpop.f32.mrf.mxu0
    %7840 = vdwg.mxu0
    %7841 = vmatprep.subr.bf16.mxu0 %v7767
    %7842 = vmatpush1.bf16.msra.mxu0 %v7766
    %7843 = vmatprep.subr.bf16.mxu0 %v7763
    %7844 = vmatpush1.bf16.msra.mxu0 %v7762
    %7845 = vmatprep.subr.bf16.mxu0 %v7759
    %7846 = vmatpush1.bf16.msra.mxu0 %v7758
    %7847 = vmatprep.subr.bf16.mxu0 %v7755
    %7848 = vmatpush1.bf16.msra.mxu0 %v7754
    %7849 = vmatprep.subr.bf16.mxu0 %v7751
    %7850 = vmatpush1.bf16.msra.mxu0 %v7750
    %7851 = vmatprep.subr.bf16.mxu0 %v7747
    %7852 = vmatpush1.bf16.msra.mxu0 %v7746
    %7853 = vmatprep.subr.bf16.mxu0 %v7743
    %7854 = vmatpush1.bf16.msra.mxu0 %v7742
    %7855 = vmatprep.subr.bf16.mxu0 %v7739
    %7856 = vmatpush1.bf16.msra.mxu0 %v7738
    %7857 = vmatprep.subr.bf16.mxu0 0
    %7858 = vmatpush2.bf16.msra.mxu0 0
    %7859 = vmatprep.subr.bf16.mxu0 0
    %7860 = vmatpush2.bf16.msra.mxu0 0
    %7861 = vmatprep.subr.bf16.mxu0 0
    %7862 = vmatpush2.bf16.msra.mxu0 0
    %7863 = vmatprep.subr.bf16.mxu0 0
    %7864 = vmatpush2.bf16.msra.mxu0 0
    %7865 = vmatprep.subr.bf16.mxu0 0
    %7866 = vmatpush2.bf16.msra.mxu0 0
    %7867 = vmatprep.subr.bf16.mxu0 0
    %7868 = vmatpush2.bf16.msra.mxu0 0
    %7869 = vmatprep.subr.bf16.mxu0 0
    %7870 = vmatpush2.bf16.msra.mxu0 0
    %7871 = vmatprep.subr.bf16.mxu0 0
    %7872 = vmatpush2.bf16.msra.mxu0 0
    %7873 = vmatprep.mubr.bf16.mxu0 0
    %7874 = vmatmul.mubr.bf16.gmra.mxu0 %v7638
    %v7875 = vpop.f32.mrf.mxu0
    %v7876 = vadd.f32 0.0, %v7875
    %v7877 = vpop.f32.mrf.mxu0
    %v7878 = vadd.f32 0.0, %v7877
    %v7879 = vpop.f32.mrf.mxu0
    %v7880 = vpop.f32.mrf.mxu0
    %7881 = vdwg.mxu0
    %v7886 = vcombine.low %v7835, %v7837
    %v7887 = vcombine.low %v7876, %v7878
    %v7889 = vunpack.c.l.s4 1966171168
    %v7890 = vunpack.c.0.s8 %v7889
    %v7891 = vlaneseq
    %v7892 = vshrl.u32 %v7891, 7
    %v7893 = vsub.s32 %v7890, %v7892
    %v7894 = vrot.slane %v7886, %v7893
    %v7896 = vunpack.c.l.s4 1966171168
    %v7897 = vunpack.c.0.s8 %v7896
    %v7898 = vlaneseq
    %v7899 = vshrl.u32 %v7898, 7
    %v7900 = vsub.s32 %v7897, %v7899
    %v7901 = vrot.slane %v7887, %v7900
    %v7902 = vcombine.low %v7894, %v7901
    %v7903 = vcombine.high %v7894, %v7901
    %v7905 = vunpack.c.l.s4 1966171168
    %v7906 = vunpack.c.0.s8 %v7905
    %v7907 = vlaneseq
    %v7908 = vshrl.u32 %v7907, 7
    %v7909 = vsub.s32 %v7906, %v7908
    %v7910 = vrot.slane %v7902, %v7909
    %v7912 = vunpack.c.l.s4 1966171168
    %v7913 = vunpack.c.0.s8 %v7912
    %v7914 = vlaneseq
    %v7915 = vshrl.u32 %v7914, 7
    %v7916 = vsub.s32 %v7913, %v7915
    %v7917 = vrot.slane %v7903, %v7916
    %v7920 = vadd.f32 %v7595, %v7910
    %v7921 = vadd.f32 %v7597, %v7917
    %v7922 = vxor.u32 %v7920, 2147483648
    %v7923 = vxor.u32 %v7921, 2147483648
    %v7924 = vmul.f32 %v7922, 1.442695
    %v7925 = vpow.pop %v7924
    %v7926 = vmul.f32 %v7923, 1.442695
    %v7927 = vpow.pop %v7926
    %v7928 = vadd.f32 %v7925, 1.0
    %v7929 = vadd.f32 %v7927, 1.0
    %v7930 = vrcp.pop %v7928
    %v7931 = vmul.f32 1.0, %v7930
    %v7932 = vrcp.pop %v7929
    %v7933 = vmul.f32 1.0, %v7932
    %v7936 = vrot.slane %v7920, 3
    %v7937 = vrot.slane %v7921, 3
    %v7940 = vtanh.pop %v7936
    %v7941 = vtanh.pop %v7937
    %v7944 = vrot.slane %v7931, 1
    %v7945 = vrot.slane %v7933, 1
    %v7948 = vmul.f32 %v7944, %v6914
    %v7949 = vmul.f32 %v7945, %v6915
    %v7950 = vmul.f32 %v7931, %v7940
    %v7951 = vmul.f32 %v7933, %v7941
    %v7952 = vadd.f32 %v7948, %v7950
    %v7953 = vadd.f32 %v7949, %v7951
    %v7954 = vtanh.pop %v7952
    %v7955 = vtanh.pop %v7953
    %v7956 = vrot.slane %v7931, 2
    %v7957 = vrot.slane %v7933, 2
    %v7960 = vmul.f32 %v7956, %v7954
    %v7961 = vmul.f32 %v7957, %v7955
    %v7964 = vcombine.low %v7960, %v7961
    %v7966 = vunpack.c.l.s4 1966171168
    %v7967 = vunpack.c.0.s8 %v7966
    %v7968 = vlaneseq
    %v7969 = vshrl.u32 %v7968, 7
    %v7970 = vsub.s32 %v7967, %v7969
    %v7971 = vrot.slane %v7964, %v7970
    %v7973 = vunpack.c.l.s4 1966171168
    %v7974 = vunpack.c.0.s8 %v7973
    %v7975 = vlaneseq
    %v7976 = vshrl.u32 %v7975, 7
    %v7977 = vsub.s32 %v7974, %v7976
    %v7978 = vrot.slane %v7971, %v7977
    %v7980 = vpack.c.bf16 %v7978, %v7978
    %v7981 = vld [vmem:[#allocation6] sm:$0xff]
    %v7982 = vld [vmem:[#allocation6 + $0x8] sm:$0xff]
    %v7983 = vld [vmem:[#allocation6 + $0x10] sm:$0xff]
    %v7984 = vld [vmem:[#allocation6 + $0x18] sm:$0xff]
    %v7985 = vld [vmem:[#allocation6 + $0x20] sm:$0xff]
    %v7986 = vld [vmem:[#allocation6 + $0x28] sm:$0xff]
    %v7987 = vld [vmem:[#allocation6 + $0x30] sm:$0xff]
    %v7988 = vld [vmem:[#allocation6 + $0x38] sm:$0xff]
    %v7989 = vld [vmem:[#allocation6 + $0x40] sm:$0xff]
    %v7990 = vld [vmem:[#allocation6 + $0x48] sm:$0xff]
    %v7991 = vld [vmem:[#allocation6 + $0x50] sm:$0xff]
    %v7992 = vld [vmem:[#allocation6 + $0x58] sm:$0xff]
    %v7993 = vld [vmem:[#allocation6 + $0x60] sm:$0xff]
    %v7994 = vld [vmem:[#allocation6 + $0x68] sm:$0xff]
    %v7995 = vld [vmem:[#allocation6 + $0x70] sm:$0xff]
    %v7996 = vld [vmem:[#allocation6 + $0x78] sm:$0xff]
    %v7997 = vld [vmem:[#allocation6 + $0x80] sm:$0xff]
    %v7998 = vld [vmem:[#allocation6 + $0x88] sm:$0xff]
    %v7999 = vld [vmem:[#allocation6 + $0x90] sm:$0xff]
    %v8000 = vld [vmem:[#allocation6 + $0x98] sm:$0xff]
    %v8001 = vld [vmem:[#allocation6 + $0xa0] sm:$0xff]
    %v8002 = vld [vmem:[#allocation6 + $0xa8] sm:$0xff]
    %v8003 = vld [vmem:[#allocation6 + $0xb0] sm:$0xff]
    %v8004 = vld [vmem:[#allocation6 + $0xb8] sm:$0xff]
    %v8005 = vld [vmem:[#allocation6 + $0xc0] sm:$0xff]
    %v8006 = vld [vmem:[#allocation6 + $0xc8] sm:$0xff]
    %v8007 = vld [vmem:[#allocation6 + $0xd0] sm:$0xff]
    %v8008 = vld [vmem:[#allocation6 + $0xd8] sm:$0xff]
    %v8009 = vld [vmem:[#allocation6 + $0xe0] sm:$0xff]
    %v8010 = vld [vmem:[#allocation6 + $0xe8] sm:$0xff]
    %v8011 = vld [vmem:[#allocation6 + $0xf0] sm:$0xff]
    %v8012 = vld [vmem:[#allocation6 + $0xf8] sm:$0xff]
    %v8013 = vld [vmem:[#allocation6 + $0x100] sm:$0xff]
    %v8014 = vld [vmem:[#allocation6 + $0x108] sm:$0xff]
    %v8015 = vld [vmem:[#allocation6 + $0x110] sm:$0xff]
    %v8016 = vld [vmem:[#allocation6 + $0x118] sm:$0xff]
    %v8017 = vld [vmem:[#allocation6 + $0x120] sm:$0xff]
    %v8018 = vld [vmem:[#allocation6 + $0x128] sm:$0xff]
    %v8019 = vld [vmem:[#allocation6 + $0x130] sm:$0xff]
    %v8020 = vld [vmem:[#allocation6 + $0x138] sm:$0xff]
    %v8021 = vld [vmem:[#allocation6 + $0x140] sm:$0xff]
    %v8022 = vld [vmem:[#allocation6 + $0x148] sm:$0xff]
    %v8023 = vld [vmem:[#allocation6 + $0x150] sm:$0xff]
    %v8024 = vld [vmem:[#allocation6 + $0x158] sm:$0xff]
    %v8025 = vld [vmem:[#allocation6 + $0x160] sm:$0xff]
    %v8026 = vld [vmem:[#allocation6 + $0x168] sm:$0xff]
    %v8027 = vld [vmem:[#allocation6 + $0x170] sm:$0xff]
    %v8028 = vld [vmem:[#allocation6 + $0x178] sm:$0xff]
    %v8029 = vld [vmem:[#allocation6 + $0x180] sm:$0xff]
    %v8030 = vld [vmem:[#allocation6 + $0x188] sm:$0xff]
    %v8031 = vld [vmem:[#allocation6 + $0x190] sm:$0xff]
    %v8032 = vld [vmem:[#allocation6 + $0x198] sm:$0xff]
    %v8033 = vld [vmem:[#allocation6 + $0x1a0] sm:$0xff]
    %v8034 = vld [vmem:[#allocation6 + $0x1a8] sm:$0xff]
    %v8035 = vld [vmem:[#allocation6 + $0x1b0] sm:$0xff]
    %v8036 = vld [vmem:[#allocation6 + $0x1b8] sm:$0xff]
    %v8037 = vld [vmem:[#allocation6 + $0x1c0] sm:$0xff]
    %v8038 = vld [vmem:[#allocation6 + $0x1c8] sm:$0xff]
    %v8039 = vld [vmem:[#allocation6 + $0x1d0] sm:$0xff]
    %v8040 = vld [vmem:[#allocation6 + $0x1d8] sm:$0xff]
    %v8041 = vld [vmem:[#allocation6 + $0x1e0] sm:$0xff]
    %v8042 = vld [vmem:[#allocation6 + $0x1e8] sm:$0xff]
    %v8043 = vld [vmem:[#allocation6 + $0x1f0] sm:$0xff]
    %v8044 = vld [vmem:[#allocation6 + $0x1f8] sm:$0xff]
    %v8045 = vld [vmem:[%s5] sm:$0xf]
    %v8047 = vlaneseq
    %v8048 = vshrl.u32 %v8047, 7
    %v8049 = vsub.s32 0, %v8048
    %v8050 = vrot.slane %v8045, %v8049
    %v8051 = vlaneseq
    %v8052 = vshrl.u32 %v8051, 7
    %v8053 = vsub.s32 1, %v8052
    %v8054 = vrot.slane %v8045, %v8053
    %v8055 = vlaneseq
    %v8056 = vshrl.u32 %v8055, 7
    %v8057 = vsub.s32 2, %v8056
    %v8058 = vrot.slane %v8045, %v8057
    %v8059 = vlaneseq
    %v8060 = vshrl.u32 %v8059, 7
    %v8061 = vsub.s32 3, %v8060
    %v8062 = vrot.slane %v8045, %v8061
    %v8131 = vunpack.c.l.b16 %v7981
    %v8132 = vunpack.c.h.b16 %v7981
    %v8133 = vunpack.c.l.b16 %v7982
    %v8134 = vunpack.c.h.b16 %v7982
    %v8135 = vunpack.c.l.b16 %v7983
    %v8136 = vunpack.c.h.b16 %v7983
    %v8137 = vunpack.c.l.b16 %v7984
    %v8138 = vunpack.c.h.b16 %v7984
    %v8139 = vunpack.c.l.b16 %v7985
    %v8140 = vunpack.c.h.b16 %v7985
    %v8141 = vunpack.c.l.b16 %v7986
    %v8142 = vunpack.c.h.b16 %v7986
    %v8143 = vunpack.c.l.b16 %v7987
    %v8144 = vunpack.c.h.b16 %v7987
    %v8145 = vunpack.c.l.b16 %v7988
    %v8146 = vunpack.c.h.b16 %v7988
    %v8147 = vunpack.c.l.b16 %v7989
    %v8148 = vunpack.c.h.b16 %v7989
    %v8149 = vunpack.c.l.b16 %v7990
    %v8150 = vunpack.c.h.b16 %v7990
    %v8151 = vunpack.c.l.b16 %v7991
    %v8152 = vunpack.c.h.b16 %v7991
    %v8153 = vunpack.c.l.b16 %v7992
    %v8154 = vunpack.c.h.b16 %v7992
    %v8155 = vunpack.c.l.b16 %v7993
    %v8156 = vunpack.c.h.b16 %v7993
    %v8157 = vunpack.c.l.b16 %v7994
    %v8158 = vunpack.c.h.b16 %v7994
    %v8159 = vunpack.c.l.b16 %v7995
    %v8160 = vunpack.c.h.b16 %v7995
    %v8161 = vunpack.c.l.b16 %v7996
    %v8162 = vunpack.c.h.b16 %v7996
    %v8163 = vunpack.c.l.b16 %v7997
    %v8164 = vunpack.c.h.b16 %v7997
    %v8165 = vunpack.c.l.b16 %v7998
    %v8166 = vunpack.c.h.b16 %v7998
    %v8167 = vunpack.c.l.b16 %v7999
    %v8168 = vunpack.c.h.b16 %v7999
    %v8169 = vunpack.c.l.b16 %v8000
    %v8170 = vunpack.c.h.b16 %v8000
    %v8171 = vunpack.c.l.b16 %v8001
    %v8172 = vunpack.c.h.b16 %v8001
    %v8173 = vunpack.c.l.b16 %v8002
    %v8174 = vunpack.c.h.b16 %v8002
    %v8175 = vunpack.c.l.b16 %v8003
    %v8176 = vunpack.c.h.b16 %v8003
    %v8177 = vunpack.c.l.b16 %v8004
    %v8178 = vunpack.c.h.b16 %v8004
    %v8179 = vunpack.c.l.b16 %v8005
    %v8180 = vunpack.c.h.b16 %v8005
    %v8181 = vunpack.c.l.b16 %v8006
    %v8182 = vunpack.c.h.b16 %v8006
    %v8183 = vunpack.c.l.b16 %v8007
    %v8184 = vunpack.c.h.b16 %v8007
    %v8185 = vunpack.c.l.b16 %v8008
    %v8186 = vunpack.c.h.b16 %v8008
    %v8187 = vunpack.c.l.b16 %v8009
    %v8188 = vunpack.c.h.b16 %v8009
    %v8189 = vunpack.c.l.b16 %v8010
    %v8190 = vunpack.c.h.b16 %v8010
    %v8191 = vunpack.c.l.b16 %v8011
    %v8192 = vunpack.c.h.b16 %v8011
    %v8193 = vunpack.c.l.b16 %v8012
    %v8194 = vunpack.c.h.b16 %v8012
    %v8195 = vunpack.c.l.b16 %v8013
    %v8196 = vunpack.c.h.b16 %v8013
    %v8197 = vunpack.c.l.b16 %v8014
    %v8198 = vunpack.c.h.b16 %v8014
    %v8199 = vunpack.c.l.b16 %v8015
    %v8200 = vunpack.c.h.b16 %v8015
    %v8201 = vunpack.c.l.b16 %v8016
    %v8202 = vunpack.c.h.b16 %v8016
    %v8203 = vunpack.c.l.b16 %v8017
    %v8204 = vunpack.c.h.b16 %v8017
    %v8205 = vunpack.c.l.b16 %v8018
    %v8206 = vunpack.c.h.b16 %v8018
    %v8207 = vunpack.c.l.b16 %v8019
    %v8208 = vunpack.c.h.b16 %v8019
    %v8209 = vunpack.c.l.b16 %v8020
    %v8210 = vunpack.c.h.b16 %v8020
    %v8211 = vunpack.c.l.b16 %v8021
    %v8212 = vunpack.c.h.b16 %v8021
    %v8213 = vunpack.c.l.b16 %v8022
    %v8214 = vunpack.c.h.b16 %v8022
    %v8215 = vunpack.c.l.b16 %v8023
    %v8216 = vunpack.c.h.b16 %v8023
    %v8217 = vunpack.c.l.b16 %v8024
    %v8218 = vunpack.c.h.b16 %v8024
    %v8219 = vunpack.c.l.b16 %v8025
    %v8220 = vunpack.c.h.b16 %v8025
    %v8221 = vunpack.c.l.b16 %v8026
    %v8222 = vunpack.c.h.b16 %v8026
    %v8223 = vunpack.c.l.b16 %v8027
    %v8224 = vunpack.c.h.b16 %v8027
    %v8225 = vunpack.c.l.b16 %v8028
    %v8226 = vunpack.c.h.b16 %v8028
    %v8227 = vunpack.c.l.b16 %v8029
    %v8228 = vunpack.c.h.b16 %v8029
    %v8229 = vunpack.c.l.b16 %v8030
    %v8230 = vunpack.c.h.b16 %v8030
    %v8231 = vunpack.c.l.b16 %v8031
    %v8232 = vunpack.c.h.b16 %v8031
    %v8233 = vunpack.c.l.b16 %v8032
    %v8234 = vunpack.c.h.b16 %v8032
    %v8235 = vunpack.c.l.b16 %v8033
    %v8236 = vunpack.c.h.b16 %v8033
    %v8237 = vunpack.c.l.b16 %v8034
    %v8238 = vunpack.c.h.b16 %v8034
    %v8239 = vunpack.c.l.b16 %v8035
    %v8240 = vunpack.c.h.b16 %v8035
    %v8241 = vunpack.c.l.b16 %v8036
    %v8242 = vunpack.c.h.b16 %v8036
    %v8243 = vunpack.c.l.b16 %v8037
    %v8244 = vunpack.c.h.b16 %v8037
    %v8245 = vunpack.c.l.b16 %v8038
    %v8246 = vunpack.c.h.b16 %v8038
    %v8247 = vunpack.c.l.b16 %v8039
    %v8248 = vunpack.c.h.b16 %v8039
    %v8249 = vunpack.c.l.b16 %v8040
    %v8250 = vunpack.c.h.b16 %v8040
    %v8251 = vunpack.c.l.b16 %v8041
    %v8252 = vunpack.c.h.b16 %v8041
    %v8253 = vunpack.c.l.b16 %v8042
    %v8254 = vunpack.c.h.b16 %v8042
    %v8255 = vunpack.c.l.b16 %v8043
    %v8256 = vunpack.c.h.b16 %v8043
    %v8257 = vunpack.c.l.b16 %v8044
    %v8258 = vunpack.c.h.b16 %v8044
    %v8259 = vpack.c.b16 %v8135, %v8131
    %v8260 = vpack.c.b16 %v8136, %v8132
    %v8261 = vpack.c.b16 %v8137, %v8133
    %v8262 = vpack.c.b16 %v8138, %v8134
    %v8263 = vpack.c.b16 %v8143, %v8139
    %v8264 = vpack.c.b16 %v8144, %v8140
    %v8265 = vpack.c.b16 %v8145, %v8141
    %v8266 = vpack.c.b16 %v8146, %v8142
    %v8267 = vpack.c.b16 %v8151, %v8147
    %v8268 = vpack.c.b16 %v8152, %v8148
    %v8269 = vpack.c.b16 %v8153, %v8149
    %v8270 = vpack.c.b16 %v8154, %v8150
    %v8271 = vpack.c.b16 %v8159, %v8155
    %v8272 = vpack.c.b16 %v8160, %v8156
    %v8273 = vpack.c.b16 %v8161, %v8157
    %v8274 = vpack.c.b16 %v8162, %v8158
    %v8275 = vpack.c.b16 %v8167, %v8163
    %v8276 = vpack.c.b16 %v8168, %v8164
    %v8277 = vpack.c.b16 %v8169, %v8165
    %v8278 = vpack.c.b16 %v8170, %v8166
    %v8279 = vpack.c.b16 %v8175, %v8171
    %v8280 = vpack.c.b16 %v8176, %v8172
    %v8281 = vpack.c.b16 %v8177, %v8173
    %v8282 = vpack.c.b16 %v8178, %v8174
    %v8283 = vpack.c.b16 %v8183, %v8179
    %v8284 = vpack.c.b16 %v8184, %v8180
    %v8285 = vpack.c.b16 %v8185, %v8181
    %v8286 = vpack.c.b16 %v8186, %v8182
    %v8287 = vpack.c.b16 %v8191, %v8187
    %v8288 = vpack.c.b16 %v8192, %v8188
    %v8289 = vpack.c.b16 %v8193, %v8189
    %v8290 = vpack.c.b16 %v8194, %v8190
    %v8291 = vpack.c.b16 %v8199, %v8195
    %v8292 = vpack.c.b16 %v8200, %v8196
    %v8293 = vpack.c.b16 %v8201, %v8197
    %v8294 = vpack.c.b16 %v8202, %v8198
    %v8295 = vpack.c.b16 %v8207, %v8203
    %v8296 = vpack.c.b16 %v8208, %v8204
    %v8297 = vpack.c.b16 %v8209, %v8205
    %v8298 = vpack.c.b16 %v8210, %v8206
    %v8299 = vpack.c.b16 %v8215, %v8211
    %v8300 = vpack.c.b16 %v8216, %v8212
    %v8301 = vpack.c.b16 %v8217, %v8213
    %v8302 = vpack.c.b16 %v8218, %v8214
    %v8303 = vpack.c.b16 %v8223, %v8219
    %v8304 = vpack.c.b16 %v8224, %v8220
    %v8305 = vpack.c.b16 %v8225, %v8221
    %v8306 = vpack.c.b16 %v8226, %v8222
    %v8307 = vpack.c.b16 %v8231, %v8227
    %v8308 = vpack.c.b16 %v8232, %v8228
    %v8309 = vpack.c.b16 %v8233, %v8229
    %v8310 = vpack.c.b16 %v8234, %v8230
    %v8311 = vpack.c.b16 %v8239, %v8235
    %v8312 = vpack.c.b16 %v8240, %v8236
    %v8313 = vpack.c.b16 %v8241, %v8237
    %v8314 = vpack.c.b16 %v8242, %v8238
    %v8315 = vpack.c.b16 %v8247, %v8243
    %v8316 = vpack.c.b16 %v8248, %v8244
    %v8317 = vpack.c.b16 %v8249, %v8245
    %v8318 = vpack.c.b16 %v8250, %v8246
    %v8319 = vpack.c.b16 %v8255, %v8251
    %v8320 = vpack.c.b16 %v8256, %v8252
    %v8321 = vpack.c.b16 %v8257, %v8253
    %v8322 = vpack.c.b16 %v8258, %v8254
    %8387 = vmatprep.subr.bf16.mxu0 %v8288
    %8388 = vmatpush1.bf16.msra.mxu0 %v8287
    %8389 = vmatprep.subr.bf16.mxu0 %v8284
    %8390 = vmatpush1.bf16.msra.mxu0 %v8283
    %8391 = vmatprep.subr.bf16.mxu0 %v8280
    %8392 = vmatpush1.bf16.msra.mxu0 %v8279
    %8393 = vmatprep.subr.bf16.mxu0 %v8276
    %8394 = vmatpush1.bf16.msra.mxu0 %v8275
    %8395 = vmatprep.subr.bf16.mxu0 %v8272
    %8396 = vmatpush1.bf16.msra.mxu0 %v8271
    %8397 = vmatprep.subr.bf16.mxu0 %v8268
    %8398 = vmatpush1.bf16.msra.mxu0 %v8267
    %8399 = vmatprep.subr.bf16.mxu0 %v8264
    %8400 = vmatpush1.bf16.msra.mxu0 %v8263
    %8401 = vmatprep.subr.bf16.mxu0 %v8260
    %8402 = vmatpush1.bf16.msra.mxu0 %v8259
    %8403 = vmatprep.subr.bf16.mxu0 %v8320
    %8404 = vmatpush2.bf16.msra.mxu0 %v8319
    %8405 = vmatprep.subr.bf16.mxu0 %v8316
    %8406 = vmatpush2.bf16.msra.mxu0 %v8315
    %8407 = vmatprep.subr.bf16.mxu0 %v8312
    %8408 = vmatpush2.bf16.msra.mxu0 %v8311
    %8409 = vmatprep.subr.bf16.mxu0 %v8308
    %8410 = vmatpush2.bf16.msra.mxu0 %v8307
    %8411 = vmatprep.subr.bf16.mxu0 %v8304
    %8412 = vmatpush2.bf16.msra.mxu0 %v8303
    %8413 = vmatprep.subr.bf16.mxu0 %v8300
    %8414 = vmatpush2.bf16.msra.mxu0 %v8299
    %8415 = vmatprep.subr.bf16.mxu0 %v8296
    %8416 = vmatpush2.bf16.msra.mxu0 %v8295
    %8417 = vmatprep.subr.bf16.mxu0 %v8292
    %8418 = vmatpush2.bf16.msra.mxu0 %v8291
    %8419 = vmatprep.mubr.bf16.mxu0 %v7455
    %8420 = vmatmul.mubr.bf16.gmra.mxu0 %v7980
    %v8421 = vpop.f32.mrf.mxu0
    %v8422 = vadd.f32 %v8050, %v8421
    %v8423 = vpop.f32.mrf.mxu0
    %v8424 = vadd.f32 %v8054, %v8423
    %v8425 = vpop.f32.mrf.mxu0
    %v8426 = vpop.f32.mrf.mxu0
    %8427 = vdwg.mxu0
    %8428 = vmatprep.subr.bf16.mxu0 %v8290
    %8429 = vmatpush1.bf16.msra.mxu0 %v8289
    %8430 = vmatprep.subr.bf16.mxu0 %v8286
    %8431 = vmatpush1.bf16.msra.mxu0 %v8285
    %8432 = vmatprep.subr.bf16.mxu0 %v8282
    %8433 = vmatpush1.bf16.msra.mxu0 %v8281
    %8434 = vmatprep.subr.bf16.mxu0 %v8278
    %8435 = vmatpush1.bf16.msra.mxu0 %v8277
    %8436 = vmatprep.subr.bf16.mxu0 %v8274
    %8437 = vmatpush1.bf16.msra.mxu0 %v8273
    %8438 = vmatprep.subr.bf16.mxu0 %v8270
    %8439 = vmatpush1.bf16.msra.mxu0 %v8269
    %8440 = vmatprep.subr.bf16.mxu0 %v8266
    %8441 = vmatpush1.bf16.msra.mxu0 %v8265
    %8442 = vmatprep.subr.bf16.mxu0 %v8262
    %8443 = vmatpush1.bf16.msra.mxu0 %v8261
    %8444 = vmatprep.subr.bf16.mxu0 %v8322
    %8445 = vmatpush2.bf16.msra.mxu0 %v8321
    %8446 = vmatprep.subr.bf16.mxu0 %v8318
    %8447 = vmatpush2.bf16.msra.mxu0 %v8317
    %8448 = vmatprep.subr.bf16.mxu0 %v8314
    %8449 = vmatpush2.bf16.msra.mxu0 %v8313
    %8450 = vmatprep.subr.bf16.mxu0 %v8310
    %8451 = vmatpush2.bf16.msra.mxu0 %v8309
    %8452 = vmatprep.subr.bf16.mxu0 %v8306
    %8453 = vmatpush2.bf16.msra.mxu0 %v8305
    %8454 = vmatprep.subr.bf16.mxu0 %v8302
    %8455 = vmatpush2.bf16.msra.mxu0 %v8301
    %8456 = vmatprep.subr.bf16.mxu0 %v8298
    %8457 = vmatpush2.bf16.msra.mxu0 %v8297
    %8458 = vmatprep.subr.bf16.mxu0 %v8294
    %8459 = vmatpush2.bf16.msra.mxu0 %v8293
    %8460 = vmatprep.mubr.bf16.mxu0 %v7455
    %8461 = vmatmul.mubr.bf16.gmra.mxu0 %v7980
    %v8462 = vpop.f32.mrf.mxu0
    %v8463 = vadd.f32 %v8058, %v8462
    %v8464 = vpop.f32.mrf.mxu0
    %v8465 = vadd.f32 %v8062, %v8464
    %v8466 = vpop.f32.mrf.mxu0
    %v8467 = vpop.f32.mrf.mxu0
    %8468 = vdwg.mxu0
    %v8469 = vxor.u32 %v8422, 2147483648
    %v8470 = vxor.u32 %v8424, 2147483648
    %v8471 = vxor.u32 %v8463, 2147483648
    %v8472 = vmul.f32 %v8469, 1.442695
    %v8473 = vpow.pop %v8472
    %v8474 = vmul.f32 %v8470, 1.442695
    %v8475 = vpow.pop %v8474
    %v8476 = vmul.f32 %v8471, 1.442695
    %v8477 = vpow.pop %v8476
    %v8478 = vadd.f32 %v8473, 1.0
    %v8479 = vadd.f32 %v8475, 1.0
    %v8480 = vadd.f32 %v8477, 1.0
    %v8481 = vrcp.pop %v8478
    %v8482 = vmul.f32 1.0, %v8481
    %v8483 = vrcp.pop %v8479
    %v8484 = vmul.f32 1.0, %v8483
    %v8485 = vrcp.pop %v8480
    %v8486 = vmul.f32 1.0, %v8485
    %v8487 = vtanh.pop %v8465
    %v8488 = vmul.f32 %v8484, %v7452
    %v8489 = vmul.f32 %v8482, %v8487
    %v8490 = vadd.f32 %v8488, %v8489
    %v8491 = vtanh.pop %v8490
    %v8492 = vmul.f32 %v8486, %v8491
    %v8493 = vpack.c.bf16 %v8492, %v8492
    %v8494 = vld [vmem:[%s6] sm:$0xf]
    %v8495 = vld [vmem:[%s6 + $0x4] sm:$0xf]
    %v8496 = vld [vmem:[%s6 + $0x8] sm:$0xf]
    %v8497 = vld [vmem:[%s6 + $0xc] sm:$0xf]
    %v8498 = vld [vmem:[%s6 + $0x10] sm:$0xf]
    %v8499 = vld [vmem:[%s6 + $0x14] sm:$0xf]
    %v8500 = vld [vmem:[%s6 + $0x18] sm:$0xf]
    %v8501 = vld [vmem:[%s6 + $0x1c] sm:$0xf]
    %v8502 = vld [vmem:[%s6 + $0x20] sm:$0xf]
    %v8503 = vld [vmem:[%s6 + $0x24] sm:$0xf]
    %v8504 = vld [vmem:[%s6 + $0x28] sm:$0xf]
    %v8505 = vld [vmem:[%s6 + $0x2c] sm:$0xf]
    %v8506 = vld [vmem:[%s6 + $0x30] sm:$0xf]
    %v8507 = vld [vmem:[%s6 + $0x34] sm:$0xf]
    %v8508 = vld [vmem:[%s6 + $0x38] sm:$0xf]
    %v8509 = vld [vmem:[%s6 + $0x3c] sm:$0xf]
    %v8510 = vld [vmem:[%s7] sm:$0x1]
    %v8512 = vlaneseq
    %v8513 = vshrl.u32 %v8512, 7
    %v8514 = vsub.s32 0, %v8513
    %v8515 = vrot.slane %v8510, %v8514
    %v8533 = vunpack.c.l.b16 %v8494
    %v8534 = vunpack.c.l.b16 %v8495
    %v8535 = vunpack.c.l.b16 %v8496
    %v8536 = vunpack.c.l.b16 %v8497
    %v8537 = vunpack.c.l.b16 %v8498
    %v8538 = vunpack.c.l.b16 %v8499
    %v8539 = vunpack.c.l.b16 %v8500
    %v8540 = vunpack.c.l.b16 %v8501
    %v8541 = vunpack.c.l.b16 %v8502
    %v8542 = vunpack.c.l.b16 %v8503
    %v8543 = vunpack.c.l.b16 %v8504
    %v8544 = vunpack.c.l.b16 %v8505
    %v8545 = vunpack.c.l.b16 %v8506
    %v8546 = vunpack.c.l.b16 %v8507
    %v8547 = vunpack.c.l.b16 %v8508
    %v8548 = vunpack.c.l.b16 %v8509
    %v8549 = vpack.c.b16 %v8534, %v8533
    %v8550 = vpack.c.b16 %v8536, %v8535
    %v8551 = vpack.c.b16 %v8538, %v8537
    %v8552 = vpack.c.b16 %v8540, %v8539
    %v8553 = vpack.c.b16 %v8542, %v8541
    %v8554 = vpack.c.b16 %v8544, %v8543
    %v8555 = vpack.c.b16 %v8546, %v8545
    %v8556 = vpack.c.b16 %v8548, %v8547
    %8565 = vmatprep.subr.bf16.mxu0 0
    %8566 = vmatpush1.bf16.msra.mxu0 %v8556
    %8567 = vmatprep.subr.bf16.mxu0 0
    %8568 = vmatpush1.bf16.msra.mxu0 %v8555
    %8569 = vmatprep.subr.bf16.mxu0 0
    %8570 = vmatpush1.bf16.msra.mxu0 %v8554
    %8571 = vmatprep.subr.bf16.mxu0 0
    %8572 = vmatpush1.bf16.msra.mxu0 %v8553
    %8573 = vmatprep.subr.bf16.mxu0 0
    %8574 = vmatpush1.bf16.msra.mxu0 %v8552
    %8575 = vmatprep.subr.bf16.mxu0 0
    %8576 = vmatpush1.bf16.msra.mxu0 %v8551
    %8577 = vmatprep.subr.bf16.mxu0 0
    %8578 = vmatpush1.bf16.msra.mxu0 %v8550
    %8579 = vmatprep.subr.bf16.mxu0 0
    %8580 = vmatpush1.bf16.msra.mxu0 %v8549
    %8581 = vmatprep.subr.bf16.mxu0 0
    %8582 = vmatpush2.bf16.msra.mxu0 0
    %8583 = vmatprep.subr.bf16.mxu0 0
    %8584 = vmatpush2.bf16.msra.mxu0 0
    %8585 = vmatprep.subr.bf16.mxu0 0
    %8586 = vmatpush2.bf16.msra.mxu0 0
    %8587 = vmatprep.subr.bf16.mxu0 0
    %8588 = vmatpush2.bf16.msra.mxu0 0
    %8589 = vmatprep.subr.bf16.mxu0 0
    %8590 = vmatpush2.bf16.msra.mxu0 0
    %8591 = vmatprep.subr.bf16.mxu0 0
    %8592 = vmatpush2.bf16.msra.mxu0 0
    %8593 = vmatprep.subr.bf16.mxu0 0
    %8594 = vmatpush2.bf16.msra.mxu0 0
    %8595 = vmatprep.subr.bf16.mxu0 0
    %8596 = vmatpush2.bf16.msra.mxu0 0
    %8597 = vmatprep.mubr.bf16.mxu0 0
    %8598 = vmatmul.mubr.bf16.gmra.mxu0 %v8493
    %v8599 = vpop.f32.mrf.mxu0
    %v8600 = vadd.f32 %v8515, %v8599
    %v8601 = vpop.f32.mrf.mxu0
    %v8602 = vpop.f32.mrf.mxu0
    %v8603 = vpop.f32.mrf.mxu0
    %8604 = vdwg.mxu0
    %v8607 = vunpack.c.l.s4 1966171168
    %v8608 = vunpack.c.0.s8 %v8607
    %v8609 = vlaneseq
    %v8610 = vshrl.u32 %v8609, 7
    %v8611 = vsub.s32 %v8608, %v8610
    %v8612 = vrot.slane %v8600, %v8611
    %v8613 = vcombine.high %v8612, %v8612
    %v8615 = vunpack.c.l.s4 1966171168
    %v8616 = vunpack.c.0.s8 %v8615
    %v8617 = vlaneseq
    %v8618 = vshrl.u32 %v8617, 7
    %v8619 = vsub.s32 %v8616, %v8618
    %v8620 = vrot.slane %v8612, %v8619
    %v8622 = vunpack.c.l.s4 1966171168
    %v8623 = vunpack.c.0.s8 %v8622
    %v8624 = vlaneseq
    %v8625 = vshrl.u32 %v8624, 7
    %v8626 = vsub.s32 %v8623, %v8625
    %v8627 = vrot.slane %v8613, %v8626
    %8630 = vst.msk [vmem:[#allocation8 + $0x7] sm:$0x1] %vm1362, %v8620
    %8631 = vst.msk [vmem:[#allocation8 + $0xf] sm:$0x1] %vm1362, %v8627
    // Predicated region
    $region42: #{tpu_custom_call.1} parent=1 // pred_check
      _
    $region43: #{tpu_custom_call.1} parent=1 // pred_check_branch
      %8633 = sbr.rel (0) target = $region45
    $region44: #{tpu_custom_call.1} parent=1 // pred_region
      %s8635 = ssub.s32 256, 256
      %8636 = vsyncadd [#allocation5], %s8635
      %s8637 = sshll.u32 [#allocation8], 4
      %s8638 = int_to_ptr.vmem [resolvable:$true] %s8637
      %8643 = dma.vmem_to_hbm [thread:$0]  %s8638, 256, %s8, [#allocation5], 128, 128, 8
    $region45: #{tpu_custom_call.1} parent=1 // pred_fallthru
      _
    // Predicated region
    $region46: #{tpu_custom_call.1} parent=1 // pred_check
      _
    $region47: #{tpu_custom_call.1} parent=1 // pred_check_branch
      %8645 = sbr.rel (0) target = $region49
    $region48: #{tpu_custom_call.1} parent=1 // pred_region
      %8646 = dma.done [#allocation5], 256
    $region49: #{tpu_custom_call.1} parent=1 // pred_fallthru
      _
    %8647 = vsyncpa [#allocation4], 1
    %8648 = vsyncpa [#allocation7], 1
    %8649 = vsyncpa [#allocation5], 1

</llo_original>
